<compile_context>
chip_gen: v7x
topology: tpu7x:2x2x1
jax: 0.10.0
libtpu: 0.0.40
codegen_flags: <defaults>
</compile_context>

<pallas_src>
import jax
import jax.numpy as jnp
from jax import lax
from jax.experimental import pallas as pl
from jax.experimental.pallas import tpu as pltpu


# ----------------------------------------------------------------------------
# Kernels
# ----------------------------------------------------------------------------
def conv3x3_bn_relu_kernel(x_ref, w_ref, scale_ref, shift_ref, o_ref):
    """x_ref: (1, H+2, W+2, Cin) f32 (zero padded); w_ref: (9, Cin, Cout) bf16;
    scale_ref/shift_ref: (1, Cout) f32 (folded BN + conv bias); o_ref: (1, H, W, Cout)."""
    _, H, W, Cout = o_ref.shape
    Cin = x_ref.shape[-1]

    acc = jnp.zeros((H * W, Cout), jnp.float32)
    for k in range(9):                      # 9 taps of the 3x3 kernel, unrolled
        dy, dx = k // 3, k % 3
        xs = x_ref[0, dy:dy + H, dx:dx + W, :].reshape(H * W, Cin)
        acc = acc + jnp.dot(xs.astype(jnp.bfloat16), w_ref[k],
                            preferred_element_type=jnp.float32)
    y = jnp.maximum(acc * scale_ref[...] + shift_ref[...], 0.0)   # BN + ReLU in f32
    o_ref[...] = y.reshape(1, H, W, Cout)


def maxpool2x2_kernel(x_ref, o_ref):
    """x_ref: (2, 2, N, Wo, C) — the four pixels of each 2x2 window, pre-grouped by a
    wrapper-side reshape/transpose; o_ref: (N, Wo, C)."""
    o_ref[...] = jnp.maximum(jnp.maximum(x_ref[0, 0], x_ref[0, 1]),
                             jnp.maximum(x_ref[1, 0], x_ref[1, 1]))


def fc_head_kernel(x_ref, w1_ref, b1_ref, w2_ref, b2_ref, o_ref):
    """fc1 + ReLU + fc2.  Weights are bf16, accumulation f32."""
    h = jnp.dot(x_ref[...].astype(jnp.bfloat16), w1_ref[...],
                preferred_element_type=jnp.float32) + b1_ref[...]
    h = jnp.maximum(h, 0.0)
    o_ref[...] = jnp.dot(h.astype(jnp.bfloat16), w2_ref[...],
                         preferred_element_type=jnp.float32) + b2_ref[...]


# ----------------------------------------------------------------------------
# Pallas wrappers
# ----------------------------------------------------------------------------
def conv3x3_bn_relu(x_nhwc, w9_bf16, scale, shift):
    B, H, W, Cin = x_nhwc.shape
    Cout = w9_bf16.shape[-1]
    x_pad = jnp.pad(x_nhwc, ((0, 0), (1, 1), (1, 1), (0, 0)))      # 'SAME' padding
    Hp, Wp = H + 2, W + 2
    return pl.pallas_call(
        conv3x3_bn_relu_kernel,
        out_shape=jax.ShapeDtypeStruct((B, H, W, Cout), jnp.float32),
        grid_spec=pltpu.PrefetchScalarGridSpec(
            num_scalar_prefetch=0,
            grid=(B,),                                             # batch grid, pipelined
            in_specs=[
                pl.BlockSpec((1, Hp, Wp, Cin), lambda b: (b, 0, 0, 0)),
                pl.BlockSpec((9, Cin, Cout), lambda b: (0, 0, 0)),  # weights resident
                pl.BlockSpec((1, Cout), lambda b: (0, 0)),
                pl.BlockSpec((1, Cout), lambda b: (0, 0)),
            ],
            out_specs=pl.BlockSpec((1, H, W, Cout), lambda b: (b, 0, 0, 0)),
        ),
        compiler_params=pltpu.CompilerParams(dimension_semantics=("parallel",)),
    )(x_pad, w9_bf16, scale, shift)


def maxpool2x2(x_nhwc):
    B, H, W, C = x_nhwc.shape
    Ho, Wo = H // 2, W // 2
    # Layout plumbing only: group the 4 pixels of each 2x2 window onto two leading
    # (untiled) axes so the kernel sees lane-dense (N, Wo, C) slabs.
    xg = x_nhwc.reshape(B, Ho, 2, Wo, 2, C)
    xg = jnp.transpose(xg, (2, 4, 0, 1, 3, 5)).reshape(2, 2, B * Ho, Wo, C)
    pooled = pl.pallas_call(
        maxpool2x2_kernel,
        out_shape=jax.ShapeDtypeStruct((B * Ho, Wo, C), jnp.float32),
        in_specs=[pl.BlockSpec(memory_space=pltpu.MemorySpace.VMEM)],
        out_specs=pl.BlockSpec(memory_space=pltpu.MemorySpace.VMEM),
    )(xg)
    return pooled.reshape(B, Ho, Wo, C)


def fc_head(x, w1_bf16, b1, w2_bf16, b2):
    B, F0 = x.shape
    F1 = w1_bf16.shape[1]
    NOUT = w2_bf16.shape[1]
    TM = min(B, 256)                                # >=128/256 rows per MXU issue at scale
    flops = 2 * B * (F0 * F1 + F1 * NOUT)
    bytes_accessed = (w1_bf16.size + w2_bf16.size) * 2 + (b1.size + b2.size) * 4 \
                     + (x.size + B * NOUT) * 4
    return pl.pallas_call(
        fc_head_kernel,
        out_shape=jax.ShapeDtypeStruct((B, NOUT), jnp.float32),
        grid_spec=pltpu.PrefetchScalarGridSpec(
            num_scalar_prefetch=0,
            grid=(pl.cdiv(B, TM),),
            in_specs=[
                pl.BlockSpec((TM, F0), lambda i: (i, 0)),           # pipelined activations
                pl.BlockSpec((F0, F1), lambda i: (0, 0)),           # resident weights
                pl.BlockSpec((1, F1), lambda i: (0, 0)),
                pl.BlockSpec((F1, NOUT), lambda i: (0, 0)),
                pl.BlockSpec((1, NOUT), lambda i: (0, 0)),
            ],
            out_specs=pl.BlockSpec((TM, NOUT), lambda i: (i, 0)),
        ),
        compiler_params=pltpu.CompilerParams(dimension_semantics=("parallel",)),
        cost_estimate=pl.CostEstimate(flops=flops, transcendentals=0,
                                      bytes_accessed=bytes_accessed),
    )(x, w1_bf16, b1, w2_bf16, b2)


# ----------------------------------------------------------------------------
# Parameters & forward
# ----------------------------------------------------------------------------
CONV_CHANNELS = [(3, 16), (16, 16), (16, 32), (32, 32), (32, 64), (64, 64)]
FC_DIMS = [(64 * 4 * 4, 128), (128, 10)]
BN_EPS = 1e-5


def init_params(key):
    conv_params = []
    for cin, cout in CONV_CHANNELS:
        key, kw, kb, kg, kbe, km, kv = jax.random.split(key, 7)
        bound = (cin * 9) ** -0.5
        w = jax.random.uniform(kw, (3, 3, cin, cout), jnp.float32, -bound, bound)  # HWIO
        b = jax.random.uniform(kb, (cout,), jnp.float32, -bound, bound)
        gamma = jax.random.uniform(kg, (cout,), jnp.float32, 0.8, 1.2)
        beta = 0.1 * jax.random.normal(kbe, (cout,), jnp.float32)
        mean = 0.1 * jax.random.normal(km, (cout,), jnp.float32)
        var = jax.random.uniform(kv, (cout,), jnp.float32, 0.8, 1.2)
        conv_params.append((w, b, gamma, beta, mean, var))
    fc_params = []
    for fi, fo in FC_DIMS:
        key, kw, kb = jax.random.split(key, 3)
        bound = fi ** -0.5
        w = jax.random.uniform(kw, (fi, fo), jnp.float32, -bound, bound)
        b = jax.random.uniform(kb, (1, fo), jnp.float32, -bound, bound)
        fc_params.append((w, b))
    return conv_params, fc_params


def _fold_conv_bn(w_hwio, b, gamma, beta, mean, var):
    cin, cout = w_hwio.shape[2], w_hwio.shape[3]
    scale = gamma / jnp.sqrt(var + BN_EPS)
    shift = beta + (b - mean) * scale
    w9 = w_hwio.reshape(9, cin, cout).astype(jnp.bfloat16)
    return w9, scale.reshape(1, cout), shift.reshape(1, cout)


def cnn_forward(x_nchw, conv_params, fc_params):
    """x_nchw: (B, 3, 32, 32) f32 -> (B, 10) logits (no softmax, like the PyTorch module)."""
    x = jnp.transpose(x_nchw, (0, 2, 3, 1))          # NHWC for lane-dense channels
    for i, (w, b, gamma, beta, mean, var) in enumerate(conv_params):
        w9, scale, shift = _fold_conv_bn(w, b, gamma, beta, mean, var)
        x = conv3x3_bn_relu(x, w9, scale, shift)
        if i % 2 == 1:                               # pool after conv2, conv4, conv6
            x = maxpool2x2(x)
    x = x.reshape(x.shape[0], -1)                    # flatten (H, W, C order)
    (w1, b1), (w2, b2) = fc_params
    return fc_head(x, w1.astype(jnp.bfloat16), b1, w2.astype(jnp.bfloat16), b2)


# ----------------------------------------------------------------------------
# Plain-JAX reference (same bf16-operand / f32-accumulate math) for a sanity check
# ----------------------------------------------------------------------------
def reference_forward(x_nchw, conv_params, fc_params):
    x = jnp.transpose(x_nchw, (0, 2, 3, 1))
    for i, (w, b, gamma, beta, mean, var) in enumerate(conv_params):
        y = lax.conv_general_dilated(
            x.astype(jnp.bfloat16), w.astype(jnp.bfloat16), (1, 1), "SAME",
            dimension_numbers=("NHWC", "HWIO", "NHWC"),
            preferred_element_type=jnp.float32)
        scale = gamma / jnp.sqrt(var + BN_EPS)
        y = y * scale + (beta + (b - mean) * scale)
        x = jnp.maximum(y, 0.0)
        if i % 2 == 1:
            B, H, W, C = x.shape
            x = x.reshape(B, H // 2, 2, W // 2, 2, C).max(axis=(2, 4))
    x = x.reshape(x.shape[0], -1)
    (w1, b1), (w2, b2) = fc_params
    h = jnp.dot(x.astype(jnp.bfloat16), w1.astype(jnp.bfloat16),
                preferred_element_type=jnp.float32) + b1
    h = jnp.maximum(h, 0.0)
    return jnp.dot(h.astype(jnp.bfloat16), w2.astype(jnp.bfloat16),
                   preferred_element_type=jnp.float32) + b2


if __name__ == "__main__":
    key = jax.random.PRNGKey(0)
    kx, kp = jax.random.split(key)

    B = 2
    x = jax.random.normal(kx, (B, 3, 32, 32), jnp.float32)   # CIFAR-10 shaped input
    conv_params, fc_params = init_params(kp)

    out = cnn_forward(x, conv_params, fc_params)
    out = jax.block_until_ready(out)

    ref = reference_forward(x, conv_params, fc_params)
    assert out.shape == (B, 10)
    assert jnp.allclose(out, ref, atol=2e-2, rtol=2e-2), float(jnp.max(jnp.abs(out - ref)))

    print("KERNEL_OK")
</pallas_src>

<mosaic_0001>
module attributes {stable_mosaic.version = 11 : i64} {
  func.func @conv3x3_bn_relu_kernel(%arg0: i32, %arg1: memref<1x34x34x3xf32, #tpu.memory_space<vmem>>, %arg2: memref<9x3x16xbf16, #tpu.memory_space<vmem>>, %arg3: memref<1x16xf32, #tpu.memory_space<vmem>>, %arg4: memref<1x16xf32, #tpu.memory_space<vmem>>, %arg5: memref<1x32x32x16xf32, #tpu.memory_space<vmem>>) attributes {dimension_semantics = [#tpu.dimension_semantics<parallel>], iteration_bounds = array<i64: 2>, scalar_prefetch = 0 : i64, scratch_operands = 0 : i64, tpu.core_type = #tpu.core_type<tc>, window_params = [{transform_indices = @transform_0, window_bounds = array<i64: 1, 34, 34, 3>}, {pipeline_mode = #tpu.pipeline_mode<synchronous>, transform_indices = @transform_1, window_bounds = array<i64: 9, 3, 16>}, {pipeline_mode = #tpu.pipeline_mode<synchronous>, transform_indices = @transform_2, window_bounds = array<i64: 1, 16>}, {pipeline_mode = #tpu.pipeline_mode<synchronous>, transform_indices = @transform_3, window_bounds = array<i64: 1, 16>}, {transform_indices = @transform_4, window_bounds = array<i64: 1, 32, 32, 16>}]} {
    %cst = arith.constant 0.000000e+00 : f32
    %0 = vector.broadcast %cst : f32 to vector<1024x16xf32>
    %c0 = arith.constant 0 : index
    %c0_0 = arith.constant 0 : index
    %c0_1 = arith.constant 0 : index
    %c0_2 = arith.constant 0 : index
    %1 = vector.load %arg1[%c0, %c0_0, %c0_1, %c0_2] : memref<1x34x34x3xf32, #tpu.memory_space<vmem>>, vector<1x32x32x3xf32>
    %2 = vector.shape_cast %1 : vector<1x32x32x3xf32> to vector<32x32x3xf32>
    %3 = vector.shape_cast %2 : vector<32x32x3xf32> to vector<1024x3xf32>
    %4 = arith.truncf %3 : vector<1024x3xf32> to vector<1024x3xbf16>
    %c0_3 = arith.constant 0 : index
    %c0_4 = arith.constant 0 : index
    %c0_5 = arith.constant 0 : index
    %5 = vector.load %arg2[%c0_3, %c0_4, %c0_5] : memref<9x3x16xbf16, #tpu.memory_space<vmem>>, vector<1x3x16xbf16>
    %6 = vector.shape_cast %5 : vector<1x3x16xbf16> to vector<3x16xbf16>
    %cst_6 = arith.constant dense<0.000000e+00> : vector<1024x16xf32>
    %7 = tpu.matmul %4, %6, %cst_6 {dimension_numbers = #tpu.dot_dimension_numbers<[1], [0], [0], [1], [0, 0, 1, 1], [], []>} : vector<1024x3xbf16>, vector<3x16xbf16>, vector<1024x16xf32> -> vector<1024x16xf32>
    %8 = arith.addf %0, %7 : vector<1024x16xf32>
    %c0_7 = arith.constant 0 : index
    %c0_8 = arith.constant 0 : index
    %c1 = arith.constant 1 : index
    %c0_9 = arith.constant 0 : index
    %9 = vector.load %arg1[%c0_7, %c0_8, %c1, %c0_9] : memref<1x34x34x3xf32, #tpu.memory_space<vmem>>, vector<1x32x32x3xf32>
    %10 = vector.shape_cast %9 : vector<1x32x32x3xf32> to vector<32x32x3xf32>
    %11 = vector.shape_cast %10 : vector<32x32x3xf32> to vector<1024x3xf32>
    %12 = arith.truncf %11 : vector<1024x3xf32> to vector<1024x3xbf16>
    %c1_10 = arith.constant 1 : index
    %c0_11 = arith.constant 0 : index
    %c0_12 = arith.constant 0 : index
    %13 = vector.load %arg2[%c1_10, %c0_11, %c0_12] : memref<9x3x16xbf16, #tpu.memory_space<vmem>>, vector<1x3x16xbf16>
    %14 = vector.shape_cast %13 : vector<1x3x16xbf16> to vector<3x16xbf16>
    %cst_13 = arith.constant dense<0.000000e+00> : vector<1024x16xf32>
    %15 = tpu.matmul %12, %14, %cst_13 {dimension_numbers = #tpu.dot_dimension_numbers<[1], [0], [0], [1], [0, 0, 1, 1], [], []>} : vector<1024x3xbf16>, vector<3x16xbf16>, vector<1024x16xf32> -> vector<1024x16xf32>
    %16 = arith.addf %8, %15 : vector<1024x16xf32>
    %c0_14 = arith.constant 0 : index
    %c0_15 = arith.constant 0 : index
    %c2 = arith.constant 2 : index
    %c0_16 = arith.constant 0 : index
    %17 = vector.load %arg1[%c0_14, %c0_15, %c2, %c0_16] : memref<1x34x34x3xf32, #tpu.memory_space<vmem>>, vector<1x32x32x3xf32>
    %18 = vector.shape_cast %17 : vector<1x32x32x3xf32> to vector<32x32x3xf32>
    %19 = vector.shape_cast %18 : vector<32x32x3xf32> to vector<1024x3xf32>
    %20 = arith.truncf %19 : vector<1024x3xf32> to vector<1024x3xbf16>
    %c2_17 = arith.constant 2 : index
    %c0_18 = arith.constant 0 : index
    %c0_19 = arith.constant 0 : index
    %21 = vector.load %arg2[%c2_17, %c0_18, %c0_19] : memref<9x3x16xbf16, #tpu.memory_space<vmem>>, vector<1x3x16xbf16>
    %22 = vector.shape_cast %21 : vector<1x3x16xbf16> to vector<3x16xbf16>
    %cst_20 = arith.constant dense<0.000000e+00> : vector<1024x16xf32>
    %23 = tpu.matmul %20, %22, %cst_20 {dimension_numbers = #tpu.dot_dimension_numbers<[1], [0], [0], [1], [0, 0, 1, 1], [], []>} : vector<1024x3xbf16>, vector<3x16xbf16>, vector<1024x16xf32> -> vector<1024x16xf32>
    %24 = arith.addf %16, %23 : vector<1024x16xf32>
    %c0_21 = arith.constant 0 : index
    %c1_22 = arith.constant 1 : index
    %c0_23 = arith.constant 0 : index
    %c0_24 = arith.constant 0 : index
    %25 = vector.load %arg1[%c0_21, %c1_22, %c0_23, %c0_24] : memref<1x34x34x3xf32, #tpu.memory_space<vmem>>, vector<1x32x32x3xf32>
    %26 = vector.shape_cast %25 : vector<1x32x32x3xf32> to vector<32x32x3xf32>
    %27 = vector.shape_cast %26 : vector<32x32x3xf32> to vector<1024x3xf32>
    %28 = arith.truncf %27 : vector<1024x3xf32> to vector<1024x3xbf16>
    %c3 = arith.constant 3 : index
    %c0_25 = arith.constant 0 : index
    %c0_26 = arith.constant 0 : index
    %29 = vector.load %arg2[%c3, %c0_25, %c0_26] : memref<9x3x16xbf16, #tpu.memory_space<vmem>>, vector<1x3x16xbf16>
    %30 = vector.shape_cast %29 : vector<1x3x16xbf16> to vector<3x16xbf16>
    %cst_27 = arith.constant dense<0.000000e+00> : vector<1024x16xf32>
    %31 = tpu.matmul %28, %30, %cst_27 {dimension_numbers = #tpu.dot_dimension_numbers<[1], [0], [0], [1], [0, 0, 1, 1], [], []>} : vector<1024x3xbf16>, vector<3x16xbf16>, vector<1024x16xf32> -> vector<1024x16xf32>
    %32 = arith.addf %24, %31 : vector<1024x16xf32>
    %c0_28 = arith.constant 0 : index
    %c1_29 = arith.constant 1 : index
    %c1_30 = arith.constant 1 : index
    %c0_31 = arith.constant 0 : index
    %33 = vector.load %arg1[%c0_28, %c1_29, %c1_30, %c0_31] : memref<1x34x34x3xf32, #tpu.memory_space<vmem>>, vector<1x32x32x3xf32>
    %34 = vector.shape_cast %33 : vector<1x32x32x3xf32> to vector<32x32x3xf32>
    %35 = vector.shape_cast %34 : vector<32x32x3xf32> to vector<1024x3xf32>
    %36 = arith.truncf %35 : vector<1024x3xf32> to vector<1024x3xbf16>
    %c4 = arith.constant 4 : index
    %c0_32 = arith.constant 0 : index
    %c0_33 = arith.constant 0 : index
    %37 = vector.load %arg2[%c4, %c0_32, %c0_33] : memref<9x3x16xbf16, #tpu.memory_space<vmem>>, vector<1x3x16xbf16>
    %38 = vector.shape_cast %37 : vector<1x3x16xbf16> to vector<3x16xbf16>
    %cst_34 = arith.constant dense<0.000000e+00> : vector<1024x16xf32>
    %39 = tpu.matmul %36, %38, %cst_34 {dimension_numbers = #tpu.dot_dimension_numbers<[1], [0], [0], [1], [0, 0, 1, 1], [], []>} : vector<1024x3xbf16>, vector<3x16xbf16>, vector<1024x16xf32> -> vector<1024x16xf32>
    %40 = arith.addf %32, %39 : vector<1024x16xf32>
    %c0_35 = arith.constant 0 : index
    %c1_36 = arith.constant 1 : index
    %c2_37 = arith.constant 2 : index
    %c0_38 = arith.constant 0 : index
    %41 = vector.load %arg1[%c0_35, %c1_36, %c2_37, %c0_38] : memref<1x34x34x3xf32, #tpu.memory_space<vmem>>, vector<1x32x32x3xf32>
    %42 = vector.shape_cast %41 : vector<1x32x32x3xf32> to vector<32x32x3xf32>
    %43 = vector.shape_cast %42 : vector<32x32x3xf32> to vector<1024x3xf32>
    %44 = arith.truncf %43 : vector<1024x3xf32> to vector<1024x3xbf16>
    %c5 = arith.constant 5 : index
    %c0_39 = arith.constant 0 : index
    %c0_40 = arith.constant 0 : index
    %45 = vector.load %arg2[%c5, %c0_39, %c0_40] : memref<9x3x16xbf16, #tpu.memory_space<vmem>>, vector<1x3x16xbf16>
    %46 = vector.shape_cast %45 : vector<1x3x16xbf16> to vector<3x16xbf16>
    %cst_41 = arith.constant dense<0.000000e+00> : vector<1024x16xf32>
    %47 = tpu.matmul %44, %46, %cst_41 {dimension_numbers = #tpu.dot_dimension_numbers<[1], [0], [0], [1], [0, 0, 1, 1], [], []>} : vector<1024x3xbf16>, vector<3x16xbf16>, vector<1024x16xf32> -> vector<1024x16xf32>
    %48 = arith.addf %40, %47 : vector<1024x16xf32>
    %c0_42 = arith.constant 0 : index
    %c2_43 = arith.constant 2 : index
    %c0_44 = arith.constant 0 : index
    %c0_45 = arith.constant 0 : index
    %49 = vector.load %arg1[%c0_42, %c2_43, %c0_44, %c0_45] : memref<1x34x34x3xf32, #tpu.memory_space<vmem>>, vector<1x32x32x3xf32>
    %50 = vector.shape_cast %49 : vector<1x32x32x3xf32> to vector<32x32x3xf32>
    %51 = vector.shape_cast %50 : vector<32x32x3xf32> to vector<1024x3xf32>
    %52 = arith.truncf %51 : vector<1024x3xf32> to vector<1024x3xbf16>
    %c6 = arith.constant 6 : index
    %c0_46 = arith.constant 0 : index
    %c0_47 = arith.constant 0 : index
    %53 = vector.load %arg2[%c6, %c0_46, %c0_47] : memref<9x3x16xbf16, #tpu.memory_space<vmem>>, vector<1x3x16xbf16>
    %54 = vector.shape_cast %53 : vector<1x3x16xbf16> to vector<3x16xbf16>
    %cst_48 = arith.constant dense<0.000000e+00> : vector<1024x16xf32>
    %55 = tpu.matmul %52, %54, %cst_48 {dimension_numbers = #tpu.dot_dimension_numbers<[1], [0], [0], [1], [0, 0, 1, 1], [], []>} : vector<1024x3xbf16>, vector<3x16xbf16>, vector<1024x16xf32> -> vector<1024x16xf32>
    %56 = arith.addf %48, %55 : vector<1024x16xf32>
    %c0_49 = arith.constant 0 : index
    %c2_50 = arith.constant 2 : index
    %c1_51 = arith.constant 1 : index
    %c0_52 = arith.constant 0 : index
    %57 = vector.load %arg1[%c0_49, %c2_50, %c1_51, %c0_52] : memref<1x34x34x3xf32, #tpu.memory_space<vmem>>, vector<1x32x32x3xf32>
    %58 = vector.shape_cast %57 : vector<1x32x32x3xf32> to vector<32x32x3xf32>
    %59 = vector.shape_cast %58 : vector<32x32x3xf32> to vector<1024x3xf32>
    %60 = arith.truncf %59 : vector<1024x3xf32> to vector<1024x3xbf16>
    %c7 = arith.constant 7 : index
    %c0_53 = arith.constant 0 : index
    %c0_54 = arith.constant 0 : index
    %61 = vector.load %arg2[%c7, %c0_53, %c0_54] : memref<9x3x16xbf16, #tpu.memory_space<vmem>>, vector<1x3x16xbf16>
    %62 = vector.shape_cast %61 : vector<1x3x16xbf16> to vector<3x16xbf16>
    %cst_55 = arith.constant dense<0.000000e+00> : vector<1024x16xf32>
    %63 = tpu.matmul %60, %62, %cst_55 {dimension_numbers = #tpu.dot_dimension_numbers<[1], [0], [0], [1], [0, 0, 1, 1], [], []>} : vector<1024x3xbf16>, vector<3x16xbf16>, vector<1024x16xf32> -> vector<1024x16xf32>
    %64 = arith.addf %56, %63 : vector<1024x16xf32>
    %c0_56 = arith.constant 0 : index
    %c2_57 = arith.constant 2 : index
    %c2_58 = arith.constant 2 : index
    %c0_59 = arith.constant 0 : index
    %65 = vector.load %arg1[%c0_56, %c2_57, %c2_58, %c0_59] : memref<1x34x34x3xf32, #tpu.memory_space<vmem>>, vector<1x32x32x3xf32>
    %66 = vector.shape_cast %65 : vector<1x32x32x3xf32> to vector<32x32x3xf32>
    %67 = vector.shape_cast %66 : vector<32x32x3xf32> to vector<1024x3xf32>
    %68 = arith.truncf %67 : vector<1024x3xf32> to vector<1024x3xbf16>
    %c8 = arith.constant 8 : index
    %c0_60 = arith.constant 0 : index
    %c0_61 = arith.constant 0 : index
    %69 = vector.load %arg2[%c8, %c0_60, %c0_61] : memref<9x3x16xbf16, #tpu.memory_space<vmem>>, vector<1x3x16xbf16>
    %70 = vector.shape_cast %69 : vector<1x3x16xbf16> to vector<3x16xbf16>
    %cst_62 = arith.constant dense<0.000000e+00> : vector<1024x16xf32>
    %71 = tpu.matmul %68, %70, %cst_62 {dimension_numbers = #tpu.dot_dimension_numbers<[1], [0], [0], [1], [0, 0, 1, 1], [], []>} : vector<1024x3xbf16>, vector<3x16xbf16>, vector<1024x16xf32> -> vector<1024x16xf32>
    %72 = arith.addf %64, %71 : vector<1024x16xf32>
    %c0_63 = arith.constant 0 : index
    %c0_64 = arith.constant 0 : index
    %73 = vector.load %arg3[%c0_63, %c0_64] : memref<1x16xf32, #tpu.memory_space<vmem>>, vector<1x16xf32>
    %74 = vector.broadcast %73 : vector<1x16xf32> to vector<1024x16xf32>
    %75 = arith.mulf %72, %74 : vector<1024x16xf32>
    %c0_65 = arith.constant 0 : index
    %c0_66 = arith.constant 0 : index
    %76 = vector.load %arg4[%c0_65, %c0_66] : memref<1x16xf32, #tpu.memory_space<vmem>>, vector<1x16xf32>
    %77 = vector.broadcast %76 : vector<1x16xf32> to vector<1024x16xf32>
    %78 = arith.addf %75, %77 : vector<1024x16xf32>
    %cst_67 = arith.constant 0.000000e+00 : f32
    %79 = vector.broadcast %cst_67 : f32 to vector<1024x16xf32>
    %80 = arith.maximumf %78, %79 : vector<1024x16xf32>
    %81 = vector.shape_cast %80 : vector<1024x16xf32> to vector<1x32x32x16xf32>
    %c0_68 = arith.constant 0 : index
    %c0_69 = arith.constant 0 : index
    %c0_70 = arith.constant 0 : index
    %c0_71 = arith.constant 0 : index
    %82 = vector.load %arg5[%c0_68, %c0_69, %c0_70, %c0_71] : memref<1x32x32x16xf32, #tpu.memory_space<vmem>>, vector<1x32x32x16xf32>
    tpu.vector_store %arg5[%c0_68, %c0_69, %c0_70, %c0_71], %81 {strides = array<i32>} : memref<1x32x32x16xf32, #tpu.memory_space<vmem>>, vector<1x32x32x16xf32>,
    return
  }
  func.func @transform_0(%arg0: i32) -> (i32, i32, i32, i32) {
    %c0_i32 = arith.constant 0 : i32
    %c0_i32_0 = arith.constant 0 : i32
    %c0_i32_1 = arith.constant 0 : i32
    %c0_i32_2 = arith.constant 0 : i32
    return %arg0, %c0_i32, %c0_i32_0, %c0_i32_1 : i32, i32, i32, i32
  }
  func.func @transform_1(%arg0: i32) -> (i32, i32, i32) {
    %c0_i32 = arith.constant 0 : i32
    %c0_i32_0 = arith.constant 0 : i32
    %c0_i32_1 = arith.constant 0 : i32
    %c0_i32_2 = arith.constant 0 : i32
    return %c0_i32, %c0_i32_0, %c0_i32_1 : i32, i32, i32
  }
  func.func @transform_2(%arg0: i32) -> (i32, i32) {
    %c0_i32 = arith.constant 0 : i32
    %c0_i32_0 = arith.constant 0 : i32
    %c0_i32_1 = arith.constant 0 : i32
    return %c0_i32, %c0_i32_0 : i32, i32
  }
  func.func @transform_3(%arg0: i32) -> (i32, i32) {
    %c0_i32 = arith.constant 0 : i32
    %c0_i32_0 = arith.constant 0 : i32
    %c0_i32_1 = arith.constant 0 : i32
    return %c0_i32, %c0_i32_0 : i32, i32
  }
  func.func @transform_4(%arg0: i32) -> (i32, i32, i32, i32) {
    %c0_i32 = arith.constant 0 : i32
    %c0_i32_0 = arith.constant 0 : i32
    %c0_i32_1 = arith.constant 0 : i32
    %c0_i32_2 = arith.constant 0 : i32
    return %arg0, %c0_i32, %c0_i32_0, %c0_i32_1 : i32, i32, i32, i32
  }
}

</mosaic_0001>

<llo_original>
// kernel: tpu_custom_call.1
$region0: #{tpu_custom_call.1}
  #allocation0 [shape = 'u32[]', space=smem, size = 0x4, offset = 0x4, fixed_abs, tag = 'smem constant byte address 0x4 - core index']
  #allocation1 [shape = 'u32[144,128]{1,0:T(1,128)}', space=vmem, size = 0x12000, scoped, tag = 'internal scratch']
  %s0 = inlined_call_operand.vmem [shape: f32[2,34,34,3], index: 0, kind: input, shape index: {}]
  %s1 = inlined_call_operand.vmem [shape: bf16[9,3,16], index: 1, kind: input, shape index: {}]
  %s2 = inlined_call_operand.vmem [shape: f32[1,16], index: 2, kind: input, shape index: {}]
  %s3 = inlined_call_operand.vmem [shape: f32[1,16], index: 3, kind: input, shape index: {}]
  %s4 = inlined_call_operand.vmem [shape: f32[2,32,32,16], index: 4, kind: output, shape index: {}]
  %s5 = sld [smem:[#allocation0]]
  $region49: #{tpu_custom_call.1} parent=0
    _
  %s7 = ssub.s32 1, %s5
  %s8 = scalar_select 0, %s7, %s5
  loop: start=0, step=1, limit=4
  $region2: #{tpu_custom_call.1} parent=0 // loop_pre_header
    _
  $region3: #{tpu_custom_call.1} parent=0 // loop_header
    %s10 = sphi 0, %s14
    %p11 = scmp.ge.s32.totalorder %s10, 4
    %s20 = sphi 0, %s22
    %s23 = sphi 0, %s20
    %s24 = sphi 0, %s23
    %s40 = sphi 0, %s24
    %s44 = sphi 0, %s44
    %s46 = sphi 0, %s44
    %s47 = sphi 0, %s46
    %s61 = sphi 0, %s47
    %s65 = sphi 0, %s65
    %s67 = sphi 0, %s65
    %s68 = sphi 0, %s67
    %s82 = sphi 0, %s68
    %s86 = sphi 0, %s86
    %s88 = sphi 0, %s86
    %s89 = sphi 0, %s88
    %s103 = sphi 0, %s89
    %s109 = sphi 0, %s111
    %s112 = sphi 0, %s109
    %s113 = sphi 0, %s112
    %s129 = sphi 0, %s113
  $region4: #{tpu_custom_call.1} parent=0 // loop_header_branch
    %13 = sbr.rel (%p11) target = $region8
  $region5: #{tpu_custom_call.1} parent=0 // loop_body
    %s15 = ssub.s32 %s10, 1
    %s16 = ssub.s32 %s10, 2
    %s17 = sadd.s32 %s10, 1
    %s18 = ssub.s32 %s10, %s17
    %p19 = scmp.eq.s32.totalorder %s18, 0
    %s21 = sadd.s32 %s20, 1
    %s22 = scalar_select %p19, %s20, %s21
    %p25 = pneg %p19
    %p26 = scmp.eq.s32.totalorder %s10, 1
    %p27 = por %p25, %p26
    %p28 = scmp.ne.s32.totalorder %s20, %s23
    %p29 = scmp.eq.s32.totalorder %s10, 0
    %p30 = por %p28, %p29
    %p31 = scmp.ne.s32.totalorder %s20, %s23
    %p32 = scmp.eq.s32.totalorder %s15, 1
    %p33 = por %p31, %p32
    %p34 = scmp.ne.s32.totalorder %s23, %s24
    %p35 = scmp.eq.s32.totalorder %s15, 0
    %p36 = por %p34, %p35
    %p37 = scmp.ne.s32.totalorder %s23, %s24
    %p38 = scmp.eq.s32.totalorder %s16, 1
    %p39 = por %p37, %p38
    %p41 = scmp.ne.s32.totalorder %s24, %s40
    %p42 = scmp.eq.s32.totalorder %s16, 0
    %p43 = por %p41, %p42
    %s45 = sadd.s32 %s44, 1
    %p48 = scmp.eq.s32.totalorder %s10, 1
    %p49 = scmp.ne.s32.totalorder %s44, %s46
    %p50 = scmp.eq.s32.totalorder %s10, 0
    %p51 = por %p49, %p50
    %p52 = scmp.ne.s32.totalorder %s44, %s46
    %p53 = scmp.eq.s32.totalorder %s15, 1
    %p54 = por %p52, %p53
    %p55 = scmp.ne.s32.totalorder %s46, %s47
    %p56 = scmp.eq.s32.totalorder %s15, 0
    %p57 = por %p55, %p56
    %p58 = scmp.ne.s32.totalorder %s46, %s47
    %p59 = scmp.eq.s32.totalorder %s16, 1
    %p60 = por %p58, %p59
    %p62 = scmp.ne.s32.totalorder %s47, %s61
    %p63 = scmp.eq.s32.totalorder %s16, 0
    %p64 = por %p62, %p63
    %s66 = sadd.s32 %s65, 1
    %p69 = scmp.eq.s32.totalorder %s10, 1
    %p70 = scmp.ne.s32.totalorder %s65, %s67
    %p71 = scmp.eq.s32.totalorder %s10, 0
    %p72 = por %p70, %p71
    %p73 = scmp.ne.s32.totalorder %s65, %s67
    %p74 = scmp.eq.s32.totalorder %s15, 1
    %p75 = por %p73, %p74
    %p76 = scmp.ne.s32.totalorder %s67, %s68
    %p77 = scmp.eq.s32.totalorder %s15, 0
    %p78 = por %p76, %p77
    %p79 = scmp.ne.s32.totalorder %s67, %s68
    %p80 = scmp.eq.s32.totalorder %s16, 1
    %p81 = por %p79, %p80
    %p83 = scmp.ne.s32.totalorder %s68, %s82
    %p84 = scmp.eq.s32.totalorder %s16, 0
    %p85 = por %p83, %p84
    %s87 = sadd.s32 %s86, 1
    %p90 = scmp.eq.s32.totalorder %s10, 1
    %p91 = scmp.ne.s32.totalorder %s86, %s88
    %p92 = scmp.eq.s32.totalorder %s10, 0
    %p93 = por %p91, %p92
    %p94 = scmp.ne.s32.totalorder %s86, %s88
    %p95 = scmp.eq.s32.totalorder %s15, 1
    %p96 = por %p94, %p95
    %p97 = scmp.ne.s32.totalorder %s88, %s89
    %p98 = scmp.eq.s32.totalorder %s15, 0
    %p99 = por %p97, %p98
    %p100 = scmp.ne.s32.totalorder %s88, %s89
    %p101 = scmp.eq.s32.totalorder %s16, 1
    %p102 = por %p100, %p101
    %p104 = scmp.ne.s32.totalorder %s89, %s103
    %p105 = scmp.eq.s32.totalorder %s16, 0
    %p106 = por %p104, %p105
    %s107 = ssub.s32 %s10, %s17
    %p108 = scmp.eq.s32.totalorder %s107, 0
    %s110 = sadd.s32 %s109, 1
    %s111 = scalar_select %p108, %s109, %s110
    %p114 = pneg %p108
    %p115 = scmp.eq.s32.totalorder %s10, 1
    %p116 = por %p114, %p115
    %p117 = scmp.ne.s32.totalorder %s109, %s112
    %p118 = scmp.eq.s32.totalorder %s10, 0
    %p119 = por %p117, %p118
    %p120 = scmp.ne.s32.totalorder %s109, %s112
    %p121 = scmp.eq.s32.totalorder %s15, 1
    %p122 = por %p120, %p121
    %p123 = scmp.ne.s32.totalorder %s112, %s113
    %p124 = scmp.eq.s32.totalorder %s15, 0
    %p125 = por %p123, %p124
    %p126 = scmp.ne.s32.totalorder %s112, %s113
    %p127 = scmp.eq.s32.totalorder %s16, 1
    %p128 = por %p126, %p127
    %p130 = scmp.ne.s32.totalorder %s113, %s129
    %p131 = scmp.eq.s32.totalorder %s16, 0
    %p132 = por %p130, %p131
    %p133 = scmp.le.s32.totalorder 1, %s10
    %p134 = scmp.lt.s32.totalorder %s10, 3
    %p135 = pnand %p133, %p134
    %p136 = pneg %p135
    // Predicated region
    $region9: #{tpu_custom_call.1} parent=5 // pred_check
      _
    $region10: #{tpu_custom_call.1} parent=5 // pred_check_branch
      %138 = sbr.rel (%p135) target = $region12
    $region11: #{tpu_custom_call.1} parent=5 // pred_region
      %s139 = ssub.s32 %s10, 1
      // Predicated region
      $region13: #{tpu_custom_call.1} parent=11 // pred_check
        %p140 = pneg %p57
      $region14: #{tpu_custom_call.1} parent=11 // pred_check_branch
        %142 = sbr.rel (%p140) target = $region16
      $region15: #{tpu_custom_call.1} parent=11 // pred_region
        _
      $region16: #{tpu_custom_call.1} parent=11 // pred_fallthru
        _
      // Predicated region
      $region17: #{tpu_custom_call.1} parent=11 // pred_check
        %p143 = pneg %p78
      $region18: #{tpu_custom_call.1} parent=11 // pred_check_branch
        %145 = sbr.rel (%p143) target = $region20
      $region19: #{tpu_custom_call.1} parent=11 // pred_region
        _
      $region20: #{tpu_custom_call.1} parent=11 // pred_fallthru
        _
      // Predicated region
      $region21: #{tpu_custom_call.1} parent=11 // pred_check
        %p146 = pneg %p99
      $region22: #{tpu_custom_call.1} parent=11 // pred_check_branch
        %148 = sbr.rel (%p146) target = $region24
      $region23: #{tpu_custom_call.1} parent=11 // pred_region
        _
      $region24: #{tpu_custom_call.1} parent=11 // pred_fallthru
        _
    $region12: #{tpu_custom_call.1} parent=5 // pred_fallthru
      _
    %p149 = scmp.lt.s32.totalorder %s10, 2
    // Predicated region
    $region25: #{tpu_custom_call.1} parent=5 // pred_check
      %p150 = pneg %p149
    $region26: #{tpu_custom_call.1} parent=5 // pred_check_branch
      %152 = sbr.rel (%p150) target = $region28
    $region27: #{tpu_custom_call.1} parent=5 // pred_region
      // Predicated region
      $region29: #{tpu_custom_call.1} parent=27 // pred_check
        %p153 = pneg %p30
      $region30: #{tpu_custom_call.1} parent=27 // pred_check_branch
        %155 = sbr.rel (%p153) target = $region32
      $region31: #{tpu_custom_call.1} parent=27 // pred_region
        %p156 = scmp.lt.s32.totalorder %s10, 1
        %s157 = scalar_select %p156, %s10, 1
        %s158 = smul.addr %s157, 170
        %s159 = smul.addr %s158, 8
        %s160 = scalar_lea.vmem %s0, %s159
      $region32: #{tpu_custom_call.1} parent=27 // pred_fallthru
        _
    $region28: #{tpu_custom_call.1} parent=5 // pred_fallthru
      _
    %p161 = scmp.le.s32.totalorder 1, %s10
    %p162 = scmp.lt.s32.totalorder %s10, 3
    %p163 = pnand %p161, %p162
    %p164 = pneg %p163
    // Predicated region
    $region33: #{tpu_custom_call.1} parent=5 // pred_check
      _
    $region34: #{tpu_custom_call.1} parent=5 // pred_check_branch
      %166 = sbr.rel (%p163) target = $region36
    $region35: #{tpu_custom_call.1} parent=5 // pred_region
      %s167 = ssub.s32 %s10, 1
      %p168 = scmp.lt.s32.totalorder %s15, 1
      %s169 = scalar_select %p168, %s15, 1
      %s170 = smul.addr %s169, 170
      %s171 = smul.addr %s170, 8
      %s172 = scalar_lea.vmem %s0, %s171
      %p173 = pneg %p36
      %p174 = pneg %p33
      %p175 = pneg %p57
      %p176 = pneg %p54
      %p177 = pneg %p78
      %p178 = pneg %p75
      %p179 = pneg %p99
      %p180 = pneg %p96
      %p181 = pneg %p125
      %p182 = pneg %p122
      %p183 = scmp.lt.s32.totalorder %s15, 1
      %s184 = scalar_select %p183, %s15, 1
      %s185 = smul.addr %s184, 128
      %s186 = smul.addr %s185, 8
      %s187 = scalar_lea.vmem %s4, %s186
      %p188 = scmp.lt.s32.totalorder %s15, 1
      %s189 = scalar_select %p188, %s15, 1
      %s190 = smul.addr %s189, 170
      %s191 = smul.addr %s190, 8
      %s192 = scalar_lea.vmem %s0, %s191
      %p193 = scmp.lt.s32.totalorder %s15, 1
      %s194 = scalar_select %p193, %s15, 1
      %s195 = smul.addr %s194, 128
      %s196 = smul.addr %s195, 8
      %s197 = scalar_lea.vmem %s4, %s196
      %v199 = vld [vmem:[%s192] sm:$0xff]
      %v200 = vld [vmem:[%s192 + $0x8] sm:$0xff]
      %v201 = vld [vmem:[%s192 + $0x10] sm:$0xff]
      %v202 = vld [vmem:[%s192 + $0x18] sm:$0xff]
      %v203 = vld [vmem:[%s192 + $0x28] sm:$0xff]
      %v204 = vld [vmem:[%s192 + $0x30] sm:$0xff]
      %v205 = vld [vmem:[%s192 + $0x38] sm:$0xff]
      %v206 = vld [vmem:[%s192 + $0x40] sm:$0xff]
      %v207 = vld [vmem:[%s192 + $0x50] sm:$0xff]
      %v208 = vld [vmem:[%s192 + $0x58] sm:$0xff]
      %v209 = vld [vmem:[%s192 + $0x60] sm:$0xff]
      %v210 = vld [vmem:[%s192 + $0x68] sm:$0xff]
      %v211 = vld [vmem:[%s192 + $0x78] sm:$0xff]
      %v212 = vld [vmem:[%s192 + $0x80] sm:$0xff]
      %v213 = vld [vmem:[%s192 + $0x88] sm:$0xff]
      %v214 = vld [vmem:[%s192 + $0x90] sm:$0xff]
      %v215 = vld [vmem:[%s192 + $0xa0] sm:$0xff]
      %v216 = vld [vmem:[%s192 + $0xa8] sm:$0xff]
      %v217 = vld [vmem:[%s192 + $0xb0] sm:$0xff]
      %v218 = vld [vmem:[%s192 + $0xb8] sm:$0xff]
      %v219 = vld [vmem:[%s192 + $0xc8] sm:$0xff]
      %v220 = vld [vmem:[%s192 + $0xd0] sm:$0xff]
      %v221 = vld [vmem:[%s192 + $0xd8] sm:$0xff]
      %v222 = vld [vmem:[%s192 + $0xe0] sm:$0xff]
      %v223 = vld [vmem:[%s192 + $0xf0] sm:$0xff]
      %v224 = vld [vmem:[%s192 + $0xf8] sm:$0xff]
      %v225 = vld [vmem:[%s192 + $0x100] sm:$0xff]
      %v226 = vld [vmem:[%s192 + $0x108] sm:$0xff]
      %v227 = vld [vmem:[%s192 + $0x118] sm:$0xff]
      %v228 = vld [vmem:[%s192 + $0x120] sm:$0xff]
      %v229 = vld [vmem:[%s192 + $0x128] sm:$0xff]
      %v230 = vld [vmem:[%s192 + $0x130] sm:$0xff]
      %v231 = vld [vmem:[%s192 + $0x140] sm:$0xff]
      %v232 = vld [vmem:[%s192 + $0x148] sm:$0xff]
      %v233 = vld [vmem:[%s192 + $0x150] sm:$0xff]
      %v234 = vld [vmem:[%s192 + $0x158] sm:$0xff]
      %v235 = vld [vmem:[%s192 + $0x168] sm:$0xff]
      %v236 = vld [vmem:[%s192 + $0x170] sm:$0xff]
      %v237 = vld [vmem:[%s192 + $0x178] sm:$0xff]
      %v238 = vld [vmem:[%s192 + $0x180] sm:$0xff]
      %v239 = vld [vmem:[%s192 + $0x190] sm:$0xff]
      %v240 = vld [vmem:[%s192 + $0x198] sm:$0xff]
      %v241 = vld [vmem:[%s192 + $0x1a0] sm:$0xff]
      %v242 = vld [vmem:[%s192 + $0x1a8] sm:$0xff]
      %v243 = vld [vmem:[%s192 + $0x1b8] sm:$0xff]
      %v244 = vld [vmem:[%s192 + $0x1c0] sm:$0xff]
      %v245 = vld [vmem:[%s192 + $0x1c8] sm:$0xff]
      %v246 = vld [vmem:[%s192 + $0x1d0] sm:$0xff]
      %v247 = vld [vmem:[%s192 + $0x1e0] sm:$0xff]
      %v248 = vld [vmem:[%s192 + $0x1e8] sm:$0xff]
      %v249 = vld [vmem:[%s192 + $0x1f0] sm:$0xff]
      %v250 = vld [vmem:[%s192 + $0x1f8] sm:$0xff]
      %v251 = vld [vmem:[%s192 + $0x208] sm:$0xff]
      %v252 = vld [vmem:[%s192 + $0x210] sm:$0xff]
      %v253 = vld [vmem:[%s192 + $0x218] sm:$0xff]
      %v254 = vld [vmem:[%s192 + $0x220] sm:$0xff]
      %v255 = vld [vmem:[%s192 + $0x230] sm:$0xff]
      %v256 = vld [vmem:[%s192 + $0x238] sm:$0xff]
      %v257 = vld [vmem:[%s192 + $0x240] sm:$0xff]
      %v258 = vld [vmem:[%s192 + $0x248] sm:$0xff]
      %v259 = vld [vmem:[%s192 + $0x258] sm:$0xff]
      %v260 = vld [vmem:[%s192 + $0x260] sm:$0xff]
      %v261 = vld [vmem:[%s192 + $0x268] sm:$0xff]
      %v262 = vld [vmem:[%s192 + $0x270] sm:$0xff]
      %v263 = vld [vmem:[%s192 + $0x280] sm:$0xff]
      %v264 = vld [vmem:[%s192 + $0x288] sm:$0xff]
      %v265 = vld [vmem:[%s192 + $0x290] sm:$0xff]
      %v266 = vld [vmem:[%s192 + $0x298] sm:$0xff]
      %v267 = vld [vmem:[%s192 + $0x2a8] sm:$0xff]
      %v268 = vld [vmem:[%s192 + $0x2b0] sm:$0xff]
      %v269 = vld [vmem:[%s192 + $0x2b8] sm:$0xff]
      %v270 = vld [vmem:[%s192 + $0x2c0] sm:$0xff]
      %v271 = vld [vmem:[%s192 + $0x2d0] sm:$0xff]
      %v272 = vld [vmem:[%s192 + $0x2d8] sm:$0xff]
      %v273 = vld [vmem:[%s192 + $0x2e0] sm:$0xff]
      %v274 = vld [vmem:[%s192 + $0x2e8] sm:$0xff]
      %v275 = vld [vmem:[%s192 + $0x2f8] sm:$0xff]
      %v276 = vld [vmem:[%s192 + $0x300] sm:$0xff]
      %v277 = vld [vmem:[%s192 + $0x308] sm:$0xff]
      %v278 = vld [vmem:[%s192 + $0x310] sm:$0xff]
      %v279 = vld [vmem:[%s192 + $0x320] sm:$0xff]
      %v280 = vld [vmem:[%s192 + $0x328] sm:$0xff]
      %v281 = vld [vmem:[%s192 + $0x330] sm:$0xff]
      %v282 = vld [vmem:[%s192 + $0x338] sm:$0xff]
      %v283 = vld [vmem:[%s192 + $0x348] sm:$0xff]
      %v284 = vld [vmem:[%s192 + $0x350] sm:$0xff]
      %v285 = vld [vmem:[%s192 + $0x358] sm:$0xff]
      %v286 = vld [vmem:[%s192 + $0x360] sm:$0xff]
      %v287 = vld [vmem:[%s192 + $0x370] sm:$0xff]
      %v288 = vld [vmem:[%s192 + $0x378] sm:$0xff]
      %v289 = vld [vmem:[%s192 + $0x380] sm:$0xff]
      %v290 = vld [vmem:[%s192 + $0x388] sm:$0xff]
      %v291 = vld [vmem:[%s192 + $0x398] sm:$0xff]
      %v292 = vld [vmem:[%s192 + $0x3a0] sm:$0xff]
      %v293 = vld [vmem:[%s192 + $0x3a8] sm:$0xff]
      %v294 = vld [vmem:[%s192 + $0x3b0] sm:$0xff]
      %v295 = vld [vmem:[%s192 + $0x3c0] sm:$0xff]
      %v296 = vld [vmem:[%s192 + $0x3c8] sm:$0xff]
      %v297 = vld [vmem:[%s192 + $0x3d0] sm:$0xff]
      %v298 = vld [vmem:[%s192 + $0x3d8] sm:$0xff]
      %v299 = vld [vmem:[%s192 + $0x3e8] sm:$0xff]
      %v300 = vld [vmem:[%s192 + $0x3f0] sm:$0xff]
      %v301 = vld [vmem:[%s192 + $0x3f8] sm:$0xff]
      %v302 = vld [vmem:[%s192 + $0x400] sm:$0xff]
      %v303 = vld [vmem:[%s192 + $0x410] sm:$0xff]
      %v304 = vld [vmem:[%s192 + $0x418] sm:$0xff]
      %v305 = vld [vmem:[%s192 + $0x420] sm:$0xff]
      %v306 = vld [vmem:[%s192 + $0x428] sm:$0xff]
      %v307 = vld [vmem:[%s192 + $0x438] sm:$0xff]
      %v308 = vld [vmem:[%s192 + $0x440] sm:$0xff]
      %v309 = vld [vmem:[%s192 + $0x448] sm:$0xff]
      %v310 = vld [vmem:[%s192 + $0x450] sm:$0xff]
      %v311 = vld [vmem:[%s192 + $0x460] sm:$0xff]
      %v312 = vld [vmem:[%s192 + $0x468] sm:$0xff]
      %v313 = vld [vmem:[%s192 + $0x470] sm:$0xff]
      %v314 = vld [vmem:[%s192 + $0x478] sm:$0xff]
      %v315 = vld [vmem:[%s192 + $0x488] sm:$0xff]
      %v316 = vld [vmem:[%s192 + $0x490] sm:$0xff]
      %v317 = vld [vmem:[%s192 + $0x498] sm:$0xff]
      %v318 = vld [vmem:[%s192 + $0x4a0] sm:$0xff]
      %v319 = vld [vmem:[%s192 + $0x4b0] sm:$0xff]
      %v320 = vld [vmem:[%s192 + $0x4b8] sm:$0xff]
      %v321 = vld [vmem:[%s192 + $0x4c0] sm:$0xff]
      %v322 = vld [vmem:[%s192 + $0x4c8] sm:$0xff]
      %v323 = vld [vmem:[%s192 + $0x4d8] sm:$0xff]
      %v324 = vld [vmem:[%s192 + $0x4e0] sm:$0xff]
      %v325 = vld [vmem:[%s192 + $0x4e8] sm:$0xff]
      %v326 = vld [vmem:[%s192 + $0x4f0] sm:$0xff]
      %v327 = vpack.c.bf16 %v200, %v199
      %v328 = vpack.c.bf16 %v202, %v201
      %v329 = vpack.c.bf16 %v204, %v203
      %v330 = vpack.c.bf16 %v206, %v205
      %v331 = vpack.c.bf16 %v208, %v207
      %v332 = vpack.c.bf16 %v210, %v209
      %v333 = vpack.c.bf16 %v212, %v211
      %v334 = vpack.c.bf16 %v214, %v213
      %v335 = vpack.c.bf16 %v216, %v215
      %v336 = vpack.c.bf16 %v218, %v217
      %v337 = vpack.c.bf16 %v220, %v219
      %v338 = vpack.c.bf16 %v222, %v221
      %v339 = vpack.c.bf16 %v224, %v223
      %v340 = vpack.c.bf16 %v226, %v225
      %v341 = vpack.c.bf16 %v228, %v227
      %v342 = vpack.c.bf16 %v230, %v229
      %v343 = vpack.c.bf16 %v232, %v231
      %v344 = vpack.c.bf16 %v234, %v233
      %v345 = vpack.c.bf16 %v236, %v235
      %v346 = vpack.c.bf16 %v238, %v237
      %v347 = vpack.c.bf16 %v240, %v239
      %v348 = vpack.c.bf16 %v242, %v241
      %v349 = vpack.c.bf16 %v244, %v243
      %v350 = vpack.c.bf16 %v246, %v245
      %v351 = vpack.c.bf16 %v248, %v247
      %v352 = vpack.c.bf16 %v250, %v249
      %v353 = vpack.c.bf16 %v252, %v251
      %v354 = vpack.c.bf16 %v254, %v253
      %v355 = vpack.c.bf16 %v256, %v255
      %v356 = vpack.c.bf16 %v258, %v257
      %v357 = vpack.c.bf16 %v260, %v259
      %v358 = vpack.c.bf16 %v262, %v261
      %v359 = vpack.c.bf16 %v264, %v263
      %v360 = vpack.c.bf16 %v266, %v265
      %v361 = vpack.c.bf16 %v268, %v267
      %v362 = vpack.c.bf16 %v270, %v269
      %v363 = vpack.c.bf16 %v272, %v271
      %v364 = vpack.c.bf16 %v274, %v273
      %v365 = vpack.c.bf16 %v276, %v275
      %v366 = vpack.c.bf16 %v278, %v277
      %v367 = vpack.c.bf16 %v280, %v279
      %v368 = vpack.c.bf16 %v282, %v281
      %v369 = vpack.c.bf16 %v284, %v283
      %v370 = vpack.c.bf16 %v286, %v285
      %v371 = vpack.c.bf16 %v288, %v287
      %v372 = vpack.c.bf16 %v290, %v289
      %v373 = vpack.c.bf16 %v292, %v291
      %v374 = vpack.c.bf16 %v294, %v293
      %v375 = vpack.c.bf16 %v296, %v295
      %v376 = vpack.c.bf16 %v298, %v297
      %v377 = vpack.c.bf16 %v300, %v299
      %v378 = vpack.c.bf16 %v302, %v301
      %v379 = vpack.c.bf16 %v304, %v303
      %v380 = vpack.c.bf16 %v306, %v305
      %v381 = vpack.c.bf16 %v308, %v307
      %v382 = vpack.c.bf16 %v310, %v309
      %v383 = vpack.c.bf16 %v312, %v311
      %v384 = vpack.c.bf16 %v314, %v313
      %v385 = vpack.c.bf16 %v316, %v315
      %v386 = vpack.c.bf16 %v318, %v317
      %v387 = vpack.c.bf16 %v320, %v319
      %v388 = vpack.c.bf16 %v322, %v321
      %v389 = vpack.c.bf16 %v324, %v323
      %v390 = vpack.c.bf16 %v326, %v325
      %v391 = vld [vmem:[%s1] sm:$0x3]
      %v392 = vld [vmem:[%s192 + $0x1] sm:$0xff]
      %v393 = vld [vmem:[%s192 + $0x9] sm:$0xff]
      %v394 = vld [vmem:[%s192 + $0x11] sm:$0xff]
      %v395 = vld [vmem:[%s192 + $0x19] sm:$0xff]
      %v396 = vld [vmem:[%s192 + $0x29] sm:$0xff]
      %v397 = vld [vmem:[%s192 + $0x31] sm:$0xff]
      %v398 = vld [vmem:[%s192 + $0x39] sm:$0xff]
      %v399 = vld [vmem:[%s192 + $0x41] sm:$0xff]
      %v400 = vld [vmem:[%s192 + $0x51] sm:$0xff]
      %v401 = vld [vmem:[%s192 + $0x59] sm:$0xff]
      %v402 = vld [vmem:[%s192 + $0x61] sm:$0xff]
      %v403 = vld [vmem:[%s192 + $0x69] sm:$0xff]
      %v404 = vld [vmem:[%s192 + $0x79] sm:$0xff]
      %v405 = vld [vmem:[%s192 + $0x81] sm:$0xff]
      %v406 = vld [vmem:[%s192 + $0x89] sm:$0xff]
      %v407 = vld [vmem:[%s192 + $0x91] sm:$0xff]
      %v408 = vld [vmem:[%s192 + $0xa1] sm:$0xff]
      %v409 = vld [vmem:[%s192 + $0xa9] sm:$0xff]
      %v410 = vld [vmem:[%s192 + $0xb1] sm:$0xff]
      %v411 = vld [vmem:[%s192 + $0xb9] sm:$0xff]
      %v412 = vld [vmem:[%s192 + $0xc9] sm:$0xff]
      %v413 = vld [vmem:[%s192 + $0xd1] sm:$0xff]
      %v414 = vld [vmem:[%s192 + $0xd9] sm:$0xff]
      %v415 = vld [vmem:[%s192 + $0xe1] sm:$0xff]
      %v416 = vld [vmem:[%s192 + $0xf1] sm:$0xff]
      %v417 = vld [vmem:[%s192 + $0xf9] sm:$0xff]
      %v418 = vld [vmem:[%s192 + $0x101] sm:$0xff]
      %v419 = vld [vmem:[%s192 + $0x109] sm:$0xff]
      %v420 = vld [vmem:[%s192 + $0x119] sm:$0xff]
      %v421 = vld [vmem:[%s192 + $0x121] sm:$0xff]
      %v422 = vld [vmem:[%s192 + $0x129] sm:$0xff]
      %v423 = vld [vmem:[%s192 + $0x131] sm:$0xff]
      %v424 = vld [vmem:[%s192 + $0x141] sm:$0xff]
      %v425 = vld [vmem:[%s192 + $0x149] sm:$0xff]
      %v426 = vld [vmem:[%s192 + $0x151] sm:$0xff]
      %v427 = vld [vmem:[%s192 + $0x159] sm:$0xff]
      %v428 = vld [vmem:[%s192 + $0x169] sm:$0xff]
      %v429 = vld [vmem:[%s192 + $0x171] sm:$0xff]
      %v430 = vld [vmem:[%s192 + $0x179] sm:$0xff]
      %v431 = vld [vmem:[%s192 + $0x181] sm:$0xff]
      %v432 = vld [vmem:[%s192 + $0x191] sm:$0xff]
      %v433 = vld [vmem:[%s192 + $0x199] sm:$0xff]
      %v434 = vld [vmem:[%s192 + $0x1a1] sm:$0xff]
      %v435 = vld [vmem:[%s192 + $0x1a9] sm:$0xff]
      %v436 = vld [vmem:[%s192 + $0x1b9] sm:$0xff]
      %v437 = vld [vmem:[%s192 + $0x1c1] sm:$0xff]
      %v438 = vld [vmem:[%s192 + $0x1c9] sm:$0xff]
      %v439 = vld [vmem:[%s192 + $0x1d1] sm:$0xff]
      %v440 = vld [vmem:[%s192 + $0x1e1] sm:$0xff]
      %v441 = vld [vmem:[%s192 + $0x1e9] sm:$0xff]
      %v442 = vld [vmem:[%s192 + $0x1f1] sm:$0xff]
      %v443 = vld [vmem:[%s192 + $0x1f9] sm:$0xff]
      %v444 = vld [vmem:[%s192 + $0x209] sm:$0xff]
      %v445 = vld [vmem:[%s192 + $0x211] sm:$0xff]
      %v446 = vld [vmem:[%s192 + $0x219] sm:$0xff]
      %v447 = vld [vmem:[%s192 + $0x221] sm:$0xff]
      %v448 = vld [vmem:[%s192 + $0x231] sm:$0xff]
      %v449 = vld [vmem:[%s192 + $0x239] sm:$0xff]
      %v450 = vld [vmem:[%s192 + $0x241] sm:$0xff]
      %v451 = vld [vmem:[%s192 + $0x249] sm:$0xff]
      %v452 = vld [vmem:[%s192 + $0x259] sm:$0xff]
      %v453 = vld [vmem:[%s192 + $0x261] sm:$0xff]
      %v454 = vld [vmem:[%s192 + $0x269] sm:$0xff]
      %v455 = vld [vmem:[%s192 + $0x271] sm:$0xff]
      %v456 = vld [vmem:[%s192 + $0x281] sm:$0xff]
      %v457 = vld [vmem:[%s192 + $0x289] sm:$0xff]
      %v458 = vld [vmem:[%s192 + $0x291] sm:$0xff]
      %v459 = vld [vmem:[%s192 + $0x299] sm:$0xff]
      %v460 = vld [vmem:[%s192 + $0x2a9] sm:$0xff]
      %v461 = vld [vmem:[%s192 + $0x2b1] sm:$0xff]
      %v462 = vld [vmem:[%s192 + $0x2b9] sm:$0xff]
      %v463 = vld [vmem:[%s192 + $0x2c1] sm:$0xff]
      %v464 = vld [vmem:[%s192 + $0x2d1] sm:$0xff]
      %v465 = vld [vmem:[%s192 + $0x2d9] sm:$0xff]
      %v466 = vld [vmem:[%s192 + $0x2e1] sm:$0xff]
      %v467 = vld [vmem:[%s192 + $0x2e9] sm:$0xff]
      %v468 = vld [vmem:[%s192 + $0x2f9] sm:$0xff]
      %v469 = vld [vmem:[%s192 + $0x301] sm:$0xff]
      %v470 = vld [vmem:[%s192 + $0x309] sm:$0xff]
      %v471 = vld [vmem:[%s192 + $0x311] sm:$0xff]
      %v472 = vld [vmem:[%s192 + $0x321] sm:$0xff]
      %v473 = vld [vmem:[%s192 + $0x329] sm:$0xff]
      %v474 = vld [vmem:[%s192 + $0x331] sm:$0xff]
      %v475 = vld [vmem:[%s192 + $0x339] sm:$0xff]
      %v476 = vld [vmem:[%s192 + $0x349] sm:$0xff]
      %v477 = vld [vmem:[%s192 + $0x351] sm:$0xff]
      %v478 = vld [vmem:[%s192 + $0x359] sm:$0xff]
      %v479 = vld [vmem:[%s192 + $0x361] sm:$0xff]
      %v480 = vld [vmem:[%s192 + $0x371] sm:$0xff]
      %v481 = vld [vmem:[%s192 + $0x379] sm:$0xff]
      %v482 = vld [vmem:[%s192 + $0x381] sm:$0xff]
      %v483 = vld [vmem:[%s192 + $0x389] sm:$0xff]
      %v484 = vld [vmem:[%s192 + $0x399] sm:$0xff]
      %v485 = vld [vmem:[%s192 + $0x3a1] sm:$0xff]
      %v486 = vld [vmem:[%s192 + $0x3a9] sm:$0xff]
      %v487 = vld [vmem:[%s192 + $0x3b1] sm:$0xff]
      %v488 = vld [vmem:[%s192 + $0x3c1] sm:$0xff]
      %v489 = vld [vmem:[%s192 + $0x3c9] sm:$0xff]
      %v490 = vld [vmem:[%s192 + $0x3d1] sm:$0xff]
      %v491 = vld [vmem:[%s192 + $0x3d9] sm:$0xff]
      %v492 = vld [vmem:[%s192 + $0x3e9] sm:$0xff]
      %v493 = vld [vmem:[%s192 + $0x3f1] sm:$0xff]
      %v494 = vld [vmem:[%s192 + $0x3f9] sm:$0xff]
      %v495 = vld [vmem:[%s192 + $0x401] sm:$0xff]
      %v496 = vld [vmem:[%s192 + $0x411] sm:$0xff]
      %v497 = vld [vmem:[%s192 + $0x419] sm:$0xff]
      %v498 = vld [vmem:[%s192 + $0x421] sm:$0xff]
      %v499 = vld [vmem:[%s192 + $0x429] sm:$0xff]
      %v500 = vld [vmem:[%s192 + $0x439] sm:$0xff]
      %v501 = vld [vmem:[%s192 + $0x441] sm:$0xff]
      %v502 = vld [vmem:[%s192 + $0x449] sm:$0xff]
      %v503 = vld [vmem:[%s192 + $0x451] sm:$0xff]
      %v504 = vld [vmem:[%s192 + $0x461] sm:$0xff]
      %v505 = vld [vmem:[%s192 + $0x469] sm:$0xff]
      %v506 = vld [vmem:[%s192 + $0x471] sm:$0xff]
      %v507 = vld [vmem:[%s192 + $0x479] sm:$0xff]
      %v508 = vld [vmem:[%s192 + $0x489] sm:$0xff]
      %v509 = vld [vmem:[%s192 + $0x491] sm:$0xff]
      %v510 = vld [vmem:[%s192 + $0x499] sm:$0xff]
      %v511 = vld [vmem:[%s192 + $0x4a1] sm:$0xff]
      %v512 = vld [vmem:[%s192 + $0x4b1] sm:$0xff]
      %v513 = vld [vmem:[%s192 + $0x4b9] sm:$0xff]
      %v514 = vld [vmem:[%s192 + $0x4c1] sm:$0xff]
      %v515 = vld [vmem:[%s192 + $0x4c9] sm:$0xff]
      %v516 = vld [vmem:[%s192 + $0x4d9] sm:$0xff]
      %v517 = vld [vmem:[%s192 + $0x4e1] sm:$0xff]
      %v518 = vld [vmem:[%s192 + $0x4e9] sm:$0xff]
      %v519 = vld [vmem:[%s192 + $0x4f1] sm:$0xff]
      %v520 = vpack.c.bf16 %v393, %v392
      %v521 = vpack.c.bf16 %v395, %v394
      %v522 = vpack.c.bf16 %v397, %v396
      %v523 = vpack.c.bf16 %v399, %v398
      %v524 = vpack.c.bf16 %v401, %v400
      %v525 = vpack.c.bf16 %v403, %v402
      %v526 = vpack.c.bf16 %v405, %v404
      %v527 = vpack.c.bf16 %v407, %v406
      %v528 = vpack.c.bf16 %v409, %v408
      %v529 = vpack.c.bf16 %v411, %v410
      %v530 = vpack.c.bf16 %v413, %v412
      %v531 = vpack.c.bf16 %v415, %v414
      %v532 = vpack.c.bf16 %v417, %v416
      %v533 = vpack.c.bf16 %v419, %v418
      %v534 = vpack.c.bf16 %v421, %v420
      %v535 = vpack.c.bf16 %v423, %v422
      %v536 = vpack.c.bf16 %v425, %v424
      %v537 = vpack.c.bf16 %v427, %v426
      %v538 = vpack.c.bf16 %v429, %v428
      %v539 = vpack.c.bf16 %v431, %v430
      %v540 = vpack.c.bf16 %v433, %v432
      %v541 = vpack.c.bf16 %v435, %v434
      %v542 = vpack.c.bf16 %v437, %v436
      %v543 = vpack.c.bf16 %v439, %v438
      %v544 = vpack.c.bf16 %v441, %v440
      %v545 = vpack.c.bf16 %v443, %v442
      %v546 = vpack.c.bf16 %v445, %v444
      %v547 = vpack.c.bf16 %v447, %v446
      %v548 = vpack.c.bf16 %v449, %v448
      %v549 = vpack.c.bf16 %v451, %v450
      %v550 = vpack.c.bf16 %v453, %v452
      %v551 = vpack.c.bf16 %v455, %v454
      %v552 = vpack.c.bf16 %v457, %v456
      %v553 = vpack.c.bf16 %v459, %v458
      %v554 = vpack.c.bf16 %v461, %v460
      %v555 = vpack.c.bf16 %v463, %v462
      %v556 = vpack.c.bf16 %v465, %v464
      %v557 = vpack.c.bf16 %v467, %v466
      %v558 = vpack.c.bf16 %v469, %v468
      %v559 = vpack.c.bf16 %v471, %v470
      %v560 = vpack.c.bf16 %v473, %v472
      %v561 = vpack.c.bf16 %v475, %v474
      %v562 = vpack.c.bf16 %v477, %v476
      %v563 = vpack.c.bf16 %v479, %v478
      %v564 = vpack.c.bf16 %v481, %v480
      %v565 = vpack.c.bf16 %v483, %v482
      %v566 = vpack.c.bf16 %v485, %v484
      %v567 = vpack.c.bf16 %v487, %v486
      %v568 = vpack.c.bf16 %v489, %v488
      %v569 = vpack.c.bf16 %v491, %v490
      %v570 = vpack.c.bf16 %v493, %v492
      %v571 = vpack.c.bf16 %v495, %v494
      %v572 = vpack.c.bf16 %v497, %v496
      %v573 = vpack.c.bf16 %v499, %v498
      %v574 = vpack.c.bf16 %v501, %v500
      %v575 = vpack.c.bf16 %v503, %v502
      %v576 = vpack.c.bf16 %v505, %v504
      %v577 = vpack.c.bf16 %v507, %v506
      %v578 = vpack.c.bf16 %v509, %v508
      %v579 = vpack.c.bf16 %v511, %v510
      %v580 = vpack.c.bf16 %v513, %v512
      %v581 = vpack.c.bf16 %v515, %v514
      %v582 = vpack.c.bf16 %v517, %v516
      %v583 = vpack.c.bf16 %v519, %v518
      %s584 = scalar_lea.vmem %s1, 2
      %v585 = vld [vmem:[%s584] sm:$0x3]
      %vm586 = vcmask 23552
      %v588 = vsel %vm586, %v520, 0
      %v591 = vsel %vm586, %v521, 0
      %v594 = vsel %vm586, %v522, 0
      %v597 = vsel %vm586, %v523, 0
      %v600 = vsel %vm586, %v524, 0
      %v603 = vsel %vm586, %v525, 0
      %v606 = vsel %vm586, %v526, 0
      %v609 = vsel %vm586, %v527, 0
      %v612 = vsel %vm586, %v528, 0
      %v615 = vsel %vm586, %v529, 0
      %v618 = vsel %vm586, %v530, 0
      %v621 = vsel %vm586, %v531, 0
      %v624 = vsel %vm586, %v532, 0
      %v627 = vsel %vm586, %v533, 0
      %v630 = vsel %vm586, %v534, 0
      %v633 = vsel %vm586, %v535, 0
      %v636 = vsel %vm586, %v536, 0
      %v639 = vsel %vm586, %v537, 0
      %v642 = vsel %vm586, %v538, 0
      %v645 = vsel %vm586, %v539, 0
      %v648 = vsel %vm586, %v540, 0
      %v651 = vsel %vm586, %v541, 0
      %v654 = vsel %vm586, %v542, 0
      %v657 = vsel %vm586, %v543, 0
      %v660 = vsel %vm586, %v544, 0
      %v663 = vsel %vm586, %v545, 0
      %v666 = vsel %vm586, %v546, 0
      %v669 = vsel %vm586, %v547, 0
      %v672 = vsel %vm586, %v548, 0
      %v675 = vsel %vm586, %v549, 0
      %v678 = vsel %vm586, %v550, 0
      %v681 = vsel %vm586, %v551, 0
      %v684 = vsel %vm586, %v552, 0
      %v687 = vsel %vm586, %v553, 0
      %v690 = vsel %vm586, %v554, 0
      %v693 = vsel %vm586, %v555, 0
      %v696 = vsel %vm586, %v556, 0
      %v699 = vsel %vm586, %v557, 0
      %v702 = vsel %vm586, %v558, 0
      %v705 = vsel %vm586, %v559, 0
      %v708 = vsel %vm586, %v560, 0
      %v711 = vsel %vm586, %v561, 0
      %v714 = vsel %vm586, %v562, 0
      %v717 = vsel %vm586, %v563, 0
      %v720 = vsel %vm586, %v564, 0
      %v723 = vsel %vm586, %v565, 0
      %v726 = vsel %vm586, %v566, 0
      %v729 = vsel %vm586, %v567, 0
      %v732 = vsel %vm586, %v568, 0
      %v735 = vsel %vm586, %v569, 0
      %v738 = vsel %vm586, %v570, 0
      %v741 = vsel %vm586, %v571, 0
      %v744 = vsel %vm586, %v572, 0
      %v747 = vsel %vm586, %v573, 0
      %v750 = vsel %vm586, %v574, 0
      %v753 = vsel %vm586, %v575, 0
      %v756 = vsel %vm586, %v576, 0
      %v759 = vsel %vm586, %v577, 0
      %v762 = vsel %vm586, %v578, 0
      %v765 = vsel %vm586, %v579, 0
      %v768 = vsel %vm586, %v580, 0
      %v771 = vsel %vm586, %v581, 0
      %v774 = vsel %vm586, %v582, 0
      %v777 = vsel %vm586, %v583, 0
      %vm779 = vcmask 1040384
      %vm780 = vcmask 1041408
      %v781 = vsel %vm779, 4294967295, 65535
      %v782 = vsel %vm780, %v781, 0
      %v784 = vand.u32 %v585, %v782
      %786 = vmatprep.subr.bf16.mxu0 0
      %787 = vmatpush1.bf16.msra.mxu0 %v784
      %788 = vmatprep.subr.bf16.mxu0 0
      %789 = vmatpush1.bf16.msra.mxu0 0
      %790 = vmatprep.subr.bf16.mxu0 0
      %791 = vmatpush1.bf16.msra.mxu0 0
      %792 = vmatprep.subr.bf16.mxu0 0
      %793 = vmatpush1.bf16.msra.mxu0 0
      %794 = vmatprep.subr.bf16.mxu0 0
      %795 = vmatpush1.bf16.msra.mxu0 0
      %796 = vmatprep.subr.bf16.mxu0 0
      %797 = vmatpush1.bf16.msra.mxu0 0
      %798 = vmatprep.subr.bf16.mxu0 0
      %799 = vmatpush1.bf16.msra.mxu0 0
      %800 = vmatprep.subr.bf16.mxu0 0
      %801 = vmatpush1.bf16.msra.mxu0 0
      %802 = vmatprep.subr.bf16.mxu0 0
      %803 = vmatpush1.bf16.msra.mxu0 0
      %804 = vmatprep.subr.bf16.mxu0 0
      %805 = vmatpush1.bf16.msra.mxu0 0
      %806 = vmatprep.subr.bf16.mxu0 0
      %807 = vmatpush1.bf16.msra.mxu0 0
      %808 = vmatprep.subr.bf16.mxu0 0
      %809 = vmatpush1.bf16.msra.mxu0 0
      %810 = vmatprep.subr.bf16.mxu0 0
      %811 = vmatpush1.bf16.msra.mxu0 0
      %812 = vmatprep.subr.bf16.mxu0 0
      %813 = vmatpush1.bf16.msra.mxu0 0
      %814 = vmatprep.subr.bf16.mxu0 0
      %815 = vmatpush1.bf16.msra.mxu0 0
      %816 = vmatprep.subr.bf16.mxu0 0
      %817 = vmatpush1.bf16.msra.mxu0 0
      %818 = vmatprep.mubr.bf16.mxu0 0
      %819 = vmatmul.mubr.bf16.gmra.mrb[0].mxu0 %v588
      %v820 = vpop.f32.mrb[0].mxu0
      %v821 = vadd.f32 0.0, %v820
      %v822 = vpop.f32.mrb[0].mxu0
      %v823 = vpop.f32.mrb[0].mxu0
      %v824 = vadd.f32 0.0, %v823
      %v825 = vpop.f32.mrb[0].mxu0
      %826 = vmatprep.mubr.bf16.mxu0 0
      %827 = vmatmul.mubr.bf16.gmra.mrb[0].mxu0 %v591
      %v828 = vpop.f32.mrb[0].mxu0
      %v829 = vadd.f32 0.0, %v828
      %v830 = vpop.f32.mrb[0].mxu0
      %v831 = vpop.f32.mrb[0].mxu0
      %v832 = vadd.f32 0.0, %v831
      %v833 = vpop.f32.mrb[0].mxu0
      %834 = vmatprep.mubr.bf16.mxu0 0
      %835 = vmatmul.mubr.bf16.gmra.mrb[0].mxu0 %v594
      %v836 = vpop.f32.mrb[0].mxu0
      %v837 = vadd.f32 0.0, %v836
      %v838 = vpop.f32.mrb[0].mxu0
      %v839 = vpop.f32.mrb[0].mxu0
      %v840 = vadd.f32 0.0, %v839
      %v841 = vpop.f32.mrb[0].mxu0
      %842 = vmatprep.mubr.bf16.mxu0 0
      %843 = vmatmul.mubr.bf16.gmra.mrb[0].mxu0 %v597
      %v844 = vpop.f32.mrb[0].mxu0
      %v845 = vadd.f32 0.0, %v844
      %v846 = vpop.f32.mrb[0].mxu0
      %v847 = vpop.f32.mrb[0].mxu0
      %v848 = vadd.f32 0.0, %v847
      %v849 = vpop.f32.mrb[0].mxu0
      %850 = vmatprep.mubr.bf16.mxu0 0
      %851 = vmatmul.mubr.bf16.gmra.mrb[0].mxu0 %v600
      %v852 = vpop.f32.mrb[0].mxu0
      %v853 = vadd.f32 0.0, %v852
      %v854 = vpop.f32.mrb[0].mxu0
      %v855 = vpop.f32.mrb[0].mxu0
      %v856 = vadd.f32 0.0, %v855
      %v857 = vpop.f32.mrb[0].mxu0
      %858 = vmatprep.mubr.bf16.mxu0 0
      %859 = vmatmul.mubr.bf16.gmra.mrb[0].mxu0 %v603
      %v860 = vpop.f32.mrb[0].mxu0
      %v861 = vadd.f32 0.0, %v860
      %v862 = vpop.f32.mrb[0].mxu0
      %v863 = vpop.f32.mrb[0].mxu0
      %v864 = vadd.f32 0.0, %v863
      %v865 = vpop.f32.mrb[0].mxu0
      %866 = vmatprep.mubr.bf16.mxu0 0
      %867 = vmatmul.mubr.bf16.gmra.mrb[0].mxu0 %v606
      %v868 = vpop.f32.mrb[0].mxu0
      %v869 = vadd.f32 0.0, %v868
      %v870 = vpop.f32.mrb[0].mxu0
      %v871 = vpop.f32.mrb[0].mxu0
      %v872 = vadd.f32 0.0, %v871
      %v873 = vpop.f32.mrb[0].mxu0
      %874 = vmatprep.mubr.bf16.mxu0 0
      %875 = vmatmul.mubr.bf16.gmra.mrb[0].mxu0 %v609
      %v876 = vpop.f32.mrb[0].mxu0
      %v877 = vadd.f32 0.0, %v876
      %v878 = vpop.f32.mrb[0].mxu0
      %v879 = vpop.f32.mrb[0].mxu0
      %v880 = vadd.f32 0.0, %v879
      %v881 = vpop.f32.mrb[0].mxu0
      %882 = vmatprep.mubr.bf16.mxu0 0
      %883 = vmatmul.mubr.bf16.gmra.mrb[0].mxu0 %v612
      %v884 = vpop.f32.mrb[0].mxu0
      %v885 = vadd.f32 0.0, %v884
      %v886 = vpop.f32.mrb[0].mxu0
      %v887 = vpop.f32.mrb[0].mxu0
      %v888 = vadd.f32 0.0, %v887
      %v889 = vpop.f32.mrb[0].mxu0
      %890 = vmatprep.mubr.bf16.mxu0 0
      %891 = vmatmul.mubr.bf16.gmra.mrb[0].mxu0 %v615
      %v892 = vpop.f32.mrb[0].mxu0
      %v893 = vadd.f32 0.0, %v892
      %v894 = vpop.f32.mrb[0].mxu0
      %v895 = vpop.f32.mrb[0].mxu0
      %v896 = vadd.f32 0.0, %v895
      %v897 = vpop.f32.mrb[0].mxu0
      %898 = vmatprep.mubr.bf16.mxu0 0
      %899 = vmatmul.mubr.bf16.gmra.mrb[0].mxu0 %v618
      %v900 = vpop.f32.mrb[0].mxu0
      %v901 = vadd.f32 0.0, %v900
      %v902 = vpop.f32.mrb[0].mxu0
      %v903 = vpop.f32.mrb[0].mxu0
      %v904 = vadd.f32 0.0, %v903
      %v905 = vpop.f32.mrb[0].mxu0
      %906 = vmatprep.mubr.bf16.mxu0 0
      %907 = vmatmul.mubr.bf16.gmra.mrb[0].mxu0 %v621
      %v908 = vpop.f32.mrb[0].mxu0
      %v909 = vadd.f32 0.0, %v908
      %v910 = vpop.f32.mrb[0].mxu0
      %v911 = vpop.f32.mrb[0].mxu0
      %v912 = vadd.f32 0.0, %v911
      %v913 = vpop.f32.mrb[0].mxu0
      %914 = vmatprep.mubr.bf16.mxu0 0
      %915 = vmatmul.mubr.bf16.gmra.mrb[0].mxu0 %v624
      %v916 = vpop.f32.mrb[0].mxu0
      %v917 = vadd.f32 0.0, %v916
      %v918 = vpop.f32.mrb[0].mxu0
      %v919 = vpop.f32.mrb[0].mxu0
      %v920 = vadd.f32 0.0, %v919
      %v921 = vpop.f32.mrb[0].mxu0
      %922 = vmatprep.mubr.bf16.mxu0 0
      %923 = vmatmul.mubr.bf16.gmra.mrb[0].mxu0 %v627
      %v924 = vpop.f32.mrb[0].mxu0
      %v925 = vadd.f32 0.0, %v924
      %v926 = vpop.f32.mrb[0].mxu0
      %v927 = vpop.f32.mrb[0].mxu0
      %v928 = vadd.f32 0.0, %v927
      %v929 = vpop.f32.mrb[0].mxu0
      %930 = vmatprep.mubr.bf16.mxu0 0
      %931 = vmatmul.mubr.bf16.gmra.mrb[0].mxu0 %v630
      %v932 = vpop.f32.mrb[0].mxu0
      %v933 = vadd.f32 0.0, %v932
      %v934 = vpop.f32.mrb[0].mxu0
      %v935 = vpop.f32.mrb[0].mxu0
      %v936 = vadd.f32 0.0, %v935
      %v937 = vpop.f32.mrb[0].mxu0
      %938 = vmatprep.mubr.bf16.mxu0 0
      %939 = vmatmul.mubr.bf16.gmra.mrb[0].mxu0 %v633
      %v940 = vpop.f32.mrb[0].mxu0
      %v941 = vadd.f32 0.0, %v940
      %v942 = vpop.f32.mrb[0].mxu0
      %v943 = vpop.f32.mrb[0].mxu0
      %v944 = vadd.f32 0.0, %v943
      %v945 = vpop.f32.mrb[0].mxu0
      %946 = vmatprep.mubr.bf16.mxu0 0
      %947 = vmatmul.mubr.bf16.gmra.mrb[0].mxu0 %v636
      %v948 = vpop.f32.mrb[0].mxu0
      %v949 = vadd.f32 0.0, %v948
      %v950 = vpop.f32.mrb[0].mxu0
      %v951 = vpop.f32.mrb[0].mxu0
      %v952 = vadd.f32 0.0, %v951
      %v953 = vpop.f32.mrb[0].mxu0
      %954 = vmatprep.mubr.bf16.mxu0 0
      %955 = vmatmul.mubr.bf16.gmra.mrb[0].mxu0 %v639
      %v956 = vpop.f32.mrb[0].mxu0
      %v957 = vadd.f32 0.0, %v956
      %v958 = vpop.f32.mrb[0].mxu0
      %v959 = vpop.f32.mrb[0].mxu0
      %v960 = vadd.f32 0.0, %v959
      %v961 = vpop.f32.mrb[0].mxu0
      %962 = vmatprep.mubr.bf16.mxu0 0
      %963 = vmatmul.mubr.bf16.gmra.mrb[0].mxu0 %v642
      %v964 = vpop.f32.mrb[0].mxu0
      %v965 = vadd.f32 0.0, %v964
      %v966 = vpop.f32.mrb[0].mxu0
      %v967 = vpop.f32.mrb[0].mxu0
      %v968 = vadd.f32 0.0, %v967
      %v969 = vpop.f32.mrb[0].mxu0
      %970 = vmatprep.mubr.bf16.mxu0 0
      %971 = vmatmul.mubr.bf16.gmra.mrb[0].mxu0 %v645
      %v972 = vpop.f32.mrb[0].mxu0
      %v973 = vadd.f32 0.0, %v972
      %v974 = vpop.f32.mrb[0].mxu0
      %v975 = vpop.f32.mrb[0].mxu0
      %v976 = vadd.f32 0.0, %v975
      %v977 = vpop.f32.mrb[0].mxu0
      %978 = vmatprep.mubr.bf16.mxu0 0
      %979 = vmatmul.mubr.bf16.gmra.mrb[0].mxu0 %v648
      %v980 = vpop.f32.mrb[0].mxu0
      %v981 = vadd.f32 0.0, %v980
      %v982 = vpop.f32.mrb[0].mxu0
      %v983 = vpop.f32.mrb[0].mxu0
      %v984 = vadd.f32 0.0, %v983
      %v985 = vpop.f32.mrb[0].mxu0
      %986 = vmatprep.mubr.bf16.mxu0 0
      %987 = vmatmul.mubr.bf16.gmra.mrb[0].mxu0 %v651
      %v988 = vpop.f32.mrb[0].mxu0
      %v989 = vadd.f32 0.0, %v988
      %v990 = vpop.f32.mrb[0].mxu0
      %v991 = vpop.f32.mrb[0].mxu0
      %v992 = vadd.f32 0.0, %v991
      %v993 = vpop.f32.mrb[0].mxu0
      %994 = vmatprep.mubr.bf16.mxu0 0
      %995 = vmatmul.mubr.bf16.gmra.mrb[0].mxu0 %v654
      %v996 = vpop.f32.mrb[0].mxu0
      %v997 = vadd.f32 0.0, %v996
      %v998 = vpop.f32.mrb[0].mxu0
      %v999 = vpop.f32.mrb[0].mxu0
      %v1000 = vadd.f32 0.0, %v999
      %v1001 = vpop.f32.mrb[0].mxu0
      %1002 = vmatprep.mubr.bf16.mxu0 0
      %1003 = vmatmul.mubr.bf16.gmra.mrb[0].mxu0 %v657
      %v1004 = vpop.f32.mrb[0].mxu0
      %v1005 = vadd.f32 0.0, %v1004
      %v1006 = vpop.f32.mrb[0].mxu0
      %v1007 = vpop.f32.mrb[0].mxu0
      %v1008 = vadd.f32 0.0, %v1007
      %v1009 = vpop.f32.mrb[0].mxu0
      %1010 = vmatprep.mubr.bf16.mxu0 0
      %1011 = vmatmul.mubr.bf16.gmra.mrb[0].mxu0 %v660
      %v1012 = vpop.f32.mrb[0].mxu0
      %v1013 = vadd.f32 0.0, %v1012
      %v1014 = vpop.f32.mrb[0].mxu0
      %v1015 = vpop.f32.mrb[0].mxu0
      %v1016 = vadd.f32 0.0, %v1015
      %v1017 = vpop.f32.mrb[0].mxu0
      %1018 = vmatprep.mubr.bf16.mxu0 0
      %1019 = vmatmul.mubr.bf16.gmra.mrb[0].mxu0 %v663
      %v1020 = vpop.f32.mrb[0].mxu0
      %v1021 = vadd.f32 0.0, %v1020
      %v1022 = vpop.f32.mrb[0].mxu0
      %v1023 = vpop.f32.mrb[0].mxu0
      %v1024 = vadd.f32 0.0, %v1023
      %v1025 = vpop.f32.mrb[0].mxu0
      %1026 = vmatprep.mubr.bf16.mxu0 0
      %1027 = vmatmul.mubr.bf16.gmra.mrb[0].mxu0 %v666
      %v1028 = vpop.f32.mrb[0].mxu0
      %v1029 = vadd.f32 0.0, %v1028
      %v1030 = vpop.f32.mrb[0].mxu0
      %v1031 = vpop.f32.mrb[0].mxu0
      %v1032 = vadd.f32 0.0, %v1031
      %v1033 = vpop.f32.mrb[0].mxu0
      %1034 = vmatprep.mubr.bf16.mxu0 0
      %1035 = vmatmul.mubr.bf16.gmra.mrb[0].mxu0 %v669
      %v1036 = vpop.f32.mrb[0].mxu0
      %v1037 = vadd.f32 0.0, %v1036
      %v1038 = vpop.f32.mrb[0].mxu0
      %v1039 = vpop.f32.mrb[0].mxu0
      %v1040 = vadd.f32 0.0, %v1039
      %v1041 = vpop.f32.mrb[0].mxu0
      %1042 = vmatprep.mubr.bf16.mxu0 0
      %1043 = vmatmul.mubr.bf16.gmra.mrb[0].mxu0 %v672
      %v1044 = vpop.f32.mrb[0].mxu0
      %v1045 = vadd.f32 0.0, %v1044
      %v1046 = vpop.f32.mrb[0].mxu0
      %v1047 = vpop.f32.mrb[0].mxu0
      %v1048 = vadd.f32 0.0, %v1047
      %v1049 = vpop.f32.mrb[0].mxu0
      %1050 = vmatprep.mubr.bf16.mxu0 0
      %1051 = vmatmul.mubr.bf16.gmra.mrb[0].mxu0 %v675
      %v1052 = vpop.f32.mrb[0].mxu0
      %v1053 = vadd.f32 0.0, %v1052
      %v1054 = vpop.f32.mrb[0].mxu0
      %v1055 = vpop.f32.mrb[0].mxu0
      %v1056 = vadd.f32 0.0, %v1055
      %v1057 = vpop.f32.mrb[0].mxu0
      %1058 = vmatprep.mubr.bf16.mxu0 0
      %1059 = vmatmul.mubr.bf16.gmra.mrb[0].mxu0 %v678
      %v1060 = vpop.f32.mrb[0].mxu0
      %v1061 = vadd.f32 0.0, %v1060
      %v1062 = vpop.f32.mrb[0].mxu0
      %v1063 = vpop.f32.mrb[0].mxu0
      %v1064 = vadd.f32 0.0, %v1063
      %v1065 = vpop.f32.mrb[0].mxu0
      %1066 = vmatprep.mubr.bf16.mxu0 0
      %1067 = vmatmul.mubr.bf16.gmra.mrb[0].mxu0 %v681
      %v1068 = vpop.f32.mrb[0].mxu0
      %v1069 = vadd.f32 0.0, %v1068
      %v1070 = vpop.f32.mrb[0].mxu0
      %v1071 = vpop.f32.mrb[0].mxu0
      %v1072 = vadd.f32 0.0, %v1071
      %v1073 = vpop.f32.mrb[0].mxu0
      %1074 = vmatprep.mubr.bf16.mxu0 0
      %1075 = vmatmul.mubr.bf16.gmra.mrb[0].mxu0 %v684
      %v1076 = vpop.f32.mrb[0].mxu0
      %v1077 = vadd.f32 0.0, %v1076
      %v1078 = vpop.f32.mrb[0].mxu0
      %v1079 = vpop.f32.mrb[0].mxu0
      %v1080 = vadd.f32 0.0, %v1079
      %v1081 = vpop.f32.mrb[0].mxu0
      %1082 = vmatprep.mubr.bf16.mxu0 0
      %1083 = vmatmul.mubr.bf16.gmra.mrb[0].mxu0 %v687
      %v1084 = vpop.f32.mrb[0].mxu0
      %v1085 = vadd.f32 0.0, %v1084
      %v1086 = vpop.f32.mrb[0].mxu0
      %v1087 = vpop.f32.mrb[0].mxu0
      %v1088 = vadd.f32 0.0, %v1087
      %v1089 = vpop.f32.mrb[0].mxu0
      %1090 = vmatprep.mubr.bf16.mxu0 0
      %1091 = vmatmul.mubr.bf16.gmra.mrb[0].mxu0 %v690
      %v1092 = vpop.f32.mrb[0].mxu0
      %v1093 = vadd.f32 0.0, %v1092
      %v1094 = vpop.f32.mrb[0].mxu0
      %v1095 = vpop.f32.mrb[0].mxu0
      %v1096 = vadd.f32 0.0, %v1095
      %v1097 = vpop.f32.mrb[0].mxu0
      %1098 = vmatprep.mubr.bf16.mxu0 0
      %1099 = vmatmul.mubr.bf16.gmra.mrb[0].mxu0 %v693
      %v1100 = vpop.f32.mrb[0].mxu0
      %v1101 = vadd.f32 0.0, %v1100
      %v1102 = vpop.f32.mrb[0].mxu0
      %v1103 = vpop.f32.mrb[0].mxu0
      %v1104 = vadd.f32 0.0, %v1103
      %v1105 = vpop.f32.mrb[0].mxu0
      %1106 = vmatprep.mubr.bf16.mxu0 0
      %1107 = vmatmul.mubr.bf16.gmra.mrb[0].mxu0 %v696
      %v1108 = vpop.f32.mrb[0].mxu0
      %v1109 = vadd.f32 0.0, %v1108
      %v1110 = vpop.f32.mrb[0].mxu0
      %v1111 = vpop.f32.mrb[0].mxu0
      %v1112 = vadd.f32 0.0, %v1111
      %v1113 = vpop.f32.mrb[0].mxu0
      %1114 = vmatprep.mubr.bf16.mxu0 0
      %1115 = vmatmul.mubr.bf16.gmra.mrb[0].mxu0 %v699
      %v1116 = vpop.f32.mrb[0].mxu0
      %v1117 = vadd.f32 0.0, %v1116
      %v1118 = vpop.f32.mrb[0].mxu0
      %v1119 = vpop.f32.mrb[0].mxu0
      %v1120 = vadd.f32 0.0, %v1119
      %v1121 = vpop.f32.mrb[0].mxu0
      %1122 = vmatprep.mubr.bf16.mxu0 0
      %1123 = vmatmul.mubr.bf16.gmra.mrb[0].mxu0 %v702
      %v1124 = vpop.f32.mrb[0].mxu0
      %v1125 = vadd.f32 0.0, %v1124
      %v1126 = vpop.f32.mrb[0].mxu0
      %v1127 = vpop.f32.mrb[0].mxu0
      %v1128 = vadd.f32 0.0, %v1127
      %v1129 = vpop.f32.mrb[0].mxu0
      %1130 = vmatprep.mubr.bf16.mxu0 0
      %1131 = vmatmul.mubr.bf16.gmra.mrb[0].mxu0 %v705
      %v1132 = vpop.f32.mrb[0].mxu0
      %v1133 = vadd.f32 0.0, %v1132
      %v1134 = vpop.f32.mrb[0].mxu0
      %v1135 = vpop.f32.mrb[0].mxu0
      %v1136 = vadd.f32 0.0, %v1135
      %v1137 = vpop.f32.mrb[0].mxu0
      %1138 = vmatprep.mubr.bf16.mxu0 0
      %1139 = vmatmul.mubr.bf16.gmra.mrb[0].mxu0 %v708
      %v1140 = vpop.f32.mrb[0].mxu0
      %v1141 = vadd.f32 0.0, %v1140
      %v1142 = vpop.f32.mrb[0].mxu0
      %v1143 = vpop.f32.mrb[0].mxu0
      %v1144 = vadd.f32 0.0, %v1143
      %v1145 = vpop.f32.mrb[0].mxu0
      %1146 = vmatprep.mubr.bf16.mxu0 0
      %1147 = vmatmul.mubr.bf16.gmra.mrb[0].mxu0 %v711
      %v1148 = vpop.f32.mrb[0].mxu0
      %v1149 = vadd.f32 0.0, %v1148
      %v1150 = vpop.f32.mrb[0].mxu0
      %v1151 = vpop.f32.mrb[0].mxu0
      %v1152 = vadd.f32 0.0, %v1151
      %v1153 = vpop.f32.mrb[0].mxu0
      %1154 = vmatprep.mubr.bf16.mxu0 0
      %1155 = vmatmul.mubr.bf16.gmra.mrb[0].mxu0 %v714
      %v1156 = vpop.f32.mrb[0].mxu0
      %v1157 = vadd.f32 0.0, %v1156
      %v1158 = vpop.f32.mrb[0].mxu0
      %v1159 = vpop.f32.mrb[0].mxu0
      %v1160 = vadd.f32 0.0, %v1159
      %v1161 = vpop.f32.mrb[0].mxu0
      %1162 = vmatprep.mubr.bf16.mxu0 0
      %1163 = vmatmul.mubr.bf16.gmra.mrb[0].mxu0 %v717
      %v1164 = vpop.f32.mrb[0].mxu0
      %v1165 = vadd.f32 0.0, %v1164
      %v1166 = vpop.f32.mrb[0].mxu0
      %v1167 = vpop.f32.mrb[0].mxu0
      %v1168 = vadd.f32 0.0, %v1167
      %v1169 = vpop.f32.mrb[0].mxu0
      %1170 = vmatprep.mubr.bf16.mxu0 0
      %1171 = vmatmul.mubr.bf16.gmra.mrb[0].mxu0 %v720
      %v1172 = vpop.f32.mrb[0].mxu0
      %v1173 = vadd.f32 0.0, %v1172
      %v1174 = vpop.f32.mrb[0].mxu0
      %v1175 = vpop.f32.mrb[0].mxu0
      %v1176 = vadd.f32 0.0, %v1175
      %v1177 = vpop.f32.mrb[0].mxu0
      %1178 = vmatprep.mubr.bf16.mxu0 0
      %1179 = vmatmul.mubr.bf16.gmra.mrb[0].mxu0 %v723
      %v1180 = vpop.f32.mrb[0].mxu0
      %v1181 = vadd.f32 0.0, %v1180
      %v1182 = vpop.f32.mrb[0].mxu0
      %v1183 = vpop.f32.mrb[0].mxu0
      %v1184 = vadd.f32 0.0, %v1183
      %v1185 = vpop.f32.mrb[0].mxu0
      %1186 = vmatprep.mubr.bf16.mxu0 0
      %1187 = vmatmul.mubr.bf16.gmra.mrb[0].mxu0 %v726
      %v1188 = vpop.f32.mrb[0].mxu0
      %v1189 = vadd.f32 0.0, %v1188
      %v1190 = vpop.f32.mrb[0].mxu0
      %v1191 = vpop.f32.mrb[0].mxu0
      %v1192 = vadd.f32 0.0, %v1191
      %v1193 = vpop.f32.mrb[0].mxu0
      %1194 = vmatprep.mubr.bf16.mxu0 0
      %1195 = vmatmul.mubr.bf16.gmra.mrb[0].mxu0 %v729
      %v1196 = vpop.f32.mrb[0].mxu0
      %v1197 = vadd.f32 0.0, %v1196
      %v1198 = vpop.f32.mrb[0].mxu0
      %v1199 = vpop.f32.mrb[0].mxu0
      %v1200 = vadd.f32 0.0, %v1199
      %v1201 = vpop.f32.mrb[0].mxu0
      %1202 = vmatprep.mubr.bf16.mxu0 0
      %1203 = vmatmul.mubr.bf16.gmra.mrb[0].mxu0 %v732
      %v1204 = vpop.f32.mrb[0].mxu0
      %v1205 = vadd.f32 0.0, %v1204
      %v1206 = vpop.f32.mrb[0].mxu0
      %v1207 = vpop.f32.mrb[0].mxu0
      %v1208 = vadd.f32 0.0, %v1207
      %v1209 = vpop.f32.mrb[0].mxu0
      %1210 = vmatprep.mubr.bf16.mxu0 0
      %1211 = vmatmul.mubr.bf16.gmra.mrb[0].mxu0 %v735
      %v1212 = vpop.f32.mrb[0].mxu0
      %v1213 = vadd.f32 0.0, %v1212
      %v1214 = vpop.f32.mrb[0].mxu0
      %v1215 = vpop.f32.mrb[0].mxu0
      %v1216 = vadd.f32 0.0, %v1215
      %v1217 = vpop.f32.mrb[0].mxu0
      %1218 = vmatprep.mubr.bf16.mxu0 0
      %1219 = vmatmul.mubr.bf16.gmra.mrb[0].mxu0 %v738
      %v1220 = vpop.f32.mrb[0].mxu0
      %v1221 = vadd.f32 0.0, %v1220
      %v1222 = vpop.f32.mrb[0].mxu0
      %v1223 = vpop.f32.mrb[0].mxu0
      %v1224 = vadd.f32 0.0, %v1223
      %v1225 = vpop.f32.mrb[0].mxu0
      %1226 = vmatprep.mubr.bf16.mxu0 0
      %1227 = vmatmul.mubr.bf16.gmra.mrb[0].mxu0 %v741
      %v1228 = vpop.f32.mrb[0].mxu0
      %v1229 = vadd.f32 0.0, %v1228
      %v1230 = vpop.f32.mrb[0].mxu0
      %v1231 = vpop.f32.mrb[0].mxu0
      %v1232 = vadd.f32 0.0, %v1231
      %v1233 = vpop.f32.mrb[0].mxu0
      %1234 = vmatprep.mubr.bf16.mxu0 0
      %1235 = vmatmul.mubr.bf16.gmra.mrb[0].mxu0 %v744
      %v1236 = vpop.f32.mrb[0].mxu0
      %v1237 = vadd.f32 0.0, %v1236
      %v1238 = vpop.f32.mrb[0].mxu0
      %v1239 = vpop.f32.mrb[0].mxu0
      %v1240 = vadd.f32 0.0, %v1239
      %v1241 = vpop.f32.mrb[0].mxu0
      %1242 = vmatprep.mubr.bf16.mxu0 0
      %1243 = vmatmul.mubr.bf16.gmra.mrb[0].mxu0 %v747
      %v1244 = vpop.f32.mrb[0].mxu0
      %v1245 = vadd.f32 0.0, %v1244
      %v1246 = vpop.f32.mrb[0].mxu0
      %v1247 = vpop.f32.mrb[0].mxu0
      %v1248 = vadd.f32 0.0, %v1247
      %v1249 = vpop.f32.mrb[0].mxu0
      %1250 = vmatprep.mubr.bf16.mxu0 0
      %1251 = vmatmul.mubr.bf16.gmra.mrb[0].mxu0 %v750
      %v1252 = vpop.f32.mrb[0].mxu0
      %v1253 = vadd.f32 0.0, %v1252
      %v1254 = vpop.f32.mrb[0].mxu0
      %v1255 = vpop.f32.mrb[0].mxu0
      %v1256 = vadd.f32 0.0, %v1255
      %v1257 = vpop.f32.mrb[0].mxu0
      %1258 = vmatprep.mubr.bf16.mxu0 0
      %1259 = vmatmul.mubr.bf16.gmra.mrb[0].mxu0 %v753
      %v1260 = vpop.f32.mrb[0].mxu0
      %v1261 = vadd.f32 0.0, %v1260
      %v1262 = vpop.f32.mrb[0].mxu0
      %v1263 = vpop.f32.mrb[0].mxu0
      %v1264 = vadd.f32 0.0, %v1263
      %v1265 = vpop.f32.mrb[0].mxu0
      %1266 = vmatprep.mubr.bf16.mxu0 0
      %1267 = vmatmul.mubr.bf16.gmra.mrb[0].mxu0 %v756
      %v1268 = vpop.f32.mrb[0].mxu0
      %v1269 = vadd.f32 0.0, %v1268
      %v1270 = vpop.f32.mrb[0].mxu0
      %v1271 = vpop.f32.mrb[0].mxu0
      %v1272 = vadd.f32 0.0, %v1271
      %v1273 = vpop.f32.mrb[0].mxu0
      %1274 = vmatprep.mubr.bf16.mxu0 0
      %1275 = vmatmul.mubr.bf16.gmra.mrb[0].mxu0 %v759
      %v1276 = vpop.f32.mrb[0].mxu0
      %v1277 = vadd.f32 0.0, %v1276
      %v1278 = vpop.f32.mrb[0].mxu0
      %v1279 = vpop.f32.mrb[0].mxu0
      %v1280 = vadd.f32 0.0, %v1279
      %v1281 = vpop.f32.mrb[0].mxu0
      %1282 = vmatprep.mubr.bf16.mxu0 0
      %1283 = vmatmul.mubr.bf16.gmra.mrb[0].mxu0 %v762
      %v1284 = vpop.f32.mrb[0].mxu0
      %v1285 = vadd.f32 0.0, %v1284
      %v1286 = vpop.f32.mrb[0].mxu0
      %v1287 = vpop.f32.mrb[0].mxu0
      %v1288 = vadd.f32 0.0, %v1287
      %v1289 = vpop.f32.mrb[0].mxu0
      %1290 = vmatprep.mubr.bf16.mxu0 0
      %1291 = vmatmul.mubr.bf16.gmra.mrb[0].mxu0 %v765
      %v1292 = vpop.f32.mrb[0].mxu0
      %v1293 = vadd.f32 0.0, %v1292
      %v1294 = vpop.f32.mrb[0].mxu0
      %v1295 = vpop.f32.mrb[0].mxu0
      %v1296 = vadd.f32 0.0, %v1295
      %v1297 = vpop.f32.mrb[0].mxu0
      %1298 = vmatprep.mubr.bf16.mxu0 0
      %1299 = vmatmul.mubr.bf16.gmra.mrb[0].mxu0 %v768
      %v1300 = vpop.f32.mrb[0].mxu0
      %v1301 = vadd.f32 0.0, %v1300
      %v1302 = vpop.f32.mrb[0].mxu0
      %v1303 = vpop.f32.mrb[0].mxu0
      %v1304 = vadd.f32 0.0, %v1303
      %v1305 = vpop.f32.mrb[0].mxu0
      %1306 = vmatprep.mubr.bf16.mxu0 0
      %1307 = vmatmul.mubr.bf16.gmra.mrb[0].mxu0 %v771
      %v1308 = vpop.f32.mrb[0].mxu0
      %v1309 = vadd.f32 0.0, %v1308
      %v1310 = vpop.f32.mrb[0].mxu0
      %v1311 = vpop.f32.mrb[0].mxu0
      %v1312 = vadd.f32 0.0, %v1311
      %v1313 = vpop.f32.mrb[0].mxu0
      %1314 = vmatprep.mubr.bf16.mxu0 0
      %1315 = vmatmul.mubr.bf16.gmra.mrb[0].mxu0 %v774
      %v1316 = vpop.f32.mrb[0].mxu0
      %v1317 = vadd.f32 0.0, %v1316
      %v1318 = vpop.f32.mrb[0].mxu0
      %v1319 = vpop.f32.mrb[0].mxu0
      %v1320 = vadd.f32 0.0, %v1319
      %v1321 = vpop.f32.mrb[0].mxu0
      %1322 = vmatprep.mubr.bf16.mxu0 0
      %1323 = vmatmul.mubr.bf16.gmra.mrb[0].mxu0 %v777
      %v1324 = vpop.f32.mrb[0].mxu0
      %v1325 = vadd.f32 0.0, %v1324
      %v1326 = vpop.f32.mrb[0].mxu0
      %v1327 = vpop.f32.mrb[0].mxu0
      %v1328 = vadd.f32 0.0, %v1327
      %v1329 = vpop.f32.mrb[0].mxu0
      %1330 = vdwg.mxu0
      %v1332 = vsel %vm586, %v327, 0
      %v1335 = vsel %vm586, %v328, 0
      %v1338 = vsel %vm586, %v329, 0
      %v1341 = vsel %vm586, %v330, 0
      %v1344 = vsel %vm586, %v331, 0
      %v1347 = vsel %vm586, %v332, 0
      %v1350 = vsel %vm586, %v333, 0
      %v1353 = vsel %vm586, %v334, 0
      %v1356 = vsel %vm586, %v335, 0
      %v1359 = vsel %vm586, %v336, 0
      %v1362 = vsel %vm586, %v337, 0
      %v1365 = vsel %vm586, %v338, 0
      %v1368 = vsel %vm586, %v339, 0
      %v1371 = vsel %vm586, %v340, 0
      %v1374 = vsel %vm586, %v341, 0
      %v1377 = vsel %vm586, %v342, 0
      %v1380 = vsel %vm586, %v343, 0
      %v1383 = vsel %vm586, %v344, 0
      %v1386 = vsel %vm586, %v345, 0
      %v1389 = vsel %vm586, %v346, 0
      %v1392 = vsel %vm586, %v347, 0
      %v1395 = vsel %vm586, %v348, 0
      %v1398 = vsel %vm586, %v349, 0
      %v1401 = vsel %vm586, %v350, 0
      %v1404 = vsel %vm586, %v351, 0
      %v1407 = vsel %vm586, %v352, 0
      %v1410 = vsel %vm586, %v353, 0
      %v1413 = vsel %vm586, %v354, 0
      %v1416 = vsel %vm586, %v355, 0
      %v1419 = vsel %vm586, %v356, 0
      %v1422 = vsel %vm586, %v357, 0
      %v1425 = vsel %vm586, %v358, 0
      %v1428 = vsel %vm586, %v359, 0
      %v1431 = vsel %vm586, %v360, 0
      %v1434 = vsel %vm586, %v361, 0
      %v1437 = vsel %vm586, %v362, 0
      %v1440 = vsel %vm586, %v363, 0
      %v1443 = vsel %vm586, %v364, 0
      %v1446 = vsel %vm586, %v365, 0
      %v1449 = vsel %vm586, %v366, 0
      %v1452 = vsel %vm586, %v367, 0
      %v1455 = vsel %vm586, %v368, 0
      %v1458 = vsel %vm586, %v369, 0
      %v1461 = vsel %vm586, %v370, 0
      %v1464 = vsel %vm586, %v371, 0
      %v1467 = vsel %vm586, %v372, 0
      %v1470 = vsel %vm586, %v373, 0
      %v1473 = vsel %vm586, %v374, 0
      %v1476 = vsel %vm586, %v375, 0
      %v1479 = vsel %vm586, %v376, 0
      %v1482 = vsel %vm586, %v377, 0
      %v1485 = vsel %vm586, %v378, 0
      %v1488 = vsel %vm586, %v379, 0
      %v1491 = vsel %vm586, %v380, 0
      %v1494 = vsel %vm586, %v381, 0
      %v1497 = vsel %vm586, %v382, 0
      %v1500 = vsel %vm586, %v383, 0
      %v1503 = vsel %vm586, %v384, 0
      %v1506 = vsel %vm586, %v385, 0
      %v1509 = vsel %vm586, %v386, 0
      %v1512 = vsel %vm586, %v387, 0
      %v1515 = vsel %vm586, %v388, 0
      %v1518 = vsel %vm586, %v389, 0
      %v1521 = vsel %vm586, %v390, 0
      %v1524 = vand.u32 %v391, %v782
      %1526 = vmatprep.subr.bf16.mxu0 0
      %1527 = vmatpush1.bf16.msra.mxu0 %v1524
      %1528 = vmatprep.subr.bf16.mxu0 0
      %1529 = vmatpush1.bf16.msra.mxu0 0
      %1530 = vmatprep.subr.bf16.mxu0 0
      %1531 = vmatpush1.bf16.msra.mxu0 0
      %1532 = vmatprep.subr.bf16.mxu0 0
      %1533 = vmatpush1.bf16.msra.mxu0 0
      %1534 = vmatprep.subr.bf16.mxu0 0
      %1535 = vmatpush1.bf16.msra.mxu0 0
      %1536 = vmatprep.subr.bf16.mxu0 0
      %1537 = vmatpush1.bf16.msra.mxu0 0
      %1538 = vmatprep.subr.bf16.mxu0 0
      %1539 = vmatpush1.bf16.msra.mxu0 0
      %1540 = vmatprep.subr.bf16.mxu0 0
      %1541 = vmatpush1.bf16.msra.mxu0 0
      %1542 = vmatprep.subr.bf16.mxu0 0
      %1543 = vmatpush1.bf16.msra.mxu0 0
      %1544 = vmatprep.subr.bf16.mxu0 0
      %1545 = vmatpush1.bf16.msra.mxu0 0
      %1546 = vmatprep.subr.bf16.mxu0 0
      %1547 = vmatpush1.bf16.msra.mxu0 0
      %1548 = vmatprep.subr.bf16.mxu0 0
      %1549 = vmatpush1.bf16.msra.mxu0 0
      %1550 = vmatprep.subr.bf16.mxu0 0
      %1551 = vmatpush1.bf16.msra.mxu0 0
      %1552 = vmatprep.subr.bf16.mxu0 0
      %1553 = vmatpush1.bf16.msra.mxu0 0
      %1554 = vmatprep.subr.bf16.mxu0 0
      %1555 = vmatpush1.bf16.msra.mxu0 0
      %1556 = vmatprep.subr.bf16.mxu0 0
      %1557 = vmatpush1.bf16.msra.mxu0 0
      %1558 = vmatprep.mubr.bf16.mxu0 0
      %1559 = vmatmul.mubr.bf16.gmra.mrb[0].mxu0 %v1332
      %v1560 = vpop.f32.mrb[0].mxu0
      %v1561 = vadd.f32 %v821, %v1560
      %v1562 = vpop.f32.mrb[0].mxu0
      %v1563 = vpop.f32.mrb[0].mxu0
      %v1564 = vadd.f32 %v824, %v1563
      %v1565 = vpop.f32.mrb[0].mxu0
      %1566 = vmatprep.mubr.bf16.mxu0 0
      %1567 = vmatmul.mubr.bf16.gmra.mrb[0].mxu0 %v1335
      %v1568 = vpop.f32.mrb[0].mxu0
      %v1569 = vadd.f32 %v829, %v1568
      %v1570 = vpop.f32.mrb[0].mxu0
      %v1571 = vpop.f32.mrb[0].mxu0
      %v1572 = vadd.f32 %v832, %v1571
      %v1573 = vpop.f32.mrb[0].mxu0
      %1574 = vmatprep.mubr.bf16.mxu0 0
      %1575 = vmatmul.mubr.bf16.gmra.mrb[0].mxu0 %v1338
      %v1576 = vpop.f32.mrb[0].mxu0
      %v1577 = vadd.f32 %v837, %v1576
      %v1578 = vpop.f32.mrb[0].mxu0
      %v1579 = vpop.f32.mrb[0].mxu0
      %v1580 = vadd.f32 %v840, %v1579
      %v1581 = vpop.f32.mrb[0].mxu0
      %1582 = vmatprep.mubr.bf16.mxu0 0
      %1583 = vmatmul.mubr.bf16.gmra.mrb[0].mxu0 %v1341
      %v1584 = vpop.f32.mrb[0].mxu0
      %v1585 = vadd.f32 %v845, %v1584
      %v1586 = vpop.f32.mrb[0].mxu0
      %v1587 = vpop.f32.mrb[0].mxu0
      %v1588 = vadd.f32 %v848, %v1587
      %v1589 = vpop.f32.mrb[0].mxu0
      %1590 = vmatprep.mubr.bf16.mxu0 0
      %1591 = vmatmul.mubr.bf16.gmra.mrb[0].mxu0 %v1344
      %v1592 = vpop.f32.mrb[0].mxu0
      %v1593 = vadd.f32 %v853, %v1592
      %v1594 = vpop.f32.mrb[0].mxu0
      %v1595 = vpop.f32.mrb[0].mxu0
      %v1596 = vadd.f32 %v856, %v1595
      %v1597 = vpop.f32.mrb[0].mxu0
      %1598 = vmatprep.mubr.bf16.mxu0 0
      %1599 = vmatmul.mubr.bf16.gmra.mrb[0].mxu0 %v1347
      %v1600 = vpop.f32.mrb[0].mxu0
      %v1601 = vadd.f32 %v861, %v1600
      %v1602 = vpop.f32.mrb[0].mxu0
      %v1603 = vpop.f32.mrb[0].mxu0
      %v1604 = vadd.f32 %v864, %v1603
      %v1605 = vpop.f32.mrb[0].mxu0
      %1606 = vmatprep.mubr.bf16.mxu0 0
      %1607 = vmatmul.mubr.bf16.gmra.mrb[0].mxu0 %v1350
      %v1608 = vpop.f32.mrb[0].mxu0
      %v1609 = vadd.f32 %v869, %v1608
      %v1610 = vpop.f32.mrb[0].mxu0
      %v1611 = vpop.f32.mrb[0].mxu0
      %v1612 = vadd.f32 %v872, %v1611
      %v1613 = vpop.f32.mrb[0].mxu0
      %1614 = vmatprep.mubr.bf16.mxu0 0
      %1615 = vmatmul.mubr.bf16.gmra.mrb[0].mxu0 %v1353
      %v1616 = vpop.f32.mrb[0].mxu0
      %v1617 = vadd.f32 %v877, %v1616
      %v1618 = vpop.f32.mrb[0].mxu0
      %v1619 = vpop.f32.mrb[0].mxu0
      %v1620 = vadd.f32 %v880, %v1619
      %v1621 = vpop.f32.mrb[0].mxu0
      %1622 = vmatprep.mubr.bf16.mxu0 0
      %1623 = vmatmul.mubr.bf16.gmra.mrb[0].mxu0 %v1356
      %v1624 = vpop.f32.mrb[0].mxu0
      %v1625 = vadd.f32 %v885, %v1624
      %v1626 = vpop.f32.mrb[0].mxu0
      %v1627 = vpop.f32.mrb[0].mxu0
      %v1628 = vadd.f32 %v888, %v1627
      %v1629 = vpop.f32.mrb[0].mxu0
      %1630 = vmatprep.mubr.bf16.mxu0 0
      %1631 = vmatmul.mubr.bf16.gmra.mrb[0].mxu0 %v1359
      %v1632 = vpop.f32.mrb[0].mxu0
      %v1633 = vadd.f32 %v893, %v1632
      %v1634 = vpop.f32.mrb[0].mxu0
      %v1635 = vpop.f32.mrb[0].mxu0
      %v1636 = vadd.f32 %v896, %v1635
      %v1637 = vpop.f32.mrb[0].mxu0
      %1638 = vmatprep.mubr.bf16.mxu0 0
      %1639 = vmatmul.mubr.bf16.gmra.mrb[0].mxu0 %v1362
      %v1640 = vpop.f32.mrb[0].mxu0
      %v1641 = vadd.f32 %v901, %v1640
      %v1642 = vpop.f32.mrb[0].mxu0
      %v1643 = vpop.f32.mrb[0].mxu0
      %v1644 = vadd.f32 %v904, %v1643
      %v1645 = vpop.f32.mrb[0].mxu0
      %1646 = vmatprep.mubr.bf16.mxu0 0
      %1647 = vmatmul.mubr.bf16.gmra.mrb[0].mxu0 %v1365
      %v1648 = vpop.f32.mrb[0].mxu0
      %v1649 = vadd.f32 %v909, %v1648
      %v1650 = vpop.f32.mrb[0].mxu0
      %v1651 = vpop.f32.mrb[0].mxu0
      %v1652 = vadd.f32 %v912, %v1651
      %v1653 = vpop.f32.mrb[0].mxu0
      %1654 = vmatprep.mubr.bf16.mxu0 0
      %1655 = vmatmul.mubr.bf16.gmra.mrb[0].mxu0 %v1368
      %v1656 = vpop.f32.mrb[0].mxu0
      %v1657 = vadd.f32 %v917, %v1656
      %v1658 = vpop.f32.mrb[0].mxu0
      %v1659 = vpop.f32.mrb[0].mxu0
      %v1660 = vadd.f32 %v920, %v1659
      %v1661 = vpop.f32.mrb[0].mxu0
      %1662 = vmatprep.mubr.bf16.mxu0 0
      %1663 = vmatmul.mubr.bf16.gmra.mrb[0].mxu0 %v1371
      %v1664 = vpop.f32.mrb[0].mxu0
      %v1665 = vadd.f32 %v925, %v1664
      %v1666 = vpop.f32.mrb[0].mxu0
      %v1667 = vpop.f32.mrb[0].mxu0
      %v1668 = vadd.f32 %v928, %v1667
      %v1669 = vpop.f32.mrb[0].mxu0
      %1670 = vmatprep.mubr.bf16.mxu0 0
      %1671 = vmatmul.mubr.bf16.gmra.mrb[0].mxu0 %v1374
      %v1672 = vpop.f32.mrb[0].mxu0
      %v1673 = vadd.f32 %v933, %v1672
      %v1674 = vpop.f32.mrb[0].mxu0
      %v1675 = vpop.f32.mrb[0].mxu0
      %v1676 = vadd.f32 %v936, %v1675
      %v1677 = vpop.f32.mrb[0].mxu0
      %1678 = vmatprep.mubr.bf16.mxu0 0
      %1679 = vmatmul.mubr.bf16.gmra.mrb[0].mxu0 %v1377
      %v1680 = vpop.f32.mrb[0].mxu0
      %v1681 = vadd.f32 %v941, %v1680
      %v1682 = vpop.f32.mrb[0].mxu0
      %v1683 = vpop.f32.mrb[0].mxu0
      %v1684 = vadd.f32 %v944, %v1683
      %v1685 = vpop.f32.mrb[0].mxu0
      %1686 = vmatprep.mubr.bf16.mxu0 0
      %1687 = vmatmul.mubr.bf16.gmra.mrb[0].mxu0 %v1380
      %v1688 = vpop.f32.mrb[0].mxu0
      %v1689 = vadd.f32 %v949, %v1688
      %v1690 = vpop.f32.mrb[0].mxu0
      %v1691 = vpop.f32.mrb[0].mxu0
      %v1692 = vadd.f32 %v952, %v1691
      %v1693 = vpop.f32.mrb[0].mxu0
      %1694 = vmatprep.mubr.bf16.mxu0 0
      %1695 = vmatmul.mubr.bf16.gmra.mrb[0].mxu0 %v1383
      %v1696 = vpop.f32.mrb[0].mxu0
      %v1697 = vadd.f32 %v957, %v1696
      %v1698 = vpop.f32.mrb[0].mxu0
      %v1699 = vpop.f32.mrb[0].mxu0
      %v1700 = vadd.f32 %v960, %v1699
      %v1701 = vpop.f32.mrb[0].mxu0
      %1702 = vmatprep.mubr.bf16.mxu0 0
      %1703 = vmatmul.mubr.bf16.gmra.mrb[0].mxu0 %v1386
      %v1704 = vpop.f32.mrb[0].mxu0
      %v1705 = vadd.f32 %v965, %v1704
      %v1706 = vpop.f32.mrb[0].mxu0
      %v1707 = vpop.f32.mrb[0].mxu0
      %v1708 = vadd.f32 %v968, %v1707
      %v1709 = vpop.f32.mrb[0].mxu0
      %1710 = vmatprep.mubr.bf16.mxu0 0
      %1711 = vmatmul.mubr.bf16.gmra.mrb[0].mxu0 %v1389
      %v1712 = vpop.f32.mrb[0].mxu0
      %v1713 = vadd.f32 %v973, %v1712
      %v1714 = vpop.f32.mrb[0].mxu0
      %v1715 = vpop.f32.mrb[0].mxu0
      %v1716 = vadd.f32 %v976, %v1715
      %v1717 = vpop.f32.mrb[0].mxu0
      %1718 = vmatprep.mubr.bf16.mxu0 0
      %1719 = vmatmul.mubr.bf16.gmra.mrb[0].mxu0 %v1392
      %v1720 = vpop.f32.mrb[0].mxu0
      %v1721 = vadd.f32 %v981, %v1720
      %v1722 = vpop.f32.mrb[0].mxu0
      %v1723 = vpop.f32.mrb[0].mxu0
      %v1724 = vadd.f32 %v984, %v1723
      %v1725 = vpop.f32.mrb[0].mxu0
      %1726 = vmatprep.mubr.bf16.mxu0 0
      %1727 = vmatmul.mubr.bf16.gmra.mrb[0].mxu0 %v1395
      %v1728 = vpop.f32.mrb[0].mxu0
      %v1729 = vadd.f32 %v989, %v1728
      %v1730 = vpop.f32.mrb[0].mxu0
      %v1731 = vpop.f32.mrb[0].mxu0
      %v1732 = vadd.f32 %v992, %v1731
      %v1733 = vpop.f32.mrb[0].mxu0
      %1734 = vmatprep.mubr.bf16.mxu0 0
      %1735 = vmatmul.mubr.bf16.gmra.mrb[0].mxu0 %v1398
      %v1736 = vpop.f32.mrb[0].mxu0
      %v1737 = vadd.f32 %v997, %v1736
      %v1738 = vpop.f32.mrb[0].mxu0
      %v1739 = vpop.f32.mrb[0].mxu0
      %v1740 = vadd.f32 %v1000, %v1739
      %v1741 = vpop.f32.mrb[0].mxu0
      %1742 = vmatprep.mubr.bf16.mxu0 0
      %1743 = vmatmul.mubr.bf16.gmra.mrb[0].mxu0 %v1401
      %v1744 = vpop.f32.mrb[0].mxu0
      %v1745 = vadd.f32 %v1005, %v1744
      %v1746 = vpop.f32.mrb[0].mxu0
      %v1747 = vpop.f32.mrb[0].mxu0
      %v1748 = vadd.f32 %v1008, %v1747
      %v1749 = vpop.f32.mrb[0].mxu0
      %1750 = vmatprep.mubr.bf16.mxu0 0
      %1751 = vmatmul.mubr.bf16.gmra.mrb[0].mxu0 %v1404
      %v1752 = vpop.f32.mrb[0].mxu0
      %v1753 = vadd.f32 %v1013, %v1752
      %v1754 = vpop.f32.mrb[0].mxu0
      %v1755 = vpop.f32.mrb[0].mxu0
      %v1756 = vadd.f32 %v1016, %v1755
      %v1757 = vpop.f32.mrb[0].mxu0
      %1758 = vmatprep.mubr.bf16.mxu0 0
      %1759 = vmatmul.mubr.bf16.gmra.mrb[0].mxu0 %v1407
      %v1760 = vpop.f32.mrb[0].mxu0
      %v1761 = vadd.f32 %v1021, %v1760
      %v1762 = vpop.f32.mrb[0].mxu0
      %v1763 = vpop.f32.mrb[0].mxu0
      %v1764 = vadd.f32 %v1024, %v1763
      %v1765 = vpop.f32.mrb[0].mxu0
      %1766 = vmatprep.mubr.bf16.mxu0 0
      %1767 = vmatmul.mubr.bf16.gmra.mrb[0].mxu0 %v1410
      %v1768 = vpop.f32.mrb[0].mxu0
      %v1769 = vadd.f32 %v1029, %v1768
      %v1770 = vpop.f32.mrb[0].mxu0
      %v1771 = vpop.f32.mrb[0].mxu0
      %v1772 = vadd.f32 %v1032, %v1771
      %v1773 = vpop.f32.mrb[0].mxu0
      %1774 = vmatprep.mubr.bf16.mxu0 0
      %1775 = vmatmul.mubr.bf16.gmra.mrb[0].mxu0 %v1413
      %v1776 = vpop.f32.mrb[0].mxu0
      %v1777 = vadd.f32 %v1037, %v1776
      %v1778 = vpop.f32.mrb[0].mxu0
      %v1779 = vpop.f32.mrb[0].mxu0
      %v1780 = vadd.f32 %v1040, %v1779
      %v1781 = vpop.f32.mrb[0].mxu0
      %1782 = vmatprep.mubr.bf16.mxu0 0
      %1783 = vmatmul.mubr.bf16.gmra.mrb[0].mxu0 %v1416
      %v1784 = vpop.f32.mrb[0].mxu0
      %v1785 = vadd.f32 %v1045, %v1784
      %v1786 = vpop.f32.mrb[0].mxu0
      %v1787 = vpop.f32.mrb[0].mxu0
      %v1788 = vadd.f32 %v1048, %v1787
      %v1789 = vpop.f32.mrb[0].mxu0
      %1790 = vmatprep.mubr.bf16.mxu0 0
      %1791 = vmatmul.mubr.bf16.gmra.mrb[0].mxu0 %v1419
      %v1792 = vpop.f32.mrb[0].mxu0
      %v1793 = vadd.f32 %v1053, %v1792
      %v1794 = vpop.f32.mrb[0].mxu0
      %v1795 = vpop.f32.mrb[0].mxu0
      %v1796 = vadd.f32 %v1056, %v1795
      %v1797 = vpop.f32.mrb[0].mxu0
      %1798 = vmatprep.mubr.bf16.mxu0 0
      %1799 = vmatmul.mubr.bf16.gmra.mrb[0].mxu0 %v1422
      %v1800 = vpop.f32.mrb[0].mxu0
      %v1801 = vadd.f32 %v1061, %v1800
      %v1802 = vpop.f32.mrb[0].mxu0
      %v1803 = vpop.f32.mrb[0].mxu0
      %v1804 = vadd.f32 %v1064, %v1803
      %v1805 = vpop.f32.mrb[0].mxu0
      %1806 = vmatprep.mubr.bf16.mxu0 0
      %1807 = vmatmul.mubr.bf16.gmra.mrb[0].mxu0 %v1425
      %v1808 = vpop.f32.mrb[0].mxu0
      %v1809 = vadd.f32 %v1069, %v1808
      %v1810 = vpop.f32.mrb[0].mxu0
      %v1811 = vpop.f32.mrb[0].mxu0
      %v1812 = vadd.f32 %v1072, %v1811
      %v1813 = vpop.f32.mrb[0].mxu0
      %1814 = vmatprep.mubr.bf16.mxu0 0
      %1815 = vmatmul.mubr.bf16.gmra.mrb[0].mxu0 %v1428
      %v1816 = vpop.f32.mrb[0].mxu0
      %v1817 = vadd.f32 %v1077, %v1816
      %v1818 = vpop.f32.mrb[0].mxu0
      %v1819 = vpop.f32.mrb[0].mxu0
      %v1820 = vadd.f32 %v1080, %v1819
      %v1821 = vpop.f32.mrb[0].mxu0
      %1822 = vmatprep.mubr.bf16.mxu0 0
      %1823 = vmatmul.mubr.bf16.gmra.mrb[0].mxu0 %v1431
      %v1824 = vpop.f32.mrb[0].mxu0
      %v1825 = vadd.f32 %v1085, %v1824
      %v1826 = vpop.f32.mrb[0].mxu0
      %v1827 = vpop.f32.mrb[0].mxu0
      %v1828 = vadd.f32 %v1088, %v1827
      %v1829 = vpop.f32.mrb[0].mxu0
      %1830 = vmatprep.mubr.bf16.mxu0 0
      %1831 = vmatmul.mubr.bf16.gmra.mrb[0].mxu0 %v1434
      %v1832 = vpop.f32.mrb[0].mxu0
      %v1833 = vadd.f32 %v1093, %v1832
      %v1834 = vpop.f32.mrb[0].mxu0
      %v1835 = vpop.f32.mrb[0].mxu0
      %v1836 = vadd.f32 %v1096, %v1835
      %v1837 = vpop.f32.mrb[0].mxu0
      %1838 = vmatprep.mubr.bf16.mxu0 0
      %1839 = vmatmul.mubr.bf16.gmra.mrb[0].mxu0 %v1437
      %v1840 = vpop.f32.mrb[0].mxu0
      %v1841 = vadd.f32 %v1101, %v1840
      %v1842 = vpop.f32.mrb[0].mxu0
      %v1843 = vpop.f32.mrb[0].mxu0
      %v1844 = vadd.f32 %v1104, %v1843
      %v1845 = vpop.f32.mrb[0].mxu0
      %1846 = vmatprep.mubr.bf16.mxu0 0
      %1847 = vmatmul.mubr.bf16.gmra.mrb[0].mxu0 %v1440
      %v1848 = vpop.f32.mrb[0].mxu0
      %v1849 = vadd.f32 %v1109, %v1848
      %v1850 = vpop.f32.mrb[0].mxu0
      %v1851 = vpop.f32.mrb[0].mxu0
      %v1852 = vadd.f32 %v1112, %v1851
      %v1853 = vpop.f32.mrb[0].mxu0
      %1854 = vmatprep.mubr.bf16.mxu0 0
      %1855 = vmatmul.mubr.bf16.gmra.mrb[0].mxu0 %v1443
      %v1856 = vpop.f32.mrb[0].mxu0
      %v1857 = vadd.f32 %v1117, %v1856
      %v1858 = vpop.f32.mrb[0].mxu0
      %v1859 = vpop.f32.mrb[0].mxu0
      %v1860 = vadd.f32 %v1120, %v1859
      %v1861 = vpop.f32.mrb[0].mxu0
      %1862 = vmatprep.mubr.bf16.mxu0 0
      %1863 = vmatmul.mubr.bf16.gmra.mrb[0].mxu0 %v1446
      %v1864 = vpop.f32.mrb[0].mxu0
      %v1865 = vadd.f32 %v1125, %v1864
      %v1866 = vpop.f32.mrb[0].mxu0
      %v1867 = vpop.f32.mrb[0].mxu0
      %v1868 = vadd.f32 %v1128, %v1867
      %v1869 = vpop.f32.mrb[0].mxu0
      %1870 = vmatprep.mubr.bf16.mxu0 0
      %1871 = vmatmul.mubr.bf16.gmra.mrb[0].mxu0 %v1449
      %v1872 = vpop.f32.mrb[0].mxu0
      %v1873 = vadd.f32 %v1133, %v1872
      %v1874 = vpop.f32.mrb[0].mxu0
      %v1875 = vpop.f32.mrb[0].mxu0
      %v1876 = vadd.f32 %v1136, %v1875
      %v1877 = vpop.f32.mrb[0].mxu0
      %1878 = vmatprep.mubr.bf16.mxu0 0
      %1879 = vmatmul.mubr.bf16.gmra.mrb[0].mxu0 %v1452
      %v1880 = vpop.f32.mrb[0].mxu0
      %v1881 = vadd.f32 %v1141, %v1880
      %v1882 = vpop.f32.mrb[0].mxu0
      %v1883 = vpop.f32.mrb[0].mxu0
      %v1884 = vadd.f32 %v1144, %v1883
      %v1885 = vpop.f32.mrb[0].mxu0
      %1886 = vmatprep.mubr.bf16.mxu0 0
      %1887 = vmatmul.mubr.bf16.gmra.mrb[0].mxu0 %v1455
      %v1888 = vpop.f32.mrb[0].mxu0
      %v1889 = vadd.f32 %v1149, %v1888
      %v1890 = vpop.f32.mrb[0].mxu0
      %v1891 = vpop.f32.mrb[0].mxu0
      %v1892 = vadd.f32 %v1152, %v1891
      %v1893 = vpop.f32.mrb[0].mxu0
      %1894 = vmatprep.mubr.bf16.mxu0 0
      %1895 = vmatmul.mubr.bf16.gmra.mrb[0].mxu0 %v1458
      %v1896 = vpop.f32.mrb[0].mxu0
      %v1897 = vadd.f32 %v1157, %v1896
      %v1898 = vpop.f32.mrb[0].mxu0
      %v1899 = vpop.f32.mrb[0].mxu0
      %v1900 = vadd.f32 %v1160, %v1899
      %v1901 = vpop.f32.mrb[0].mxu0
      %1902 = vmatprep.mubr.bf16.mxu0 0
      %1903 = vmatmul.mubr.bf16.gmra.mrb[0].mxu0 %v1461
      %v1904 = vpop.f32.mrb[0].mxu0
      %v1905 = vadd.f32 %v1165, %v1904
      %v1906 = vpop.f32.mrb[0].mxu0
      %v1907 = vpop.f32.mrb[0].mxu0
      %v1908 = vadd.f32 %v1168, %v1907
      %v1909 = vpop.f32.mrb[0].mxu0
      %1910 = vmatprep.mubr.bf16.mxu0 0
      %1911 = vmatmul.mubr.bf16.gmra.mrb[0].mxu0 %v1464
      %v1912 = vpop.f32.mrb[0].mxu0
      %v1913 = vadd.f32 %v1173, %v1912
      %v1914 = vpop.f32.mrb[0].mxu0
      %v1915 = vpop.f32.mrb[0].mxu0
      %v1916 = vadd.f32 %v1176, %v1915
      %v1917 = vpop.f32.mrb[0].mxu0
      %1918 = vmatprep.mubr.bf16.mxu0 0
      %1919 = vmatmul.mubr.bf16.gmra.mrb[0].mxu0 %v1467
      %v1920 = vpop.f32.mrb[0].mxu0
      %v1921 = vadd.f32 %v1181, %v1920
      %v1922 = vpop.f32.mrb[0].mxu0
      %v1923 = vpop.f32.mrb[0].mxu0
      %v1924 = vadd.f32 %v1184, %v1923
      %v1925 = vpop.f32.mrb[0].mxu0
      %1926 = vmatprep.mubr.bf16.mxu0 0
      %1927 = vmatmul.mubr.bf16.gmra.mrb[0].mxu0 %v1470
      %v1928 = vpop.f32.mrb[0].mxu0
      %v1929 = vadd.f32 %v1189, %v1928
      %v1930 = vpop.f32.mrb[0].mxu0
      %v1931 = vpop.f32.mrb[0].mxu0
      %v1932 = vadd.f32 %v1192, %v1931
      %v1933 = vpop.f32.mrb[0].mxu0
      %1934 = vmatprep.mubr.bf16.mxu0 0
      %1935 = vmatmul.mubr.bf16.gmra.mrb[0].mxu0 %v1473
      %v1936 = vpop.f32.mrb[0].mxu0
      %v1937 = vadd.f32 %v1197, %v1936
      %v1938 = vpop.f32.mrb[0].mxu0
      %v1939 = vpop.f32.mrb[0].mxu0
      %v1940 = vadd.f32 %v1200, %v1939
      %v1941 = vpop.f32.mrb[0].mxu0
      %1942 = vmatprep.mubr.bf16.mxu0 0
      %1943 = vmatmul.mubr.bf16.gmra.mrb[0].mxu0 %v1476
      %v1944 = vpop.f32.mrb[0].mxu0
      %v1945 = vadd.f32 %v1205, %v1944
      %v1946 = vpop.f32.mrb[0].mxu0
      %v1947 = vpop.f32.mrb[0].mxu0
      %v1948 = vadd.f32 %v1208, %v1947
      %v1949 = vpop.f32.mrb[0].mxu0
      %1950 = vmatprep.mubr.bf16.mxu0 0
      %1951 = vmatmul.mubr.bf16.gmra.mrb[0].mxu0 %v1479
      %v1952 = vpop.f32.mrb[0].mxu0
      %v1953 = vadd.f32 %v1213, %v1952
      %v1954 = vpop.f32.mrb[0].mxu0
      %v1955 = vpop.f32.mrb[0].mxu0
      %v1956 = vadd.f32 %v1216, %v1955
      %v1957 = vpop.f32.mrb[0].mxu0
      %1958 = vmatprep.mubr.bf16.mxu0 0
      %1959 = vmatmul.mubr.bf16.gmra.mrb[0].mxu0 %v1482
      %v1960 = vpop.f32.mrb[0].mxu0
      %v1961 = vadd.f32 %v1221, %v1960
      %v1962 = vpop.f32.mrb[0].mxu0
      %v1963 = vpop.f32.mrb[0].mxu0
      %v1964 = vadd.f32 %v1224, %v1963
      %v1965 = vpop.f32.mrb[0].mxu0
      %1966 = vmatprep.mubr.bf16.mxu0 0
      %1967 = vmatmul.mubr.bf16.gmra.mrb[0].mxu0 %v1485
      %v1968 = vpop.f32.mrb[0].mxu0
      %v1969 = vadd.f32 %v1229, %v1968
      %v1970 = vpop.f32.mrb[0].mxu0
      %v1971 = vpop.f32.mrb[0].mxu0
      %v1972 = vadd.f32 %v1232, %v1971
      %v1973 = vpop.f32.mrb[0].mxu0
      %1974 = vmatprep.mubr.bf16.mxu0 0
      %1975 = vmatmul.mubr.bf16.gmra.mrb[0].mxu0 %v1488
      %v1976 = vpop.f32.mrb[0].mxu0
      %v1977 = vadd.f32 %v1237, %v1976
      %v1978 = vpop.f32.mrb[0].mxu0
      %v1979 = vpop.f32.mrb[0].mxu0
      %v1980 = vadd.f32 %v1240, %v1979
      %v1981 = vpop.f32.mrb[0].mxu0
      %1982 = vmatprep.mubr.bf16.mxu0 0
      %1983 = vmatmul.mubr.bf16.gmra.mrb[0].mxu0 %v1491
      %v1984 = vpop.f32.mrb[0].mxu0
      %v1985 = vadd.f32 %v1245, %v1984
      %v1986 = vpop.f32.mrb[0].mxu0
      %v1987 = vpop.f32.mrb[0].mxu0
      %v1988 = vadd.f32 %v1248, %v1987
      %v1989 = vpop.f32.mrb[0].mxu0
      %1990 = vmatprep.mubr.bf16.mxu0 0
      %1991 = vmatmul.mubr.bf16.gmra.mrb[0].mxu0 %v1494
      %v1992 = vpop.f32.mrb[0].mxu0
      %v1993 = vadd.f32 %v1253, %v1992
      %v1994 = vpop.f32.mrb[0].mxu0
      %v1995 = vpop.f32.mrb[0].mxu0
      %v1996 = vadd.f32 %v1256, %v1995
      %v1997 = vpop.f32.mrb[0].mxu0
      %1998 = vmatprep.mubr.bf16.mxu0 0
      %1999 = vmatmul.mubr.bf16.gmra.mrb[0].mxu0 %v1497
      %v2000 = vpop.f32.mrb[0].mxu0
      %v2001 = vadd.f32 %v1261, %v2000
      %v2002 = vpop.f32.mrb[0].mxu0
      %v2003 = vpop.f32.mrb[0].mxu0
      %v2004 = vadd.f32 %v1264, %v2003
      %v2005 = vpop.f32.mrb[0].mxu0
      %2006 = vmatprep.mubr.bf16.mxu0 0
      %2007 = vmatmul.mubr.bf16.gmra.mrb[0].mxu0 %v1500
      %v2008 = vpop.f32.mrb[0].mxu0
      %v2009 = vadd.f32 %v1269, %v2008
      %v2010 = vpop.f32.mrb[0].mxu0
      %v2011 = vpop.f32.mrb[0].mxu0
      %v2012 = vadd.f32 %v1272, %v2011
      %v2013 = vpop.f32.mrb[0].mxu0
      %2014 = vmatprep.mubr.bf16.mxu0 0
      %2015 = vmatmul.mubr.bf16.gmra.mrb[0].mxu0 %v1503
      %v2016 = vpop.f32.mrb[0].mxu0
      %v2017 = vadd.f32 %v1277, %v2016
      %v2018 = vpop.f32.mrb[0].mxu0
      %v2019 = vpop.f32.mrb[0].mxu0
      %v2020 = vadd.f32 %v1280, %v2019
      %v2021 = vpop.f32.mrb[0].mxu0
      %2022 = vmatprep.mubr.bf16.mxu0 0
      %2023 = vmatmul.mubr.bf16.gmra.mrb[0].mxu0 %v1506
      %v2024 = vpop.f32.mrb[0].mxu0
      %v2025 = vadd.f32 %v1285, %v2024
      %v2026 = vpop.f32.mrb[0].mxu0
      %v2027 = vpop.f32.mrb[0].mxu0
      %v2028 = vadd.f32 %v1288, %v2027
      %v2029 = vpop.f32.mrb[0].mxu0
      %2030 = vmatprep.mubr.bf16.mxu0 0
      %2031 = vmatmul.mubr.bf16.gmra.mrb[0].mxu0 %v1509
      %v2032 = vpop.f32.mrb[0].mxu0
      %v2033 = vadd.f32 %v1293, %v2032
      %v2034 = vpop.f32.mrb[0].mxu0
      %v2035 = vpop.f32.mrb[0].mxu0
      %v2036 = vadd.f32 %v1296, %v2035
      %v2037 = vpop.f32.mrb[0].mxu0
      %2038 = vmatprep.mubr.bf16.mxu0 0
      %2039 = vmatmul.mubr.bf16.gmra.mrb[0].mxu0 %v1512
      %v2040 = vpop.f32.mrb[0].mxu0
      %v2041 = vadd.f32 %v1301, %v2040
      %v2042 = vpop.f32.mrb[0].mxu0
      %v2043 = vpop.f32.mrb[0].mxu0
      %v2044 = vadd.f32 %v1304, %v2043
      %v2045 = vpop.f32.mrb[0].mxu0
      %2046 = vmatprep.mubr.bf16.mxu0 0
      %2047 = vmatmul.mubr.bf16.gmra.mrb[0].mxu0 %v1515
      %v2048 = vpop.f32.mrb[0].mxu0
      %v2049 = vadd.f32 %v1309, %v2048
      %v2050 = vpop.f32.mrb[0].mxu0
      %v2051 = vpop.f32.mrb[0].mxu0
      %v2052 = vadd.f32 %v1312, %v2051
      %v2053 = vpop.f32.mrb[0].mxu0
      %2054 = vmatprep.mubr.bf16.mxu0 0
      %2055 = vmatmul.mubr.bf16.gmra.mrb[0].mxu0 %v1518
      %v2056 = vpop.f32.mrb[0].mxu0
      %v2057 = vadd.f32 %v1317, %v2056
      %v2058 = vpop.f32.mrb[0].mxu0
      %v2059 = vpop.f32.mrb[0].mxu0
      %v2060 = vadd.f32 %v1320, %v2059
      %v2061 = vpop.f32.mrb[0].mxu0
      %2062 = vmatprep.mubr.bf16.mxu0 0
      %2063 = vmatmul.mubr.bf16.gmra.mrb[0].mxu0 %v1521
      %v2064 = vpop.f32.mrb[0].mxu0
      %v2065 = vadd.f32 %v1325, %v2064
      %v2066 = vpop.f32.mrb[0].mxu0
      %v2067 = vpop.f32.mrb[0].mxu0
      %v2068 = vadd.f32 %v1328, %v2067
      %v2069 = vpop.f32.mrb[0].mxu0
      %2070 = vdwg.mxu0
      %v2071 = vld [vmem:[%s192 + $0x2] sm:$0xff]
      %v2072 = vld [vmem:[%s192 + $0xa] sm:$0xff]
      %v2073 = vld [vmem:[%s192 + $0x12] sm:$0xff]
      %v2074 = vld [vmem:[%s192 + $0x1a] sm:$0xff]
      %v2075 = vld [vmem:[%s192 + $0x2a] sm:$0xff]
      %v2076 = vld [vmem:[%s192 + $0x32] sm:$0xff]
      %v2077 = vld [vmem:[%s192 + $0x3a] sm:$0xff]
      %v2078 = vld [vmem:[%s192 + $0x42] sm:$0xff]
      %v2079 = vld [vmem:[%s192 + $0x52] sm:$0xff]
      %v2080 = vld [vmem:[%s192 + $0x5a] sm:$0xff]
      %v2081 = vld [vmem:[%s192 + $0x62] sm:$0xff]
      %v2082 = vld [vmem:[%s192 + $0x6a] sm:$0xff]
      %v2083 = vld [vmem:[%s192 + $0x7a] sm:$0xff]
      %v2084 = vld [vmem:[%s192 + $0x82] sm:$0xff]
      %v2085 = vld [vmem:[%s192 + $0x8a] sm:$0xff]
      %v2086 = vld [vmem:[%s192 + $0x92] sm:$0xff]
      %v2087 = vld [vmem:[%s192 + $0xa2] sm:$0xff]
      %v2088 = vld [vmem:[%s192 + $0xaa] sm:$0xff]
      %v2089 = vld [vmem:[%s192 + $0xb2] sm:$0xff]
      %v2090 = vld [vmem:[%s192 + $0xba] sm:$0xff]
      %v2091 = vld [vmem:[%s192 + $0xca] sm:$0xff]
      %v2092 = vld [vmem:[%s192 + $0xd2] sm:$0xff]
      %v2093 = vld [vmem:[%s192 + $0xda] sm:$0xff]
      %v2094 = vld [vmem:[%s192 + $0xe2] sm:$0xff]
      %v2095 = vld [vmem:[%s192 + $0xf2] sm:$0xff]
      %v2096 = vld [vmem:[%s192 + $0xfa] sm:$0xff]
      %v2097 = vld [vmem:[%s192 + $0x102] sm:$0xff]
      %v2098 = vld [vmem:[%s192 + $0x10a] sm:$0xff]
      %v2099 = vld [vmem:[%s192 + $0x11a] sm:$0xff]
      %v2100 = vld [vmem:[%s192 + $0x122] sm:$0xff]
      %v2101 = vld [vmem:[%s192 + $0x12a] sm:$0xff]
      %v2102 = vld [vmem:[%s192 + $0x132] sm:$0xff]
      %v2103 = vld [vmem:[%s192 + $0x142] sm:$0xff]
      %v2104 = vld [vmem:[%s192 + $0x14a] sm:$0xff]
      %v2105 = vld [vmem:[%s192 + $0x152] sm:$0xff]
      %v2106 = vld [vmem:[%s192 + $0x15a] sm:$0xff]
      %v2107 = vld [vmem:[%s192 + $0x16a] sm:$0xff]
      %v2108 = vld [vmem:[%s192 + $0x172] sm:$0xff]
      %v2109 = vld [vmem:[%s192 + $0x17a] sm:$0xff]
      %v2110 = vld [vmem:[%s192 + $0x182] sm:$0xff]
      %v2111 = vld [vmem:[%s192 + $0x192] sm:$0xff]
      %v2112 = vld [vmem:[%s192 + $0x19a] sm:$0xff]
      %v2113 = vld [vmem:[%s192 + $0x1a2] sm:$0xff]
      %v2114 = vld [vmem:[%s192 + $0x1aa] sm:$0xff]
      %v2115 = vld [vmem:[%s192 + $0x1ba] sm:$0xff]
      %v2116 = vld [vmem:[%s192 + $0x1c2] sm:$0xff]
      %v2117 = vld [vmem:[%s192 + $0x1ca] sm:$0xff]
      %v2118 = vld [vmem:[%s192 + $0x1d2] sm:$0xff]
      %v2119 = vld [vmem:[%s192 + $0x1e2] sm:$0xff]
      %v2120 = vld [vmem:[%s192 + $0x1ea] sm:$0xff]
      %v2121 = vld [vmem:[%s192 + $0x1f2] sm:$0xff]
      %v2122 = vld [vmem:[%s192 + $0x1fa] sm:$0xff]
      %v2123 = vld [vmem:[%s192 + $0x20a] sm:$0xff]
      %v2124 = vld [vmem:[%s192 + $0x212] sm:$0xff]
      %v2125 = vld [vmem:[%s192 + $0x21a] sm:$0xff]
      %v2126 = vld [vmem:[%s192 + $0x222] sm:$0xff]
      %v2127 = vld [vmem:[%s192 + $0x232] sm:$0xff]
      %v2128 = vld [vmem:[%s192 + $0x23a] sm:$0xff]
      %v2129 = vld [vmem:[%s192 + $0x242] sm:$0xff]
      %v2130 = vld [vmem:[%s192 + $0x24a] sm:$0xff]
      %v2131 = vld [vmem:[%s192 + $0x25a] sm:$0xff]
      %v2132 = vld [vmem:[%s192 + $0x262] sm:$0xff]
      %v2133 = vld [vmem:[%s192 + $0x26a] sm:$0xff]
      %v2134 = vld [vmem:[%s192 + $0x272] sm:$0xff]
      %v2135 = vld [vmem:[%s192 + $0x282] sm:$0xff]
      %v2136 = vld [vmem:[%s192 + $0x28a] sm:$0xff]
      %v2137 = vld [vmem:[%s192 + $0x292] sm:$0xff]
      %v2138 = vld [vmem:[%s192 + $0x29a] sm:$0xff]
      %v2139 = vld [vmem:[%s192 + $0x2aa] sm:$0xff]
      %v2140 = vld [vmem:[%s192 + $0x2b2] sm:$0xff]
      %v2141 = vld [vmem:[%s192 + $0x2ba] sm:$0xff]
      %v2142 = vld [vmem:[%s192 + $0x2c2] sm:$0xff]
      %v2143 = vld [vmem:[%s192 + $0x2d2] sm:$0xff]
      %v2144 = vld [vmem:[%s192 + $0x2da] sm:$0xff]
      %v2145 = vld [vmem:[%s192 + $0x2e2] sm:$0xff]
      %v2146 = vld [vmem:[%s192 + $0x2ea] sm:$0xff]
      %v2147 = vld [vmem:[%s192 + $0x2fa] sm:$0xff]
      %v2148 = vld [vmem:[%s192 + $0x302] sm:$0xff]
      %v2149 = vld [vmem:[%s192 + $0x30a] sm:$0xff]
      %v2150 = vld [vmem:[%s192 + $0x312] sm:$0xff]
      %v2151 = vld [vmem:[%s192 + $0x322] sm:$0xff]
      %v2152 = vld [vmem:[%s192 + $0x32a] sm:$0xff]
      %v2153 = vld [vmem:[%s192 + $0x332] sm:$0xff]
      %v2154 = vld [vmem:[%s192 + $0x33a] sm:$0xff]
      %v2155 = vld [vmem:[%s192 + $0x34a] sm:$0xff]
      %v2156 = vld [vmem:[%s192 + $0x352] sm:$0xff]
      %v2157 = vld [vmem:[%s192 + $0x35a] sm:$0xff]
      %v2158 = vld [vmem:[%s192 + $0x362] sm:$0xff]
      %v2159 = vld [vmem:[%s192 + $0x372] sm:$0xff]
      %v2160 = vld [vmem:[%s192 + $0x37a] sm:$0xff]
      %v2161 = vld [vmem:[%s192 + $0x382] sm:$0xff]
      %v2162 = vld [vmem:[%s192 + $0x38a] sm:$0xff]
      %v2163 = vld [vmem:[%s192 + $0x39a] sm:$0xff]
      %v2164 = vld [vmem:[%s192 + $0x3a2] sm:$0xff]
      %v2165 = vld [vmem:[%s192 + $0x3aa] sm:$0xff]
      %v2166 = vld [vmem:[%s192 + $0x3b2] sm:$0xff]
      %v2167 = vld [vmem:[%s192 + $0x3c2] sm:$0xff]
      %v2168 = vld [vmem:[%s192 + $0x3ca] sm:$0xff]
      %v2169 = vld [vmem:[%s192 + $0x3d2] sm:$0xff]
      %v2170 = vld [vmem:[%s192 + $0x3da] sm:$0xff]
      %v2171 = vld [vmem:[%s192 + $0x3ea] sm:$0xff]
      %v2172 = vld [vmem:[%s192 + $0x3f2] sm:$0xff]
      %v2173 = vld [vmem:[%s192 + $0x3fa] sm:$0xff]
      %v2174 = vld [vmem:[%s192 + $0x402] sm:$0xff]
      %v2175 = vld [vmem:[%s192 + $0x412] sm:$0xff]
      %v2176 = vld [vmem:[%s192 + $0x41a] sm:$0xff]
      %v2177 = vld [vmem:[%s192 + $0x422] sm:$0xff]
      %v2178 = vld [vmem:[%s192 + $0x42a] sm:$0xff]
      %v2179 = vld [vmem:[%s192 + $0x43a] sm:$0xff]
      %v2180 = vld [vmem:[%s192 + $0x442] sm:$0xff]
      %v2181 = vld [vmem:[%s192 + $0x44a] sm:$0xff]
      %v2182 = vld [vmem:[%s192 + $0x452] sm:$0xff]
      %v2183 = vld [vmem:[%s192 + $0x462] sm:$0xff]
      %v2184 = vld [vmem:[%s192 + $0x46a] sm:$0xff]
      %v2185 = vld [vmem:[%s192 + $0x472] sm:$0xff]
      %v2186 = vld [vmem:[%s192 + $0x47a] sm:$0xff]
      %v2187 = vld [vmem:[%s192 + $0x48a] sm:$0xff]
      %v2188 = vld [vmem:[%s192 + $0x492] sm:$0xff]
      %v2189 = vld [vmem:[%s192 + $0x49a] sm:$0xff]
      %v2190 = vld [vmem:[%s192 + $0x4a2] sm:$0xff]
      %v2191 = vld [vmem:[%s192 + $0x4b2] sm:$0xff]
      %v2192 = vld [vmem:[%s192 + $0x4ba] sm:$0xff]
      %v2193 = vld [vmem:[%s192 + $0x4c2] sm:$0xff]
      %v2194 = vld [vmem:[%s192 + $0x4ca] sm:$0xff]
      %v2195 = vld [vmem:[%s192 + $0x4da] sm:$0xff]
      %v2196 = vld [vmem:[%s192 + $0x4e2] sm:$0xff]
      %v2197 = vld [vmem:[%s192 + $0x4ea] sm:$0xff]
      %v2198 = vld [vmem:[%s192 + $0x4f2] sm:$0xff]
      %v2199 = vpack.c.bf16 %v2072, %v2071
      %v2200 = vpack.c.bf16 %v2074, %v2073
      %v2201 = vpack.c.bf16 %v2076, %v2075
      %v2202 = vpack.c.bf16 %v2078, %v2077
      %v2203 = vpack.c.bf16 %v2080, %v2079
      %v2204 = vpack.c.bf16 %v2082, %v2081
      %v2205 = vpack.c.bf16 %v2084, %v2083
      %v2206 = vpack.c.bf16 %v2086, %v2085
      %v2207 = vpack.c.bf16 %v2088, %v2087
      %v2208 = vpack.c.bf16 %v2090, %v2089
      %v2209 = vpack.c.bf16 %v2092, %v2091
      %v2210 = vpack.c.bf16 %v2094, %v2093
      %v2211 = vpack.c.bf16 %v2096, %v2095
      %v2212 = vpack.c.bf16 %v2098, %v2097
      %v2213 = vpack.c.bf16 %v2100, %v2099
      %v2214 = vpack.c.bf16 %v2102, %v2101
      %v2215 = vpack.c.bf16 %v2104, %v2103
      %v2216 = vpack.c.bf16 %v2106, %v2105
      %v2217 = vpack.c.bf16 %v2108, %v2107
      %v2218 = vpack.c.bf16 %v2110, %v2109
      %v2219 = vpack.c.bf16 %v2112, %v2111
      %v2220 = vpack.c.bf16 %v2114, %v2113
      %v2221 = vpack.c.bf16 %v2116, %v2115
      %v2222 = vpack.c.bf16 %v2118, %v2117
      %v2223 = vpack.c.bf16 %v2120, %v2119
      %v2224 = vpack.c.bf16 %v2122, %v2121
      %v2225 = vpack.c.bf16 %v2124, %v2123
      %v2226 = vpack.c.bf16 %v2126, %v2125
      %v2227 = vpack.c.bf16 %v2128, %v2127
      %v2228 = vpack.c.bf16 %v2130, %v2129
      %v2229 = vpack.c.bf16 %v2132, %v2131
      %v2230 = vpack.c.bf16 %v2134, %v2133
      %v2231 = vpack.c.bf16 %v2136, %v2135
      %v2232 = vpack.c.bf16 %v2138, %v2137
      %v2233 = vpack.c.bf16 %v2140, %v2139
      %v2234 = vpack.c.bf16 %v2142, %v2141
      %v2235 = vpack.c.bf16 %v2144, %v2143
      %v2236 = vpack.c.bf16 %v2146, %v2145
      %v2237 = vpack.c.bf16 %v2148, %v2147
      %v2238 = vpack.c.bf16 %v2150, %v2149
      %v2239 = vpack.c.bf16 %v2152, %v2151
      %v2240 = vpack.c.bf16 %v2154, %v2153
      %v2241 = vpack.c.bf16 %v2156, %v2155
      %v2242 = vpack.c.bf16 %v2158, %v2157
      %v2243 = vpack.c.bf16 %v2160, %v2159
      %v2244 = vpack.c.bf16 %v2162, %v2161
      %v2245 = vpack.c.bf16 %v2164, %v2163
      %v2246 = vpack.c.bf16 %v2166, %v2165
      %v2247 = vpack.c.bf16 %v2168, %v2167
      %v2248 = vpack.c.bf16 %v2170, %v2169
      %v2249 = vpack.c.bf16 %v2172, %v2171
      %v2250 = vpack.c.bf16 %v2174, %v2173
      %v2251 = vpack.c.bf16 %v2176, %v2175
      %v2252 = vpack.c.bf16 %v2178, %v2177
      %v2253 = vpack.c.bf16 %v2180, %v2179
      %v2254 = vpack.c.bf16 %v2182, %v2181
      %v2255 = vpack.c.bf16 %v2184, %v2183
      %v2256 = vpack.c.bf16 %v2186, %v2185
      %v2257 = vpack.c.bf16 %v2188, %v2187
      %v2258 = vpack.c.bf16 %v2190, %v2189
      %v2259 = vpack.c.bf16 %v2192, %v2191
      %v2260 = vpack.c.bf16 %v2194, %v2193
      %v2261 = vpack.c.bf16 %v2196, %v2195
      %v2262 = vpack.c.bf16 %v2198, %v2197
      %s2263 = scalar_lea.vmem %s1, 4
      %v2264 = vld [vmem:[%s2263] sm:$0x3]
      %v2266 = vsel %vm586, %v2199, 0
      %v2269 = vsel %vm586, %v2200, 0
      %v2272 = vsel %vm586, %v2201, 0
      %v2275 = vsel %vm586, %v2202, 0
      %v2278 = vsel %vm586, %v2203, 0
      %v2281 = vsel %vm586, %v2204, 0
      %v2284 = vsel %vm586, %v2205, 0
      %v2287 = vsel %vm586, %v2206, 0
      %v2290 = vsel %vm586, %v2207, 0
      %v2293 = vsel %vm586, %v2208, 0
      %v2296 = vsel %vm586, %v2209, 0
      %v2299 = vsel %vm586, %v2210, 0
      %v2302 = vsel %vm586, %v2211, 0
      %v2305 = vsel %vm586, %v2212, 0
      %v2308 = vsel %vm586, %v2213, 0
      %v2311 = vsel %vm586, %v2214, 0
      %v2314 = vsel %vm586, %v2215, 0
      %v2317 = vsel %vm586, %v2216, 0
      %v2320 = vsel %vm586, %v2217, 0
      %v2323 = vsel %vm586, %v2218, 0
      %v2326 = vsel %vm586, %v2219, 0
      %v2329 = vsel %vm586, %v2220, 0
      %v2332 = vsel %vm586, %v2221, 0
      %v2335 = vsel %vm586, %v2222, 0
      %v2338 = vsel %vm586, %v2223, 0
      %v2341 = vsel %vm586, %v2224, 0
      %v2344 = vsel %vm586, %v2225, 0
      %v2347 = vsel %vm586, %v2226, 0
      %v2350 = vsel %vm586, %v2227, 0
      %v2353 = vsel %vm586, %v2228, 0
      %v2356 = vsel %vm586, %v2229, 0
      %v2359 = vsel %vm586, %v2230, 0
      %v2362 = vsel %vm586, %v2231, 0
      %v2365 = vsel %vm586, %v2232, 0
      %v2368 = vsel %vm586, %v2233, 0
      %v2371 = vsel %vm586, %v2234, 0
      %v2374 = vsel %vm586, %v2235, 0
      %v2377 = vsel %vm586, %v2236, 0
      %v2380 = vsel %vm586, %v2237, 0
      %v2383 = vsel %vm586, %v2238, 0
      %v2386 = vsel %vm586, %v2239, 0
      %v2389 = vsel %vm586, %v2240, 0
      %v2392 = vsel %vm586, %v2241, 0
      %v2395 = vsel %vm586, %v2242, 0
      %v2398 = vsel %vm586, %v2243, 0
      %v2401 = vsel %vm586, %v2244, 0
      %v2404 = vsel %vm586, %v2245, 0
      %v2407 = vsel %vm586, %v2246, 0
      %v2410 = vsel %vm586, %v2247, 0
      %v2413 = vsel %vm586, %v2248, 0
      %v2416 = vsel %vm586, %v2249, 0
      %v2419 = vsel %vm586, %v2250, 0
      %v2422 = vsel %vm586, %v2251, 0
      %v2425 = vsel %vm586, %v2252, 0
      %v2428 = vsel %vm586, %v2253, 0
      %v2431 = vsel %vm586, %v2254, 0
      %v2434 = vsel %vm586, %v2255, 0
      %v2437 = vsel %vm586, %v2256, 0
      %v2440 = vsel %vm586, %v2257, 0
      %v2443 = vsel %vm586, %v2258, 0
      %v2446 = vsel %vm586, %v2259, 0
      %v2449 = vsel %vm586, %v2260, 0
      %v2452 = vsel %vm586, %v2261, 0
      %v2455 = vsel %vm586, %v2262, 0
      %v2458 = vand.u32 %v2264, %v782
      %2460 = vmatprep.subr.bf16.mxu0 0
      %2461 = vmatpush1.bf16.msra.mxu0 %v2458
      %2462 = vmatprep.subr.bf16.mxu0 0
      %2463 = vmatpush1.bf16.msra.mxu0 0
      %2464 = vmatprep.subr.bf16.mxu0 0
      %2465 = vmatpush1.bf16.msra.mxu0 0
      %2466 = vmatprep.subr.bf16.mxu0 0
      %2467 = vmatpush1.bf16.msra.mxu0 0
      %2468 = vmatprep.subr.bf16.mxu0 0
      %2469 = vmatpush1.bf16.msra.mxu0 0
      %2470 = vmatprep.subr.bf16.mxu0 0
      %2471 = vmatpush1.bf16.msra.mxu0 0
      %2472 = vmatprep.subr.bf16.mxu0 0
      %2473 = vmatpush1.bf16.msra.mxu0 0
      %2474 = vmatprep.subr.bf16.mxu0 0
      %2475 = vmatpush1.bf16.msra.mxu0 0
      %2476 = vmatprep.subr.bf16.mxu0 0
      %2477 = vmatpush1.bf16.msra.mxu0 0
      %2478 = vmatprep.subr.bf16.mxu0 0
      %2479 = vmatpush1.bf16.msra.mxu0 0
      %2480 = vmatprep.subr.bf16.mxu0 0
      %2481 = vmatpush1.bf16.msra.mxu0 0
      %2482 = vmatprep.subr.bf16.mxu0 0
      %2483 = vmatpush1.bf16.msra.mxu0 0
      %2484 = vmatprep.subr.bf16.mxu0 0
      %2485 = vmatpush1.bf16.msra.mxu0 0
      %2486 = vmatprep.subr.bf16.mxu0 0
      %2487 = vmatpush1.bf16.msra.mxu0 0
      %2488 = vmatprep.subr.bf16.mxu0 0
      %2489 = vmatpush1.bf16.msra.mxu0 0
      %2490 = vmatprep.subr.bf16.mxu0 0
      %2491 = vmatpush1.bf16.msra.mxu0 0
      %2492 = vmatprep.mubr.bf16.mxu0 0
      %2493 = vmatmul.mubr.bf16.gmra.mrb[0].mxu0 %v2266
      %v2494 = vpop.f32.mrb[0].mxu0
      %v2495 = vadd.f32 0.0, %v2494
      %v2496 = vpop.f32.mrb[0].mxu0
      %v2497 = vpop.f32.mrb[0].mxu0
      %v2498 = vadd.f32 0.0, %v2497
      %v2499 = vpop.f32.mrb[0].mxu0
      %2500 = vmatprep.mubr.bf16.mxu0 0
      %2501 = vmatmul.mubr.bf16.gmra.mrb[0].mxu0 %v2269
      %v2502 = vpop.f32.mrb[0].mxu0
      %v2503 = vadd.f32 0.0, %v2502
      %v2504 = vpop.f32.mrb[0].mxu0
      %v2505 = vpop.f32.mrb[0].mxu0
      %v2506 = vadd.f32 0.0, %v2505
      %v2507 = vpop.f32.mrb[0].mxu0
      %2508 = vmatprep.mubr.bf16.mxu0 0
      %2509 = vmatmul.mubr.bf16.gmra.mrb[0].mxu0 %v2272
      %v2510 = vpop.f32.mrb[0].mxu0
      %v2511 = vadd.f32 0.0, %v2510
      %v2512 = vpop.f32.mrb[0].mxu0
      %v2513 = vpop.f32.mrb[0].mxu0
      %v2514 = vadd.f32 0.0, %v2513
      %v2515 = vpop.f32.mrb[0].mxu0
      %2516 = vmatprep.mubr.bf16.mxu0 0
      %2517 = vmatmul.mubr.bf16.gmra.mrb[0].mxu0 %v2275
      %v2518 = vpop.f32.mrb[0].mxu0
      %v2519 = vadd.f32 0.0, %v2518
      %v2520 = vpop.f32.mrb[0].mxu0
      %v2521 = vpop.f32.mrb[0].mxu0
      %v2522 = vadd.f32 0.0, %v2521
      %v2523 = vpop.f32.mrb[0].mxu0
      %2524 = vmatprep.mubr.bf16.mxu0 0
      %2525 = vmatmul.mubr.bf16.gmra.mrb[0].mxu0 %v2278
      %v2526 = vpop.f32.mrb[0].mxu0
      %v2527 = vadd.f32 0.0, %v2526
      %v2528 = vpop.f32.mrb[0].mxu0
      %v2529 = vpop.f32.mrb[0].mxu0
      %v2530 = vadd.f32 0.0, %v2529
      %v2531 = vpop.f32.mrb[0].mxu0
      %2532 = vmatprep.mubr.bf16.mxu0 0
      %2533 = vmatmul.mubr.bf16.gmra.mrb[0].mxu0 %v2281
      %v2534 = vpop.f32.mrb[0].mxu0
      %v2535 = vadd.f32 0.0, %v2534
      %v2536 = vpop.f32.mrb[0].mxu0
      %v2537 = vpop.f32.mrb[0].mxu0
      %v2538 = vadd.f32 0.0, %v2537
      %v2539 = vpop.f32.mrb[0].mxu0
      %2540 = vmatprep.mubr.bf16.mxu0 0
      %2541 = vmatmul.mubr.bf16.gmra.mrb[0].mxu0 %v2284
      %v2542 = vpop.f32.mrb[0].mxu0
      %v2543 = vadd.f32 0.0, %v2542
      %v2544 = vpop.f32.mrb[0].mxu0
      %v2545 = vpop.f32.mrb[0].mxu0
      %v2546 = vadd.f32 0.0, %v2545
      %v2547 = vpop.f32.mrb[0].mxu0
      %2548 = vmatprep.mubr.bf16.mxu0 0
      %2549 = vmatmul.mubr.bf16.gmra.mrb[0].mxu0 %v2287
      %v2550 = vpop.f32.mrb[0].mxu0
      %v2551 = vadd.f32 0.0, %v2550
      %v2552 = vpop.f32.mrb[0].mxu0
      %v2553 = vpop.f32.mrb[0].mxu0
      %v2554 = vadd.f32 0.0, %v2553
      %v2555 = vpop.f32.mrb[0].mxu0
      %2556 = vmatprep.mubr.bf16.mxu0 0
      %2557 = vmatmul.mubr.bf16.gmra.mrb[0].mxu0 %v2290
      %v2558 = vpop.f32.mrb[0].mxu0
      %v2559 = vadd.f32 0.0, %v2558
      %v2560 = vpop.f32.mrb[0].mxu0
      %v2561 = vpop.f32.mrb[0].mxu0
      %v2562 = vadd.f32 0.0, %v2561
      %v2563 = vpop.f32.mrb[0].mxu0
      %2564 = vmatprep.mubr.bf16.mxu0 0
      %2565 = vmatmul.mubr.bf16.gmra.mrb[0].mxu0 %v2293
      %v2566 = vpop.f32.mrb[0].mxu0
      %v2567 = vadd.f32 0.0, %v2566
      %v2568 = vpop.f32.mrb[0].mxu0
      %v2569 = vpop.f32.mrb[0].mxu0
      %v2570 = vadd.f32 0.0, %v2569
      %v2571 = vpop.f32.mrb[0].mxu0
      %2572 = vmatprep.mubr.bf16.mxu0 0
      %2573 = vmatmul.mubr.bf16.gmra.mrb[0].mxu0 %v2296
      %v2574 = vpop.f32.mrb[0].mxu0
      %v2575 = vadd.f32 0.0, %v2574
      %v2576 = vpop.f32.mrb[0].mxu0
      %v2577 = vpop.f32.mrb[0].mxu0
      %v2578 = vadd.f32 0.0, %v2577
      %v2579 = vpop.f32.mrb[0].mxu0
      %2580 = vmatprep.mubr.bf16.mxu0 0
      %2581 = vmatmul.mubr.bf16.gmra.mrb[0].mxu0 %v2299
      %v2582 = vpop.f32.mrb[0].mxu0
      %v2583 = vadd.f32 0.0, %v2582
      %v2584 = vpop.f32.mrb[0].mxu0
      %v2585 = vpop.f32.mrb[0].mxu0
      %v2586 = vadd.f32 0.0, %v2585
      %v2587 = vpop.f32.mrb[0].mxu0
      %2588 = vmatprep.mubr.bf16.mxu0 0
      %2589 = vmatmul.mubr.bf16.gmra.mrb[0].mxu0 %v2302
      %v2590 = vpop.f32.mrb[0].mxu0
      %v2591 = vadd.f32 0.0, %v2590
      %v2592 = vpop.f32.mrb[0].mxu0
      %v2593 = vpop.f32.mrb[0].mxu0
      %v2594 = vadd.f32 0.0, %v2593
      %v2595 = vpop.f32.mrb[0].mxu0
      %2596 = vmatprep.mubr.bf16.mxu0 0
      %2597 = vmatmul.mubr.bf16.gmra.mrb[0].mxu0 %v2305
      %v2598 = vpop.f32.mrb[0].mxu0
      %v2599 = vadd.f32 0.0, %v2598
      %v2600 = vpop.f32.mrb[0].mxu0
      %v2601 = vpop.f32.mrb[0].mxu0
      %v2602 = vadd.f32 0.0, %v2601
      %v2603 = vpop.f32.mrb[0].mxu0
      %2604 = vmatprep.mubr.bf16.mxu0 0
      %2605 = vmatmul.mubr.bf16.gmra.mrb[0].mxu0 %v2308
      %v2606 = vpop.f32.mrb[0].mxu0
      %v2607 = vadd.f32 0.0, %v2606
      %v2608 = vpop.f32.mrb[0].mxu0
      %v2609 = vpop.f32.mrb[0].mxu0
      %v2610 = vadd.f32 0.0, %v2609
      %v2611 = vpop.f32.mrb[0].mxu0
      %2612 = vmatprep.mubr.bf16.mxu0 0
      %2613 = vmatmul.mubr.bf16.gmra.mrb[0].mxu0 %v2311
      %v2614 = vpop.f32.mrb[0].mxu0
      %v2615 = vadd.f32 0.0, %v2614
      %v2616 = vpop.f32.mrb[0].mxu0
      %v2617 = vpop.f32.mrb[0].mxu0
      %v2618 = vadd.f32 0.0, %v2617
      %v2619 = vpop.f32.mrb[0].mxu0
      %2620 = vmatprep.mubr.bf16.mxu0 0
      %2621 = vmatmul.mubr.bf16.gmra.mrb[0].mxu0 %v2314
      %v2622 = vpop.f32.mrb[0].mxu0
      %v2623 = vadd.f32 0.0, %v2622
      %v2624 = vpop.f32.mrb[0].mxu0
      %v2625 = vpop.f32.mrb[0].mxu0
      %v2626 = vadd.f32 0.0, %v2625
      %v2627 = vpop.f32.mrb[0].mxu0
      %2628 = vmatprep.mubr.bf16.mxu0 0
      %2629 = vmatmul.mubr.bf16.gmra.mrb[0].mxu0 %v2317
      %v2630 = vpop.f32.mrb[0].mxu0
      %v2631 = vadd.f32 0.0, %v2630
      %v2632 = vpop.f32.mrb[0].mxu0
      %v2633 = vpop.f32.mrb[0].mxu0
      %v2634 = vadd.f32 0.0, %v2633
      %v2635 = vpop.f32.mrb[0].mxu0
      %2636 = vmatprep.mubr.bf16.mxu0 0
      %2637 = vmatmul.mubr.bf16.gmra.mrb[0].mxu0 %v2320
      %v2638 = vpop.f32.mrb[0].mxu0
      %v2639 = vadd.f32 0.0, %v2638
      %v2640 = vpop.f32.mrb[0].mxu0
      %v2641 = vpop.f32.mrb[0].mxu0
      %v2642 = vadd.f32 0.0, %v2641
      %v2643 = vpop.f32.mrb[0].mxu0
      %2644 = vmatprep.mubr.bf16.mxu0 0
      %2645 = vmatmul.mubr.bf16.gmra.mrb[0].mxu0 %v2323
      %v2646 = vpop.f32.mrb[0].mxu0
      %v2647 = vadd.f32 0.0, %v2646
      %v2648 = vpop.f32.mrb[0].mxu0
      %v2649 = vpop.f32.mrb[0].mxu0
      %v2650 = vadd.f32 0.0, %v2649
      %v2651 = vpop.f32.mrb[0].mxu0
      %2652 = vmatprep.mubr.bf16.mxu0 0
      %2653 = vmatmul.mubr.bf16.gmra.mrb[0].mxu0 %v2326
      %v2654 = vpop.f32.mrb[0].mxu0
      %v2655 = vadd.f32 0.0, %v2654
      %v2656 = vpop.f32.mrb[0].mxu0
      %v2657 = vpop.f32.mrb[0].mxu0
      %v2658 = vadd.f32 0.0, %v2657
      %v2659 = vpop.f32.mrb[0].mxu0
      %2660 = vmatprep.mubr.bf16.mxu0 0
      %2661 = vmatmul.mubr.bf16.gmra.mrb[0].mxu0 %v2329
      %v2662 = vpop.f32.mrb[0].mxu0
      %v2663 = vadd.f32 0.0, %v2662
      %v2664 = vpop.f32.mrb[0].mxu0
      %v2665 = vpop.f32.mrb[0].mxu0
      %v2666 = vadd.f32 0.0, %v2665
      %v2667 = vpop.f32.mrb[0].mxu0
      %2668 = vmatprep.mubr.bf16.mxu0 0
      %2669 = vmatmul.mubr.bf16.gmra.mrb[0].mxu0 %v2332
      %v2670 = vpop.f32.mrb[0].mxu0
      %v2671 = vadd.f32 0.0, %v2670
      %v2672 = vpop.f32.mrb[0].mxu0
      %v2673 = vpop.f32.mrb[0].mxu0
      %v2674 = vadd.f32 0.0, %v2673
      %v2675 = vpop.f32.mrb[0].mxu0
      %2676 = vmatprep.mubr.bf16.mxu0 0
      %2677 = vmatmul.mubr.bf16.gmra.mrb[0].mxu0 %v2335
      %v2678 = vpop.f32.mrb[0].mxu0
      %v2679 = vadd.f32 0.0, %v2678
      %v2680 = vpop.f32.mrb[0].mxu0
      %v2681 = vpop.f32.mrb[0].mxu0
      %v2682 = vadd.f32 0.0, %v2681
      %v2683 = vpop.f32.mrb[0].mxu0
      %2684 = vmatprep.mubr.bf16.mxu0 0
      %2685 = vmatmul.mubr.bf16.gmra.mrb[0].mxu0 %v2338
      %v2686 = vpop.f32.mrb[0].mxu0
      %v2687 = vadd.f32 0.0, %v2686
      %v2688 = vpop.f32.mrb[0].mxu0
      %v2689 = vpop.f32.mrb[0].mxu0
      %v2690 = vadd.f32 0.0, %v2689
      %v2691 = vpop.f32.mrb[0].mxu0
      %2692 = vmatprep.mubr.bf16.mxu0 0
      %2693 = vmatmul.mubr.bf16.gmra.mrb[0].mxu0 %v2341
      %v2694 = vpop.f32.mrb[0].mxu0
      %v2695 = vadd.f32 0.0, %v2694
      %v2696 = vpop.f32.mrb[0].mxu0
      %v2697 = vpop.f32.mrb[0].mxu0
      %v2698 = vadd.f32 0.0, %v2697
      %v2699 = vpop.f32.mrb[0].mxu0
      %2700 = vmatprep.mubr.bf16.mxu0 0
      %2701 = vmatmul.mubr.bf16.gmra.mrb[0].mxu0 %v2344
      %v2702 = vpop.f32.mrb[0].mxu0
      %v2703 = vadd.f32 0.0, %v2702
      %v2704 = vpop.f32.mrb[0].mxu0
      %v2705 = vpop.f32.mrb[0].mxu0
      %v2706 = vadd.f32 0.0, %v2705
      %v2707 = vpop.f32.mrb[0].mxu0
      %2708 = vmatprep.mubr.bf16.mxu0 0
      %2709 = vmatmul.mubr.bf16.gmra.mrb[0].mxu0 %v2347
      %v2710 = vpop.f32.mrb[0].mxu0
      %v2711 = vadd.f32 0.0, %v2710
      %v2712 = vpop.f32.mrb[0].mxu0
      %v2713 = vpop.f32.mrb[0].mxu0
      %v2714 = vadd.f32 0.0, %v2713
      %v2715 = vpop.f32.mrb[0].mxu0
      %2716 = vmatprep.mubr.bf16.mxu0 0
      %2717 = vmatmul.mubr.bf16.gmra.mrb[0].mxu0 %v2350
      %v2718 = vpop.f32.mrb[0].mxu0
      %v2719 = vadd.f32 0.0, %v2718
      %v2720 = vpop.f32.mrb[0].mxu0
      %v2721 = vpop.f32.mrb[0].mxu0
      %v2722 = vadd.f32 0.0, %v2721
      %v2723 = vpop.f32.mrb[0].mxu0
      %2724 = vmatprep.mubr.bf16.mxu0 0
      %2725 = vmatmul.mubr.bf16.gmra.mrb[0].mxu0 %v2353
      %v2726 = vpop.f32.mrb[0].mxu0
      %v2727 = vadd.f32 0.0, %v2726
      %v2728 = vpop.f32.mrb[0].mxu0
      %v2729 = vpop.f32.mrb[0].mxu0
      %v2730 = vadd.f32 0.0, %v2729
      %v2731 = vpop.f32.mrb[0].mxu0
      %2732 = vmatprep.mubr.bf16.mxu0 0
      %2733 = vmatmul.mubr.bf16.gmra.mrb[0].mxu0 %v2356
      %v2734 = vpop.f32.mrb[0].mxu0
      %v2735 = vadd.f32 0.0, %v2734
      %v2736 = vpop.f32.mrb[0].mxu0
      %v2737 = vpop.f32.mrb[0].mxu0
      %v2738 = vadd.f32 0.0, %v2737
      %v2739 = vpop.f32.mrb[0].mxu0
      %2740 = vmatprep.mubr.bf16.mxu0 0
      %2741 = vmatmul.mubr.bf16.gmra.mrb[0].mxu0 %v2359
      %v2742 = vpop.f32.mrb[0].mxu0
      %v2743 = vadd.f32 0.0, %v2742
      %v2744 = vpop.f32.mrb[0].mxu0
      %v2745 = vpop.f32.mrb[0].mxu0
      %v2746 = vadd.f32 0.0, %v2745
      %v2747 = vpop.f32.mrb[0].mxu0
      %2748 = vmatprep.mubr.bf16.mxu0 0
      %2749 = vmatmul.mubr.bf16.gmra.mrb[0].mxu0 %v2362
      %v2750 = vpop.f32.mrb[0].mxu0
      %v2751 = vadd.f32 0.0, %v2750
      %v2752 = vpop.f32.mrb[0].mxu0
      %v2753 = vpop.f32.mrb[0].mxu0
      %v2754 = vadd.f32 0.0, %v2753
      %v2755 = vpop.f32.mrb[0].mxu0
      %2756 = vmatprep.mubr.bf16.mxu0 0
      %2757 = vmatmul.mubr.bf16.gmra.mrb[0].mxu0 %v2365
      %v2758 = vpop.f32.mrb[0].mxu0
      %v2759 = vadd.f32 0.0, %v2758
      %v2760 = vpop.f32.mrb[0].mxu0
      %v2761 = vpop.f32.mrb[0].mxu0
      %v2762 = vadd.f32 0.0, %v2761
      %v2763 = vpop.f32.mrb[0].mxu0
      %2764 = vmatprep.mubr.bf16.mxu0 0
      %2765 = vmatmul.mubr.bf16.gmra.mrb[0].mxu0 %v2368
      %v2766 = vpop.f32.mrb[0].mxu0
      %v2767 = vadd.f32 0.0, %v2766
      %v2768 = vpop.f32.mrb[0].mxu0
      %v2769 = vpop.f32.mrb[0].mxu0
      %v2770 = vadd.f32 0.0, %v2769
      %v2771 = vpop.f32.mrb[0].mxu0
      %2772 = vmatprep.mubr.bf16.mxu0 0
      %2773 = vmatmul.mubr.bf16.gmra.mrb[0].mxu0 %v2371
      %v2774 = vpop.f32.mrb[0].mxu0
      %v2775 = vadd.f32 0.0, %v2774
      %v2776 = vpop.f32.mrb[0].mxu0
      %v2777 = vpop.f32.mrb[0].mxu0
      %v2778 = vadd.f32 0.0, %v2777
      %v2779 = vpop.f32.mrb[0].mxu0
      %2780 = vmatprep.mubr.bf16.mxu0 0
      %2781 = vmatmul.mubr.bf16.gmra.mrb[0].mxu0 %v2374
      %v2782 = vpop.f32.mrb[0].mxu0
      %v2783 = vadd.f32 0.0, %v2782
      %v2784 = vpop.f32.mrb[0].mxu0
      %v2785 = vpop.f32.mrb[0].mxu0
      %v2786 = vadd.f32 0.0, %v2785
      %v2787 = vpop.f32.mrb[0].mxu0
      %2788 = vmatprep.mubr.bf16.mxu0 0
      %2789 = vmatmul.mubr.bf16.gmra.mrb[0].mxu0 %v2377
      %v2790 = vpop.f32.mrb[0].mxu0
      %v2791 = vadd.f32 0.0, %v2790
      %v2792 = vpop.f32.mrb[0].mxu0
      %v2793 = vpop.f32.mrb[0].mxu0
      %v2794 = vadd.f32 0.0, %v2793
      %v2795 = vpop.f32.mrb[0].mxu0
      %2796 = vmatprep.mubr.bf16.mxu0 0
      %2797 = vmatmul.mubr.bf16.gmra.mrb[0].mxu0 %v2380
      %v2798 = vpop.f32.mrb[0].mxu0
      %v2799 = vadd.f32 0.0, %v2798
      %v2800 = vpop.f32.mrb[0].mxu0
      %v2801 = vpop.f32.mrb[0].mxu0
      %v2802 = vadd.f32 0.0, %v2801
      %v2803 = vpop.f32.mrb[0].mxu0
      %2804 = vmatprep.mubr.bf16.mxu0 0
      %2805 = vmatmul.mubr.bf16.gmra.mrb[0].mxu0 %v2383
      %v2806 = vpop.f32.mrb[0].mxu0
      %v2807 = vadd.f32 0.0, %v2806
      %v2808 = vpop.f32.mrb[0].mxu0
      %v2809 = vpop.f32.mrb[0].mxu0
      %v2810 = vadd.f32 0.0, %v2809
      %v2811 = vpop.f32.mrb[0].mxu0
      %2812 = vmatprep.mubr.bf16.mxu0 0
      %2813 = vmatmul.mubr.bf16.gmra.mrb[0].mxu0 %v2386
      %v2814 = vpop.f32.mrb[0].mxu0
      %v2815 = vadd.f32 0.0, %v2814
      %v2816 = vpop.f32.mrb[0].mxu0
      %v2817 = vpop.f32.mrb[0].mxu0
      %v2818 = vadd.f32 0.0, %v2817
      %v2819 = vpop.f32.mrb[0].mxu0
      %2820 = vmatprep.mubr.bf16.mxu0 0
      %2821 = vmatmul.mubr.bf16.gmra.mrb[0].mxu0 %v2389
      %v2822 = vpop.f32.mrb[0].mxu0
      %v2823 = vadd.f32 0.0, %v2822
      %v2824 = vpop.f32.mrb[0].mxu0
      %v2825 = vpop.f32.mrb[0].mxu0
      %v2826 = vadd.f32 0.0, %v2825
      %v2827 = vpop.f32.mrb[0].mxu0
      %2828 = vmatprep.mubr.bf16.mxu0 0
      %2829 = vmatmul.mubr.bf16.gmra.mrb[0].mxu0 %v2392
      %v2830 = vpop.f32.mrb[0].mxu0
      %v2831 = vadd.f32 0.0, %v2830
      %v2832 = vpop.f32.mrb[0].mxu0
      %v2833 = vpop.f32.mrb[0].mxu0
      %v2834 = vadd.f32 0.0, %v2833
      %v2835 = vpop.f32.mrb[0].mxu0
      %2836 = vmatprep.mubr.bf16.mxu0 0
      %2837 = vmatmul.mubr.bf16.gmra.mrb[0].mxu0 %v2395
      %v2838 = vpop.f32.mrb[0].mxu0
      %v2839 = vadd.f32 0.0, %v2838
      %v2840 = vpop.f32.mrb[0].mxu0
      %v2841 = vpop.f32.mrb[0].mxu0
      %v2842 = vadd.f32 0.0, %v2841
      %v2843 = vpop.f32.mrb[0].mxu0
      %2844 = vmatprep.mubr.bf16.mxu0 0
      %2845 = vmatmul.mubr.bf16.gmra.mrb[0].mxu0 %v2398
      %v2846 = vpop.f32.mrb[0].mxu0
      %v2847 = vadd.f32 0.0, %v2846
      %v2848 = vpop.f32.mrb[0].mxu0
      %v2849 = vpop.f32.mrb[0].mxu0
      %v2850 = vadd.f32 0.0, %v2849
      %v2851 = vpop.f32.mrb[0].mxu0
      %2852 = vmatprep.mubr.bf16.mxu0 0
      %2853 = vmatmul.mubr.bf16.gmra.mrb[0].mxu0 %v2401
      %v2854 = vpop.f32.mrb[0].mxu0
      %v2855 = vadd.f32 0.0, %v2854
      %v2856 = vpop.f32.mrb[0].mxu0
      %v2857 = vpop.f32.mrb[0].mxu0
      %v2858 = vadd.f32 0.0, %v2857
      %v2859 = vpop.f32.mrb[0].mxu0
      %2860 = vmatprep.mubr.bf16.mxu0 0
      %2861 = vmatmul.mubr.bf16.gmra.mrb[0].mxu0 %v2404
      %v2862 = vpop.f32.mrb[0].mxu0
      %v2863 = vadd.f32 0.0, %v2862
      %v2864 = vpop.f32.mrb[0].mxu0
      %v2865 = vpop.f32.mrb[0].mxu0
      %v2866 = vadd.f32 0.0, %v2865
      %v2867 = vpop.f32.mrb[0].mxu0
      %2868 = vmatprep.mubr.bf16.mxu0 0
      %2869 = vmatmul.mubr.bf16.gmra.mrb[0].mxu0 %v2407
      %v2870 = vpop.f32.mrb[0].mxu0
      %v2871 = vadd.f32 0.0, %v2870
      %v2872 = vpop.f32.mrb[0].mxu0
      %v2873 = vpop.f32.mrb[0].mxu0
      %v2874 = vadd.f32 0.0, %v2873
      %v2875 = vpop.f32.mrb[0].mxu0
      %2876 = vmatprep.mubr.bf16.mxu0 0
      %2877 = vmatmul.mubr.bf16.gmra.mrb[0].mxu0 %v2410
      %v2878 = vpop.f32.mrb[0].mxu0
      %v2879 = vadd.f32 0.0, %v2878
      %v2880 = vpop.f32.mrb[0].mxu0
      %v2881 = vpop.f32.mrb[0].mxu0
      %v2882 = vadd.f32 0.0, %v2881
      %v2883 = vpop.f32.mrb[0].mxu0
      %2884 = vmatprep.mubr.bf16.mxu0 0
      %2885 = vmatmul.mubr.bf16.gmra.mrb[0].mxu0 %v2413
      %v2886 = vpop.f32.mrb[0].mxu0
      %v2887 = vadd.f32 0.0, %v2886
      %v2888 = vpop.f32.mrb[0].mxu0
      %v2889 = vpop.f32.mrb[0].mxu0
      %v2890 = vadd.f32 0.0, %v2889
      %v2891 = vpop.f32.mrb[0].mxu0
      %2892 = vmatprep.mubr.bf16.mxu0 0
      %2893 = vmatmul.mubr.bf16.gmra.mrb[0].mxu0 %v2416
      %v2894 = vpop.f32.mrb[0].mxu0
      %v2895 = vadd.f32 0.0, %v2894
      %v2896 = vpop.f32.mrb[0].mxu0
      %v2897 = vpop.f32.mrb[0].mxu0
      %v2898 = vadd.f32 0.0, %v2897
      %v2899 = vpop.f32.mrb[0].mxu0
      %2900 = vmatprep.mubr.bf16.mxu0 0
      %2901 = vmatmul.mubr.bf16.gmra.mrb[0].mxu0 %v2419
      %v2902 = vpop.f32.mrb[0].mxu0
      %v2903 = vadd.f32 0.0, %v2902
      %v2904 = vpop.f32.mrb[0].mxu0
      %v2905 = vpop.f32.mrb[0].mxu0
      %v2906 = vadd.f32 0.0, %v2905
      %v2907 = vpop.f32.mrb[0].mxu0
      %2908 = vmatprep.mubr.bf16.mxu0 0
      %2909 = vmatmul.mubr.bf16.gmra.mrb[0].mxu0 %v2422
      %v2910 = vpop.f32.mrb[0].mxu0
      %v2911 = vadd.f32 0.0, %v2910
      %v2912 = vpop.f32.mrb[0].mxu0
      %v2913 = vpop.f32.mrb[0].mxu0
      %v2914 = vadd.f32 0.0, %v2913
      %v2915 = vpop.f32.mrb[0].mxu0
      %2916 = vmatprep.mubr.bf16.mxu0 0
      %2917 = vmatmul.mubr.bf16.gmra.mrb[0].mxu0 %v2425
      %v2918 = vpop.f32.mrb[0].mxu0
      %v2919 = vadd.f32 0.0, %v2918
      %v2920 = vpop.f32.mrb[0].mxu0
      %v2921 = vpop.f32.mrb[0].mxu0
      %v2922 = vadd.f32 0.0, %v2921
      %v2923 = vpop.f32.mrb[0].mxu0
      %2924 = vmatprep.mubr.bf16.mxu0 0
      %2925 = vmatmul.mubr.bf16.gmra.mrb[0].mxu0 %v2428
      %v2926 = vpop.f32.mrb[0].mxu0
      %v2927 = vadd.f32 0.0, %v2926
      %v2928 = vpop.f32.mrb[0].mxu0
      %v2929 = vpop.f32.mrb[0].mxu0
      %v2930 = vadd.f32 0.0, %v2929
      %v2931 = vpop.f32.mrb[0].mxu0
      %2932 = vmatprep.mubr.bf16.mxu0 0
      %2933 = vmatmul.mubr.bf16.gmra.mrb[0].mxu0 %v2431
      %v2934 = vpop.f32.mrb[0].mxu0
      %v2935 = vadd.f32 0.0, %v2934
      %v2936 = vpop.f32.mrb[0].mxu0
      %v2937 = vpop.f32.mrb[0].mxu0
      %v2938 = vadd.f32 0.0, %v2937
      %v2939 = vpop.f32.mrb[0].mxu0
      %2940 = vmatprep.mubr.bf16.mxu0 0
      %2941 = vmatmul.mubr.bf16.gmra.mrb[0].mxu0 %v2434
      %v2942 = vpop.f32.mrb[0].mxu0
      %v2943 = vadd.f32 0.0, %v2942
      %v2944 = vpop.f32.mrb[0].mxu0
      %v2945 = vpop.f32.mrb[0].mxu0
      %v2946 = vadd.f32 0.0, %v2945
      %v2947 = vpop.f32.mrb[0].mxu0
      %2948 = vmatprep.mubr.bf16.mxu0 0
      %2949 = vmatmul.mubr.bf16.gmra.mrb[0].mxu0 %v2437
      %v2950 = vpop.f32.mrb[0].mxu0
      %v2951 = vadd.f32 0.0, %v2950
      %v2952 = vpop.f32.mrb[0].mxu0
      %v2953 = vpop.f32.mrb[0].mxu0
      %v2954 = vadd.f32 0.0, %v2953
      %v2955 = vpop.f32.mrb[0].mxu0
      %2956 = vmatprep.mubr.bf16.mxu0 0
      %2957 = vmatmul.mubr.bf16.gmra.mrb[0].mxu0 %v2440
      %v2958 = vpop.f32.mrb[0].mxu0
      %v2959 = vadd.f32 0.0, %v2958
      %v2960 = vpop.f32.mrb[0].mxu0
      %v2961 = vpop.f32.mrb[0].mxu0
      %v2962 = vadd.f32 0.0, %v2961
      %v2963 = vpop.f32.mrb[0].mxu0
      %2964 = vmatprep.mubr.bf16.mxu0 0
      %2965 = vmatmul.mubr.bf16.gmra.mrb[0].mxu0 %v2443
      %v2966 = vpop.f32.mrb[0].mxu0
      %v2967 = vadd.f32 0.0, %v2966
      %v2968 = vpop.f32.mrb[0].mxu0
      %v2969 = vpop.f32.mrb[0].mxu0
      %v2970 = vadd.f32 0.0, %v2969
      %v2971 = vpop.f32.mrb[0].mxu0
      %2972 = vmatprep.mubr.bf16.mxu0 0
      %2973 = vmatmul.mubr.bf16.gmra.mrb[0].mxu0 %v2446
      %v2974 = vpop.f32.mrb[0].mxu0
      %v2975 = vadd.f32 0.0, %v2974
      %v2976 = vpop.f32.mrb[0].mxu0
      %v2977 = vpop.f32.mrb[0].mxu0
      %v2978 = vadd.f32 0.0, %v2977
      %v2979 = vpop.f32.mrb[0].mxu0
      %2980 = vmatprep.mubr.bf16.mxu0 0
      %2981 = vmatmul.mubr.bf16.gmra.mrb[0].mxu0 %v2449
      %v2982 = vpop.f32.mrb[0].mxu0
      %v2983 = vadd.f32 0.0, %v2982
      %v2984 = vpop.f32.mrb[0].mxu0
      %v2985 = vpop.f32.mrb[0].mxu0
      %v2986 = vadd.f32 0.0, %v2985
      %v2987 = vpop.f32.mrb[0].mxu0
      %2988 = vmatprep.mubr.bf16.mxu0 0
      %2989 = vmatmul.mubr.bf16.gmra.mrb[0].mxu0 %v2452
      %v2990 = vpop.f32.mrb[0].mxu0
      %v2991 = vadd.f32 0.0, %v2990
      %v2992 = vpop.f32.mrb[0].mxu0
      %v2993 = vpop.f32.mrb[0].mxu0
      %v2994 = vadd.f32 0.0, %v2993
      %v2995 = vpop.f32.mrb[0].mxu0
      %2996 = vmatprep.mubr.bf16.mxu0 0
      %2997 = vmatmul.mubr.bf16.gmra.mrb[0].mxu0 %v2455
      %v2998 = vpop.f32.mrb[0].mxu0
      %v2999 = vadd.f32 0.0, %v2998
      %v3000 = vpop.f32.mrb[0].mxu0
      %v3001 = vpop.f32.mrb[0].mxu0
      %v3002 = vadd.f32 0.0, %v3001
      %v3003 = vpop.f32.mrb[0].mxu0
      %3004 = vdwg.mxu0
      %v3005 = vadd.f32 %v1561, %v2495
      %v3006 = vadd.f32 %v1564, %v2498
      %v3007 = vadd.f32 %v1569, %v2503
      %v3008 = vadd.f32 %v1572, %v2506
      %v3009 = vadd.f32 %v1577, %v2511
      %v3010 = vadd.f32 %v1580, %v2514
      %v3011 = vadd.f32 %v1585, %v2519
      %v3012 = vadd.f32 %v1588, %v2522
      %v3013 = vadd.f32 %v1593, %v2527
      %v3014 = vadd.f32 %v1596, %v2530
      %v3015 = vadd.f32 %v1601, %v2535
      %v3016 = vadd.f32 %v1604, %v2538
      %v3017 = vadd.f32 %v1609, %v2543
      %v3018 = vadd.f32 %v1612, %v2546
      %v3019 = vadd.f32 %v1617, %v2551
      %v3020 = vadd.f32 %v1620, %v2554
      %v3021 = vadd.f32 %v1625, %v2559
      %v3022 = vadd.f32 %v1628, %v2562
      %v3023 = vadd.f32 %v1633, %v2567
      %v3024 = vadd.f32 %v1636, %v2570
      %v3025 = vadd.f32 %v1641, %v2575
      %v3026 = vadd.f32 %v1644, %v2578
      %v3027 = vadd.f32 %v1649, %v2583
      %v3028 = vadd.f32 %v1652, %v2586
      %v3029 = vadd.f32 %v1657, %v2591
      %v3030 = vadd.f32 %v1660, %v2594
      %v3031 = vadd.f32 %v1665, %v2599
      %v3032 = vadd.f32 %v1668, %v2602
      %v3033 = vadd.f32 %v1673, %v2607
      %v3034 = vadd.f32 %v1676, %v2610
      %v3035 = vadd.f32 %v1681, %v2615
      %v3036 = vadd.f32 %v1684, %v2618
      %v3037 = vadd.f32 %v1689, %v2623
      %v3038 = vadd.f32 %v1692, %v2626
      %v3039 = vadd.f32 %v1697, %v2631
      %v3040 = vadd.f32 %v1700, %v2634
      %v3041 = vadd.f32 %v1705, %v2639
      %v3042 = vadd.f32 %v1708, %v2642
      %v3043 = vadd.f32 %v1713, %v2647
      %v3044 = vadd.f32 %v1716, %v2650
      %v3045 = vadd.f32 %v1721, %v2655
      %v3046 = vadd.f32 %v1724, %v2658
      %v3047 = vadd.f32 %v1729, %v2663
      %v3048 = vadd.f32 %v1732, %v2666
      %v3049 = vadd.f32 %v1737, %v2671
      %v3050 = vadd.f32 %v1740, %v2674
      %v3051 = vadd.f32 %v1745, %v2679
      %v3052 = vadd.f32 %v1748, %v2682
      %v3053 = vadd.f32 %v1753, %v2687
      %v3054 = vadd.f32 %v1756, %v2690
      %v3055 = vadd.f32 %v1761, %v2695
      %v3056 = vadd.f32 %v1764, %v2698
      %v3057 = vadd.f32 %v1769, %v2703
      %v3058 = vadd.f32 %v1772, %v2706
      %v3059 = vadd.f32 %v1777, %v2711
      %v3060 = vadd.f32 %v1780, %v2714
      %v3061 = vadd.f32 %v1785, %v2719
      %v3062 = vadd.f32 %v1788, %v2722
      %v3063 = vadd.f32 %v1793, %v2727
      %v3064 = vadd.f32 %v1796, %v2730
      %v3065 = vadd.f32 %v1801, %v2735
      %v3066 = vadd.f32 %v1804, %v2738
      %v3067 = vadd.f32 %v1809, %v2743
      %v3068 = vadd.f32 %v1812, %v2746
      %v3069 = vadd.f32 %v1817, %v2751
      %v3070 = vadd.f32 %v1820, %v2754
      %v3071 = vadd.f32 %v1825, %v2759
      %v3072 = vadd.f32 %v1828, %v2762
      %v3073 = vadd.f32 %v1833, %v2767
      %v3074 = vadd.f32 %v1836, %v2770
      %v3075 = vadd.f32 %v1841, %v2775
      %v3076 = vadd.f32 %v1844, %v2778
      %v3077 = vadd.f32 %v1849, %v2783
      %v3078 = vadd.f32 %v1852, %v2786
      %v3079 = vadd.f32 %v1857, %v2791
      %v3080 = vadd.f32 %v1860, %v2794
      %v3081 = vadd.f32 %v1865, %v2799
      %v3082 = vadd.f32 %v1868, %v2802
      %v3083 = vadd.f32 %v1873, %v2807
      %v3084 = vadd.f32 %v1876, %v2810
      %v3085 = vadd.f32 %v1881, %v2815
      %v3086 = vadd.f32 %v1884, %v2818
      %v3087 = vadd.f32 %v1889, %v2823
      %v3088 = vadd.f32 %v1892, %v2826
      %v3089 = vadd.f32 %v1897, %v2831
      %v3090 = vadd.f32 %v1900, %v2834
      %v3091 = vadd.f32 %v1905, %v2839
      %v3092 = vadd.f32 %v1908, %v2842
      %v3093 = vadd.f32 %v1913, %v2847
      %v3094 = vadd.f32 %v1916, %v2850
      %v3095 = vadd.f32 %v1921, %v2855
      %v3096 = vadd.f32 %v1924, %v2858
      %v3097 = vadd.f32 %v1929, %v2863
      %v3098 = vadd.f32 %v1932, %v2866
      %v3099 = vadd.f32 %v1937, %v2871
      %v3100 = vadd.f32 %v1940, %v2874
      %v3101 = vadd.f32 %v1945, %v2879
      %v3102 = vadd.f32 %v1948, %v2882
      %v3103 = vadd.f32 %v1953, %v2887
      %v3104 = vadd.f32 %v1956, %v2890
      %v3105 = vadd.f32 %v1961, %v2895
      %v3106 = vadd.f32 %v1964, %v2898
      %v3107 = vadd.f32 %v1969, %v2903
      %v3108 = vadd.f32 %v1972, %v2906
      %v3109 = vadd.f32 %v1977, %v2911
      %v3110 = vadd.f32 %v1980, %v2914
      %v3111 = vadd.f32 %v1985, %v2919
      %v3112 = vadd.f32 %v1988, %v2922
      %v3113 = vadd.f32 %v1993, %v2927
      %v3114 = vadd.f32 %v1996, %v2930
      %v3115 = vadd.f32 %v2001, %v2935
      %v3116 = vadd.f32 %v2004, %v2938
      %v3117 = vadd.f32 %v2009, %v2943
      %v3118 = vadd.f32 %v2012, %v2946
      %v3119 = vadd.f32 %v2017, %v2951
      %v3120 = vadd.f32 %v2020, %v2954
      %v3121 = vadd.f32 %v2025, %v2959
      %v3122 = vadd.f32 %v2028, %v2962
      %v3123 = vadd.f32 %v2033, %v2967
      %v3124 = vadd.f32 %v2036, %v2970
      %v3125 = vadd.f32 %v2041, %v2975
      %v3126 = vadd.f32 %v2044, %v2978
      %v3127 = vadd.f32 %v2049, %v2983
      %v3128 = vadd.f32 %v2052, %v2986
      %v3129 = vadd.f32 %v2057, %v2991
      %v3130 = vadd.f32 %v2060, %v2994
      %v3131 = vadd.f32 %v2065, %v2999
      %v3132 = vadd.f32 %v2068, %v3002
      %s3133 = scalar_lea.vmem %s192, 40
      %v3134 = vld [vmem:[%s3133] sm:$0xff]
      %v3135 = vld [vmem:[%s3133 + $0x8] sm:$0xff]
      %v3136 = vld [vmem:[%s3133 + $0x10] sm:$0xff]
      %v3137 = vld [vmem:[%s3133 + $0x18] sm:$0xff]
      %v3138 = vld [vmem:[%s3133 + $0x28] sm:$0xff]
      %v3139 = vld [vmem:[%s3133 + $0x30] sm:$0xff]
      %v3140 = vld [vmem:[%s3133 + $0x38] sm:$0xff]
      %v3141 = vld [vmem:[%s3133 + $0x40] sm:$0xff]
      %v3142 = vld [vmem:[%s3133 + $0x50] sm:$0xff]
      %v3143 = vld [vmem:[%s3133 + $0x58] sm:$0xff]
      %v3144 = vld [vmem:[%s3133 + $0x60] sm:$0xff]
      %v3145 = vld [vmem:[%s3133 + $0x68] sm:$0xff]
      %v3146 = vld [vmem:[%s3133 + $0x78] sm:$0xff]
      %v3147 = vld [vmem:[%s3133 + $0x80] sm:$0xff]
      %v3148 = vld [vmem:[%s3133 + $0x88] sm:$0xff]
      %v3149 = vld [vmem:[%s3133 + $0x90] sm:$0xff]
      %v3150 = vld [vmem:[%s3133 + $0xa0] sm:$0xff]
      %v3151 = vld [vmem:[%s3133 + $0xa8] sm:$0xff]
      %v3152 = vld [vmem:[%s3133 + $0xb0] sm:$0xff]
      %v3153 = vld [vmem:[%s3133 + $0xb8] sm:$0xff]
      %v3154 = vld [vmem:[%s3133 + $0xc8] sm:$0xff]
      %v3155 = vld [vmem:[%s3133 + $0xd0] sm:$0xff]
      %v3156 = vld [vmem:[%s3133 + $0xd8] sm:$0xff]
      %v3157 = vld [vmem:[%s3133 + $0xe0] sm:$0xff]
      %v3158 = vld [vmem:[%s3133 + $0xf0] sm:$0xff]
      %v3159 = vld [vmem:[%s3133 + $0xf8] sm:$0xff]
      %v3160 = vld [vmem:[%s3133 + $0x100] sm:$0xff]
      %v3161 = vld [vmem:[%s3133 + $0x108] sm:$0xff]
      %v3162 = vld [vmem:[%s3133 + $0x118] sm:$0xff]
      %v3163 = vld [vmem:[%s3133 + $0x120] sm:$0xff]
      %v3164 = vld [vmem:[%s3133 + $0x128] sm:$0xff]
      %v3165 = vld [vmem:[%s3133 + $0x130] sm:$0xff]
      %v3166 = vld [vmem:[%s3133 + $0x140] sm:$0xff]
      %v3167 = vld [vmem:[%s3133 + $0x148] sm:$0xff]
      %v3168 = vld [vmem:[%s3133 + $0x150] sm:$0xff]
      %v3169 = vld [vmem:[%s3133 + $0x158] sm:$0xff]
      %v3170 = vld [vmem:[%s3133 + $0x168] sm:$0xff]
      %v3171 = vld [vmem:[%s3133 + $0x170] sm:$0xff]
      %v3172 = vld [vmem:[%s3133 + $0x178] sm:$0xff]
      %v3173 = vld [vmem:[%s3133 + $0x180] sm:$0xff]
      %v3174 = vld [vmem:[%s3133 + $0x190] sm:$0xff]
      %v3175 = vld [vmem:[%s3133 + $0x198] sm:$0xff]
      %v3176 = vld [vmem:[%s3133 + $0x1a0] sm:$0xff]
      %v3177 = vld [vmem:[%s3133 + $0x1a8] sm:$0xff]
      %v3178 = vld [vmem:[%s3133 + $0x1b8] sm:$0xff]
      %v3179 = vld [vmem:[%s3133 + $0x1c0] sm:$0xff]
      %v3180 = vld [vmem:[%s3133 + $0x1c8] sm:$0xff]
      %v3181 = vld [vmem:[%s3133 + $0x1d0] sm:$0xff]
      %v3182 = vld [vmem:[%s3133 + $0x1e0] sm:$0xff]
      %v3183 = vld [vmem:[%s3133 + $0x1e8] sm:$0xff]
      %v3184 = vld [vmem:[%s3133 + $0x1f0] sm:$0xff]
      %v3185 = vld [vmem:[%s3133 + $0x1f8] sm:$0xff]
      %v3186 = vld [vmem:[%s3133 + $0x208] sm:$0xff]
      %v3187 = vld [vmem:[%s3133 + $0x210] sm:$0xff]
      %v3188 = vld [vmem:[%s3133 + $0x218] sm:$0xff]
      %v3189 = vld [vmem:[%s3133 + $0x220] sm:$0xff]
      %v3190 = vld [vmem:[%s3133 + $0x230] sm:$0xff]
      %v3191 = vld [vmem:[%s3133 + $0x238] sm:$0xff]
      %v3192 = vld [vmem:[%s3133 + $0x240] sm:$0xff]
      %v3193 = vld [vmem:[%s3133 + $0x248] sm:$0xff]
      %v3194 = vld [vmem:[%s3133 + $0x258] sm:$0xff]
      %v3195 = vld [vmem:[%s3133 + $0x260] sm:$0xff]
      %v3196 = vld [vmem:[%s3133 + $0x268] sm:$0xff]
      %v3197 = vld [vmem:[%s3133 + $0x270] sm:$0xff]
      %v3198 = vld [vmem:[%s3133 + $0x280] sm:$0xff]
      %v3199 = vld [vmem:[%s3133 + $0x288] sm:$0xff]
      %v3200 = vld [vmem:[%s3133 + $0x290] sm:$0xff]
      %v3201 = vld [vmem:[%s3133 + $0x298] sm:$0xff]
      %v3202 = vld [vmem:[%s3133 + $0x2a8] sm:$0xff]
      %v3203 = vld [vmem:[%s3133 + $0x2b0] sm:$0xff]
      %v3204 = vld [vmem:[%s3133 + $0x2b8] sm:$0xff]
      %v3205 = vld [vmem:[%s3133 + $0x2c0] sm:$0xff]
      %v3206 = vld [vmem:[%s3133 + $0x2d0] sm:$0xff]
      %v3207 = vld [vmem:[%s3133 + $0x2d8] sm:$0xff]
      %v3208 = vld [vmem:[%s3133 + $0x2e0] sm:$0xff]
      %v3209 = vld [vmem:[%s3133 + $0x2e8] sm:$0xff]
      %v3210 = vld [vmem:[%s3133 + $0x2f8] sm:$0xff]
      %v3211 = vld [vmem:[%s3133 + $0x300] sm:$0xff]
      %v3212 = vld [vmem:[%s3133 + $0x308] sm:$0xff]
      %v3213 = vld [vmem:[%s3133 + $0x310] sm:$0xff]
      %v3214 = vld [vmem:[%s3133 + $0x320] sm:$0xff]
      %v3215 = vld [vmem:[%s3133 + $0x328] sm:$0xff]
      %v3216 = vld [vmem:[%s3133 + $0x330] sm:$0xff]
      %v3217 = vld [vmem:[%s3133 + $0x338] sm:$0xff]
      %v3218 = vld [vmem:[%s3133 + $0x348] sm:$0xff]
      %v3219 = vld [vmem:[%s3133 + $0x350] sm:$0xff]
      %v3220 = vld [vmem:[%s3133 + $0x358] sm:$0xff]
      %v3221 = vld [vmem:[%s3133 + $0x360] sm:$0xff]
      %v3222 = vld [vmem:[%s3133 + $0x370] sm:$0xff]
      %v3223 = vld [vmem:[%s3133 + $0x378] sm:$0xff]
      %v3224 = vld [vmem:[%s3133 + $0x380] sm:$0xff]
      %v3225 = vld [vmem:[%s3133 + $0x388] sm:$0xff]
      %v3226 = vld [vmem:[%s3133 + $0x398] sm:$0xff]
      %v3227 = vld [vmem:[%s3133 + $0x3a0] sm:$0xff]
      %v3228 = vld [vmem:[%s3133 + $0x3a8] sm:$0xff]
      %v3229 = vld [vmem:[%s3133 + $0x3b0] sm:$0xff]
      %v3230 = vld [vmem:[%s3133 + $0x3c0] sm:$0xff]
      %v3231 = vld [vmem:[%s3133 + $0x3c8] sm:$0xff]
      %v3232 = vld [vmem:[%s3133 + $0x3d0] sm:$0xff]
      %v3233 = vld [vmem:[%s3133 + $0x3d8] sm:$0xff]
      %v3234 = vld [vmem:[%s3133 + $0x3e8] sm:$0xff]
      %v3235 = vld [vmem:[%s3133 + $0x3f0] sm:$0xff]
      %v3236 = vld [vmem:[%s3133 + $0x3f8] sm:$0xff]
      %v3237 = vld [vmem:[%s3133 + $0x400] sm:$0xff]
      %v3238 = vld [vmem:[%s3133 + $0x410] sm:$0xff]
      %v3239 = vld [vmem:[%s3133 + $0x418] sm:$0xff]
      %v3240 = vld [vmem:[%s3133 + $0x420] sm:$0xff]
      %v3241 = vld [vmem:[%s3133 + $0x428] sm:$0xff]
      %v3242 = vld [vmem:[%s3133 + $0x438] sm:$0xff]
      %v3243 = vld [vmem:[%s3133 + $0x440] sm:$0xff]
      %v3244 = vld [vmem:[%s3133 + $0x448] sm:$0xff]
      %v3245 = vld [vmem:[%s3133 + $0x450] sm:$0xff]
      %v3246 = vld [vmem:[%s3133 + $0x460] sm:$0xff]
      %v3247 = vld [vmem:[%s3133 + $0x468] sm:$0xff]
      %v3248 = vld [vmem:[%s3133 + $0x470] sm:$0xff]
      %v3249 = vld [vmem:[%s3133 + $0x478] sm:$0xff]
      %v3250 = vld [vmem:[%s3133 + $0x488] sm:$0xff]
      %v3251 = vld [vmem:[%s3133 + $0x490] sm:$0xff]
      %v3252 = vld [vmem:[%s3133 + $0x498] sm:$0xff]
      %v3253 = vld [vmem:[%s3133 + $0x4a0] sm:$0xff]
      %v3254 = vld [vmem:[%s3133 + $0x4b0] sm:$0xff]
      %v3255 = vld [vmem:[%s3133 + $0x4b8] sm:$0xff]
      %v3256 = vld [vmem:[%s3133 + $0x4c0] sm:$0xff]
      %v3257 = vld [vmem:[%s3133 + $0x4c8] sm:$0xff]
      %v3258 = vld [vmem:[%s3133 + $0x4d8] sm:$0xff]
      %v3259 = vld [vmem:[%s3133 + $0x4e0] sm:$0xff]
      %v3260 = vld [vmem:[%s3133 + $0x4e8] sm:$0xff]
      %v3261 = vld [vmem:[%s3133 + $0x4f0] sm:$0xff]
      %v3262 = vpack.c.bf16 %v3135, %v3134
      %v3263 = vpack.c.bf16 %v3137, %v3136
      %v3264 = vpack.c.bf16 %v3139, %v3138
      %v3265 = vpack.c.bf16 %v3141, %v3140
      %v3266 = vpack.c.bf16 %v3143, %v3142
      %v3267 = vpack.c.bf16 %v3145, %v3144
      %v3268 = vpack.c.bf16 %v3147, %v3146
      %v3269 = vpack.c.bf16 %v3149, %v3148
      %v3270 = vpack.c.bf16 %v3151, %v3150
      %v3271 = vpack.c.bf16 %v3153, %v3152
      %v3272 = vpack.c.bf16 %v3155, %v3154
      %v3273 = vpack.c.bf16 %v3157, %v3156
      %v3274 = vpack.c.bf16 %v3159, %v3158
      %v3275 = vpack.c.bf16 %v3161, %v3160
      %v3276 = vpack.c.bf16 %v3163, %v3162
      %v3277 = vpack.c.bf16 %v3165, %v3164
      %v3278 = vpack.c.bf16 %v3167, %v3166
      %v3279 = vpack.c.bf16 %v3169, %v3168
      %v3280 = vpack.c.bf16 %v3171, %v3170
      %v3281 = vpack.c.bf16 %v3173, %v3172
      %v3282 = vpack.c.bf16 %v3175, %v3174
      %v3283 = vpack.c.bf16 %v3177, %v3176
      %v3284 = vpack.c.bf16 %v3179, %v3178
      %v3285 = vpack.c.bf16 %v3181, %v3180
      %v3286 = vpack.c.bf16 %v3183, %v3182
      %v3287 = vpack.c.bf16 %v3185, %v3184
      %v3288 = vpack.c.bf16 %v3187, %v3186
      %v3289 = vpack.c.bf16 %v3189, %v3188
      %v3290 = vpack.c.bf16 %v3191, %v3190
      %v3291 = vpack.c.bf16 %v3193, %v3192
      %v3292 = vpack.c.bf16 %v3195, %v3194
      %v3293 = vpack.c.bf16 %v3197, %v3196
      %v3294 = vpack.c.bf16 %v3199, %v3198
      %v3295 = vpack.c.bf16 %v3201, %v3200
      %v3296 = vpack.c.bf16 %v3203, %v3202
      %v3297 = vpack.c.bf16 %v3205, %v3204
      %v3298 = vpack.c.bf16 %v3207, %v3206
      %v3299 = vpack.c.bf16 %v3209, %v3208
      %v3300 = vpack.c.bf16 %v3211, %v3210
      %v3301 = vpack.c.bf16 %v3213, %v3212
      %v3302 = vpack.c.bf16 %v3215, %v3214
      %v3303 = vpack.c.bf16 %v3217, %v3216
      %v3304 = vpack.c.bf16 %v3219, %v3218
      %v3305 = vpack.c.bf16 %v3221, %v3220
      %v3306 = vpack.c.bf16 %v3223, %v3222
      %v3307 = vpack.c.bf16 %v3225, %v3224
      %v3308 = vpack.c.bf16 %v3227, %v3226
      %v3309 = vpack.c.bf16 %v3229, %v3228
      %v3310 = vpack.c.bf16 %v3231, %v3230
      %v3311 = vpack.c.bf16 %v3233, %v3232
      %v3312 = vpack.c.bf16 %v3235, %v3234
      %v3313 = vpack.c.bf16 %v3237, %v3236
      %v3314 = vpack.c.bf16 %v3239, %v3238
      %v3315 = vpack.c.bf16 %v3241, %v3240
      %v3316 = vpack.c.bf16 %v3243, %v3242
      %v3317 = vpack.c.bf16 %v3245, %v3244
      %v3318 = vpack.c.bf16 %v3247, %v3246
      %v3319 = vpack.c.bf16 %v3249, %v3248
      %v3320 = vpack.c.bf16 %v3251, %v3250
      %v3321 = vpack.c.bf16 %v3253, %v3252
      %v3322 = vpack.c.bf16 %v3255, %v3254
      %v3323 = vpack.c.bf16 %v3257, %v3256
      %v3324 = vpack.c.bf16 %v3259, %v3258
      %v3325 = vpack.c.bf16 %v3261, %v3260
      %s3326 = scalar_lea.vmem %s1, 6
      %v3327 = vld [vmem:[%s3326] sm:$0x3]
      %v3329 = vsel %vm586, %v3262, 0
      %v3332 = vsel %vm586, %v3263, 0
      %v3335 = vsel %vm586, %v3264, 0
      %v3338 = vsel %vm586, %v3265, 0
      %v3341 = vsel %vm586, %v3266, 0
      %v3344 = vsel %vm586, %v3267, 0
      %v3347 = vsel %vm586, %v3268, 0
      %v3350 = vsel %vm586, %v3269, 0
      %v3353 = vsel %vm586, %v3270, 0
      %v3356 = vsel %vm586, %v3271, 0
      %v3359 = vsel %vm586, %v3272, 0
      %v3362 = vsel %vm586, %v3273, 0
      %v3365 = vsel %vm586, %v3274, 0
      %v3368 = vsel %vm586, %v3275, 0
      %v3371 = vsel %vm586, %v3276, 0
      %v3374 = vsel %vm586, %v3277, 0
      %v3377 = vsel %vm586, %v3278, 0
      %v3380 = vsel %vm586, %v3279, 0
      %v3383 = vsel %vm586, %v3280, 0
      %v3386 = vsel %vm586, %v3281, 0
      %v3389 = vsel %vm586, %v3282, 0
      %v3392 = vsel %vm586, %v3283, 0
      %v3395 = vsel %vm586, %v3284, 0
      %v3398 = vsel %vm586, %v3285, 0
      %v3401 = vsel %vm586, %v3286, 0
      %v3404 = vsel %vm586, %v3287, 0
      %v3407 = vsel %vm586, %v3288, 0
      %v3410 = vsel %vm586, %v3289, 0
      %v3413 = vsel %vm586, %v3290, 0
      %v3416 = vsel %vm586, %v3291, 0
      %v3419 = vsel %vm586, %v3292, 0
      %v3422 = vsel %vm586, %v3293, 0
      %v3425 = vsel %vm586, %v3294, 0
      %v3428 = vsel %vm586, %v3295, 0
      %v3431 = vsel %vm586, %v3296, 0
      %v3434 = vsel %vm586, %v3297, 0
      %v3437 = vsel %vm586, %v3298, 0
      %v3440 = vsel %vm586, %v3299, 0
      %v3443 = vsel %vm586, %v3300, 0
      %v3446 = vsel %vm586, %v3301, 0
      %v3449 = vsel %vm586, %v3302, 0
      %v3452 = vsel %vm586, %v3303, 0
      %v3455 = vsel %vm586, %v3304, 0
      %v3458 = vsel %vm586, %v3305, 0
      %v3461 = vsel %vm586, %v3306, 0
      %v3464 = vsel %vm586, %v3307, 0
      %v3467 = vsel %vm586, %v3308, 0
      %v3470 = vsel %vm586, %v3309, 0
      %v3473 = vsel %vm586, %v3310, 0
      %v3476 = vsel %vm586, %v3311, 0
      %v3479 = vsel %vm586, %v3312, 0
      %v3482 = vsel %vm586, %v3313, 0
      %v3485 = vsel %vm586, %v3314, 0
      %v3488 = vsel %vm586, %v3315, 0
      %v3491 = vsel %vm586, %v3316, 0
      %v3494 = vsel %vm586, %v3317, 0
      %v3497 = vsel %vm586, %v3318, 0
      %v3500 = vsel %vm586, %v3319, 0
      %v3503 = vsel %vm586, %v3320, 0
      %v3506 = vsel %vm586, %v3321, 0
      %v3509 = vsel %vm586, %v3322, 0
      %v3512 = vsel %vm586, %v3323, 0
      %v3515 = vsel %vm586, %v3324, 0
      %v3518 = vsel %vm586, %v3325, 0
      %v3521 = vand.u32 %v3327, %v782
      %3523 = vmatprep.subr.bf16.mxu0 0
      %3524 = vmatpush1.bf16.msra.mxu0 %v3521
      %3525 = vmatprep.subr.bf16.mxu0 0
      %3526 = vmatpush1.bf16.msra.mxu0 0
      %3527 = vmatprep.subr.bf16.mxu0 0
      %3528 = vmatpush1.bf16.msra.mxu0 0
      %3529 = vmatprep.subr.bf16.mxu0 0
      %3530 = vmatpush1.bf16.msra.mxu0 0
      %3531 = vmatprep.subr.bf16.mxu0 0
      %3532 = vmatpush1.bf16.msra.mxu0 0
      %3533 = vmatprep.subr.bf16.mxu0 0
      %3534 = vmatpush1.bf16.msra.mxu0 0
      %3535 = vmatprep.subr.bf16.mxu0 0
      %3536 = vmatpush1.bf16.msra.mxu0 0
      %3537 = vmatprep.subr.bf16.mxu0 0
      %3538 = vmatpush1.bf16.msra.mxu0 0
      %3539 = vmatprep.subr.bf16.mxu0 0
      %3540 = vmatpush1.bf16.msra.mxu0 0
      %3541 = vmatprep.subr.bf16.mxu0 0
      %3542 = vmatpush1.bf16.msra.mxu0 0
      %3543 = vmatprep.subr.bf16.mxu0 0
      %3544 = vmatpush1.bf16.msra.mxu0 0
      %3545 = vmatprep.subr.bf16.mxu0 0
      %3546 = vmatpush1.bf16.msra.mxu0 0
      %3547 = vmatprep.subr.bf16.mxu0 0
      %3548 = vmatpush1.bf16.msra.mxu0 0
      %3549 = vmatprep.subr.bf16.mxu0 0
      %3550 = vmatpush1.bf16.msra.mxu0 0
      %3551 = vmatprep.subr.bf16.mxu0 0
      %3552 = vmatpush1.bf16.msra.mxu0 0
      %3553 = vmatprep.subr.bf16.mxu0 0
      %3554 = vmatpush1.bf16.msra.mxu0 0
      %3555 = vmatprep.mubr.bf16.mxu0 0
      %3556 = vmatmul.mubr.bf16.gmra.mrb[0].mxu0 %v3329
      %v3557 = vpop.f32.mrb[0].mxu0
      %v3558 = vadd.f32 0.0, %v3557
      %v3559 = vpop.f32.mrb[0].mxu0
      %v3560 = vpop.f32.mrb[0].mxu0
      %v3561 = vadd.f32 0.0, %v3560
      %v3562 = vpop.f32.mrb[0].mxu0
      %3563 = vmatprep.mubr.bf16.mxu0 0
      %3564 = vmatmul.mubr.bf16.gmra.mrb[0].mxu0 %v3332
      %v3565 = vpop.f32.mrb[0].mxu0
      %v3566 = vadd.f32 0.0, %v3565
      %v3567 = vpop.f32.mrb[0].mxu0
      %v3568 = vpop.f32.mrb[0].mxu0
      %v3569 = vadd.f32 0.0, %v3568
      %v3570 = vpop.f32.mrb[0].mxu0
      %3571 = vmatprep.mubr.bf16.mxu0 0
      %3572 = vmatmul.mubr.bf16.gmra.mrb[0].mxu0 %v3335
      %v3573 = vpop.f32.mrb[0].mxu0
      %v3574 = vadd.f32 0.0, %v3573
      %v3575 = vpop.f32.mrb[0].mxu0
      %v3576 = vpop.f32.mrb[0].mxu0
      %v3577 = vadd.f32 0.0, %v3576
      %v3578 = vpop.f32.mrb[0].mxu0
      %3579 = vmatprep.mubr.bf16.mxu0 0
      %3580 = vmatmul.mubr.bf16.gmra.mrb[0].mxu0 %v3338
      %v3581 = vpop.f32.mrb[0].mxu0
      %v3582 = vadd.f32 0.0, %v3581
      %v3583 = vpop.f32.mrb[0].mxu0
      %v3584 = vpop.f32.mrb[0].mxu0
      %v3585 = vadd.f32 0.0, %v3584
      %v3586 = vpop.f32.mrb[0].mxu0
      %3587 = vmatprep.mubr.bf16.mxu0 0
      %3588 = vmatmul.mubr.bf16.gmra.mrb[0].mxu0 %v3341
      %v3589 = vpop.f32.mrb[0].mxu0
      %v3590 = vadd.f32 0.0, %v3589
      %v3591 = vpop.f32.mrb[0].mxu0
      %v3592 = vpop.f32.mrb[0].mxu0
      %v3593 = vadd.f32 0.0, %v3592
      %v3594 = vpop.f32.mrb[0].mxu0
      %3595 = vmatprep.mubr.bf16.mxu0 0
      %3596 = vmatmul.mubr.bf16.gmra.mrb[0].mxu0 %v3344
      %v3597 = vpop.f32.mrb[0].mxu0
      %v3598 = vadd.f32 0.0, %v3597
      %v3599 = vpop.f32.mrb[0].mxu0
      %v3600 = vpop.f32.mrb[0].mxu0
      %v3601 = vadd.f32 0.0, %v3600
      %v3602 = vpop.f32.mrb[0].mxu0
      %3603 = vmatprep.mubr.bf16.mxu0 0
      %3604 = vmatmul.mubr.bf16.gmra.mrb[0].mxu0 %v3347
      %v3605 = vpop.f32.mrb[0].mxu0
      %v3606 = vadd.f32 0.0, %v3605
      %v3607 = vpop.f32.mrb[0].mxu0
      %v3608 = vpop.f32.mrb[0].mxu0
      %v3609 = vadd.f32 0.0, %v3608
      %v3610 = vpop.f32.mrb[0].mxu0
      %3611 = vmatprep.mubr.bf16.mxu0 0
      %3612 = vmatmul.mubr.bf16.gmra.mrb[0].mxu0 %v3350
      %v3613 = vpop.f32.mrb[0].mxu0
      %v3614 = vadd.f32 0.0, %v3613
      %v3615 = vpop.f32.mrb[0].mxu0
      %v3616 = vpop.f32.mrb[0].mxu0
      %v3617 = vadd.f32 0.0, %v3616
      %v3618 = vpop.f32.mrb[0].mxu0
      %3619 = vmatprep.mubr.bf16.mxu0 0
      %3620 = vmatmul.mubr.bf16.gmra.mrb[0].mxu0 %v3353
      %v3621 = vpop.f32.mrb[0].mxu0
      %v3622 = vadd.f32 0.0, %v3621
      %v3623 = vpop.f32.mrb[0].mxu0
      %v3624 = vpop.f32.mrb[0].mxu0
      %v3625 = vadd.f32 0.0, %v3624
      %v3626 = vpop.f32.mrb[0].mxu0
      %3627 = vmatprep.mubr.bf16.mxu0 0
      %3628 = vmatmul.mubr.bf16.gmra.mrb[0].mxu0 %v3356
      %v3629 = vpop.f32.mrb[0].mxu0
      %v3630 = vadd.f32 0.0, %v3629
      %v3631 = vpop.f32.mrb[0].mxu0
      %v3632 = vpop.f32.mrb[0].mxu0
      %v3633 = vadd.f32 0.0, %v3632
      %v3634 = vpop.f32.mrb[0].mxu0
      %3635 = vmatprep.mubr.bf16.mxu0 0
      %3636 = vmatmul.mubr.bf16.gmra.mrb[0].mxu0 %v3359
      %v3637 = vpop.f32.mrb[0].mxu0
      %v3638 = vadd.f32 0.0, %v3637
      %v3639 = vpop.f32.mrb[0].mxu0
      %v3640 = vpop.f32.mrb[0].mxu0
      %v3641 = vadd.f32 0.0, %v3640
      %v3642 = vpop.f32.mrb[0].mxu0
      %3643 = vmatprep.mubr.bf16.mxu0 0
      %3644 = vmatmul.mubr.bf16.gmra.mrb[0].mxu0 %v3362
      %v3645 = vpop.f32.mrb[0].mxu0
      %v3646 = vadd.f32 0.0, %v3645
      %v3647 = vpop.f32.mrb[0].mxu0
      %v3648 = vpop.f32.mrb[0].mxu0
      %v3649 = vadd.f32 0.0, %v3648
      %v3650 = vpop.f32.mrb[0].mxu0
      %3651 = vmatprep.mubr.bf16.mxu0 0
      %3652 = vmatmul.mubr.bf16.gmra.mrb[0].mxu0 %v3365
      %v3653 = vpop.f32.mrb[0].mxu0
      %v3654 = vadd.f32 0.0, %v3653
      %v3655 = vpop.f32.mrb[0].mxu0
      %v3656 = vpop.f32.mrb[0].mxu0
      %v3657 = vadd.f32 0.0, %v3656
      %v3658 = vpop.f32.mrb[0].mxu0
      %3659 = vmatprep.mubr.bf16.mxu0 0
      %3660 = vmatmul.mubr.bf16.gmra.mrb[0].mxu0 %v3368
      %v3661 = vpop.f32.mrb[0].mxu0
      %v3662 = vadd.f32 0.0, %v3661
      %v3663 = vpop.f32.mrb[0].mxu0
      %v3664 = vpop.f32.mrb[0].mxu0
      %v3665 = vadd.f32 0.0, %v3664
      %v3666 = vpop.f32.mrb[0].mxu0
      %3667 = vmatprep.mubr.bf16.mxu0 0
      %3668 = vmatmul.mubr.bf16.gmra.mrb[0].mxu0 %v3371
      %v3669 = vpop.f32.mrb[0].mxu0
      %v3670 = vadd.f32 0.0, %v3669
      %v3671 = vpop.f32.mrb[0].mxu0
      %v3672 = vpop.f32.mrb[0].mxu0
      %v3673 = vadd.f32 0.0, %v3672
      %v3674 = vpop.f32.mrb[0].mxu0
      %3675 = vmatprep.mubr.bf16.mxu0 0
      %3676 = vmatmul.mubr.bf16.gmra.mrb[0].mxu0 %v3374
      %v3677 = vpop.f32.mrb[0].mxu0
      %v3678 = vadd.f32 0.0, %v3677
      %v3679 = vpop.f32.mrb[0].mxu0
      %v3680 = vpop.f32.mrb[0].mxu0
      %v3681 = vadd.f32 0.0, %v3680
      %v3682 = vpop.f32.mrb[0].mxu0
      %3683 = vmatprep.mubr.bf16.mxu0 0
      %3684 = vmatmul.mubr.bf16.gmra.mrb[0].mxu0 %v3377
      %v3685 = vpop.f32.mrb[0].mxu0
      %v3686 = vadd.f32 0.0, %v3685
      %v3687 = vpop.f32.mrb[0].mxu0
      %v3688 = vpop.f32.mrb[0].mxu0
      %v3689 = vadd.f32 0.0, %v3688
      %v3690 = vpop.f32.mrb[0].mxu0
      %3691 = vmatprep.mubr.bf16.mxu0 0
      %3692 = vmatmul.mubr.bf16.gmra.mrb[0].mxu0 %v3380
      %v3693 = vpop.f32.mrb[0].mxu0
      %v3694 = vadd.f32 0.0, %v3693
      %v3695 = vpop.f32.mrb[0].mxu0
      %v3696 = vpop.f32.mrb[0].mxu0
      %v3697 = vadd.f32 0.0, %v3696
      %v3698 = vpop.f32.mrb[0].mxu0
      %3699 = vmatprep.mubr.bf16.mxu0 0
      %3700 = vmatmul.mubr.bf16.gmra.mrb[0].mxu0 %v3383
      %v3701 = vpop.f32.mrb[0].mxu0
      %v3702 = vadd.f32 0.0, %v3701
      %v3703 = vpop.f32.mrb[0].mxu0
      %v3704 = vpop.f32.mrb[0].mxu0
      %v3705 = vadd.f32 0.0, %v3704
      %v3706 = vpop.f32.mrb[0].mxu0
      %3707 = vmatprep.mubr.bf16.mxu0 0
      %3708 = vmatmul.mubr.bf16.gmra.mrb[0].mxu0 %v3386
      %v3709 = vpop.f32.mrb[0].mxu0
      %v3710 = vadd.f32 0.0, %v3709
      %v3711 = vpop.f32.mrb[0].mxu0
      %v3712 = vpop.f32.mrb[0].mxu0
      %v3713 = vadd.f32 0.0, %v3712
      %v3714 = vpop.f32.mrb[0].mxu0
      %3715 = vmatprep.mubr.bf16.mxu0 0
      %3716 = vmatmul.mubr.bf16.gmra.mrb[0].mxu0 %v3389
      %v3717 = vpop.f32.mrb[0].mxu0
      %v3718 = vadd.f32 0.0, %v3717
      %v3719 = vpop.f32.mrb[0].mxu0
      %v3720 = vpop.f32.mrb[0].mxu0
      %v3721 = vadd.f32 0.0, %v3720
      %v3722 = vpop.f32.mrb[0].mxu0
      %3723 = vmatprep.mubr.bf16.mxu0 0
      %3724 = vmatmul.mubr.bf16.gmra.mrb[0].mxu0 %v3392
      %v3725 = vpop.f32.mrb[0].mxu0
      %v3726 = vadd.f32 0.0, %v3725
      %v3727 = vpop.f32.mrb[0].mxu0
      %v3728 = vpop.f32.mrb[0].mxu0
      %v3729 = vadd.f32 0.0, %v3728
      %v3730 = vpop.f32.mrb[0].mxu0
      %3731 = vmatprep.mubr.bf16.mxu0 0
      %3732 = vmatmul.mubr.bf16.gmra.mrb[0].mxu0 %v3395
      %v3733 = vpop.f32.mrb[0].mxu0
      %v3734 = vadd.f32 0.0, %v3733
      %v3735 = vpop.f32.mrb[0].mxu0
      %v3736 = vpop.f32.mrb[0].mxu0
      %v3737 = vadd.f32 0.0, %v3736
      %v3738 = vpop.f32.mrb[0].mxu0
      %3739 = vmatprep.mubr.bf16.mxu0 0
      %3740 = vmatmul.mubr.bf16.gmra.mrb[0].mxu0 %v3398
      %v3741 = vpop.f32.mrb[0].mxu0
      %v3742 = vadd.f32 0.0, %v3741
      %v3743 = vpop.f32.mrb[0].mxu0
      %v3744 = vpop.f32.mrb[0].mxu0
      %v3745 = vadd.f32 0.0, %v3744
      %v3746 = vpop.f32.mrb[0].mxu0
      %3747 = vmatprep.mubr.bf16.mxu0 0
      %3748 = vmatmul.mubr.bf16.gmra.mrb[0].mxu0 %v3401
      %v3749 = vpop.f32.mrb[0].mxu0
      %v3750 = vadd.f32 0.0, %v3749
      %v3751 = vpop.f32.mrb[0].mxu0
      %v3752 = vpop.f32.mrb[0].mxu0
      %v3753 = vadd.f32 0.0, %v3752
      %v3754 = vpop.f32.mrb[0].mxu0
      %3755 = vmatprep.mubr.bf16.mxu0 0
      %3756 = vmatmul.mubr.bf16.gmra.mrb[0].mxu0 %v3404
      %v3757 = vpop.f32.mrb[0].mxu0
      %v3758 = vadd.f32 0.0, %v3757
      %v3759 = vpop.f32.mrb[0].mxu0
      %v3760 = vpop.f32.mrb[0].mxu0
      %v3761 = vadd.f32 0.0, %v3760
      %v3762 = vpop.f32.mrb[0].mxu0
      %3763 = vmatprep.mubr.bf16.mxu0 0
      %3764 = vmatmul.mubr.bf16.gmra.mrb[0].mxu0 %v3407
      %v3765 = vpop.f32.mrb[0].mxu0
      %v3766 = vadd.f32 0.0, %v3765
      %v3767 = vpop.f32.mrb[0].mxu0
      %v3768 = vpop.f32.mrb[0].mxu0
      %v3769 = vadd.f32 0.0, %v3768
      %v3770 = vpop.f32.mrb[0].mxu0
      %3771 = vmatprep.mubr.bf16.mxu0 0
      %3772 = vmatmul.mubr.bf16.gmra.mrb[0].mxu0 %v3410
      %v3773 = vpop.f32.mrb[0].mxu0
      %v3774 = vadd.f32 0.0, %v3773
      %v3775 = vpop.f32.mrb[0].mxu0
      %v3776 = vpop.f32.mrb[0].mxu0
      %v3777 = vadd.f32 0.0, %v3776
      %v3778 = vpop.f32.mrb[0].mxu0
      %3779 = vmatprep.mubr.bf16.mxu0 0
      %3780 = vmatmul.mubr.bf16.gmra.mrb[0].mxu0 %v3413
      %v3781 = vpop.f32.mrb[0].mxu0
      %v3782 = vadd.f32 0.0, %v3781
      %v3783 = vpop.f32.mrb[0].mxu0
      %v3784 = vpop.f32.mrb[0].mxu0
      %v3785 = vadd.f32 0.0, %v3784
      %v3786 = vpop.f32.mrb[0].mxu0
      %3787 = vmatprep.mubr.bf16.mxu0 0
      %3788 = vmatmul.mubr.bf16.gmra.mrb[0].mxu0 %v3416
      %v3789 = vpop.f32.mrb[0].mxu0
      %v3790 = vadd.f32 0.0, %v3789
      %v3791 = vpop.f32.mrb[0].mxu0
      %v3792 = vpop.f32.mrb[0].mxu0
      %v3793 = vadd.f32 0.0, %v3792
      %v3794 = vpop.f32.mrb[0].mxu0
      %3795 = vmatprep.mubr.bf16.mxu0 0
      %3796 = vmatmul.mubr.bf16.gmra.mrb[0].mxu0 %v3419
      %v3797 = vpop.f32.mrb[0].mxu0
      %v3798 = vadd.f32 0.0, %v3797
      %v3799 = vpop.f32.mrb[0].mxu0
      %v3800 = vpop.f32.mrb[0].mxu0
      %v3801 = vadd.f32 0.0, %v3800
      %v3802 = vpop.f32.mrb[0].mxu0
      %3803 = vmatprep.mubr.bf16.mxu0 0
      %3804 = vmatmul.mubr.bf16.gmra.mrb[0].mxu0 %v3422
      %v3805 = vpop.f32.mrb[0].mxu0
      %v3806 = vadd.f32 0.0, %v3805
      %v3807 = vpop.f32.mrb[0].mxu0
      %v3808 = vpop.f32.mrb[0].mxu0
      %v3809 = vadd.f32 0.0, %v3808
      %v3810 = vpop.f32.mrb[0].mxu0
      %3811 = vmatprep.mubr.bf16.mxu0 0
      %3812 = vmatmul.mubr.bf16.gmra.mrb[0].mxu0 %v3425
      %v3813 = vpop.f32.mrb[0].mxu0
      %v3814 = vadd.f32 0.0, %v3813
      %v3815 = vpop.f32.mrb[0].mxu0
      %v3816 = vpop.f32.mrb[0].mxu0
      %v3817 = vadd.f32 0.0, %v3816
      %v3818 = vpop.f32.mrb[0].mxu0
      %3819 = vmatprep.mubr.bf16.mxu0 0
      %3820 = vmatmul.mubr.bf16.gmra.mrb[0].mxu0 %v3428
      %v3821 = vpop.f32.mrb[0].mxu0
      %v3822 = vadd.f32 0.0, %v3821
      %v3823 = vpop.f32.mrb[0].mxu0
      %v3824 = vpop.f32.mrb[0].mxu0
      %v3825 = vadd.f32 0.0, %v3824
      %v3826 = vpop.f32.mrb[0].mxu0
      %3827 = vmatprep.mubr.bf16.mxu0 0
      %3828 = vmatmul.mubr.bf16.gmra.mrb[0].mxu0 %v3431
      %v3829 = vpop.f32.mrb[0].mxu0
      %v3830 = vadd.f32 0.0, %v3829
      %v3831 = vpop.f32.mrb[0].mxu0
      %v3832 = vpop.f32.mrb[0].mxu0
      %v3833 = vadd.f32 0.0, %v3832
      %v3834 = vpop.f32.mrb[0].mxu0
      %3835 = vmatprep.mubr.bf16.mxu0 0
      %3836 = vmatmul.mubr.bf16.gmra.mrb[0].mxu0 %v3434
      %v3837 = vpop.f32.mrb[0].mxu0
      %v3838 = vadd.f32 0.0, %v3837
      %v3839 = vpop.f32.mrb[0].mxu0
      %v3840 = vpop.f32.mrb[0].mxu0
      %v3841 = vadd.f32 0.0, %v3840
      %v3842 = vpop.f32.mrb[0].mxu0
      %3843 = vmatprep.mubr.bf16.mxu0 0
      %3844 = vmatmul.mubr.bf16.gmra.mrb[0].mxu0 %v3437
      %v3845 = vpop.f32.mrb[0].mxu0
      %v3846 = vadd.f32 0.0, %v3845
      %v3847 = vpop.f32.mrb[0].mxu0
      %v3848 = vpop.f32.mrb[0].mxu0
      %v3849 = vadd.f32 0.0, %v3848
      %v3850 = vpop.f32.mrb[0].mxu0
      %3851 = vmatprep.mubr.bf16.mxu0 0
      %3852 = vmatmul.mubr.bf16.gmra.mrb[0].mxu0 %v3440
      %v3853 = vpop.f32.mrb[0].mxu0
      %v3854 = vadd.f32 0.0, %v3853
      %v3855 = vpop.f32.mrb[0].mxu0
      %v3856 = vpop.f32.mrb[0].mxu0
      %v3857 = vadd.f32 0.0, %v3856
      %v3858 = vpop.f32.mrb[0].mxu0
      %3859 = vmatprep.mubr.bf16.mxu0 0
      %3860 = vmatmul.mubr.bf16.gmra.mrb[0].mxu0 %v3443
      %v3861 = vpop.f32.mrb[0].mxu0
      %v3862 = vadd.f32 0.0, %v3861
      %v3863 = vpop.f32.mrb[0].mxu0
      %v3864 = vpop.f32.mrb[0].mxu0
      %v3865 = vadd.f32 0.0, %v3864
      %v3866 = vpop.f32.mrb[0].mxu0
      %3867 = vmatprep.mubr.bf16.mxu0 0
      %3868 = vmatmul.mubr.bf16.gmra.mrb[0].mxu0 %v3446
      %v3869 = vpop.f32.mrb[0].mxu0
      %v3870 = vadd.f32 0.0, %v3869
      %v3871 = vpop.f32.mrb[0].mxu0
      %v3872 = vpop.f32.mrb[0].mxu0
      %v3873 = vadd.f32 0.0, %v3872
      %v3874 = vpop.f32.mrb[0].mxu0
      %3875 = vmatprep.mubr.bf16.mxu0 0
      %3876 = vmatmul.mubr.bf16.gmra.mrb[0].mxu0 %v3449
      %v3877 = vpop.f32.mrb[0].mxu0
      %v3878 = vadd.f32 0.0, %v3877
      %v3879 = vpop.f32.mrb[0].mxu0
      %v3880 = vpop.f32.mrb[0].mxu0
      %v3881 = vadd.f32 0.0, %v3880
      %v3882 = vpop.f32.mrb[0].mxu0
      %3883 = vmatprep.mubr.bf16.mxu0 0
      %3884 = vmatmul.mubr.bf16.gmra.mrb[0].mxu0 %v3452
      %v3885 = vpop.f32.mrb[0].mxu0
      %v3886 = vadd.f32 0.0, %v3885
      %v3887 = vpop.f32.mrb[0].mxu0
      %v3888 = vpop.f32.mrb[0].mxu0
      %v3889 = vadd.f32 0.0, %v3888
      %v3890 = vpop.f32.mrb[0].mxu0
      %3891 = vmatprep.mubr.bf16.mxu0 0
      %3892 = vmatmul.mubr.bf16.gmra.mrb[0].mxu0 %v3455
      %v3893 = vpop.f32.mrb[0].mxu0
      %v3894 = vadd.f32 0.0, %v3893
      %v3895 = vpop.f32.mrb[0].mxu0
      %v3896 = vpop.f32.mrb[0].mxu0
      %v3897 = vadd.f32 0.0, %v3896
      %v3898 = vpop.f32.mrb[0].mxu0
      %3899 = vmatprep.mubr.bf16.mxu0 0
      %3900 = vmatmul.mubr.bf16.gmra.mrb[0].mxu0 %v3458
      %v3901 = vpop.f32.mrb[0].mxu0
      %v3902 = vadd.f32 0.0, %v3901
      %v3903 = vpop.f32.mrb[0].mxu0
      %v3904 = vpop.f32.mrb[0].mxu0
      %v3905 = vadd.f32 0.0, %v3904
      %v3906 = vpop.f32.mrb[0].mxu0
      %3907 = vmatprep.mubr.bf16.mxu0 0
      %3908 = vmatmul.mubr.bf16.gmra.mrb[0].mxu0 %v3461
      %v3909 = vpop.f32.mrb[0].mxu0
      %v3910 = vadd.f32 0.0, %v3909
      %v3911 = vpop.f32.mrb[0].mxu0
      %v3912 = vpop.f32.mrb[0].mxu0
      %v3913 = vadd.f32 0.0, %v3912
      %v3914 = vpop.f32.mrb[0].mxu0
      %3915 = vmatprep.mubr.bf16.mxu0 0
      %3916 = vmatmul.mubr.bf16.gmra.mrb[0].mxu0 %v3464
      %v3917 = vpop.f32.mrb[0].mxu0
      %v3918 = vadd.f32 0.0, %v3917
      %v3919 = vpop.f32.mrb[0].mxu0
      %v3920 = vpop.f32.mrb[0].mxu0
      %v3921 = vadd.f32 0.0, %v3920
      %v3922 = vpop.f32.mrb[0].mxu0
      %3923 = vmatprep.mubr.bf16.mxu0 0
      %3924 = vmatmul.mubr.bf16.gmra.mrb[0].mxu0 %v3467
      %v3925 = vpop.f32.mrb[0].mxu0
      %v3926 = vadd.f32 0.0, %v3925
      %v3927 = vpop.f32.mrb[0].mxu0
      %v3928 = vpop.f32.mrb[0].mxu0
      %v3929 = vadd.f32 0.0, %v3928
      %v3930 = vpop.f32.mrb[0].mxu0
      %3931 = vmatprep.mubr.bf16.mxu0 0
      %3932 = vmatmul.mubr.bf16.gmra.mrb[0].mxu0 %v3470
      %v3933 = vpop.f32.mrb[0].mxu0
      %v3934 = vadd.f32 0.0, %v3933
      %v3935 = vpop.f32.mrb[0].mxu0
      %v3936 = vpop.f32.mrb[0].mxu0
      %v3937 = vadd.f32 0.0, %v3936
      %v3938 = vpop.f32.mrb[0].mxu0
      %3939 = vmatprep.mubr.bf16.mxu0 0
      %3940 = vmatmul.mubr.bf16.gmra.mrb[0].mxu0 %v3473
      %v3941 = vpop.f32.mrb[0].mxu0
      %v3942 = vadd.f32 0.0, %v3941
      %v3943 = vpop.f32.mrb[0].mxu0
      %v3944 = vpop.f32.mrb[0].mxu0
      %v3945 = vadd.f32 0.0, %v3944
      %v3946 = vpop.f32.mrb[0].mxu0
      %3947 = vmatprep.mubr.bf16.mxu0 0
      %3948 = vmatmul.mubr.bf16.gmra.mrb[0].mxu0 %v3476
      %v3949 = vpop.f32.mrb[0].mxu0
      %v3950 = vadd.f32 0.0, %v3949
      %v3951 = vpop.f32.mrb[0].mxu0
      %v3952 = vpop.f32.mrb[0].mxu0
      %v3953 = vadd.f32 0.0, %v3952
      %v3954 = vpop.f32.mrb[0].mxu0
      %3955 = vmatprep.mubr.bf16.mxu0 0
      %3956 = vmatmul.mubr.bf16.gmra.mrb[0].mxu0 %v3479
      %v3957 = vpop.f32.mrb[0].mxu0
      %v3958 = vadd.f32 0.0, %v3957
      %v3959 = vpop.f32.mrb[0].mxu0
      %v3960 = vpop.f32.mrb[0].mxu0
      %v3961 = vadd.f32 0.0, %v3960
      %v3962 = vpop.f32.mrb[0].mxu0
      %3963 = vmatprep.mubr.bf16.mxu0 0
      %3964 = vmatmul.mubr.bf16.gmra.mrb[0].mxu0 %v3482
      %v3965 = vpop.f32.mrb[0].mxu0
      %v3966 = vadd.f32 0.0, %v3965
      %v3967 = vpop.f32.mrb[0].mxu0
      %v3968 = vpop.f32.mrb[0].mxu0
      %v3969 = vadd.f32 0.0, %v3968
      %v3970 = vpop.f32.mrb[0].mxu0
      %3971 = vmatprep.mubr.bf16.mxu0 0
      %3972 = vmatmul.mubr.bf16.gmra.mrb[0].mxu0 %v3485
      %v3973 = vpop.f32.mrb[0].mxu0
      %v3974 = vadd.f32 0.0, %v3973
      %v3975 = vpop.f32.mrb[0].mxu0
      %v3976 = vpop.f32.mrb[0].mxu0
      %v3977 = vadd.f32 0.0, %v3976
      %v3978 = vpop.f32.mrb[0].mxu0
      %3979 = vmatprep.mubr.bf16.mxu0 0
      %3980 = vmatmul.mubr.bf16.gmra.mrb[0].mxu0 %v3488
      %v3981 = vpop.f32.mrb[0].mxu0
      %v3982 = vadd.f32 0.0, %v3981
      %v3983 = vpop.f32.mrb[0].mxu0
      %v3984 = vpop.f32.mrb[0].mxu0
      %v3985 = vadd.f32 0.0, %v3984
      %v3986 = vpop.f32.mrb[0].mxu0
      %3987 = vmatprep.mubr.bf16.mxu0 0
      %3988 = vmatmul.mubr.bf16.gmra.mrb[0].mxu0 %v3491
      %v3989 = vpop.f32.mrb[0].mxu0
      %v3990 = vadd.f32 0.0, %v3989
      %v3991 = vpop.f32.mrb[0].mxu0
      %v3992 = vpop.f32.mrb[0].mxu0
      %v3993 = vadd.f32 0.0, %v3992
      %v3994 = vpop.f32.mrb[0].mxu0
      %3995 = vmatprep.mubr.bf16.mxu0 0
      %3996 = vmatmul.mubr.bf16.gmra.mrb[0].mxu0 %v3494
      %v3997 = vpop.f32.mrb[0].mxu0
      %v3998 = vadd.f32 0.0, %v3997
      %v3999 = vpop.f32.mrb[0].mxu0
      %v4000 = vpop.f32.mrb[0].mxu0
      %v4001 = vadd.f32 0.0, %v4000
      %v4002 = vpop.f32.mrb[0].mxu0
      %4003 = vmatprep.mubr.bf16.mxu0 0
      %4004 = vmatmul.mubr.bf16.gmra.mrb[0].mxu0 %v3497
      %v4005 = vpop.f32.mrb[0].mxu0
      %v4006 = vadd.f32 0.0, %v4005
      %v4007 = vpop.f32.mrb[0].mxu0
      %v4008 = vpop.f32.mrb[0].mxu0
      %v4009 = vadd.f32 0.0, %v4008
      %v4010 = vpop.f32.mrb[0].mxu0
      %4011 = vmatprep.mubr.bf16.mxu0 0
      %4012 = vmatmul.mubr.bf16.gmra.mrb[0].mxu0 %v3500
      %v4013 = vpop.f32.mrb[0].mxu0
      %v4014 = vadd.f32 0.0, %v4013
      %v4015 = vpop.f32.mrb[0].mxu0
      %v4016 = vpop.f32.mrb[0].mxu0
      %v4017 = vadd.f32 0.0, %v4016
      %v4018 = vpop.f32.mrb[0].mxu0
      %4019 = vmatprep.mubr.bf16.mxu0 0
      %4020 = vmatmul.mubr.bf16.gmra.mrb[0].mxu0 %v3503
      %v4021 = vpop.f32.mrb[0].mxu0
      %v4022 = vadd.f32 0.0, %v4021
      %v4023 = vpop.f32.mrb[0].mxu0
      %v4024 = vpop.f32.mrb[0].mxu0
      %v4025 = vadd.f32 0.0, %v4024
      %v4026 = vpop.f32.mrb[0].mxu0
      %4027 = vmatprep.mubr.bf16.mxu0 0
      %4028 = vmatmul.mubr.bf16.gmra.mrb[0].mxu0 %v3506
      %v4029 = vpop.f32.mrb[0].mxu0
      %v4030 = vadd.f32 0.0, %v4029
      %v4031 = vpop.f32.mrb[0].mxu0
      %v4032 = vpop.f32.mrb[0].mxu0
      %v4033 = vadd.f32 0.0, %v4032
      %v4034 = vpop.f32.mrb[0].mxu0
      %4035 = vmatprep.mubr.bf16.mxu0 0
      %4036 = vmatmul.mubr.bf16.gmra.mrb[0].mxu0 %v3509
      %v4037 = vpop.f32.mrb[0].mxu0
      %v4038 = vadd.f32 0.0, %v4037
      %v4039 = vpop.f32.mrb[0].mxu0
      %v4040 = vpop.f32.mrb[0].mxu0
      %v4041 = vadd.f32 0.0, %v4040
      %v4042 = vpop.f32.mrb[0].mxu0
      %4043 = vmatprep.mubr.bf16.mxu0 0
      %4044 = vmatmul.mubr.bf16.gmra.mrb[0].mxu0 %v3512
      %v4045 = vpop.f32.mrb[0].mxu0
      %v4046 = vadd.f32 0.0, %v4045
      %v4047 = vpop.f32.mrb[0].mxu0
      %v4048 = vpop.f32.mrb[0].mxu0
      %v4049 = vadd.f32 0.0, %v4048
      %v4050 = vpop.f32.mrb[0].mxu0
      %4051 = vmatprep.mubr.bf16.mxu0 0
      %4052 = vmatmul.mubr.bf16.gmra.mrb[0].mxu0 %v3515
      %v4053 = vpop.f32.mrb[0].mxu0
      %v4054 = vadd.f32 0.0, %v4053
      %v4055 = vpop.f32.mrb[0].mxu0
      %v4056 = vpop.f32.mrb[0].mxu0
      %v4057 = vadd.f32 0.0, %v4056
      %v4058 = vpop.f32.mrb[0].mxu0
      %4059 = vmatprep.mubr.bf16.mxu0 0
      %4060 = vmatmul.mubr.bf16.gmra.mrb[0].mxu0 %v3518
      %v4061 = vpop.f32.mrb[0].mxu0
      %v4062 = vadd.f32 0.0, %v4061
      %v4063 = vpop.f32.mrb[0].mxu0
      %v4064 = vpop.f32.mrb[0].mxu0
      %v4065 = vadd.f32 0.0, %v4064
      %v4066 = vpop.f32.mrb[0].mxu0
      %4067 = vdwg.mxu0
      %v4068 = vadd.f32 %v3005, %v3558
      %v4069 = vadd.f32 %v3006, %v3561
      %v4070 = vadd.f32 %v3007, %v3566
      %v4071 = vadd.f32 %v3008, %v3569
      %v4072 = vadd.f32 %v3009, %v3574
      %v4073 = vadd.f32 %v3010, %v3577
      %v4074 = vadd.f32 %v3011, %v3582
      %v4075 = vadd.f32 %v3012, %v3585
      %v4076 = vadd.f32 %v3013, %v3590
      %v4077 = vadd.f32 %v3014, %v3593
      %v4078 = vadd.f32 %v3015, %v3598
      %v4079 = vadd.f32 %v3016, %v3601
      %v4080 = vadd.f32 %v3017, %v3606
      %v4081 = vadd.f32 %v3018, %v3609
      %v4082 = vadd.f32 %v3019, %v3614
      %v4083 = vadd.f32 %v3020, %v3617
      %v4084 = vadd.f32 %v3021, %v3622
      %v4085 = vadd.f32 %v3022, %v3625
      %v4086 = vadd.f32 %v3023, %v3630
      %v4087 = vadd.f32 %v3024, %v3633
      %v4088 = vadd.f32 %v3025, %v3638
      %v4089 = vadd.f32 %v3026, %v3641
      %v4090 = vadd.f32 %v3027, %v3646
      %v4091 = vadd.f32 %v3028, %v3649
      %v4092 = vadd.f32 %v3029, %v3654
      %v4093 = vadd.f32 %v3030, %v3657
      %v4094 = vadd.f32 %v3031, %v3662
      %v4095 = vadd.f32 %v3032, %v3665
      %v4096 = vadd.f32 %v3033, %v3670
      %v4097 = vadd.f32 %v3034, %v3673
      %v4098 = vadd.f32 %v3035, %v3678
      %v4099 = vadd.f32 %v3036, %v3681
      %v4100 = vadd.f32 %v3037, %v3686
      %v4101 = vadd.f32 %v3038, %v3689
      %v4102 = vadd.f32 %v3039, %v3694
      %v4103 = vadd.f32 %v3040, %v3697
      %v4104 = vadd.f32 %v3041, %v3702
      %v4105 = vadd.f32 %v3042, %v3705
      %v4106 = vadd.f32 %v3043, %v3710
      %v4107 = vadd.f32 %v3044, %v3713
      %v4108 = vadd.f32 %v3045, %v3718
      %v4109 = vadd.f32 %v3046, %v3721
      %v4110 = vadd.f32 %v3047, %v3726
      %v4111 = vadd.f32 %v3048, %v3729
      %v4112 = vadd.f32 %v3049, %v3734
      %v4113 = vadd.f32 %v3050, %v3737
      %v4114 = vadd.f32 %v3051, %v3742
      %v4115 = vadd.f32 %v3052, %v3745
      %v4116 = vadd.f32 %v3053, %v3750
      %v4117 = vadd.f32 %v3054, %v3753
      %v4118 = vadd.f32 %v3055, %v3758
      %v4119 = vadd.f32 %v3056, %v3761
      %v4120 = vadd.f32 %v3057, %v3766
      %v4121 = vadd.f32 %v3058, %v3769
      %v4122 = vadd.f32 %v3059, %v3774
      %v4123 = vadd.f32 %v3060, %v3777
      %v4124 = vadd.f32 %v3061, %v3782
      %v4125 = vadd.f32 %v3062, %v3785
      %v4126 = vadd.f32 %v3063, %v3790
      %v4127 = vadd.f32 %v3064, %v3793
      %v4128 = vadd.f32 %v3065, %v3798
      %v4129 = vadd.f32 %v3066, %v3801
      %v4130 = vadd.f32 %v3067, %v3806
      %v4131 = vadd.f32 %v3068, %v3809
      %v4132 = vadd.f32 %v3069, %v3814
      %v4133 = vadd.f32 %v3070, %v3817
      %v4134 = vadd.f32 %v3071, %v3822
      %v4135 = vadd.f32 %v3072, %v3825
      %v4136 = vadd.f32 %v3073, %v3830
      %v4137 = vadd.f32 %v3074, %v3833
      %v4138 = vadd.f32 %v3075, %v3838
      %v4139 = vadd.f32 %v3076, %v3841
      %v4140 = vadd.f32 %v3077, %v3846
      %v4141 = vadd.f32 %v3078, %v3849
      %v4142 = vadd.f32 %v3079, %v3854
      %v4143 = vadd.f32 %v3080, %v3857
      %v4144 = vadd.f32 %v3081, %v3862
      %v4145 = vadd.f32 %v3082, %v3865
      %v4146 = vadd.f32 %v3083, %v3870
      %v4147 = vadd.f32 %v3084, %v3873
      %v4148 = vadd.f32 %v3085, %v3878
      %v4149 = vadd.f32 %v3086, %v3881
      %v4150 = vadd.f32 %v3087, %v3886
      %v4151 = vadd.f32 %v3088, %v3889
      %v4152 = vadd.f32 %v3089, %v3894
      %v4153 = vadd.f32 %v3090, %v3897
      %v4154 = vadd.f32 %v3091, %v3902
      %v4155 = vadd.f32 %v3092, %v3905
      %v4156 = vadd.f32 %v3093, %v3910
      %v4157 = vadd.f32 %v3094, %v3913
      %v4158 = vadd.f32 %v3095, %v3918
      %v4159 = vadd.f32 %v3096, %v3921
      %v4160 = vadd.f32 %v3097, %v3926
      %v4161 = vadd.f32 %v3098, %v3929
      %v4162 = vadd.f32 %v3099, %v3934
      %v4163 = vadd.f32 %v3100, %v3937
      %v4164 = vadd.f32 %v3101, %v3942
      %v4165 = vadd.f32 %v3102, %v3945
      %v4166 = vadd.f32 %v3103, %v3950
      %v4167 = vadd.f32 %v3104, %v3953
      %v4168 = vadd.f32 %v3105, %v3958
      %v4169 = vadd.f32 %v3106, %v3961
      %v4170 = vadd.f32 %v3107, %v3966
      %v4171 = vadd.f32 %v3108, %v3969
      %v4172 = vadd.f32 %v3109, %v3974
      %v4173 = vadd.f32 %v3110, %v3977
      %v4174 = vadd.f32 %v3111, %v3982
      %v4175 = vadd.f32 %v3112, %v3985
      %v4176 = vadd.f32 %v3113, %v3990
      %v4177 = vadd.f32 %v3114, %v3993
      %v4178 = vadd.f32 %v3115, %v3998
      %v4179 = vadd.f32 %v3116, %v4001
      %v4180 = vadd.f32 %v3117, %v4006
      %v4181 = vadd.f32 %v3118, %v4009
      %v4182 = vadd.f32 %v3119, %v4014
      %v4183 = vadd.f32 %v3120, %v4017
      %v4184 = vadd.f32 %v3121, %v4022
      %v4185 = vadd.f32 %v3122, %v4025
      %v4186 = vadd.f32 %v3123, %v4030
      %v4187 = vadd.f32 %v3124, %v4033
      %v4188 = vadd.f32 %v3125, %v4038
      %v4189 = vadd.f32 %v3126, %v4041
      %v4190 = vadd.f32 %v3127, %v4046
      %v4191 = vadd.f32 %v3128, %v4049
      %v4192 = vadd.f32 %v3129, %v4054
      %v4193 = vadd.f32 %v3130, %v4057
      %v4194 = vadd.f32 %v3131, %v4062
      %v4195 = vadd.f32 %v3132, %v4065
      %v4196 = vld [vmem:[%s3133 + $0x1] sm:$0xff]
      %v4197 = vld [vmem:[%s3133 + $0x9] sm:$0xff]
      %v4198 = vld [vmem:[%s3133 + $0x11] sm:$0xff]
      %v4199 = vld [vmem:[%s3133 + $0x19] sm:$0xff]
      %v4200 = vld [vmem:[%s3133 + $0x29] sm:$0xff]
      %v4201 = vld [vmem:[%s3133 + $0x31] sm:$0xff]
      %v4202 = vld [vmem:[%s3133 + $0x39] sm:$0xff]
      %v4203 = vld [vmem:[%s3133 + $0x41] sm:$0xff]
      %v4204 = vld [vmem:[%s3133 + $0x51] sm:$0xff]
      %v4205 = vld [vmem:[%s3133 + $0x59] sm:$0xff]
      %v4206 = vld [vmem:[%s3133 + $0x61] sm:$0xff]
      %v4207 = vld [vmem:[%s3133 + $0x69] sm:$0xff]
      %v4208 = vld [vmem:[%s3133 + $0x79] sm:$0xff]
      %v4209 = vld [vmem:[%s3133 + $0x81] sm:$0xff]
      %v4210 = vld [vmem:[%s3133 + $0x89] sm:$0xff]
      %v4211 = vld [vmem:[%s3133 + $0x91] sm:$0xff]
      %v4212 = vld [vmem:[%s3133 + $0xa1] sm:$0xff]
      %v4213 = vld [vmem:[%s3133 + $0xa9] sm:$0xff]
      %v4214 = vld [vmem:[%s3133 + $0xb1] sm:$0xff]
      %v4215 = vld [vmem:[%s3133 + $0xb9] sm:$0xff]
      %v4216 = vld [vmem:[%s3133 + $0xc9] sm:$0xff]
      %v4217 = vld [vmem:[%s3133 + $0xd1] sm:$0xff]
      %v4218 = vld [vmem:[%s3133 + $0xd9] sm:$0xff]
      %v4219 = vld [vmem:[%s3133 + $0xe1] sm:$0xff]
      %v4220 = vld [vmem:[%s3133 + $0xf1] sm:$0xff]
      %v4221 = vld [vmem:[%s3133 + $0xf9] sm:$0xff]
      %v4222 = vld [vmem:[%s3133 + $0x101] sm:$0xff]
      %v4223 = vld [vmem:[%s3133 + $0x109] sm:$0xff]
      %v4224 = vld [vmem:[%s3133 + $0x119] sm:$0xff]
      %v4225 = vld [vmem:[%s3133 + $0x121] sm:$0xff]
      %v4226 = vld [vmem:[%s3133 + $0x129] sm:$0xff]
      %v4227 = vld [vmem:[%s3133 + $0x131] sm:$0xff]
      %v4228 = vld [vmem:[%s3133 + $0x141] sm:$0xff]
      %v4229 = vld [vmem:[%s3133 + $0x149] sm:$0xff]
      %v4230 = vld [vmem:[%s3133 + $0x151] sm:$0xff]
      %v4231 = vld [vmem:[%s3133 + $0x159] sm:$0xff]
      %v4232 = vld [vmem:[%s3133 + $0x169] sm:$0xff]
      %v4233 = vld [vmem:[%s3133 + $0x171] sm:$0xff]
      %v4234 = vld [vmem:[%s3133 + $0x179] sm:$0xff]
      %v4235 = vld [vmem:[%s3133 + $0x181] sm:$0xff]
      %v4236 = vld [vmem:[%s3133 + $0x191] sm:$0xff]
      %v4237 = vld [vmem:[%s3133 + $0x199] sm:$0xff]
      %v4238 = vld [vmem:[%s3133 + $0x1a1] sm:$0xff]
      %v4239 = vld [vmem:[%s3133 + $0x1a9] sm:$0xff]
      %v4240 = vld [vmem:[%s3133 + $0x1b9] sm:$0xff]
      %v4241 = vld [vmem:[%s3133 + $0x1c1] sm:$0xff]
      %v4242 = vld [vmem:[%s3133 + $0x1c9] sm:$0xff]
      %v4243 = vld [vmem:[%s3133 + $0x1d1] sm:$0xff]
      %v4244 = vld [vmem:[%s3133 + $0x1e1] sm:$0xff]
      %v4245 = vld [vmem:[%s3133 + $0x1e9] sm:$0xff]
      %v4246 = vld [vmem:[%s3133 + $0x1f1] sm:$0xff]
      %v4247 = vld [vmem:[%s3133 + $0x1f9] sm:$0xff]
      %v4248 = vld [vmem:[%s3133 + $0x209] sm:$0xff]
      %v4249 = vld [vmem:[%s3133 + $0x211] sm:$0xff]
      %v4250 = vld [vmem:[%s3133 + $0x219] sm:$0xff]
      %v4251 = vld [vmem:[%s3133 + $0x221] sm:$0xff]
      %v4252 = vld [vmem:[%s3133 + $0x231] sm:$0xff]
      %v4253 = vld [vmem:[%s3133 + $0x239] sm:$0xff]
      %v4254 = vld [vmem:[%s3133 + $0x241] sm:$0xff]
      %v4255 = vld [vmem:[%s3133 + $0x249] sm:$0xff]
      %v4256 = vld [vmem:[%s3133 + $0x259] sm:$0xff]
      %v4257 = vld [vmem:[%s3133 + $0x261] sm:$0xff]
      %v4258 = vld [vmem:[%s3133 + $0x269] sm:$0xff]
      %v4259 = vld [vmem:[%s3133 + $0x271] sm:$0xff]
      %v4260 = vld [vmem:[%s3133 + $0x281] sm:$0xff]
      %v4261 = vld [vmem:[%s3133 + $0x289] sm:$0xff]
      %v4262 = vld [vmem:[%s3133 + $0x291] sm:$0xff]
      %v4263 = vld [vmem:[%s3133 + $0x299] sm:$0xff]
      %v4264 = vld [vmem:[%s3133 + $0x2a9] sm:$0xff]
      %v4265 = vld [vmem:[%s3133 + $0x2b1] sm:$0xff]
      %v4266 = vld [vmem:[%s3133 + $0x2b9] sm:$0xff]
      %v4267 = vld [vmem:[%s3133 + $0x2c1] sm:$0xff]
      %v4268 = vld [vmem:[%s3133 + $0x2d1] sm:$0xff]
      %v4269 = vld [vmem:[%s3133 + $0x2d9] sm:$0xff]
      %v4270 = vld [vmem:[%s3133 + $0x2e1] sm:$0xff]
      %v4271 = vld [vmem:[%s3133 + $0x2e9] sm:$0xff]
      %v4272 = vld [vmem:[%s3133 + $0x2f9] sm:$0xff]
      %v4273 = vld [vmem:[%s3133 + $0x301] sm:$0xff]
      %v4274 = vld [vmem:[%s3133 + $0x309] sm:$0xff]
      %v4275 = vld [vmem:[%s3133 + $0x311] sm:$0xff]
      %v4276 = vld [vmem:[%s3133 + $0x321] sm:$0xff]
      %v4277 = vld [vmem:[%s3133 + $0x329] sm:$0xff]
      %v4278 = vld [vmem:[%s3133 + $0x331] sm:$0xff]
      %v4279 = vld [vmem:[%s3133 + $0x339] sm:$0xff]
      %v4280 = vld [vmem:[%s3133 + $0x349] sm:$0xff]
      %v4281 = vld [vmem:[%s3133 + $0x351] sm:$0xff]
      %v4282 = vld [vmem:[%s3133 + $0x359] sm:$0xff]
      %v4283 = vld [vmem:[%s3133 + $0x361] sm:$0xff]
      %v4284 = vld [vmem:[%s3133 + $0x371] sm:$0xff]
      %v4285 = vld [vmem:[%s3133 + $0x379] sm:$0xff]
      %v4286 = vld [vmem:[%s3133 + $0x381] sm:$0xff]
      %v4287 = vld [vmem:[%s3133 + $0x389] sm:$0xff]
      %v4288 = vld [vmem:[%s3133 + $0x399] sm:$0xff]
      %v4289 = vld [vmem:[%s3133 + $0x3a1] sm:$0xff]
      %v4290 = vld [vmem:[%s3133 + $0x3a9] sm:$0xff]
      %v4291 = vld [vmem:[%s3133 + $0x3b1] sm:$0xff]
      %v4292 = vld [vmem:[%s3133 + $0x3c1] sm:$0xff]
      %v4293 = vld [vmem:[%s3133 + $0x3c9] sm:$0xff]
      %v4294 = vld [vmem:[%s3133 + $0x3d1] sm:$0xff]
      %v4295 = vld [vmem:[%s3133 + $0x3d9] sm:$0xff]
      %v4296 = vld [vmem:[%s3133 + $0x3e9] sm:$0xff]
      %v4297 = vld [vmem:[%s3133 + $0x3f1] sm:$0xff]
      %v4298 = vld [vmem:[%s3133 + $0x3f9] sm:$0xff]
      %v4299 = vld [vmem:[%s3133 + $0x401] sm:$0xff]
      %v4300 = vld [vmem:[%s3133 + $0x411] sm:$0xff]
      %v4301 = vld [vmem:[%s3133 + $0x419] sm:$0xff]
      %v4302 = vld [vmem:[%s3133 + $0x421] sm:$0xff]
      %v4303 = vld [vmem:[%s3133 + $0x429] sm:$0xff]
      %v4304 = vld [vmem:[%s3133 + $0x439] sm:$0xff]
      %v4305 = vld [vmem:[%s3133 + $0x441] sm:$0xff]
      %v4306 = vld [vmem:[%s3133 + $0x449] sm:$0xff]
      %v4307 = vld [vmem:[%s3133 + $0x451] sm:$0xff]
      %v4308 = vld [vmem:[%s3133 + $0x461] sm:$0xff]
      %v4309 = vld [vmem:[%s3133 + $0x469] sm:$0xff]
      %v4310 = vld [vmem:[%s3133 + $0x471] sm:$0xff]
      %v4311 = vld [vmem:[%s3133 + $0x479] sm:$0xff]
      %v4312 = vld [vmem:[%s3133 + $0x489] sm:$0xff]
      %v4313 = vld [vmem:[%s3133 + $0x491] sm:$0xff]
      %v4314 = vld [vmem:[%s3133 + $0x499] sm:$0xff]
      %v4315 = vld [vmem:[%s3133 + $0x4a1] sm:$0xff]
      %v4316 = vld [vmem:[%s3133 + $0x4b1] sm:$0xff]
      %v4317 = vld [vmem:[%s3133 + $0x4b9] sm:$0xff]
      %v4318 = vld [vmem:[%s3133 + $0x4c1] sm:$0xff]
      %v4319 = vld [vmem:[%s3133 + $0x4c9] sm:$0xff]
      %v4320 = vld [vmem:[%s3133 + $0x4d9] sm:$0xff]
      %v4321 = vld [vmem:[%s3133 + $0x4e1] sm:$0xff]
      %v4322 = vld [vmem:[%s3133 + $0x4e9] sm:$0xff]
      %v4323 = vld [vmem:[%s3133 + $0x4f1] sm:$0xff]
      %v4324 = vpack.c.bf16 %v4197, %v4196
      %v4325 = vpack.c.bf16 %v4199, %v4198
      %v4326 = vpack.c.bf16 %v4201, %v4200
      %v4327 = vpack.c.bf16 %v4203, %v4202
      %v4328 = vpack.c.bf16 %v4205, %v4204
      %v4329 = vpack.c.bf16 %v4207, %v4206
      %v4330 = vpack.c.bf16 %v4209, %v4208
      %v4331 = vpack.c.bf16 %v4211, %v4210
      %v4332 = vpack.c.bf16 %v4213, %v4212
      %v4333 = vpack.c.bf16 %v4215, %v4214
      %v4334 = vpack.c.bf16 %v4217, %v4216
      %v4335 = vpack.c.bf16 %v4219, %v4218
      %v4336 = vpack.c.bf16 %v4221, %v4220
      %v4337 = vpack.c.bf16 %v4223, %v4222
      %v4338 = vpack.c.bf16 %v4225, %v4224
      %v4339 = vpack.c.bf16 %v4227, %v4226
      %v4340 = vpack.c.bf16 %v4229, %v4228
      %v4341 = vpack.c.bf16 %v4231, %v4230
      %v4342 = vpack.c.bf16 %v4233, %v4232
      %v4343 = vpack.c.bf16 %v4235, %v4234
      %v4344 = vpack.c.bf16 %v4237, %v4236
      %v4345 = vpack.c.bf16 %v4239, %v4238
      %v4346 = vpack.c.bf16 %v4241, %v4240
      %v4347 = vpack.c.bf16 %v4243, %v4242
      %v4348 = vpack.c.bf16 %v4245, %v4244
      %v4349 = vpack.c.bf16 %v4247, %v4246
      %v4350 = vpack.c.bf16 %v4249, %v4248
      %v4351 = vpack.c.bf16 %v4251, %v4250
      %v4352 = vpack.c.bf16 %v4253, %v4252
      %v4353 = vpack.c.bf16 %v4255, %v4254
      %v4354 = vpack.c.bf16 %v4257, %v4256
      %v4355 = vpack.c.bf16 %v4259, %v4258
      %v4356 = vpack.c.bf16 %v4261, %v4260
      %v4357 = vpack.c.bf16 %v4263, %v4262
      %v4358 = vpack.c.bf16 %v4265, %v4264
      %v4359 = vpack.c.bf16 %v4267, %v4266
      %v4360 = vpack.c.bf16 %v4269, %v4268
      %v4361 = vpack.c.bf16 %v4271, %v4270
      %v4362 = vpack.c.bf16 %v4273, %v4272
      %v4363 = vpack.c.bf16 %v4275, %v4274
      %v4364 = vpack.c.bf16 %v4277, %v4276
      %v4365 = vpack.c.bf16 %v4279, %v4278
      %v4366 = vpack.c.bf16 %v4281, %v4280
      %v4367 = vpack.c.bf16 %v4283, %v4282
      %v4368 = vpack.c.bf16 %v4285, %v4284
      %v4369 = vpack.c.bf16 %v4287, %v4286
      %v4370 = vpack.c.bf16 %v4289, %v4288
      %v4371 = vpack.c.bf16 %v4291, %v4290
      %v4372 = vpack.c.bf16 %v4293, %v4292
      %v4373 = vpack.c.bf16 %v4295, %v4294
      %v4374 = vpack.c.bf16 %v4297, %v4296
      %v4375 = vpack.c.bf16 %v4299, %v4298
      %v4376 = vpack.c.bf16 %v4301, %v4300
      %v4377 = vpack.c.bf16 %v4303, %v4302
      %v4378 = vpack.c.bf16 %v4305, %v4304
      %v4379 = vpack.c.bf16 %v4307, %v4306
      %v4380 = vpack.c.bf16 %v4309, %v4308
      %v4381 = vpack.c.bf16 %v4311, %v4310
      %v4382 = vpack.c.bf16 %v4313, %v4312
      %v4383 = vpack.c.bf16 %v4315, %v4314
      %v4384 = vpack.c.bf16 %v4317, %v4316
      %v4385 = vpack.c.bf16 %v4319, %v4318
      %v4386 = vpack.c.bf16 %v4321, %v4320
      %v4387 = vpack.c.bf16 %v4323, %v4322
      %s4388 = scalar_lea.vmem %s1, 8
      %v4389 = vld [vmem:[%s4388] sm:$0x3]
      %v4391 = vsel %vm586, %v4324, 0
      %v4394 = vsel %vm586, %v4325, 0
      %v4397 = vsel %vm586, %v4326, 0
      %v4400 = vsel %vm586, %v4327, 0
      %v4403 = vsel %vm586, %v4328, 0
      %v4406 = vsel %vm586, %v4329, 0
      %v4409 = vsel %vm586, %v4330, 0
      %v4412 = vsel %vm586, %v4331, 0
      %v4415 = vsel %vm586, %v4332, 0
      %v4418 = vsel %vm586, %v4333, 0
      %v4421 = vsel %vm586, %v4334, 0
      %v4424 = vsel %vm586, %v4335, 0
      %v4427 = vsel %vm586, %v4336, 0
      %v4430 = vsel %vm586, %v4337, 0
      %v4433 = vsel %vm586, %v4338, 0
      %v4436 = vsel %vm586, %v4339, 0
      %v4439 = vsel %vm586, %v4340, 0
      %v4442 = vsel %vm586, %v4341, 0
      %v4445 = vsel %vm586, %v4342, 0
      %v4448 = vsel %vm586, %v4343, 0
      %v4451 = vsel %vm586, %v4344, 0
      %v4454 = vsel %vm586, %v4345, 0
      %v4457 = vsel %vm586, %v4346, 0
      %v4460 = vsel %vm586, %v4347, 0
      %v4463 = vsel %vm586, %v4348, 0
      %v4466 = vsel %vm586, %v4349, 0
      %v4469 = vsel %vm586, %v4350, 0
      %v4472 = vsel %vm586, %v4351, 0
      %v4475 = vsel %vm586, %v4352, 0
      %v4478 = vsel %vm586, %v4353, 0
      %v4481 = vsel %vm586, %v4354, 0
      %v4484 = vsel %vm586, %v4355, 0
      %v4487 = vsel %vm586, %v4356, 0
      %v4490 = vsel %vm586, %v4357, 0
      %v4493 = vsel %vm586, %v4358, 0
      %v4496 = vsel %vm586, %v4359, 0
      %v4499 = vsel %vm586, %v4360, 0
      %v4502 = vsel %vm586, %v4361, 0
      %v4505 = vsel %vm586, %v4362, 0
      %v4508 = vsel %vm586, %v4363, 0
      %v4511 = vsel %vm586, %v4364, 0
      %v4514 = vsel %vm586, %v4365, 0
      %v4517 = vsel %vm586, %v4366, 0
      %v4520 = vsel %vm586, %v4367, 0
      %v4523 = vsel %vm586, %v4368, 0
      %v4526 = vsel %vm586, %v4369, 0
      %v4529 = vsel %vm586, %v4370, 0
      %v4532 = vsel %vm586, %v4371, 0
      %v4535 = vsel %vm586, %v4372, 0
      %v4538 = vsel %vm586, %v4373, 0
      %v4541 = vsel %vm586, %v4374, 0
      %v4544 = vsel %vm586, %v4375, 0
      %v4547 = vsel %vm586, %v4376, 0
      %v4550 = vsel %vm586, %v4377, 0
      %v4553 = vsel %vm586, %v4378, 0
      %v4556 = vsel %vm586, %v4379, 0
      %v4559 = vsel %vm586, %v4380, 0
      %v4562 = vsel %vm586, %v4381, 0
      %v4565 = vsel %vm586, %v4382, 0
      %v4568 = vsel %vm586, %v4383, 0
      %v4571 = vsel %vm586, %v4384, 0
      %v4574 = vsel %vm586, %v4385, 0
      %v4577 = vsel %vm586, %v4386, 0
      %v4580 = vsel %vm586, %v4387, 0
      %v4583 = vand.u32 %v4389, %v782
      %4585 = vmatprep.subr.bf16.mxu0 0
      %4586 = vmatpush1.bf16.msra.mxu0 %v4583
      %4587 = vmatprep.subr.bf16.mxu0 0
      %4588 = vmatpush1.bf16.msra.mxu0 0
      %4589 = vmatprep.subr.bf16.mxu0 0
      %4590 = vmatpush1.bf16.msra.mxu0 0
      %4591 = vmatprep.subr.bf16.mxu0 0
      %4592 = vmatpush1.bf16.msra.mxu0 0
      %4593 = vmatprep.subr.bf16.mxu0 0
      %4594 = vmatpush1.bf16.msra.mxu0 0
      %4595 = vmatprep.subr.bf16.mxu0 0
      %4596 = vmatpush1.bf16.msra.mxu0 0
      %4597 = vmatprep.subr.bf16.mxu0 0
      %4598 = vmatpush1.bf16.msra.mxu0 0
      %4599 = vmatprep.subr.bf16.mxu0 0
      %4600 = vmatpush1.bf16.msra.mxu0 0
      %4601 = vmatprep.subr.bf16.mxu0 0
      %4602 = vmatpush1.bf16.msra.mxu0 0
      %4603 = vmatprep.subr.bf16.mxu0 0
      %4604 = vmatpush1.bf16.msra.mxu0 0
      %4605 = vmatprep.subr.bf16.mxu0 0
      %4606 = vmatpush1.bf16.msra.mxu0 0
      %4607 = vmatprep.subr.bf16.mxu0 0
      %4608 = vmatpush1.bf16.msra.mxu0 0
      %4609 = vmatprep.subr.bf16.mxu0 0
      %4610 = vmatpush1.bf16.msra.mxu0 0
      %4611 = vmatprep.subr.bf16.mxu0 0
      %4612 = vmatpush1.bf16.msra.mxu0 0
      %4613 = vmatprep.subr.bf16.mxu0 0
      %4614 = vmatpush1.bf16.msra.mxu0 0
      %4615 = vmatprep.subr.bf16.mxu0 0
      %4616 = vmatpush1.bf16.msra.mxu0 0
      %4617 = vmatprep.mubr.bf16.mxu0 0
      %4618 = vmatmul.mubr.bf16.gmra.mrb[0].mxu0 %v4391
      %v4619 = vpop.f32.mrb[0].mxu0
      %v4620 = vadd.f32 0.0, %v4619
      %v4621 = vpop.f32.mrb[0].mxu0
      %v4622 = vpop.f32.mrb[0].mxu0
      %v4623 = vadd.f32 0.0, %v4622
      %v4624 = vpop.f32.mrb[0].mxu0
      %4625 = vmatprep.mubr.bf16.mxu0 0
      %4626 = vmatmul.mubr.bf16.gmra.mrb[0].mxu0 %v4394
      %v4627 = vpop.f32.mrb[0].mxu0
      %v4628 = vadd.f32 0.0, %v4627
      %v4629 = vpop.f32.mrb[0].mxu0
      %v4630 = vpop.f32.mrb[0].mxu0
      %v4631 = vadd.f32 0.0, %v4630
      %v4632 = vpop.f32.mrb[0].mxu0
      %4633 = vmatprep.mubr.bf16.mxu0 0
      %4634 = vmatmul.mubr.bf16.gmra.mrb[0].mxu0 %v4397
      %v4635 = vpop.f32.mrb[0].mxu0
      %v4636 = vadd.f32 0.0, %v4635
      %v4637 = vpop.f32.mrb[0].mxu0
      %v4638 = vpop.f32.mrb[0].mxu0
      %v4639 = vadd.f32 0.0, %v4638
      %v4640 = vpop.f32.mrb[0].mxu0
      %4641 = vmatprep.mubr.bf16.mxu0 0
      %4642 = vmatmul.mubr.bf16.gmra.mrb[0].mxu0 %v4400
      %v4643 = vpop.f32.mrb[0].mxu0
      %v4644 = vadd.f32 0.0, %v4643
      %v4645 = vpop.f32.mrb[0].mxu0
      %v4646 = vpop.f32.mrb[0].mxu0
      %v4647 = vadd.f32 0.0, %v4646
      %v4648 = vpop.f32.mrb[0].mxu0
      %4649 = vmatprep.mubr.bf16.mxu0 0
      %4650 = vmatmul.mubr.bf16.gmra.mrb[0].mxu0 %v4403
      %v4651 = vpop.f32.mrb[0].mxu0
      %v4652 = vadd.f32 0.0, %v4651
      %v4653 = vpop.f32.mrb[0].mxu0
      %v4654 = vpop.f32.mrb[0].mxu0
      %v4655 = vadd.f32 0.0, %v4654
      %v4656 = vpop.f32.mrb[0].mxu0
      %4657 = vmatprep.mubr.bf16.mxu0 0
      %4658 = vmatmul.mubr.bf16.gmra.mrb[0].mxu0 %v4406
      %v4659 = vpop.f32.mrb[0].mxu0
      %v4660 = vadd.f32 0.0, %v4659
      %v4661 = vpop.f32.mrb[0].mxu0
      %v4662 = vpop.f32.mrb[0].mxu0
      %v4663 = vadd.f32 0.0, %v4662
      %v4664 = vpop.f32.mrb[0].mxu0
      %4665 = vmatprep.mubr.bf16.mxu0 0
      %4666 = vmatmul.mubr.bf16.gmra.mrb[0].mxu0 %v4409
      %v4667 = vpop.f32.mrb[0].mxu0
      %v4668 = vadd.f32 0.0, %v4667
      %v4669 = vpop.f32.mrb[0].mxu0
      %v4670 = vpop.f32.mrb[0].mxu0
      %v4671 = vadd.f32 0.0, %v4670
      %v4672 = vpop.f32.mrb[0].mxu0
      %4673 = vmatprep.mubr.bf16.mxu0 0
      %4674 = vmatmul.mubr.bf16.gmra.mrb[0].mxu0 %v4412
      %v4675 = vpop.f32.mrb[0].mxu0
      %v4676 = vadd.f32 0.0, %v4675
      %v4677 = vpop.f32.mrb[0].mxu0
      %v4678 = vpop.f32.mrb[0].mxu0
      %v4679 = vadd.f32 0.0, %v4678
      %v4680 = vpop.f32.mrb[0].mxu0
      %4681 = vmatprep.mubr.bf16.mxu0 0
      %4682 = vmatmul.mubr.bf16.gmra.mrb[0].mxu0 %v4415
      %v4683 = vpop.f32.mrb[0].mxu0
      %v4684 = vadd.f32 0.0, %v4683
      %v4685 = vpop.f32.mrb[0].mxu0
      %v4686 = vpop.f32.mrb[0].mxu0
      %v4687 = vadd.f32 0.0, %v4686
      %v4688 = vpop.f32.mrb[0].mxu0
      %4689 = vmatprep.mubr.bf16.mxu0 0
      %4690 = vmatmul.mubr.bf16.gmra.mrb[0].mxu0 %v4418
      %v4691 = vpop.f32.mrb[0].mxu0
      %v4692 = vadd.f32 0.0, %v4691
      %v4693 = vpop.f32.mrb[0].mxu0
      %v4694 = vpop.f32.mrb[0].mxu0
      %v4695 = vadd.f32 0.0, %v4694
      %v4696 = vpop.f32.mrb[0].mxu0
      %4697 = vmatprep.mubr.bf16.mxu0 0
      %4698 = vmatmul.mubr.bf16.gmra.mrb[0].mxu0 %v4421
      %v4699 = vpop.f32.mrb[0].mxu0
      %v4700 = vadd.f32 0.0, %v4699
      %v4701 = vpop.f32.mrb[0].mxu0
      %v4702 = vpop.f32.mrb[0].mxu0
      %v4703 = vadd.f32 0.0, %v4702
      %v4704 = vpop.f32.mrb[0].mxu0
      %4705 = vmatprep.mubr.bf16.mxu0 0
      %4706 = vmatmul.mubr.bf16.gmra.mrb[0].mxu0 %v4424
      %v4707 = vpop.f32.mrb[0].mxu0
      %v4708 = vadd.f32 0.0, %v4707
      %v4709 = vpop.f32.mrb[0].mxu0
      %v4710 = vpop.f32.mrb[0].mxu0
      %v4711 = vadd.f32 0.0, %v4710
      %v4712 = vpop.f32.mrb[0].mxu0
      %4713 = vmatprep.mubr.bf16.mxu0 0
      %4714 = vmatmul.mubr.bf16.gmra.mrb[0].mxu0 %v4427
      %v4715 = vpop.f32.mrb[0].mxu0
      %v4716 = vadd.f32 0.0, %v4715
      %v4717 = vpop.f32.mrb[0].mxu0
      %v4718 = vpop.f32.mrb[0].mxu0
      %v4719 = vadd.f32 0.0, %v4718
      %v4720 = vpop.f32.mrb[0].mxu0
      %4721 = vmatprep.mubr.bf16.mxu0 0
      %4722 = vmatmul.mubr.bf16.gmra.mrb[0].mxu0 %v4430
      %v4723 = vpop.f32.mrb[0].mxu0
      %v4724 = vadd.f32 0.0, %v4723
      %v4725 = vpop.f32.mrb[0].mxu0
      %v4726 = vpop.f32.mrb[0].mxu0
      %v4727 = vadd.f32 0.0, %v4726
      %v4728 = vpop.f32.mrb[0].mxu0
      %4729 = vmatprep.mubr.bf16.mxu0 0
      %4730 = vmatmul.mubr.bf16.gmra.mrb[0].mxu0 %v4433
      %v4731 = vpop.f32.mrb[0].mxu0
      %v4732 = vadd.f32 0.0, %v4731
      %v4733 = vpop.f32.mrb[0].mxu0
      %v4734 = vpop.f32.mrb[0].mxu0
      %v4735 = vadd.f32 0.0, %v4734
      %v4736 = vpop.f32.mrb[0].mxu0
      %4737 = vmatprep.mubr.bf16.mxu0 0
      %4738 = vmatmul.mubr.bf16.gmra.mrb[0].mxu0 %v4436
      %v4739 = vpop.f32.mrb[0].mxu0
      %v4740 = vadd.f32 0.0, %v4739
      %v4741 = vpop.f32.mrb[0].mxu0
      %v4742 = vpop.f32.mrb[0].mxu0
      %v4743 = vadd.f32 0.0, %v4742
      %v4744 = vpop.f32.mrb[0].mxu0
      %4745 = vmatprep.mubr.bf16.mxu0 0
      %4746 = vmatmul.mubr.bf16.gmra.mrb[0].mxu0 %v4439
      %v4747 = vpop.f32.mrb[0].mxu0
      %v4748 = vadd.f32 0.0, %v4747
      %v4749 = vpop.f32.mrb[0].mxu0
      %v4750 = vpop.f32.mrb[0].mxu0
      %v4751 = vadd.f32 0.0, %v4750
      %v4752 = vpop.f32.mrb[0].mxu0
      %4753 = vmatprep.mubr.bf16.mxu0 0
      %4754 = vmatmul.mubr.bf16.gmra.mrb[0].mxu0 %v4442
      %v4755 = vpop.f32.mrb[0].mxu0
      %v4756 = vadd.f32 0.0, %v4755
      %v4757 = vpop.f32.mrb[0].mxu0
      %v4758 = vpop.f32.mrb[0].mxu0
      %v4759 = vadd.f32 0.0, %v4758
      %v4760 = vpop.f32.mrb[0].mxu0
      %4761 = vmatprep.mubr.bf16.mxu0 0
      %4762 = vmatmul.mubr.bf16.gmra.mrb[0].mxu0 %v4445
      %v4763 = vpop.f32.mrb[0].mxu0
      %v4764 = vadd.f32 0.0, %v4763
      %v4765 = vpop.f32.mrb[0].mxu0
      %v4766 = vpop.f32.mrb[0].mxu0
      %v4767 = vadd.f32 0.0, %v4766
      %v4768 = vpop.f32.mrb[0].mxu0
      %4769 = vmatprep.mubr.bf16.mxu0 0
      %4770 = vmatmul.mubr.bf16.gmra.mrb[0].mxu0 %v4448
      %v4771 = vpop.f32.mrb[0].mxu0
      %v4772 = vadd.f32 0.0, %v4771
      %v4773 = vpop.f32.mrb[0].mxu0
      %v4774 = vpop.f32.mrb[0].mxu0
      %v4775 = vadd.f32 0.0, %v4774
      %v4776 = vpop.f32.mrb[0].mxu0
      %4777 = vmatprep.mubr.bf16.mxu0 0
      %4778 = vmatmul.mubr.bf16.gmra.mrb[0].mxu0 %v4451
      %v4779 = vpop.f32.mrb[0].mxu0
      %v4780 = vadd.f32 0.0, %v4779
      %v4781 = vpop.f32.mrb[0].mxu0
      %v4782 = vpop.f32.mrb[0].mxu0
      %v4783 = vadd.f32 0.0, %v4782
      %v4784 = vpop.f32.mrb[0].mxu0
      %4785 = vmatprep.mubr.bf16.mxu0 0
      %4786 = vmatmul.mubr.bf16.gmra.mrb[0].mxu0 %v4454
      %v4787 = vpop.f32.mrb[0].mxu0
      %v4788 = vadd.f32 0.0, %v4787
      %v4789 = vpop.f32.mrb[0].mxu0
      %v4790 = vpop.f32.mrb[0].mxu0
      %v4791 = vadd.f32 0.0, %v4790
      %v4792 = vpop.f32.mrb[0].mxu0
      %4793 = vmatprep.mubr.bf16.mxu0 0
      %4794 = vmatmul.mubr.bf16.gmra.mrb[0].mxu0 %v4457
      %v4795 = vpop.f32.mrb[0].mxu0
      %v4796 = vadd.f32 0.0, %v4795
      %v4797 = vpop.f32.mrb[0].mxu0
      %v4798 = vpop.f32.mrb[0].mxu0
      %v4799 = vadd.f32 0.0, %v4798
      %v4800 = vpop.f32.mrb[0].mxu0
      %4801 = vmatprep.mubr.bf16.mxu0 0
      %4802 = vmatmul.mubr.bf16.gmra.mrb[0].mxu0 %v4460
      %v4803 = vpop.f32.mrb[0].mxu0
      %v4804 = vadd.f32 0.0, %v4803
      %v4805 = vpop.f32.mrb[0].mxu0
      %v4806 = vpop.f32.mrb[0].mxu0
      %v4807 = vadd.f32 0.0, %v4806
      %v4808 = vpop.f32.mrb[0].mxu0
      %4809 = vmatprep.mubr.bf16.mxu0 0
      %4810 = vmatmul.mubr.bf16.gmra.mrb[0].mxu0 %v4463
      %v4811 = vpop.f32.mrb[0].mxu0
      %v4812 = vadd.f32 0.0, %v4811
      %v4813 = vpop.f32.mrb[0].mxu0
      %v4814 = vpop.f32.mrb[0].mxu0
      %v4815 = vadd.f32 0.0, %v4814
      %v4816 = vpop.f32.mrb[0].mxu0
      %4817 = vmatprep.mubr.bf16.mxu0 0
      %4818 = vmatmul.mubr.bf16.gmra.mrb[0].mxu0 %v4466
      %v4819 = vpop.f32.mrb[0].mxu0
      %v4820 = vadd.f32 0.0, %v4819
      %v4821 = vpop.f32.mrb[0].mxu0
      %v4822 = vpop.f32.mrb[0].mxu0
      %v4823 = vadd.f32 0.0, %v4822
      %v4824 = vpop.f32.mrb[0].mxu0
      %4825 = vmatprep.mubr.bf16.mxu0 0
      %4826 = vmatmul.mubr.bf16.gmra.mrb[0].mxu0 %v4469
      %v4827 = vpop.f32.mrb[0].mxu0
      %v4828 = vadd.f32 0.0, %v4827
      %v4829 = vpop.f32.mrb[0].mxu0
      %v4830 = vpop.f32.mrb[0].mxu0
      %v4831 = vadd.f32 0.0, %v4830
      %v4832 = vpop.f32.mrb[0].mxu0
      %4833 = vmatprep.mubr.bf16.mxu0 0
      %4834 = vmatmul.mubr.bf16.gmra.mrb[0].mxu0 %v4472
      %v4835 = vpop.f32.mrb[0].mxu0
      %v4836 = vadd.f32 0.0, %v4835
      %v4837 = vpop.f32.mrb[0].mxu0
      %v4838 = vpop.f32.mrb[0].mxu0
      %v4839 = vadd.f32 0.0, %v4838
      %v4840 = vpop.f32.mrb[0].mxu0
      %4841 = vmatprep.mubr.bf16.mxu0 0
      %4842 = vmatmul.mubr.bf16.gmra.mrb[0].mxu0 %v4475
      %v4843 = vpop.f32.mrb[0].mxu0
      %v4844 = vadd.f32 0.0, %v4843
      %v4845 = vpop.f32.mrb[0].mxu0
      %v4846 = vpop.f32.mrb[0].mxu0
      %v4847 = vadd.f32 0.0, %v4846
      %v4848 = vpop.f32.mrb[0].mxu0
      %4849 = vmatprep.mubr.bf16.mxu0 0
      %4850 = vmatmul.mubr.bf16.gmra.mrb[0].mxu0 %v4478
      %v4851 = vpop.f32.mrb[0].mxu0
      %v4852 = vadd.f32 0.0, %v4851
      %v4853 = vpop.f32.mrb[0].mxu0
      %v4854 = vpop.f32.mrb[0].mxu0
      %v4855 = vadd.f32 0.0, %v4854
      %v4856 = vpop.f32.mrb[0].mxu0
      %4857 = vmatprep.mubr.bf16.mxu0 0
      %4858 = vmatmul.mubr.bf16.gmra.mrb[0].mxu0 %v4481
      %v4859 = vpop.f32.mrb[0].mxu0
      %v4860 = vadd.f32 0.0, %v4859
      %v4861 = vpop.f32.mrb[0].mxu0
      %v4862 = vpop.f32.mrb[0].mxu0
      %v4863 = vadd.f32 0.0, %v4862
      %v4864 = vpop.f32.mrb[0].mxu0
      %4865 = vmatprep.mubr.bf16.mxu0 0
      %4866 = vmatmul.mubr.bf16.gmra.mrb[0].mxu0 %v4484
      %v4867 = vpop.f32.mrb[0].mxu0
      %v4868 = vadd.f32 0.0, %v4867
      %v4869 = vpop.f32.mrb[0].mxu0
      %v4870 = vpop.f32.mrb[0].mxu0
      %v4871 = vadd.f32 0.0, %v4870
      %v4872 = vpop.f32.mrb[0].mxu0
      %4873 = vmatprep.mubr.bf16.mxu0 0
      %4874 = vmatmul.mubr.bf16.gmra.mrb[0].mxu0 %v4487
      %v4875 = vpop.f32.mrb[0].mxu0
      %v4876 = vadd.f32 0.0, %v4875
      %v4877 = vpop.f32.mrb[0].mxu0
      %v4878 = vpop.f32.mrb[0].mxu0
      %v4879 = vadd.f32 0.0, %v4878
      %v4880 = vpop.f32.mrb[0].mxu0
      %4881 = vmatprep.mubr.bf16.mxu0 0
      %4882 = vmatmul.mubr.bf16.gmra.mrb[0].mxu0 %v4490
      %v4883 = vpop.f32.mrb[0].mxu0
      %v4884 = vadd.f32 0.0, %v4883
      %v4885 = vpop.f32.mrb[0].mxu0
      %v4886 = vpop.f32.mrb[0].mxu0
      %v4887 = vadd.f32 0.0, %v4886
      %v4888 = vpop.f32.mrb[0].mxu0
      %4889 = vmatprep.mubr.bf16.mxu0 0
      %4890 = vmatmul.mubr.bf16.gmra.mrb[0].mxu0 %v4493
      %v4891 = vpop.f32.mrb[0].mxu0
      %v4892 = vadd.f32 0.0, %v4891
      %v4893 = vpop.f32.mrb[0].mxu0
      %v4894 = vpop.f32.mrb[0].mxu0
      %v4895 = vadd.f32 0.0, %v4894
      %v4896 = vpop.f32.mrb[0].mxu0
      %4897 = vmatprep.mubr.bf16.mxu0 0
      %4898 = vmatmul.mubr.bf16.gmra.mrb[0].mxu0 %v4496
      %v4899 = vpop.f32.mrb[0].mxu0
      %v4900 = vadd.f32 0.0, %v4899
      %v4901 = vpop.f32.mrb[0].mxu0
      %v4902 = vpop.f32.mrb[0].mxu0
      %v4903 = vadd.f32 0.0, %v4902
      %v4904 = vpop.f32.mrb[0].mxu0
      %4905 = vmatprep.mubr.bf16.mxu0 0
      %4906 = vmatmul.mubr.bf16.gmra.mrb[0].mxu0 %v4499
      %v4907 = vpop.f32.mrb[0].mxu0
      %v4908 = vadd.f32 0.0, %v4907
      %v4909 = vpop.f32.mrb[0].mxu0
      %v4910 = vpop.f32.mrb[0].mxu0
      %v4911 = vadd.f32 0.0, %v4910
      %v4912 = vpop.f32.mrb[0].mxu0
      %4913 = vmatprep.mubr.bf16.mxu0 0
      %4914 = vmatmul.mubr.bf16.gmra.mrb[0].mxu0 %v4502
      %v4915 = vpop.f32.mrb[0].mxu0
      %v4916 = vadd.f32 0.0, %v4915
      %v4917 = vpop.f32.mrb[0].mxu0
      %v4918 = vpop.f32.mrb[0].mxu0
      %v4919 = vadd.f32 0.0, %v4918
      %v4920 = vpop.f32.mrb[0].mxu0
      %4921 = vmatprep.mubr.bf16.mxu0 0
      %4922 = vmatmul.mubr.bf16.gmra.mrb[0].mxu0 %v4505
      %v4923 = vpop.f32.mrb[0].mxu0
      %v4924 = vadd.f32 0.0, %v4923
      %v4925 = vpop.f32.mrb[0].mxu0
      %v4926 = vpop.f32.mrb[0].mxu0
      %v4927 = vadd.f32 0.0, %v4926
      %v4928 = vpop.f32.mrb[0].mxu0
      %4929 = vmatprep.mubr.bf16.mxu0 0
      %4930 = vmatmul.mubr.bf16.gmra.mrb[0].mxu0 %v4508
      %v4931 = vpop.f32.mrb[0].mxu0
      %v4932 = vadd.f32 0.0, %v4931
      %v4933 = vpop.f32.mrb[0].mxu0
      %v4934 = vpop.f32.mrb[0].mxu0
      %v4935 = vadd.f32 0.0, %v4934
      %v4936 = vpop.f32.mrb[0].mxu0
      %4937 = vmatprep.mubr.bf16.mxu0 0
      %4938 = vmatmul.mubr.bf16.gmra.mrb[0].mxu0 %v4511
      %v4939 = vpop.f32.mrb[0].mxu0
      %v4940 = vadd.f32 0.0, %v4939
      %v4941 = vpop.f32.mrb[0].mxu0
      %v4942 = vpop.f32.mrb[0].mxu0
      %v4943 = vadd.f32 0.0, %v4942
      %v4944 = vpop.f32.mrb[0].mxu0
      %4945 = vmatprep.mubr.bf16.mxu0 0
      %4946 = vmatmul.mubr.bf16.gmra.mrb[0].mxu0 %v4514
      %v4947 = vpop.f32.mrb[0].mxu0
      %v4948 = vadd.f32 0.0, %v4947
      %v4949 = vpop.f32.mrb[0].mxu0
      %v4950 = vpop.f32.mrb[0].mxu0
      %v4951 = vadd.f32 0.0, %v4950
      %v4952 = vpop.f32.mrb[0].mxu0
      %4953 = vmatprep.mubr.bf16.mxu0 0
      %4954 = vmatmul.mubr.bf16.gmra.mrb[0].mxu0 %v4517
      %v4955 = vpop.f32.mrb[0].mxu0
      %v4956 = vadd.f32 0.0, %v4955
      %v4957 = vpop.f32.mrb[0].mxu0
      %v4958 = vpop.f32.mrb[0].mxu0
      %v4959 = vadd.f32 0.0, %v4958
      %v4960 = vpop.f32.mrb[0].mxu0
      %4961 = vmatprep.mubr.bf16.mxu0 0
      %4962 = vmatmul.mubr.bf16.gmra.mrb[0].mxu0 %v4520
      %v4963 = vpop.f32.mrb[0].mxu0
      %v4964 = vadd.f32 0.0, %v4963
      %v4965 = vpop.f32.mrb[0].mxu0
      %v4966 = vpop.f32.mrb[0].mxu0
      %v4967 = vadd.f32 0.0, %v4966
      %v4968 = vpop.f32.mrb[0].mxu0
      %4969 = vmatprep.mubr.bf16.mxu0 0
      %4970 = vmatmul.mubr.bf16.gmra.mrb[0].mxu0 %v4523
      %v4971 = vpop.f32.mrb[0].mxu0
      %v4972 = vadd.f32 0.0, %v4971
      %v4973 = vpop.f32.mrb[0].mxu0
      %v4974 = vpop.f32.mrb[0].mxu0
      %v4975 = vadd.f32 0.0, %v4974
      %v4976 = vpop.f32.mrb[0].mxu0
      %4977 = vmatprep.mubr.bf16.mxu0 0
      %4978 = vmatmul.mubr.bf16.gmra.mrb[0].mxu0 %v4526
      %v4979 = vpop.f32.mrb[0].mxu0
      %v4980 = vadd.f32 0.0, %v4979
      %v4981 = vpop.f32.mrb[0].mxu0
      %v4982 = vpop.f32.mrb[0].mxu0
      %v4983 = vadd.f32 0.0, %v4982
      %v4984 = vpop.f32.mrb[0].mxu0
      %4985 = vmatprep.mubr.bf16.mxu0 0
      %4986 = vmatmul.mubr.bf16.gmra.mrb[0].mxu0 %v4529
      %v4987 = vpop.f32.mrb[0].mxu0
      %v4988 = vadd.f32 0.0, %v4987
      %v4989 = vpop.f32.mrb[0].mxu0
      %v4990 = vpop.f32.mrb[0].mxu0
      %v4991 = vadd.f32 0.0, %v4990
      %v4992 = vpop.f32.mrb[0].mxu0
      %4993 = vmatprep.mubr.bf16.mxu0 0
      %4994 = vmatmul.mubr.bf16.gmra.mrb[0].mxu0 %v4532
      %v4995 = vpop.f32.mrb[0].mxu0
      %v4996 = vadd.f32 0.0, %v4995
      %v4997 = vpop.f32.mrb[0].mxu0
      %v4998 = vpop.f32.mrb[0].mxu0
      %v4999 = vadd.f32 0.0, %v4998
      %v5000 = vpop.f32.mrb[0].mxu0
      %5001 = vmatprep.mubr.bf16.mxu0 0
      %5002 = vmatmul.mubr.bf16.gmra.mrb[0].mxu0 %v4535
      %v5003 = vpop.f32.mrb[0].mxu0
      %v5004 = vadd.f32 0.0, %v5003
      %v5005 = vpop.f32.mrb[0].mxu0
      %v5006 = vpop.f32.mrb[0].mxu0
      %v5007 = vadd.f32 0.0, %v5006
      %v5008 = vpop.f32.mrb[0].mxu0
      %5009 = vmatprep.mubr.bf16.mxu0 0
      %5010 = vmatmul.mubr.bf16.gmra.mrb[0].mxu0 %v4538
      %v5011 = vpop.f32.mrb[0].mxu0
      %v5012 = vadd.f32 0.0, %v5011
      %v5013 = vpop.f32.mrb[0].mxu0
      %v5014 = vpop.f32.mrb[0].mxu0
      %v5015 = vadd.f32 0.0, %v5014
      %v5016 = vpop.f32.mrb[0].mxu0
      %5017 = vmatprep.mubr.bf16.mxu0 0
      %5018 = vmatmul.mubr.bf16.gmra.mrb[0].mxu0 %v4541
      %v5019 = vpop.f32.mrb[0].mxu0
      %v5020 = vadd.f32 0.0, %v5019
      %v5021 = vpop.f32.mrb[0].mxu0
      %v5022 = vpop.f32.mrb[0].mxu0
      %v5023 = vadd.f32 0.0, %v5022
      %v5024 = vpop.f32.mrb[0].mxu0
      %5025 = vmatprep.mubr.bf16.mxu0 0
      %5026 = vmatmul.mubr.bf16.gmra.mrb[0].mxu0 %v4544
      %v5027 = vpop.f32.mrb[0].mxu0
      %v5028 = vadd.f32 0.0, %v5027
      %v5029 = vpop.f32.mrb[0].mxu0
      %v5030 = vpop.f32.mrb[0].mxu0
      %v5031 = vadd.f32 0.0, %v5030
      %v5032 = vpop.f32.mrb[0].mxu0
      %5033 = vmatprep.mubr.bf16.mxu0 0
      %5034 = vmatmul.mubr.bf16.gmra.mrb[0].mxu0 %v4547
      %v5035 = vpop.f32.mrb[0].mxu0
      %v5036 = vadd.f32 0.0, %v5035
      %v5037 = vpop.f32.mrb[0].mxu0
      %v5038 = vpop.f32.mrb[0].mxu0
      %v5039 = vadd.f32 0.0, %v5038
      %v5040 = vpop.f32.mrb[0].mxu0
      %5041 = vmatprep.mubr.bf16.mxu0 0
      %5042 = vmatmul.mubr.bf16.gmra.mrb[0].mxu0 %v4550
      %v5043 = vpop.f32.mrb[0].mxu0
      %v5044 = vadd.f32 0.0, %v5043
      %v5045 = vpop.f32.mrb[0].mxu0
      %v5046 = vpop.f32.mrb[0].mxu0
      %v5047 = vadd.f32 0.0, %v5046
      %v5048 = vpop.f32.mrb[0].mxu0
      %5049 = vmatprep.mubr.bf16.mxu0 0
      %5050 = vmatmul.mubr.bf16.gmra.mrb[0].mxu0 %v4553
      %v5051 = vpop.f32.mrb[0].mxu0
      %v5052 = vadd.f32 0.0, %v5051
      %v5053 = vpop.f32.mrb[0].mxu0
      %v5054 = vpop.f32.mrb[0].mxu0
      %v5055 = vadd.f32 0.0, %v5054
      %v5056 = vpop.f32.mrb[0].mxu0
      %5057 = vmatprep.mubr.bf16.mxu0 0
      %5058 = vmatmul.mubr.bf16.gmra.mrb[0].mxu0 %v4556
      %v5059 = vpop.f32.mrb[0].mxu0
      %v5060 = vadd.f32 0.0, %v5059
      %v5061 = vpop.f32.mrb[0].mxu0
      %v5062 = vpop.f32.mrb[0].mxu0
      %v5063 = vadd.f32 0.0, %v5062
      %v5064 = vpop.f32.mrb[0].mxu0
      %5065 = vmatprep.mubr.bf16.mxu0 0
      %5066 = vmatmul.mubr.bf16.gmra.mrb[0].mxu0 %v4559
      %v5067 = vpop.f32.mrb[0].mxu0
      %v5068 = vadd.f32 0.0, %v5067
      %v5069 = vpop.f32.mrb[0].mxu0
      %v5070 = vpop.f32.mrb[0].mxu0
      %v5071 = vadd.f32 0.0, %v5070
      %v5072 = vpop.f32.mrb[0].mxu0
      %5073 = vmatprep.mubr.bf16.mxu0 0
      %5074 = vmatmul.mubr.bf16.gmra.mrb[0].mxu0 %v4562
      %v5075 = vpop.f32.mrb[0].mxu0
      %v5076 = vadd.f32 0.0, %v5075
      %v5077 = vpop.f32.mrb[0].mxu0
      %v5078 = vpop.f32.mrb[0].mxu0
      %v5079 = vadd.f32 0.0, %v5078
      %v5080 = vpop.f32.mrb[0].mxu0
      %5081 = vmatprep.mubr.bf16.mxu0 0
      %5082 = vmatmul.mubr.bf16.gmra.mrb[0].mxu0 %v4565
      %v5083 = vpop.f32.mrb[0].mxu0
      %v5084 = vadd.f32 0.0, %v5083
      %v5085 = vpop.f32.mrb[0].mxu0
      %v5086 = vpop.f32.mrb[0].mxu0
      %v5087 = vadd.f32 0.0, %v5086
      %v5088 = vpop.f32.mrb[0].mxu0
      %5089 = vmatprep.mubr.bf16.mxu0 0
      %5090 = vmatmul.mubr.bf16.gmra.mrb[0].mxu0 %v4568
      %v5091 = vpop.f32.mrb[0].mxu0
      %v5092 = vadd.f32 0.0, %v5091
      %v5093 = vpop.f32.mrb[0].mxu0
      %v5094 = vpop.f32.mrb[0].mxu0
      %v5095 = vadd.f32 0.0, %v5094
      %v5096 = vpop.f32.mrb[0].mxu0
      %5097 = vmatprep.mubr.bf16.mxu0 0
      %5098 = vmatmul.mubr.bf16.gmra.mrb[0].mxu0 %v4571
      %v5099 = vpop.f32.mrb[0].mxu0
      %v5100 = vadd.f32 0.0, %v5099
      %v5101 = vpop.f32.mrb[0].mxu0
      %v5102 = vpop.f32.mrb[0].mxu0
      %v5103 = vadd.f32 0.0, %v5102
      %v5104 = vpop.f32.mrb[0].mxu0
      %5105 = vmatprep.mubr.bf16.mxu0 0
      %5106 = vmatmul.mubr.bf16.gmra.mrb[0].mxu0 %v4574
      %v5107 = vpop.f32.mrb[0].mxu0
      %v5108 = vadd.f32 0.0, %v5107
      %v5109 = vpop.f32.mrb[0].mxu0
      %v5110 = vpop.f32.mrb[0].mxu0
      %v5111 = vadd.f32 0.0, %v5110
      %v5112 = vpop.f32.mrb[0].mxu0
      %5113 = vmatprep.mubr.bf16.mxu0 0
      %5114 = vmatmul.mubr.bf16.gmra.mrb[0].mxu0 %v4577
      %v5115 = vpop.f32.mrb[0].mxu0
      %v5116 = vadd.f32 0.0, %v5115
      %v5117 = vpop.f32.mrb[0].mxu0
      %v5118 = vpop.f32.mrb[0].mxu0
      %v5119 = vadd.f32 0.0, %v5118
      %v5120 = vpop.f32.mrb[0].mxu0
      %5121 = vmatprep.mubr.bf16.mxu0 0
      %5122 = vmatmul.mubr.bf16.gmra.mrb[0].mxu0 %v4580
      %v5123 = vpop.f32.mrb[0].mxu0
      %v5124 = vadd.f32 0.0, %v5123
      %v5125 = vpop.f32.mrb[0].mxu0
      %v5126 = vpop.f32.mrb[0].mxu0
      %v5127 = vadd.f32 0.0, %v5126
      %v5128 = vpop.f32.mrb[0].mxu0
      %5129 = vdwg.mxu0
      %v5130 = vadd.f32 %v4068, %v4620
      %v5131 = vadd.f32 %v4069, %v4623
      %v5132 = vadd.f32 %v4070, %v4628
      %v5133 = vadd.f32 %v4071, %v4631
      %v5134 = vadd.f32 %v4072, %v4636
      %v5135 = vadd.f32 %v4073, %v4639
      %v5136 = vadd.f32 %v4074, %v4644
      %v5137 = vadd.f32 %v4075, %v4647
      %v5138 = vadd.f32 %v4076, %v4652
      %v5139 = vadd.f32 %v4077, %v4655
      %v5140 = vadd.f32 %v4078, %v4660
      %v5141 = vadd.f32 %v4079, %v4663
      %v5142 = vadd.f32 %v4080, %v4668
      %v5143 = vadd.f32 %v4081, %v4671
      %v5144 = vadd.f32 %v4082, %v4676
      %v5145 = vadd.f32 %v4083, %v4679
      %v5146 = vadd.f32 %v4084, %v4684
      %v5147 = vadd.f32 %v4085, %v4687
      %v5148 = vadd.f32 %v4086, %v4692
      %v5149 = vadd.f32 %v4087, %v4695
      %v5150 = vadd.f32 %v4088, %v4700
      %v5151 = vadd.f32 %v4089, %v4703
      %v5152 = vadd.f32 %v4090, %v4708
      %v5153 = vadd.f32 %v4091, %v4711
      %v5154 = vadd.f32 %v4092, %v4716
      %v5155 = vadd.f32 %v4093, %v4719
      %v5156 = vadd.f32 %v4094, %v4724
      %v5157 = vadd.f32 %v4095, %v4727
      %v5158 = vadd.f32 %v4096, %v4732
      %v5159 = vadd.f32 %v4097, %v4735
      %v5160 = vadd.f32 %v4098, %v4740
      %v5161 = vadd.f32 %v4099, %v4743
      %v5162 = vadd.f32 %v4100, %v4748
      %v5163 = vadd.f32 %v4101, %v4751
      %v5164 = vadd.f32 %v4102, %v4756
      %v5165 = vadd.f32 %v4103, %v4759
      %v5166 = vadd.f32 %v4104, %v4764
      %v5167 = vadd.f32 %v4105, %v4767
      %v5168 = vadd.f32 %v4106, %v4772
      %v5169 = vadd.f32 %v4107, %v4775
      %v5170 = vadd.f32 %v4108, %v4780
      %v5171 = vadd.f32 %v4109, %v4783
      %v5172 = vadd.f32 %v4110, %v4788
      %v5173 = vadd.f32 %v4111, %v4791
      %v5174 = vadd.f32 %v4112, %v4796
      %v5175 = vadd.f32 %v4113, %v4799
      %v5176 = vadd.f32 %v4114, %v4804
      %v5177 = vadd.f32 %v4115, %v4807
      %v5178 = vadd.f32 %v4116, %v4812
      %v5179 = vadd.f32 %v4117, %v4815
      %v5180 = vadd.f32 %v4118, %v4820
      %v5181 = vadd.f32 %v4119, %v4823
      %v5182 = vadd.f32 %v4120, %v4828
      %v5183 = vadd.f32 %v4121, %v4831
      %v5184 = vadd.f32 %v4122, %v4836
      %v5185 = vadd.f32 %v4123, %v4839
      %v5186 = vadd.f32 %v4124, %v4844
      %v5187 = vadd.f32 %v4125, %v4847
      %v5188 = vadd.f32 %v4126, %v4852
      %v5189 = vadd.f32 %v4127, %v4855
      %v5190 = vadd.f32 %v4128, %v4860
      %v5191 = vadd.f32 %v4129, %v4863
      %v5192 = vadd.f32 %v4130, %v4868
      %v5193 = vadd.f32 %v4131, %v4871
      %v5194 = vadd.f32 %v4132, %v4876
      %v5195 = vadd.f32 %v4133, %v4879
      %v5196 = vadd.f32 %v4134, %v4884
      %v5197 = vadd.f32 %v4135, %v4887
      %v5198 = vadd.f32 %v4136, %v4892
      %v5199 = vadd.f32 %v4137, %v4895
      %v5200 = vadd.f32 %v4138, %v4900
      %v5201 = vadd.f32 %v4139, %v4903
      %v5202 = vadd.f32 %v4140, %v4908
      %v5203 = vadd.f32 %v4141, %v4911
      %v5204 = vadd.f32 %v4142, %v4916
      %v5205 = vadd.f32 %v4143, %v4919
      %v5206 = vadd.f32 %v4144, %v4924
      %v5207 = vadd.f32 %v4145, %v4927
      %v5208 = vadd.f32 %v4146, %v4932
      %v5209 = vadd.f32 %v4147, %v4935
      %v5210 = vadd.f32 %v4148, %v4940
      %v5211 = vadd.f32 %v4149, %v4943
      %v5212 = vadd.f32 %v4150, %v4948
      %v5213 = vadd.f32 %v4151, %v4951
      %v5214 = vadd.f32 %v4152, %v4956
      %v5215 = vadd.f32 %v4153, %v4959
      %v5216 = vadd.f32 %v4154, %v4964
      %v5217 = vadd.f32 %v4155, %v4967
      %v5218 = vadd.f32 %v4156, %v4972
      %v5219 = vadd.f32 %v4157, %v4975
      %v5220 = vadd.f32 %v4158, %v4980
      %v5221 = vadd.f32 %v4159, %v4983
      %v5222 = vadd.f32 %v4160, %v4988
      %v5223 = vadd.f32 %v4161, %v4991
      %v5224 = vadd.f32 %v4162, %v4996
      %v5225 = vadd.f32 %v4163, %v4999
      %v5226 = vadd.f32 %v4164, %v5004
      %v5227 = vadd.f32 %v4165, %v5007
      %v5228 = vadd.f32 %v4166, %v5012
      %v5229 = vadd.f32 %v4167, %v5015
      %v5230 = vadd.f32 %v4168, %v5020
      %v5231 = vadd.f32 %v4169, %v5023
      %v5232 = vadd.f32 %v4170, %v5028
      %v5233 = vadd.f32 %v4171, %v5031
      %v5234 = vadd.f32 %v4172, %v5036
      %v5235 = vadd.f32 %v4173, %v5039
      %v5236 = vadd.f32 %v4174, %v5044
      %v5237 = vadd.f32 %v4175, %v5047
      %v5238 = vadd.f32 %v4176, %v5052
      %v5239 = vadd.f32 %v4177, %v5055
      %v5240 = vadd.f32 %v4178, %v5060
      %v5241 = vadd.f32 %v4179, %v5063
      %v5242 = vadd.f32 %v4180, %v5068
      %v5243 = vadd.f32 %v4181, %v5071
      %v5244 = vadd.f32 %v4182, %v5076
      %v5245 = vadd.f32 %v4183, %v5079
      %v5246 = vadd.f32 %v4184, %v5084
      %v5247 = vadd.f32 %v4185, %v5087
      %v5248 = vadd.f32 %v4186, %v5092
      %v5249 = vadd.f32 %v4187, %v5095
      %v5250 = vadd.f32 %v4188, %v5100
      %v5251 = vadd.f32 %v4189, %v5103
      %v5252 = vadd.f32 %v4190, %v5108
      %v5253 = vadd.f32 %v4191, %v5111
      %v5254 = vadd.f32 %v4192, %v5116
      %v5255 = vadd.f32 %v4193, %v5119
      %v5256 = vadd.f32 %v4194, %v5124
      %v5257 = vadd.f32 %v4195, %v5127
      %v5258 = vld [vmem:[%s3133 + $0x2] sm:$0xff]
      %v5259 = vld [vmem:[%s3133 + $0xa] sm:$0xff]
      %v5260 = vld [vmem:[%s3133 + $0x12] sm:$0xff]
      %v5261 = vld [vmem:[%s3133 + $0x1a] sm:$0xff]
      %v5262 = vld [vmem:[%s3133 + $0x2a] sm:$0xff]
      %v5263 = vld [vmem:[%s3133 + $0x32] sm:$0xff]
      %v5264 = vld [vmem:[%s3133 + $0x3a] sm:$0xff]
      %v5265 = vld [vmem:[%s3133 + $0x42] sm:$0xff]
      %v5266 = vld [vmem:[%s3133 + $0x52] sm:$0xff]
      %v5267 = vld [vmem:[%s3133 + $0x5a] sm:$0xff]
      %v5268 = vld [vmem:[%s3133 + $0x62] sm:$0xff]
      %v5269 = vld [vmem:[%s3133 + $0x6a] sm:$0xff]
      %v5270 = vld [vmem:[%s3133 + $0x7a] sm:$0xff]
      %v5271 = vld [vmem:[%s3133 + $0x82] sm:$0xff]
      %v5272 = vld [vmem:[%s3133 + $0x8a] sm:$0xff]
      %v5273 = vld [vmem:[%s3133 + $0x92] sm:$0xff]
      %v5274 = vld [vmem:[%s3133 + $0xa2] sm:$0xff]
      %v5275 = vld [vmem:[%s3133 + $0xaa] sm:$0xff]
      %v5276 = vld [vmem:[%s3133 + $0xb2] sm:$0xff]
      %v5277 = vld [vmem:[%s3133 + $0xba] sm:$0xff]
      %v5278 = vld [vmem:[%s3133 + $0xca] sm:$0xff]
      %v5279 = vld [vmem:[%s3133 + $0xd2] sm:$0xff]
      %v5280 = vld [vmem:[%s3133 + $0xda] sm:$0xff]
      %v5281 = vld [vmem:[%s3133 + $0xe2] sm:$0xff]
      %v5282 = vld [vmem:[%s3133 + $0xf2] sm:$0xff]
      %v5283 = vld [vmem:[%s3133 + $0xfa] sm:$0xff]
      %v5284 = vld [vmem:[%s3133 + $0x102] sm:$0xff]
      %v5285 = vld [vmem:[%s3133 + $0x10a] sm:$0xff]
      %v5286 = vld [vmem:[%s3133 + $0x11a] sm:$0xff]
      %v5287 = vld [vmem:[%s3133 + $0x122] sm:$0xff]
      %v5288 = vld [vmem:[%s3133 + $0x12a] sm:$0xff]
      %v5289 = vld [vmem:[%s3133 + $0x132] sm:$0xff]
      %v5290 = vld [vmem:[%s3133 + $0x142] sm:$0xff]
      %v5291 = vld [vmem:[%s3133 + $0x14a] sm:$0xff]
      %v5292 = vld [vmem:[%s3133 + $0x152] sm:$0xff]
      %v5293 = vld [vmem:[%s3133 + $0x15a] sm:$0xff]
      %v5294 = vld [vmem:[%s3133 + $0x16a] sm:$0xff]
      %v5295 = vld [vmem:[%s3133 + $0x172] sm:$0xff]
      %v5296 = vld [vmem:[%s3133 + $0x17a] sm:$0xff]
      %v5297 = vld [vmem:[%s3133 + $0x182] sm:$0xff]
      %v5298 = vld [vmem:[%s3133 + $0x192] sm:$0xff]
      %v5299 = vld [vmem:[%s3133 + $0x19a] sm:$0xff]
      %v5300 = vld [vmem:[%s3133 + $0x1a2] sm:$0xff]
      %v5301 = vld [vmem:[%s3133 + $0x1aa] sm:$0xff]
      %v5302 = vld [vmem:[%s3133 + $0x1ba] sm:$0xff]
      %v5303 = vld [vmem:[%s3133 + $0x1c2] sm:$0xff]
      %v5304 = vld [vmem:[%s3133 + $0x1ca] sm:$0xff]
      %v5305 = vld [vmem:[%s3133 + $0x1d2] sm:$0xff]
      %v5306 = vld [vmem:[%s3133 + $0x1e2] sm:$0xff]
      %v5307 = vld [vmem:[%s3133 + $0x1ea] sm:$0xff]
      %v5308 = vld [vmem:[%s3133 + $0x1f2] sm:$0xff]
      %v5309 = vld [vmem:[%s3133 + $0x1fa] sm:$0xff]
      %v5310 = vld [vmem:[%s3133 + $0x20a] sm:$0xff]
      %v5311 = vld [vmem:[%s3133 + $0x212] sm:$0xff]
      %v5312 = vld [vmem:[%s3133 + $0x21a] sm:$0xff]
      %v5313 = vld [vmem:[%s3133 + $0x222] sm:$0xff]
      %v5314 = vld [vmem:[%s3133 + $0x232] sm:$0xff]
      %v5315 = vld [vmem:[%s3133 + $0x23a] sm:$0xff]
      %v5316 = vld [vmem:[%s3133 + $0x242] sm:$0xff]
      %v5317 = vld [vmem:[%s3133 + $0x24a] sm:$0xff]
      %v5318 = vld [vmem:[%s3133 + $0x25a] sm:$0xff]
      %v5319 = vld [vmem:[%s3133 + $0x262] sm:$0xff]
      %v5320 = vld [vmem:[%s3133 + $0x26a] sm:$0xff]
      %v5321 = vld [vmem:[%s3133 + $0x272] sm:$0xff]
      %v5322 = vld [vmem:[%s3133 + $0x282] sm:$0xff]
      %v5323 = vld [vmem:[%s3133 + $0x28a] sm:$0xff]
      %v5324 = vld [vmem:[%s3133 + $0x292] sm:$0xff]
      %v5325 = vld [vmem:[%s3133 + $0x29a] sm:$0xff]
      %v5326 = vld [vmem:[%s3133 + $0x2aa] sm:$0xff]
      %v5327 = vld [vmem:[%s3133 + $0x2b2] sm:$0xff]
      %v5328 = vld [vmem:[%s3133 + $0x2ba] sm:$0xff]
      %v5329 = vld [vmem:[%s3133 + $0x2c2] sm:$0xff]
      %v5330 = vld [vmem:[%s3133 + $0x2d2] sm:$0xff]
      %v5331 = vld [vmem:[%s3133 + $0x2da] sm:$0xff]
      %v5332 = vld [vmem:[%s3133 + $0x2e2] sm:$0xff]
      %v5333 = vld [vmem:[%s3133 + $0x2ea] sm:$0xff]
      %v5334 = vld [vmem:[%s3133 + $0x2fa] sm:$0xff]
      %v5335 = vld [vmem:[%s3133 + $0x302] sm:$0xff]
      %v5336 = vld [vmem:[%s3133 + $0x30a] sm:$0xff]
      %v5337 = vld [vmem:[%s3133 + $0x312] sm:$0xff]
      %v5338 = vld [vmem:[%s3133 + $0x322] sm:$0xff]
      %v5339 = vld [vmem:[%s3133 + $0x32a] sm:$0xff]
      %v5340 = vld [vmem:[%s3133 + $0x332] sm:$0xff]
      %v5341 = vld [vmem:[%s3133 + $0x33a] sm:$0xff]
      %v5342 = vld [vmem:[%s3133 + $0x34a] sm:$0xff]
      %v5343 = vld [vmem:[%s3133 + $0x352] sm:$0xff]
      %v5344 = vld [vmem:[%s3133 + $0x35a] sm:$0xff]
      %v5345 = vld [vmem:[%s3133 + $0x362] sm:$0xff]
      %v5346 = vld [vmem:[%s3133 + $0x372] sm:$0xff]
      %v5347 = vld [vmem:[%s3133 + $0x37a] sm:$0xff]
      %v5348 = vld [vmem:[%s3133 + $0x382] sm:$0xff]
      %v5349 = vld [vmem:[%s3133 + $0x38a] sm:$0xff]
      %v5350 = vld [vmem:[%s3133 + $0x39a] sm:$0xff]
      %v5351 = vld [vmem:[%s3133 + $0x3a2] sm:$0xff]
      %v5352 = vld [vmem:[%s3133 + $0x3aa] sm:$0xff]
      %v5353 = vld [vmem:[%s3133 + $0x3b2] sm:$0xff]
      %v5354 = vld [vmem:[%s3133 + $0x3c2] sm:$0xff]
      %v5355 = vld [vmem:[%s3133 + $0x3ca] sm:$0xff]
      %v5356 = vld [vmem:[%s3133 + $0x3d2] sm:$0xff]
      %v5357 = vld [vmem:[%s3133 + $0x3da] sm:$0xff]
      %v5358 = vld [vmem:[%s3133 + $0x3ea] sm:$0xff]
      %v5359 = vld [vmem:[%s3133 + $0x3f2] sm:$0xff]
      %v5360 = vld [vmem:[%s3133 + $0x3fa] sm:$0xff]
      %v5361 = vld [vmem:[%s3133 + $0x402] sm:$0xff]
      %v5362 = vld [vmem:[%s3133 + $0x412] sm:$0xff]
      %v5363 = vld [vmem:[%s3133 + $0x41a] sm:$0xff]
      %v5364 = vld [vmem:[%s3133 + $0x422] sm:$0xff]
      %v5365 = vld [vmem:[%s3133 + $0x42a] sm:$0xff]
      %v5366 = vld [vmem:[%s3133 + $0x43a] sm:$0xff]
      %v5367 = vld [vmem:[%s3133 + $0x442] sm:$0xff]
      %v5368 = vld [vmem:[%s3133 + $0x44a] sm:$0xff]
      %v5369 = vld [vmem:[%s3133 + $0x452] sm:$0xff]
      %v5370 = vld [vmem:[%s3133 + $0x462] sm:$0xff]
      %v5371 = vld [vmem:[%s3133 + $0x46a] sm:$0xff]
      %v5372 = vld [vmem:[%s3133 + $0x472] sm:$0xff]
      %v5373 = vld [vmem:[%s3133 + $0x47a] sm:$0xff]
      %v5374 = vld [vmem:[%s3133 + $0x48a] sm:$0xff]
      %v5375 = vld [vmem:[%s3133 + $0x492] sm:$0xff]
      %v5376 = vld [vmem:[%s3133 + $0x49a] sm:$0xff]
      %v5377 = vld [vmem:[%s3133 + $0x4a2] sm:$0xff]
      %v5378 = vld [vmem:[%s3133 + $0x4b2] sm:$0xff]
      %v5379 = vld [vmem:[%s3133 + $0x4ba] sm:$0xff]
      %v5380 = vld [vmem:[%s3133 + $0x4c2] sm:$0xff]
      %v5381 = vld [vmem:[%s3133 + $0x4ca] sm:$0xff]
      %v5382 = vld [vmem:[%s3133 + $0x4da] sm:$0xff]
      %v5383 = vld [vmem:[%s3133 + $0x4e2] sm:$0xff]
      %v5384 = vld [vmem:[%s3133 + $0x4ea] sm:$0xff]
      %v5385 = vld [vmem:[%s3133 + $0x4f2] sm:$0xff]
      %v5386 = vpack.c.bf16 %v5259, %v5258
      %v5387 = vpack.c.bf16 %v5261, %v5260
      %v5388 = vpack.c.bf16 %v5263, %v5262
      %v5389 = vpack.c.bf16 %v5265, %v5264
      %v5390 = vpack.c.bf16 %v5267, %v5266
      %v5391 = vpack.c.bf16 %v5269, %v5268
      %v5392 = vpack.c.bf16 %v5271, %v5270
      %v5393 = vpack.c.bf16 %v5273, %v5272
      %v5394 = vpack.c.bf16 %v5275, %v5274
      %v5395 = vpack.c.bf16 %v5277, %v5276
      %v5396 = vpack.c.bf16 %v5279, %v5278
      %v5397 = vpack.c.bf16 %v5281, %v5280
      %v5398 = vpack.c.bf16 %v5283, %v5282
      %v5399 = vpack.c.bf16 %v5285, %v5284
      %v5400 = vpack.c.bf16 %v5287, %v5286
      %v5401 = vpack.c.bf16 %v5289, %v5288
      %v5402 = vpack.c.bf16 %v5291, %v5290
      %v5403 = vpack.c.bf16 %v5293, %v5292
      %v5404 = vpack.c.bf16 %v5295, %v5294
      %v5405 = vpack.c.bf16 %v5297, %v5296
      %v5406 = vpack.c.bf16 %v5299, %v5298
      %v5407 = vpack.c.bf16 %v5301, %v5300
      %v5408 = vpack.c.bf16 %v5303, %v5302
      %v5409 = vpack.c.bf16 %v5305, %v5304
      %v5410 = vpack.c.bf16 %v5307, %v5306
      %v5411 = vpack.c.bf16 %v5309, %v5308
      %v5412 = vpack.c.bf16 %v5311, %v5310
      %v5413 = vpack.c.bf16 %v5313, %v5312
      %v5414 = vpack.c.bf16 %v5315, %v5314
      %v5415 = vpack.c.bf16 %v5317, %v5316
      %v5416 = vpack.c.bf16 %v5319, %v5318
      %v5417 = vpack.c.bf16 %v5321, %v5320
      %v5418 = vpack.c.bf16 %v5323, %v5322
      %v5419 = vpack.c.bf16 %v5325, %v5324
      %v5420 = vpack.c.bf16 %v5327, %v5326
      %v5421 = vpack.c.bf16 %v5329, %v5328
      %v5422 = vpack.c.bf16 %v5331, %v5330
      %v5423 = vpack.c.bf16 %v5333, %v5332
      %v5424 = vpack.c.bf16 %v5335, %v5334
      %v5425 = vpack.c.bf16 %v5337, %v5336
      %v5426 = vpack.c.bf16 %v5339, %v5338
      %v5427 = vpack.c.bf16 %v5341, %v5340
      %v5428 = vpack.c.bf16 %v5343, %v5342
      %v5429 = vpack.c.bf16 %v5345, %v5344
      %v5430 = vpack.c.bf16 %v5347, %v5346
      %v5431 = vpack.c.bf16 %v5349, %v5348
      %v5432 = vpack.c.bf16 %v5351, %v5350
      %v5433 = vpack.c.bf16 %v5353, %v5352
      %v5434 = vpack.c.bf16 %v5355, %v5354
      %v5435 = vpack.c.bf16 %v5357, %v5356
      %v5436 = vpack.c.bf16 %v5359, %v5358
      %v5437 = vpack.c.bf16 %v5361, %v5360
      %v5438 = vpack.c.bf16 %v5363, %v5362
      %v5439 = vpack.c.bf16 %v5365, %v5364
      %v5440 = vpack.c.bf16 %v5367, %v5366
      %v5441 = vpack.c.bf16 %v5369, %v5368
      %v5442 = vpack.c.bf16 %v5371, %v5370
      %v5443 = vpack.c.bf16 %v5373, %v5372
      %v5444 = vpack.c.bf16 %v5375, %v5374
      %v5445 = vpack.c.bf16 %v5377, %v5376
      %v5446 = vpack.c.bf16 %v5379, %v5378
      %v5447 = vpack.c.bf16 %v5381, %v5380
      %v5448 = vpack.c.bf16 %v5383, %v5382
      %v5449 = vpack.c.bf16 %v5385, %v5384
      %s5450 = scalar_lea.vmem %s1, 10
      %v5451 = vld [vmem:[%s5450] sm:$0x3]
      %v5453 = vsel %vm586, %v5386, 0
      %v5456 = vsel %vm586, %v5387, 0
      %v5459 = vsel %vm586, %v5388, 0
      %v5462 = vsel %vm586, %v5389, 0
      %v5465 = vsel %vm586, %v5390, 0
      %v5468 = vsel %vm586, %v5391, 0
      %v5471 = vsel %vm586, %v5392, 0
      %v5474 = vsel %vm586, %v5393, 0
      %v5477 = vsel %vm586, %v5394, 0
      %v5480 = vsel %vm586, %v5395, 0
      %v5483 = vsel %vm586, %v5396, 0
      %v5486 = vsel %vm586, %v5397, 0
      %v5489 = vsel %vm586, %v5398, 0
      %v5492 = vsel %vm586, %v5399, 0
      %v5495 = vsel %vm586, %v5400, 0
      %v5498 = vsel %vm586, %v5401, 0
      %v5501 = vsel %vm586, %v5402, 0
      %v5504 = vsel %vm586, %v5403, 0
      %v5507 = vsel %vm586, %v5404, 0
      %v5510 = vsel %vm586, %v5405, 0
      %v5513 = vsel %vm586, %v5406, 0
      %v5516 = vsel %vm586, %v5407, 0
      %v5519 = vsel %vm586, %v5408, 0
      %v5522 = vsel %vm586, %v5409, 0
      %v5525 = vsel %vm586, %v5410, 0
      %v5528 = vsel %vm586, %v5411, 0
      %v5531 = vsel %vm586, %v5412, 0
      %v5534 = vsel %vm586, %v5413, 0
      %v5537 = vsel %vm586, %v5414, 0
      %v5540 = vsel %vm586, %v5415, 0
      %v5543 = vsel %vm586, %v5416, 0
      %v5546 = vsel %vm586, %v5417, 0
      %v5549 = vsel %vm586, %v5418, 0
      %v5552 = vsel %vm586, %v5419, 0
      %v5555 = vsel %vm586, %v5420, 0
      %v5558 = vsel %vm586, %v5421, 0
      %v5561 = vsel %vm586, %v5422, 0
      %v5564 = vsel %vm586, %v5423, 0
      %v5567 = vsel %vm586, %v5424, 0
      %v5570 = vsel %vm586, %v5425, 0
      %v5573 = vsel %vm586, %v5426, 0
      %v5576 = vsel %vm586, %v5427, 0
      %v5579 = vsel %vm586, %v5428, 0
      %v5582 = vsel %vm586, %v5429, 0
      %v5585 = vsel %vm586, %v5430, 0
      %v5588 = vsel %vm586, %v5431, 0
      %v5591 = vsel %vm586, %v5432, 0
      %v5594 = vsel %vm586, %v5433, 0
      %v5597 = vsel %vm586, %v5434, 0
      %v5600 = vsel %vm586, %v5435, 0
      %v5603 = vsel %vm586, %v5436, 0
      %v5606 = vsel %vm586, %v5437, 0
      %v5609 = vsel %vm586, %v5438, 0
      %v5612 = vsel %vm586, %v5439, 0
      %v5615 = vsel %vm586, %v5440, 0
      %v5618 = vsel %vm586, %v5441, 0
      %v5621 = vsel %vm586, %v5442, 0
      %v5624 = vsel %vm586, %v5443, 0
      %v5627 = vsel %vm586, %v5444, 0
      %v5630 = vsel %vm586, %v5445, 0
      %v5633 = vsel %vm586, %v5446, 0
      %v5636 = vsel %vm586, %v5447, 0
      %v5639 = vsel %vm586, %v5448, 0
      %v5642 = vsel %vm586, %v5449, 0
      %v5645 = vand.u32 %v5451, %v782
      %5647 = vmatprep.subr.bf16.mxu0 0
      %5648 = vmatpush1.bf16.msra.mxu0 %v5645
      %5649 = vmatprep.subr.bf16.mxu0 0
      %5650 = vmatpush1.bf16.msra.mxu0 0
      %5651 = vmatprep.subr.bf16.mxu0 0
      %5652 = vmatpush1.bf16.msra.mxu0 0
      %5653 = vmatprep.subr.bf16.mxu0 0
      %5654 = vmatpush1.bf16.msra.mxu0 0
      %5655 = vmatprep.subr.bf16.mxu0 0
      %5656 = vmatpush1.bf16.msra.mxu0 0
      %5657 = vmatprep.subr.bf16.mxu0 0
      %5658 = vmatpush1.bf16.msra.mxu0 0
      %5659 = vmatprep.subr.bf16.mxu0 0
      %5660 = vmatpush1.bf16.msra.mxu0 0
      %5661 = vmatprep.subr.bf16.mxu0 0
      %5662 = vmatpush1.bf16.msra.mxu0 0
      %5663 = vmatprep.subr.bf16.mxu0 0
      %5664 = vmatpush1.bf16.msra.mxu0 0
      %5665 = vmatprep.subr.bf16.mxu0 0
      %5666 = vmatpush1.bf16.msra.mxu0 0
      %5667 = vmatprep.subr.bf16.mxu0 0
      %5668 = vmatpush1.bf16.msra.mxu0 0
      %5669 = vmatprep.subr.bf16.mxu0 0
      %5670 = vmatpush1.bf16.msra.mxu0 0
      %5671 = vmatprep.subr.bf16.mxu0 0
      %5672 = vmatpush1.bf16.msra.mxu0 0
      %5673 = vmatprep.subr.bf16.mxu0 0
      %5674 = vmatpush1.bf16.msra.mxu0 0
      %5675 = vmatprep.subr.bf16.mxu0 0
      %5676 = vmatpush1.bf16.msra.mxu0 0
      %5677 = vmatprep.subr.bf16.mxu0 0
      %5678 = vmatpush1.bf16.msra.mxu0 0
      %5679 = vmatprep.mubr.bf16.mxu0 0
      %5680 = vmatmul.mubr.bf16.gmra.mrb[0].mxu0 %v5453
      %v5681 = vpop.f32.mrb[0].mxu0
      %v5682 = vadd.f32 0.0, %v5681
      %v5683 = vpop.f32.mrb[0].mxu0
      %v5684 = vpop.f32.mrb[0].mxu0
      %v5685 = vadd.f32 0.0, %v5684
      %v5686 = vpop.f32.mrb[0].mxu0
      %5687 = vmatprep.mubr.bf16.mxu0 0
      %5688 = vmatmul.mubr.bf16.gmra.mrb[0].mxu0 %v5456
      %v5689 = vpop.f32.mrb[0].mxu0
      %v5690 = vadd.f32 0.0, %v5689
      %v5691 = vpop.f32.mrb[0].mxu0
      %v5692 = vpop.f32.mrb[0].mxu0
      %v5693 = vadd.f32 0.0, %v5692
      %v5694 = vpop.f32.mrb[0].mxu0
      %5695 = vmatprep.mubr.bf16.mxu0 0
      %5696 = vmatmul.mubr.bf16.gmra.mrb[0].mxu0 %v5459
      %v5697 = vpop.f32.mrb[0].mxu0
      %v5698 = vadd.f32 0.0, %v5697
      %v5699 = vpop.f32.mrb[0].mxu0
      %v5700 = vpop.f32.mrb[0].mxu0
      %v5701 = vadd.f32 0.0, %v5700
      %v5702 = vpop.f32.mrb[0].mxu0
      %5703 = vmatprep.mubr.bf16.mxu0 0
      %5704 = vmatmul.mubr.bf16.gmra.mrb[0].mxu0 %v5462
      %v5705 = vpop.f32.mrb[0].mxu0
      %v5706 = vadd.f32 0.0, %v5705
      %v5707 = vpop.f32.mrb[0].mxu0
      %v5708 = vpop.f32.mrb[0].mxu0
      %v5709 = vadd.f32 0.0, %v5708
      %v5710 = vpop.f32.mrb[0].mxu0
      %5711 = vmatprep.mubr.bf16.mxu0 0
      %5712 = vmatmul.mubr.bf16.gmra.mrb[0].mxu0 %v5465
      %v5713 = vpop.f32.mrb[0].mxu0
      %v5714 = vadd.f32 0.0, %v5713
      %v5715 = vpop.f32.mrb[0].mxu0
      %v5716 = vpop.f32.mrb[0].mxu0
      %v5717 = vadd.f32 0.0, %v5716
      %v5718 = vpop.f32.mrb[0].mxu0
      %5719 = vmatprep.mubr.bf16.mxu0 0
      %5720 = vmatmul.mubr.bf16.gmra.mrb[0].mxu0 %v5468
      %v5721 = vpop.f32.mrb[0].mxu0
      %v5722 = vadd.f32 0.0, %v5721
      %v5723 = vpop.f32.mrb[0].mxu0
      %v5724 = vpop.f32.mrb[0].mxu0
      %v5725 = vadd.f32 0.0, %v5724
      %v5726 = vpop.f32.mrb[0].mxu0
      %5727 = vmatprep.mubr.bf16.mxu0 0
      %5728 = vmatmul.mubr.bf16.gmra.mrb[0].mxu0 %v5471
      %v5729 = vpop.f32.mrb[0].mxu0
      %v5730 = vadd.f32 0.0, %v5729
      %v5731 = vpop.f32.mrb[0].mxu0
      %v5732 = vpop.f32.mrb[0].mxu0
      %v5733 = vadd.f32 0.0, %v5732
      %v5734 = vpop.f32.mrb[0].mxu0
      %5735 = vmatprep.mubr.bf16.mxu0 0
      %5736 = vmatmul.mubr.bf16.gmra.mrb[0].mxu0 %v5474
      %v5737 = vpop.f32.mrb[0].mxu0
      %v5738 = vadd.f32 0.0, %v5737
      %v5739 = vpop.f32.mrb[0].mxu0
      %v5740 = vpop.f32.mrb[0].mxu0
      %v5741 = vadd.f32 0.0, %v5740
      %v5742 = vpop.f32.mrb[0].mxu0
      %5743 = vmatprep.mubr.bf16.mxu0 0
      %5744 = vmatmul.mubr.bf16.gmra.mrb[0].mxu0 %v5477
      %v5745 = vpop.f32.mrb[0].mxu0
      %v5746 = vadd.f32 0.0, %v5745
      %v5747 = vpop.f32.mrb[0].mxu0
      %v5748 = vpop.f32.mrb[0].mxu0
      %v5749 = vadd.f32 0.0, %v5748
      %v5750 = vpop.f32.mrb[0].mxu0
      %5751 = vmatprep.mubr.bf16.mxu0 0
      %5752 = vmatmul.mubr.bf16.gmra.mrb[0].mxu0 %v5480
      %v5753 = vpop.f32.mrb[0].mxu0
      %v5754 = vadd.f32 0.0, %v5753
      %v5755 = vpop.f32.mrb[0].mxu0
      %v5756 = vpop.f32.mrb[0].mxu0
      %v5757 = vadd.f32 0.0, %v5756
      %v5758 = vpop.f32.mrb[0].mxu0
      %5759 = vmatprep.mubr.bf16.mxu0 0
      %5760 = vmatmul.mubr.bf16.gmra.mrb[0].mxu0 %v5483
      %v5761 = vpop.f32.mrb[0].mxu0
      %v5762 = vadd.f32 0.0, %v5761
      %v5763 = vpop.f32.mrb[0].mxu0
      %v5764 = vpop.f32.mrb[0].mxu0
      %v5765 = vadd.f32 0.0, %v5764
      %v5766 = vpop.f32.mrb[0].mxu0
      %5767 = vmatprep.mubr.bf16.mxu0 0
      %5768 = vmatmul.mubr.bf16.gmra.mrb[0].mxu0 %v5486
      %v5769 = vpop.f32.mrb[0].mxu0
      %v5770 = vadd.f32 0.0, %v5769
      %v5771 = vpop.f32.mrb[0].mxu0
      %v5772 = vpop.f32.mrb[0].mxu0
      %v5773 = vadd.f32 0.0, %v5772
      %v5774 = vpop.f32.mrb[0].mxu0
      %5775 = vmatprep.mubr.bf16.mxu0 0
      %5776 = vmatmul.mubr.bf16.gmra.mrb[0].mxu0 %v5489
      %v5777 = vpop.f32.mrb[0].mxu0
      %v5778 = vadd.f32 0.0, %v5777
      %v5779 = vpop.f32.mrb[0].mxu0
      %v5780 = vpop.f32.mrb[0].mxu0
      %v5781 = vadd.f32 0.0, %v5780
      %v5782 = vpop.f32.mrb[0].mxu0
      %5783 = vmatprep.mubr.bf16.mxu0 0
      %5784 = vmatmul.mubr.bf16.gmra.mrb[0].mxu0 %v5492
      %v5785 = vpop.f32.mrb[0].mxu0
      %v5786 = vadd.f32 0.0, %v5785
      %v5787 = vpop.f32.mrb[0].mxu0
      %v5788 = vpop.f32.mrb[0].mxu0
      %v5789 = vadd.f32 0.0, %v5788
      %v5790 = vpop.f32.mrb[0].mxu0
      %5791 = vmatprep.mubr.bf16.mxu0 0
      %5792 = vmatmul.mubr.bf16.gmra.mrb[0].mxu0 %v5495
      %v5793 = vpop.f32.mrb[0].mxu0
      %v5794 = vadd.f32 0.0, %v5793
      %v5795 = vpop.f32.mrb[0].mxu0
      %v5796 = vpop.f32.mrb[0].mxu0
      %v5797 = vadd.f32 0.0, %v5796
      %v5798 = vpop.f32.mrb[0].mxu0
      %5799 = vmatprep.mubr.bf16.mxu0 0
      %5800 = vmatmul.mubr.bf16.gmra.mrb[0].mxu0 %v5498
      %v5801 = vpop.f32.mrb[0].mxu0
      %v5802 = vadd.f32 0.0, %v5801
      %v5803 = vpop.f32.mrb[0].mxu0
      %v5804 = vpop.f32.mrb[0].mxu0
      %v5805 = vadd.f32 0.0, %v5804
      %v5806 = vpop.f32.mrb[0].mxu0
      %5807 = vmatprep.mubr.bf16.mxu0 0
      %5808 = vmatmul.mubr.bf16.gmra.mrb[0].mxu0 %v5501
      %v5809 = vpop.f32.mrb[0].mxu0
      %v5810 = vadd.f32 0.0, %v5809
      %v5811 = vpop.f32.mrb[0].mxu0
      %v5812 = vpop.f32.mrb[0].mxu0
      %v5813 = vadd.f32 0.0, %v5812
      %v5814 = vpop.f32.mrb[0].mxu0
      %5815 = vmatprep.mubr.bf16.mxu0 0
      %5816 = vmatmul.mubr.bf16.gmra.mrb[0].mxu0 %v5504
      %v5817 = vpop.f32.mrb[0].mxu0
      %v5818 = vadd.f32 0.0, %v5817
      %v5819 = vpop.f32.mrb[0].mxu0
      %v5820 = vpop.f32.mrb[0].mxu0
      %v5821 = vadd.f32 0.0, %v5820
      %v5822 = vpop.f32.mrb[0].mxu0
      %5823 = vmatprep.mubr.bf16.mxu0 0
      %5824 = vmatmul.mubr.bf16.gmra.mrb[0].mxu0 %v5507
      %v5825 = vpop.f32.mrb[0].mxu0
      %v5826 = vadd.f32 0.0, %v5825
      %v5827 = vpop.f32.mrb[0].mxu0
      %v5828 = vpop.f32.mrb[0].mxu0
      %v5829 = vadd.f32 0.0, %v5828
      %v5830 = vpop.f32.mrb[0].mxu0
      %5831 = vmatprep.mubr.bf16.mxu0 0
      %5832 = vmatmul.mubr.bf16.gmra.mrb[0].mxu0 %v5510
      %v5833 = vpop.f32.mrb[0].mxu0
      %v5834 = vadd.f32 0.0, %v5833
      %v5835 = vpop.f32.mrb[0].mxu0
      %v5836 = vpop.f32.mrb[0].mxu0
      %v5837 = vadd.f32 0.0, %v5836
      %v5838 = vpop.f32.mrb[0].mxu0
      %5839 = vmatprep.mubr.bf16.mxu0 0
      %5840 = vmatmul.mubr.bf16.gmra.mrb[0].mxu0 %v5513
      %v5841 = vpop.f32.mrb[0].mxu0
      %v5842 = vadd.f32 0.0, %v5841
      %v5843 = vpop.f32.mrb[0].mxu0
      %v5844 = vpop.f32.mrb[0].mxu0
      %v5845 = vadd.f32 0.0, %v5844
      %v5846 = vpop.f32.mrb[0].mxu0
      %5847 = vmatprep.mubr.bf16.mxu0 0
      %5848 = vmatmul.mubr.bf16.gmra.mrb[0].mxu0 %v5516
      %v5849 = vpop.f32.mrb[0].mxu0
      %v5850 = vadd.f32 0.0, %v5849
      %v5851 = vpop.f32.mrb[0].mxu0
      %v5852 = vpop.f32.mrb[0].mxu0
      %v5853 = vadd.f32 0.0, %v5852
      %v5854 = vpop.f32.mrb[0].mxu0
      %5855 = vmatprep.mubr.bf16.mxu0 0
      %5856 = vmatmul.mubr.bf16.gmra.mrb[0].mxu0 %v5519
      %v5857 = vpop.f32.mrb[0].mxu0
      %v5858 = vadd.f32 0.0, %v5857
      %v5859 = vpop.f32.mrb[0].mxu0
      %v5860 = vpop.f32.mrb[0].mxu0
      %v5861 = vadd.f32 0.0, %v5860
      %v5862 = vpop.f32.mrb[0].mxu0
      %5863 = vmatprep.mubr.bf16.mxu0 0
      %5864 = vmatmul.mubr.bf16.gmra.mrb[0].mxu0 %v5522
      %v5865 = vpop.f32.mrb[0].mxu0
      %v5866 = vadd.f32 0.0, %v5865
      %v5867 = vpop.f32.mrb[0].mxu0
      %v5868 = vpop.f32.mrb[0].mxu0
      %v5869 = vadd.f32 0.0, %v5868
      %v5870 = vpop.f32.mrb[0].mxu0
      %5871 = vmatprep.mubr.bf16.mxu0 0
      %5872 = vmatmul.mubr.bf16.gmra.mrb[0].mxu0 %v5525
      %v5873 = vpop.f32.mrb[0].mxu0
      %v5874 = vadd.f32 0.0, %v5873
      %v5875 = vpop.f32.mrb[0].mxu0
      %v5876 = vpop.f32.mrb[0].mxu0
      %v5877 = vadd.f32 0.0, %v5876
      %v5878 = vpop.f32.mrb[0].mxu0
      %5879 = vmatprep.mubr.bf16.mxu0 0
      %5880 = vmatmul.mubr.bf16.gmra.mrb[0].mxu0 %v5528
      %v5881 = vpop.f32.mrb[0].mxu0
      %v5882 = vadd.f32 0.0, %v5881
      %v5883 = vpop.f32.mrb[0].mxu0
      %v5884 = vpop.f32.mrb[0].mxu0
      %v5885 = vadd.f32 0.0, %v5884
      %v5886 = vpop.f32.mrb[0].mxu0
      %5887 = vmatprep.mubr.bf16.mxu0 0
      %5888 = vmatmul.mubr.bf16.gmra.mrb[0].mxu0 %v5531
      %v5889 = vpop.f32.mrb[0].mxu0
      %v5890 = vadd.f32 0.0, %v5889
      %v5891 = vpop.f32.mrb[0].mxu0
      %v5892 = vpop.f32.mrb[0].mxu0
      %v5893 = vadd.f32 0.0, %v5892
      %v5894 = vpop.f32.mrb[0].mxu0
      %5895 = vmatprep.mubr.bf16.mxu0 0
      %5896 = vmatmul.mubr.bf16.gmra.mrb[0].mxu0 %v5534
      %v5897 = vpop.f32.mrb[0].mxu0
      %v5898 = vadd.f32 0.0, %v5897
      %v5899 = vpop.f32.mrb[0].mxu0
      %v5900 = vpop.f32.mrb[0].mxu0
      %v5901 = vadd.f32 0.0, %v5900
      %v5902 = vpop.f32.mrb[0].mxu0
      %5903 = vmatprep.mubr.bf16.mxu0 0
      %5904 = vmatmul.mubr.bf16.gmra.mrb[0].mxu0 %v5537
      %v5905 = vpop.f32.mrb[0].mxu0
      %v5906 = vadd.f32 0.0, %v5905
      %v5907 = vpop.f32.mrb[0].mxu0
      %v5908 = vpop.f32.mrb[0].mxu0
      %v5909 = vadd.f32 0.0, %v5908
      %v5910 = vpop.f32.mrb[0].mxu0
      %5911 = vmatprep.mubr.bf16.mxu0 0
      %5912 = vmatmul.mubr.bf16.gmra.mrb[0].mxu0 %v5540
      %v5913 = vpop.f32.mrb[0].mxu0
      %v5914 = vadd.f32 0.0, %v5913
      %v5915 = vpop.f32.mrb[0].mxu0
      %v5916 = vpop.f32.mrb[0].mxu0
      %v5917 = vadd.f32 0.0, %v5916
      %v5918 = vpop.f32.mrb[0].mxu0
      %5919 = vmatprep.mubr.bf16.mxu0 0
      %5920 = vmatmul.mubr.bf16.gmra.mrb[0].mxu0 %v5543
      %v5921 = vpop.f32.mrb[0].mxu0
      %v5922 = vadd.f32 0.0, %v5921
      %v5923 = vpop.f32.mrb[0].mxu0
      %v5924 = vpop.f32.mrb[0].mxu0
      %v5925 = vadd.f32 0.0, %v5924
      %v5926 = vpop.f32.mrb[0].mxu0
      %5927 = vmatprep.mubr.bf16.mxu0 0
      %5928 = vmatmul.mubr.bf16.gmra.mrb[0].mxu0 %v5546
      %v5929 = vpop.f32.mrb[0].mxu0
      %v5930 = vadd.f32 0.0, %v5929
      %v5931 = vpop.f32.mrb[0].mxu0
      %v5932 = vpop.f32.mrb[0].mxu0
      %v5933 = vadd.f32 0.0, %v5932
      %v5934 = vpop.f32.mrb[0].mxu0
      %5935 = vmatprep.mubr.bf16.mxu0 0
      %5936 = vmatmul.mubr.bf16.gmra.mrb[0].mxu0 %v5549
      %v5937 = vpop.f32.mrb[0].mxu0
      %v5938 = vadd.f32 0.0, %v5937
      %v5939 = vpop.f32.mrb[0].mxu0
      %v5940 = vpop.f32.mrb[0].mxu0
      %v5941 = vadd.f32 0.0, %v5940
      %v5942 = vpop.f32.mrb[0].mxu0
      %5943 = vmatprep.mubr.bf16.mxu0 0
      %5944 = vmatmul.mubr.bf16.gmra.mrb[0].mxu0 %v5552
      %v5945 = vpop.f32.mrb[0].mxu0
      %v5946 = vadd.f32 0.0, %v5945
      %v5947 = vpop.f32.mrb[0].mxu0
      %v5948 = vpop.f32.mrb[0].mxu0
      %v5949 = vadd.f32 0.0, %v5948
      %v5950 = vpop.f32.mrb[0].mxu0
      %5951 = vmatprep.mubr.bf16.mxu0 0
      %5952 = vmatmul.mubr.bf16.gmra.mrb[0].mxu0 %v5555
      %v5953 = vpop.f32.mrb[0].mxu0
      %v5954 = vadd.f32 0.0, %v5953
      %v5955 = vpop.f32.mrb[0].mxu0
      %v5956 = vpop.f32.mrb[0].mxu0
      %v5957 = vadd.f32 0.0, %v5956
      %v5958 = vpop.f32.mrb[0].mxu0
      %5959 = vmatprep.mubr.bf16.mxu0 0
      %5960 = vmatmul.mubr.bf16.gmra.mrb[0].mxu0 %v5558
      %v5961 = vpop.f32.mrb[0].mxu0
      %v5962 = vadd.f32 0.0, %v5961
      %v5963 = vpop.f32.mrb[0].mxu0
      %v5964 = vpop.f32.mrb[0].mxu0
      %v5965 = vadd.f32 0.0, %v5964
      %v5966 = vpop.f32.mrb[0].mxu0
      %5967 = vmatprep.mubr.bf16.mxu0 0
      %5968 = vmatmul.mubr.bf16.gmra.mrb[0].mxu0 %v5561
      %v5969 = vpop.f32.mrb[0].mxu0
      %v5970 = vadd.f32 0.0, %v5969
      %v5971 = vpop.f32.mrb[0].mxu0
      %v5972 = vpop.f32.mrb[0].mxu0
      %v5973 = vadd.f32 0.0, %v5972
      %v5974 = vpop.f32.mrb[0].mxu0
      %5975 = vmatprep.mubr.bf16.mxu0 0
      %5976 = vmatmul.mubr.bf16.gmra.mrb[0].mxu0 %v5564
      %v5977 = vpop.f32.mrb[0].mxu0
      %v5978 = vadd.f32 0.0, %v5977
      %v5979 = vpop.f32.mrb[0].mxu0
      %v5980 = vpop.f32.mrb[0].mxu0
      %v5981 = vadd.f32 0.0, %v5980
      %v5982 = vpop.f32.mrb[0].mxu0
      %5983 = vmatprep.mubr.bf16.mxu0 0
      %5984 = vmatmul.mubr.bf16.gmra.mrb[0].mxu0 %v5567
      %v5985 = vpop.f32.mrb[0].mxu0
      %v5986 = vadd.f32 0.0, %v5985
      %v5987 = vpop.f32.mrb[0].mxu0
      %v5988 = vpop.f32.mrb[0].mxu0
      %v5989 = vadd.f32 0.0, %v5988
      %v5990 = vpop.f32.mrb[0].mxu0
      %5991 = vmatprep.mubr.bf16.mxu0 0
      %5992 = vmatmul.mubr.bf16.gmra.mrb[0].mxu0 %v5570
      %v5993 = vpop.f32.mrb[0].mxu0
      %v5994 = vadd.f32 0.0, %v5993
      %v5995 = vpop.f32.mrb[0].mxu0
      %v5996 = vpop.f32.mrb[0].mxu0
      %v5997 = vadd.f32 0.0, %v5996
      %v5998 = vpop.f32.mrb[0].mxu0
      %5999 = vmatprep.mubr.bf16.mxu0 0
      %6000 = vmatmul.mubr.bf16.gmra.mrb[0].mxu0 %v5573
      %v6001 = vpop.f32.mrb[0].mxu0
      %v6002 = vadd.f32 0.0, %v6001
      %v6003 = vpop.f32.mrb[0].mxu0
      %v6004 = vpop.f32.mrb[0].mxu0
      %v6005 = vadd.f32 0.0, %v6004
      %v6006 = vpop.f32.mrb[0].mxu0
      %6007 = vmatprep.mubr.bf16.mxu0 0
      %6008 = vmatmul.mubr.bf16.gmra.mrb[0].mxu0 %v5576
      %v6009 = vpop.f32.mrb[0].mxu0
      %v6010 = vadd.f32 0.0, %v6009
      %v6011 = vpop.f32.mrb[0].mxu0
      %v6012 = vpop.f32.mrb[0].mxu0
      %v6013 = vadd.f32 0.0, %v6012
      %v6014 = vpop.f32.mrb[0].mxu0
      %6015 = vmatprep.mubr.bf16.mxu0 0
      %6016 = vmatmul.mubr.bf16.gmra.mrb[0].mxu0 %v5579
      %v6017 = vpop.f32.mrb[0].mxu0
      %v6018 = vadd.f32 0.0, %v6017
      %v6019 = vpop.f32.mrb[0].mxu0
      %v6020 = vpop.f32.mrb[0].mxu0
      %v6021 = vadd.f32 0.0, %v6020
      %v6022 = vpop.f32.mrb[0].mxu0
      %6023 = vmatprep.mubr.bf16.mxu0 0
      %6024 = vmatmul.mubr.bf16.gmra.mrb[0].mxu0 %v5582
      %v6025 = vpop.f32.mrb[0].mxu0
      %v6026 = vadd.f32 0.0, %v6025
      %v6027 = vpop.f32.mrb[0].mxu0
      %v6028 = vpop.f32.mrb[0].mxu0
      %v6029 = vadd.f32 0.0, %v6028
      %v6030 = vpop.f32.mrb[0].mxu0
      %6031 = vmatprep.mubr.bf16.mxu0 0
      %6032 = vmatmul.mubr.bf16.gmra.mrb[0].mxu0 %v5585
      %v6033 = vpop.f32.mrb[0].mxu0
      %v6034 = vadd.f32 0.0, %v6033
      %v6035 = vpop.f32.mrb[0].mxu0
      %v6036 = vpop.f32.mrb[0].mxu0
      %v6037 = vadd.f32 0.0, %v6036
      %v6038 = vpop.f32.mrb[0].mxu0
      %6039 = vmatprep.mubr.bf16.mxu0 0
      %6040 = vmatmul.mubr.bf16.gmra.mrb[0].mxu0 %v5588
      %v6041 = vpop.f32.mrb[0].mxu0
      %v6042 = vadd.f32 0.0, %v6041
      %v6043 = vpop.f32.mrb[0].mxu0
      %v6044 = vpop.f32.mrb[0].mxu0
      %v6045 = vadd.f32 0.0, %v6044
      %v6046 = vpop.f32.mrb[0].mxu0
      %6047 = vmatprep.mubr.bf16.mxu0 0
      %6048 = vmatmul.mubr.bf16.gmra.mrb[0].mxu0 %v5591
      %v6049 = vpop.f32.mrb[0].mxu0
      %v6050 = vadd.f32 0.0, %v6049
      %v6051 = vpop.f32.mrb[0].mxu0
      %v6052 = vpop.f32.mrb[0].mxu0
      %v6053 = vadd.f32 0.0, %v6052
      %v6054 = vpop.f32.mrb[0].mxu0
      %6055 = vmatprep.mubr.bf16.mxu0 0
      %6056 = vmatmul.mubr.bf16.gmra.mrb[0].mxu0 %v5594
      %v6057 = vpop.f32.mrb[0].mxu0
      %v6058 = vadd.f32 0.0, %v6057
      %v6059 = vpop.f32.mrb[0].mxu0
      %v6060 = vpop.f32.mrb[0].mxu0
      %v6061 = vadd.f32 0.0, %v6060
      %v6062 = vpop.f32.mrb[0].mxu0
      %6063 = vmatprep.mubr.bf16.mxu0 0
      %6064 = vmatmul.mubr.bf16.gmra.mrb[0].mxu0 %v5597
      %v6065 = vpop.f32.mrb[0].mxu0
      %v6066 = vadd.f32 0.0, %v6065
      %v6067 = vpop.f32.mrb[0].mxu0
      %v6068 = vpop.f32.mrb[0].mxu0
      %v6069 = vadd.f32 0.0, %v6068
      %v6070 = vpop.f32.mrb[0].mxu0
      %6071 = vmatprep.mubr.bf16.mxu0 0
      %6072 = vmatmul.mubr.bf16.gmra.mrb[0].mxu0 %v5600
      %v6073 = vpop.f32.mrb[0].mxu0
      %v6074 = vadd.f32 0.0, %v6073
      %v6075 = vpop.f32.mrb[0].mxu0
      %v6076 = vpop.f32.mrb[0].mxu0
      %v6077 = vadd.f32 0.0, %v6076
      %v6078 = vpop.f32.mrb[0].mxu0
      %6079 = vmatprep.mubr.bf16.mxu0 0
      %6080 = vmatmul.mubr.bf16.gmra.mrb[0].mxu0 %v5603
      %v6081 = vpop.f32.mrb[0].mxu0
      %v6082 = vadd.f32 0.0, %v6081
      %v6083 = vpop.f32.mrb[0].mxu0
      %v6084 = vpop.f32.mrb[0].mxu0
      %v6085 = vadd.f32 0.0, %v6084
      %v6086 = vpop.f32.mrb[0].mxu0
      %6087 = vmatprep.mubr.bf16.mxu0 0
      %6088 = vmatmul.mubr.bf16.gmra.mrb[0].mxu0 %v5606
      %v6089 = vpop.f32.mrb[0].mxu0
      %v6090 = vadd.f32 0.0, %v6089
      %v6091 = vpop.f32.mrb[0].mxu0
      %v6092 = vpop.f32.mrb[0].mxu0
      %v6093 = vadd.f32 0.0, %v6092
      %v6094 = vpop.f32.mrb[0].mxu0
      %6095 = vmatprep.mubr.bf16.mxu0 0
      %6096 = vmatmul.mubr.bf16.gmra.mrb[0].mxu0 %v5609
      %v6097 = vpop.f32.mrb[0].mxu0
      %v6098 = vadd.f32 0.0, %v6097
      %v6099 = vpop.f32.mrb[0].mxu0
      %v6100 = vpop.f32.mrb[0].mxu0
      %v6101 = vadd.f32 0.0, %v6100
      %v6102 = vpop.f32.mrb[0].mxu0
      %6103 = vmatprep.mubr.bf16.mxu0 0
      %6104 = vmatmul.mubr.bf16.gmra.mrb[0].mxu0 %v5612
      %v6105 = vpop.f32.mrb[0].mxu0
      %v6106 = vadd.f32 0.0, %v6105
      %v6107 = vpop.f32.mrb[0].mxu0
      %v6108 = vpop.f32.mrb[0].mxu0
      %v6109 = vadd.f32 0.0, %v6108
      %v6110 = vpop.f32.mrb[0].mxu0
      %6111 = vmatprep.mubr.bf16.mxu0 0
      %6112 = vmatmul.mubr.bf16.gmra.mrb[0].mxu0 %v5615
      %v6113 = vpop.f32.mrb[0].mxu0
      %v6114 = vadd.f32 0.0, %v6113
      %v6115 = vpop.f32.mrb[0].mxu0
      %v6116 = vpop.f32.mrb[0].mxu0
      %v6117 = vadd.f32 0.0, %v6116
      %v6118 = vpop.f32.mrb[0].mxu0
      %6119 = vmatprep.mubr.bf16.mxu0 0
      %6120 = vmatmul.mubr.bf16.gmra.mrb[0].mxu0 %v5618
      %v6121 = vpop.f32.mrb[0].mxu0
      %v6122 = vadd.f32 0.0, %v6121
      %v6123 = vpop.f32.mrb[0].mxu0
      %v6124 = vpop.f32.mrb[0].mxu0
      %v6125 = vadd.f32 0.0, %v6124
      %v6126 = vpop.f32.mrb[0].mxu0
      %6127 = vmatprep.mubr.bf16.mxu0 0
      %6128 = vmatmul.mubr.bf16.gmra.mrb[0].mxu0 %v5621
      %v6129 = vpop.f32.mrb[0].mxu0
      %v6130 = vadd.f32 0.0, %v6129
      %v6131 = vpop.f32.mrb[0].mxu0
      %v6132 = vpop.f32.mrb[0].mxu0
      %v6133 = vadd.f32 0.0, %v6132
      %v6134 = vpop.f32.mrb[0].mxu0
      %6135 = vmatprep.mubr.bf16.mxu0 0
      %6136 = vmatmul.mubr.bf16.gmra.mrb[0].mxu0 %v5624
      %v6137 = vpop.f32.mrb[0].mxu0
      %v6138 = vadd.f32 0.0, %v6137
      %v6139 = vpop.f32.mrb[0].mxu0
      %v6140 = vpop.f32.mrb[0].mxu0
      %v6141 = vadd.f32 0.0, %v6140
      %v6142 = vpop.f32.mrb[0].mxu0
      %6143 = vmatprep.mubr.bf16.mxu0 0
      %6144 = vmatmul.mubr.bf16.gmra.mrb[0].mxu0 %v5627
      %v6145 = vpop.f32.mrb[0].mxu0
      %v6146 = vadd.f32 0.0, %v6145
      %v6147 = vpop.f32.mrb[0].mxu0
      %v6148 = vpop.f32.mrb[0].mxu0
      %v6149 = vadd.f32 0.0, %v6148
      %v6150 = vpop.f32.mrb[0].mxu0
      %6151 = vmatprep.mubr.bf16.mxu0 0
      %6152 = vmatmul.mubr.bf16.gmra.mrb[0].mxu0 %v5630
      %v6153 = vpop.f32.mrb[0].mxu0
      %v6154 = vadd.f32 0.0, %v6153
      %v6155 = vpop.f32.mrb[0].mxu0
      %v6156 = vpop.f32.mrb[0].mxu0
      %v6157 = vadd.f32 0.0, %v6156
      %v6158 = vpop.f32.mrb[0].mxu0
      %6159 = vmatprep.mubr.bf16.mxu0 0
      %6160 = vmatmul.mubr.bf16.gmra.mrb[0].mxu0 %v5633
      %v6161 = vpop.f32.mrb[0].mxu0
      %v6162 = vadd.f32 0.0, %v6161
      %v6163 = vpop.f32.mrb[0].mxu0
      %v6164 = vpop.f32.mrb[0].mxu0
      %v6165 = vadd.f32 0.0, %v6164
      %v6166 = vpop.f32.mrb[0].mxu0
      %6167 = vmatprep.mubr.bf16.mxu0 0
      %6168 = vmatmul.mubr.bf16.gmra.mrb[0].mxu0 %v5636
      %v6169 = vpop.f32.mrb[0].mxu0
      %v6170 = vadd.f32 0.0, %v6169
      %v6171 = vpop.f32.mrb[0].mxu0
      %v6172 = vpop.f32.mrb[0].mxu0
      %v6173 = vadd.f32 0.0, %v6172
      %v6174 = vpop.f32.mrb[0].mxu0
      %6175 = vmatprep.mubr.bf16.mxu0 0
      %6176 = vmatmul.mubr.bf16.gmra.mrb[0].mxu0 %v5639
      %v6177 = vpop.f32.mrb[0].mxu0
      %v6178 = vadd.f32 0.0, %v6177
      %v6179 = vpop.f32.mrb[0].mxu0
      %v6180 = vpop.f32.mrb[0].mxu0
      %v6181 = vadd.f32 0.0, %v6180
      %v6182 = vpop.f32.mrb[0].mxu0
      %6183 = vmatprep.mubr.bf16.mxu0 0
      %6184 = vmatmul.mubr.bf16.gmra.mrb[0].mxu0 %v5642
      %v6185 = vpop.f32.mrb[0].mxu0
      %v6186 = vadd.f32 0.0, %v6185
      %v6187 = vpop.f32.mrb[0].mxu0
      %v6188 = vpop.f32.mrb[0].mxu0
      %v6189 = vadd.f32 0.0, %v6188
      %v6190 = vpop.f32.mrb[0].mxu0
      %6191 = vdwg.mxu0
      %v6192 = vadd.f32 %v5130, %v5682
      %v6193 = vadd.f32 %v5131, %v5685
      %v6194 = vadd.f32 %v5132, %v5690
      %v6195 = vadd.f32 %v5133, %v5693
      %v6196 = vadd.f32 %v5134, %v5698
      %v6197 = vadd.f32 %v5135, %v5701
      %v6198 = vadd.f32 %v5136, %v5706
      %v6199 = vadd.f32 %v5137, %v5709
      %v6200 = vadd.f32 %v5138, %v5714
      %v6201 = vadd.f32 %v5139, %v5717
      %v6202 = vadd.f32 %v5140, %v5722
      %v6203 = vadd.f32 %v5141, %v5725
      %v6204 = vadd.f32 %v5142, %v5730
      %v6205 = vadd.f32 %v5143, %v5733
      %v6206 = vadd.f32 %v5144, %v5738
      %v6207 = vadd.f32 %v5145, %v5741
      %v6208 = vadd.f32 %v5146, %v5746
      %v6209 = vadd.f32 %v5147, %v5749
      %v6210 = vadd.f32 %v5148, %v5754
      %v6211 = vadd.f32 %v5149, %v5757
      %v6212 = vadd.f32 %v5150, %v5762
      %v6213 = vadd.f32 %v5151, %v5765
      %v6214 = vadd.f32 %v5152, %v5770
      %v6215 = vadd.f32 %v5153, %v5773
      %v6216 = vadd.f32 %v5154, %v5778
      %v6217 = vadd.f32 %v5155, %v5781
      %v6218 = vadd.f32 %v5156, %v5786
      %v6219 = vadd.f32 %v5157, %v5789
      %v6220 = vadd.f32 %v5158, %v5794
      %v6221 = vadd.f32 %v5159, %v5797
      %v6222 = vadd.f32 %v5160, %v5802
      %v6223 = vadd.f32 %v5161, %v5805
      %v6224 = vadd.f32 %v5162, %v5810
      %v6225 = vadd.f32 %v5163, %v5813
      %v6226 = vadd.f32 %v5164, %v5818
      %v6227 = vadd.f32 %v5165, %v5821
      %v6228 = vadd.f32 %v5166, %v5826
      %v6229 = vadd.f32 %v5167, %v5829
      %v6230 = vadd.f32 %v5168, %v5834
      %v6231 = vadd.f32 %v5169, %v5837
      %v6232 = vadd.f32 %v5170, %v5842
      %v6233 = vadd.f32 %v5171, %v5845
      %v6234 = vadd.f32 %v5172, %v5850
      %v6235 = vadd.f32 %v5173, %v5853
      %v6236 = vadd.f32 %v5174, %v5858
      %v6237 = vadd.f32 %v5175, %v5861
      %v6238 = vadd.f32 %v5176, %v5866
      %v6239 = vadd.f32 %v5177, %v5869
      %v6240 = vadd.f32 %v5178, %v5874
      %v6241 = vadd.f32 %v5179, %v5877
      %v6242 = vadd.f32 %v5180, %v5882
      %v6243 = vadd.f32 %v5181, %v5885
      %v6244 = vadd.f32 %v5182, %v5890
      %v6245 = vadd.f32 %v5183, %v5893
      %v6246 = vadd.f32 %v5184, %v5898
      %v6247 = vadd.f32 %v5185, %v5901
      %v6248 = vadd.f32 %v5186, %v5906
      %v6249 = vadd.f32 %v5187, %v5909
      %v6250 = vadd.f32 %v5188, %v5914
      %v6251 = vadd.f32 %v5189, %v5917
      %v6252 = vadd.f32 %v5190, %v5922
      %v6253 = vadd.f32 %v5191, %v5925
      %v6254 = vadd.f32 %v5192, %v5930
      %v6255 = vadd.f32 %v5193, %v5933
      %v6256 = vadd.f32 %v5194, %v5938
      %v6257 = vadd.f32 %v5195, %v5941
      %v6258 = vadd.f32 %v5196, %v5946
      %v6259 = vadd.f32 %v5197, %v5949
      %v6260 = vadd.f32 %v5198, %v5954
      %v6261 = vadd.f32 %v5199, %v5957
      %v6262 = vadd.f32 %v5200, %v5962
      %v6263 = vadd.f32 %v5201, %v5965
      %v6264 = vadd.f32 %v5202, %v5970
      %v6265 = vadd.f32 %v5203, %v5973
      %v6266 = vadd.f32 %v5204, %v5978
      %v6267 = vadd.f32 %v5205, %v5981
      %v6268 = vadd.f32 %v5206, %v5986
      %v6269 = vadd.f32 %v5207, %v5989
      %v6270 = vadd.f32 %v5208, %v5994
      %v6271 = vadd.f32 %v5209, %v5997
      %v6272 = vadd.f32 %v5210, %v6002
      %v6273 = vadd.f32 %v5211, %v6005
      %v6274 = vadd.f32 %v5212, %v6010
      %v6275 = vadd.f32 %v5213, %v6013
      %v6276 = vadd.f32 %v5214, %v6018
      %v6277 = vadd.f32 %v5215, %v6021
      %v6278 = vadd.f32 %v5216, %v6026
      %v6279 = vadd.f32 %v5217, %v6029
      %v6280 = vadd.f32 %v5218, %v6034
      %v6281 = vadd.f32 %v5219, %v6037
      %v6282 = vadd.f32 %v5220, %v6042
      %v6283 = vadd.f32 %v5221, %v6045
      %v6284 = vadd.f32 %v5222, %v6050
      %v6285 = vadd.f32 %v5223, %v6053
      %v6286 = vadd.f32 %v5224, %v6058
      %v6287 = vadd.f32 %v5225, %v6061
      %v6288 = vadd.f32 %v5226, %v6066
      %v6289 = vadd.f32 %v5227, %v6069
      %v6290 = vadd.f32 %v5228, %v6074
      %v6291 = vadd.f32 %v5229, %v6077
      %v6292 = vadd.f32 %v5230, %v6082
      %v6293 = vadd.f32 %v5231, %v6085
      %v6294 = vadd.f32 %v5232, %v6090
      %v6295 = vadd.f32 %v5233, %v6093
      %v6296 = vadd.f32 %v5234, %v6098
      %v6297 = vadd.f32 %v5235, %v6101
      %v6298 = vadd.f32 %v5236, %v6106
      %v6299 = vadd.f32 %v5237, %v6109
      %v6300 = vadd.f32 %v5238, %v6114
      %v6301 = vadd.f32 %v5239, %v6117
      %v6302 = vadd.f32 %v5240, %v6122
      %v6303 = vadd.f32 %v5241, %v6125
      %v6304 = vadd.f32 %v5242, %v6130
      %v6305 = vadd.f32 %v5243, %v6133
      %v6306 = vadd.f32 %v5244, %v6138
      %v6307 = vadd.f32 %v5245, %v6141
      %v6308 = vadd.f32 %v5246, %v6146
      %v6309 = vadd.f32 %v5247, %v6149
      %v6310 = vadd.f32 %v5248, %v6154
      %v6311 = vadd.f32 %v5249, %v6157
      %v6312 = vadd.f32 %v5250, %v6162
      %v6313 = vadd.f32 %v5251, %v6165
      %v6314 = vadd.f32 %v5252, %v6170
      %v6315 = vadd.f32 %v5253, %v6173
      %v6316 = vadd.f32 %v5254, %v6178
      %v6317 = vadd.f32 %v5255, %v6181
      %v6318 = vadd.f32 %v5256, %v6186
      %v6319 = vadd.f32 %v5257, %v6189
      %s6320 = scalar_lea.vmem %s192, 80
      %v6321 = vld [vmem:[%s6320] sm:$0xff]
      %v6322 = vld [vmem:[%s6320 + $0x8] sm:$0xff]
      %v6323 = vld [vmem:[%s6320 + $0x10] sm:$0xff]
      %v6324 = vld [vmem:[%s6320 + $0x18] sm:$0xff]
      %v6325 = vld [vmem:[%s6320 + $0x28] sm:$0xff]
      %v6326 = vld [vmem:[%s6320 + $0x30] sm:$0xff]
      %v6327 = vld [vmem:[%s6320 + $0x38] sm:$0xff]
      %v6328 = vld [vmem:[%s6320 + $0x40] sm:$0xff]
      %v6329 = vld [vmem:[%s6320 + $0x50] sm:$0xff]
      %v6330 = vld [vmem:[%s6320 + $0x58] sm:$0xff]
      %v6331 = vld [vmem:[%s6320 + $0x60] sm:$0xff]
      %v6332 = vld [vmem:[%s6320 + $0x68] sm:$0xff]
      %v6333 = vld [vmem:[%s6320 + $0x78] sm:$0xff]
      %v6334 = vld [vmem:[%s6320 + $0x80] sm:$0xff]
      %v6335 = vld [vmem:[%s6320 + $0x88] sm:$0xff]
      %v6336 = vld [vmem:[%s6320 + $0x90] sm:$0xff]
      %v6337 = vld [vmem:[%s6320 + $0xa0] sm:$0xff]
      %v6338 = vld [vmem:[%s6320 + $0xa8] sm:$0xff]
      %v6339 = vld [vmem:[%s6320 + $0xb0] sm:$0xff]
      %v6340 = vld [vmem:[%s6320 + $0xb8] sm:$0xff]
      %v6341 = vld [vmem:[%s6320 + $0xc8] sm:$0xff]
      %v6342 = vld [vmem:[%s6320 + $0xd0] sm:$0xff]
      %v6343 = vld [vmem:[%s6320 + $0xd8] sm:$0xff]
      %v6344 = vld [vmem:[%s6320 + $0xe0] sm:$0xff]
      %v6345 = vld [vmem:[%s6320 + $0xf0] sm:$0xff]
      %v6346 = vld [vmem:[%s6320 + $0xf8] sm:$0xff]
      %v6347 = vld [vmem:[%s6320 + $0x100] sm:$0xff]
      %v6348 = vld [vmem:[%s6320 + $0x108] sm:$0xff]
      %v6349 = vld [vmem:[%s6320 + $0x118] sm:$0xff]
      %v6350 = vld [vmem:[%s6320 + $0x120] sm:$0xff]
      %v6351 = vld [vmem:[%s6320 + $0x128] sm:$0xff]
      %v6352 = vld [vmem:[%s6320 + $0x130] sm:$0xff]
      %v6353 = vld [vmem:[%s6320 + $0x140] sm:$0xff]
      %v6354 = vld [vmem:[%s6320 + $0x148] sm:$0xff]
      %v6355 = vld [vmem:[%s6320 + $0x150] sm:$0xff]
      %v6356 = vld [vmem:[%s6320 + $0x158] sm:$0xff]
      %v6357 = vld [vmem:[%s6320 + $0x168] sm:$0xff]
      %v6358 = vld [vmem:[%s6320 + $0x170] sm:$0xff]
      %v6359 = vld [vmem:[%s6320 + $0x178] sm:$0xff]
      %v6360 = vld [vmem:[%s6320 + $0x180] sm:$0xff]
      %v6361 = vld [vmem:[%s6320 + $0x190] sm:$0xff]
      %v6362 = vld [vmem:[%s6320 + $0x198] sm:$0xff]
      %v6363 = vld [vmem:[%s6320 + $0x1a0] sm:$0xff]
      %v6364 = vld [vmem:[%s6320 + $0x1a8] sm:$0xff]
      %v6365 = vld [vmem:[%s6320 + $0x1b8] sm:$0xff]
      %v6366 = vld [vmem:[%s6320 + $0x1c0] sm:$0xff]
      %v6367 = vld [vmem:[%s6320 + $0x1c8] sm:$0xff]
      %v6368 = vld [vmem:[%s6320 + $0x1d0] sm:$0xff]
      %v6369 = vld [vmem:[%s6320 + $0x1e0] sm:$0xff]
      %v6370 = vld [vmem:[%s6320 + $0x1e8] sm:$0xff]
      %v6371 = vld [vmem:[%s6320 + $0x1f0] sm:$0xff]
      %v6372 = vld [vmem:[%s6320 + $0x1f8] sm:$0xff]
      %v6373 = vld [vmem:[%s6320 + $0x208] sm:$0xff]
      %v6374 = vld [vmem:[%s6320 + $0x210] sm:$0xff]
      %v6375 = vld [vmem:[%s6320 + $0x218] sm:$0xff]
      %v6376 = vld [vmem:[%s6320 + $0x220] sm:$0xff]
      %v6377 = vld [vmem:[%s6320 + $0x230] sm:$0xff]
      %v6378 = vld [vmem:[%s6320 + $0x238] sm:$0xff]
      %v6379 = vld [vmem:[%s6320 + $0x240] sm:$0xff]
      %v6380 = vld [vmem:[%s6320 + $0x248] sm:$0xff]
      %v6381 = vld [vmem:[%s6320 + $0x258] sm:$0xff]
      %v6382 = vld [vmem:[%s6320 + $0x260] sm:$0xff]
      %v6383 = vld [vmem:[%s6320 + $0x268] sm:$0xff]
      %v6384 = vld [vmem:[%s6320 + $0x270] sm:$0xff]
      %v6385 = vld [vmem:[%s6320 + $0x280] sm:$0xff]
      %v6386 = vld [vmem:[%s6320 + $0x288] sm:$0xff]
      %v6387 = vld [vmem:[%s6320 + $0x290] sm:$0xff]
      %v6388 = vld [vmem:[%s6320 + $0x298] sm:$0xff]
      %v6389 = vld [vmem:[%s6320 + $0x2a8] sm:$0xff]
      %v6390 = vld [vmem:[%s6320 + $0x2b0] sm:$0xff]
      %v6391 = vld [vmem:[%s6320 + $0x2b8] sm:$0xff]
      %v6392 = vld [vmem:[%s6320 + $0x2c0] sm:$0xff]
      %v6393 = vld [vmem:[%s6320 + $0x2d0] sm:$0xff]
      %v6394 = vld [vmem:[%s6320 + $0x2d8] sm:$0xff]
      %v6395 = vld [vmem:[%s6320 + $0x2e0] sm:$0xff]
      %v6396 = vld [vmem:[%s6320 + $0x2e8] sm:$0xff]
      %v6397 = vld [vmem:[%s6320 + $0x2f8] sm:$0xff]
      %v6398 = vld [vmem:[%s6320 + $0x300] sm:$0xff]
      %v6399 = vld [vmem:[%s6320 + $0x308] sm:$0xff]
      %v6400 = vld [vmem:[%s6320 + $0x310] sm:$0xff]
      %v6401 = vld [vmem:[%s6320 + $0x320] sm:$0xff]
      %v6402 = vld [vmem:[%s6320 + $0x328] sm:$0xff]
      %v6403 = vld [vmem:[%s6320 + $0x330] sm:$0xff]
      %v6404 = vld [vmem:[%s6320 + $0x338] sm:$0xff]
      %v6405 = vld [vmem:[%s6320 + $0x348] sm:$0xff]
      %v6406 = vld [vmem:[%s6320 + $0x350] sm:$0xff]
      %v6407 = vld [vmem:[%s6320 + $0x358] sm:$0xff]
      %v6408 = vld [vmem:[%s6320 + $0x360] sm:$0xff]
      %v6409 = vld [vmem:[%s6320 + $0x370] sm:$0xff]
      %v6410 = vld [vmem:[%s6320 + $0x378] sm:$0xff]
      %v6411 = vld [vmem:[%s6320 + $0x380] sm:$0xff]
      %v6412 = vld [vmem:[%s6320 + $0x388] sm:$0xff]
      %v6413 = vld [vmem:[%s6320 + $0x398] sm:$0xff]
      %v6414 = vld [vmem:[%s6320 + $0x3a0] sm:$0xff]
      %v6415 = vld [vmem:[%s6320 + $0x3a8] sm:$0xff]
      %v6416 = vld [vmem:[%s6320 + $0x3b0] sm:$0xff]
      %v6417 = vld [vmem:[%s6320 + $0x3c0] sm:$0xff]
      %v6418 = vld [vmem:[%s6320 + $0x3c8] sm:$0xff]
      %v6419 = vld [vmem:[%s6320 + $0x3d0] sm:$0xff]
      %v6420 = vld [vmem:[%s6320 + $0x3d8] sm:$0xff]
      %v6421 = vld [vmem:[%s6320 + $0x3e8] sm:$0xff]
      %v6422 = vld [vmem:[%s6320 + $0x3f0] sm:$0xff]
      %v6423 = vld [vmem:[%s6320 + $0x3f8] sm:$0xff]
      %v6424 = vld [vmem:[%s6320 + $0x400] sm:$0xff]
      %v6425 = vld [vmem:[%s6320 + $0x410] sm:$0xff]
      %v6426 = vld [vmem:[%s6320 + $0x418] sm:$0xff]
      %v6427 = vld [vmem:[%s6320 + $0x420] sm:$0xff]
      %v6428 = vld [vmem:[%s6320 + $0x428] sm:$0xff]
      %v6429 = vld [vmem:[%s6320 + $0x438] sm:$0xff]
      %v6430 = vld [vmem:[%s6320 + $0x440] sm:$0xff]
      %v6431 = vld [vmem:[%s6320 + $0x448] sm:$0xff]
      %v6432 = vld [vmem:[%s6320 + $0x450] sm:$0xff]
      %v6433 = vld [vmem:[%s6320 + $0x460] sm:$0xff]
      %v6434 = vld [vmem:[%s6320 + $0x468] sm:$0xff]
      %v6435 = vld [vmem:[%s6320 + $0x470] sm:$0xff]
      %v6436 = vld [vmem:[%s6320 + $0x478] sm:$0xff]
      %v6437 = vld [vmem:[%s6320 + $0x488] sm:$0xff]
      %v6438 = vld [vmem:[%s6320 + $0x490] sm:$0xff]
      %v6439 = vld [vmem:[%s6320 + $0x498] sm:$0xff]
      %v6440 = vld [vmem:[%s6320 + $0x4a0] sm:$0xff]
      %v6441 = vld [vmem:[%s6320 + $0x4b0] sm:$0xff]
      %v6442 = vld [vmem:[%s6320 + $0x4b8] sm:$0xff]
      %v6443 = vld [vmem:[%s6320 + $0x4c0] sm:$0xff]
      %v6444 = vld [vmem:[%s6320 + $0x4c8] sm:$0xff]
      %v6445 = vld [vmem:[%s6320 + $0x4d8] sm:$0xff]
      %v6446 = vld [vmem:[%s6320 + $0x4e0] sm:$0xff]
      %v6447 = vld [vmem:[%s6320 + $0x4e8] sm:$0xff]
      %v6448 = vld [vmem:[%s6320 + $0x4f0] sm:$0xff]
      %v6449 = vpack.c.bf16 %v6322, %v6321
      %v6450 = vpack.c.bf16 %v6324, %v6323
      %v6451 = vpack.c.bf16 %v6326, %v6325
      %v6452 = vpack.c.bf16 %v6328, %v6327
      %v6453 = vpack.c.bf16 %v6330, %v6329
      %v6454 = vpack.c.bf16 %v6332, %v6331
      %v6455 = vpack.c.bf16 %v6334, %v6333
      %v6456 = vpack.c.bf16 %v6336, %v6335
      %v6457 = vpack.c.bf16 %v6338, %v6337
      %v6458 = vpack.c.bf16 %v6340, %v6339
      %v6459 = vpack.c.bf16 %v6342, %v6341
      %v6460 = vpack.c.bf16 %v6344, %v6343
      %v6461 = vpack.c.bf16 %v6346, %v6345
      %v6462 = vpack.c.bf16 %v6348, %v6347
      %v6463 = vpack.c.bf16 %v6350, %v6349
      %v6464 = vpack.c.bf16 %v6352, %v6351
      %v6465 = vpack.c.bf16 %v6354, %v6353
      %v6466 = vpack.c.bf16 %v6356, %v6355
      %v6467 = vpack.c.bf16 %v6358, %v6357
      %v6468 = vpack.c.bf16 %v6360, %v6359
      %v6469 = vpack.c.bf16 %v6362, %v6361
      %v6470 = vpack.c.bf16 %v6364, %v6363
      %v6471 = vpack.c.bf16 %v6366, %v6365
      %v6472 = vpack.c.bf16 %v6368, %v6367
      %v6473 = vpack.c.bf16 %v6370, %v6369
      %v6474 = vpack.c.bf16 %v6372, %v6371
      %v6475 = vpack.c.bf16 %v6374, %v6373
      %v6476 = vpack.c.bf16 %v6376, %v6375
      %v6477 = vpack.c.bf16 %v6378, %v6377
      %v6478 = vpack.c.bf16 %v6380, %v6379
      %v6479 = vpack.c.bf16 %v6382, %v6381
      %v6480 = vpack.c.bf16 %v6384, %v6383
      %v6481 = vpack.c.bf16 %v6386, %v6385
      %v6482 = vpack.c.bf16 %v6388, %v6387
      %v6483 = vpack.c.bf16 %v6390, %v6389
      %v6484 = vpack.c.bf16 %v6392, %v6391
      %v6485 = vpack.c.bf16 %v6394, %v6393
      %v6486 = vpack.c.bf16 %v6396, %v6395
      %v6487 = vpack.c.bf16 %v6398, %v6397
      %v6488 = vpack.c.bf16 %v6400, %v6399
      %v6489 = vpack.c.bf16 %v6402, %v6401
      %v6490 = vpack.c.bf16 %v6404, %v6403
      %v6491 = vpack.c.bf16 %v6406, %v6405
      %v6492 = vpack.c.bf16 %v6408, %v6407
      %v6493 = vpack.c.bf16 %v6410, %v6409
      %v6494 = vpack.c.bf16 %v6412, %v6411
      %v6495 = vpack.c.bf16 %v6414, %v6413
      %v6496 = vpack.c.bf16 %v6416, %v6415
      %v6497 = vpack.c.bf16 %v6418, %v6417
      %v6498 = vpack.c.bf16 %v6420, %v6419
      %v6499 = vpack.c.bf16 %v6422, %v6421
      %v6500 = vpack.c.bf16 %v6424, %v6423
      %v6501 = vpack.c.bf16 %v6426, %v6425
      %v6502 = vpack.c.bf16 %v6428, %v6427
      %v6503 = vpack.c.bf16 %v6430, %v6429
      %v6504 = vpack.c.bf16 %v6432, %v6431
      %v6505 = vpack.c.bf16 %v6434, %v6433
      %v6506 = vpack.c.bf16 %v6436, %v6435
      %v6507 = vpack.c.bf16 %v6438, %v6437
      %v6508 = vpack.c.bf16 %v6440, %v6439
      %v6509 = vpack.c.bf16 %v6442, %v6441
      %v6510 = vpack.c.bf16 %v6444, %v6443
      %v6511 = vpack.c.bf16 %v6446, %v6445
      %v6512 = vpack.c.bf16 %v6448, %v6447
      %s6513 = scalar_lea.vmem %s1, 12
      %v6514 = vld [vmem:[%s6513] sm:$0x3]
      %v6516 = vsel %vm586, %v6449, 0
      %v6519 = vsel %vm586, %v6450, 0
      %v6522 = vsel %vm586, %v6451, 0
      %v6525 = vsel %vm586, %v6452, 0
      %v6528 = vsel %vm586, %v6453, 0
      %v6531 = vsel %vm586, %v6454, 0
      %v6534 = vsel %vm586, %v6455, 0
      %v6537 = vsel %vm586, %v6456, 0
      %v6540 = vsel %vm586, %v6457, 0
      %v6543 = vsel %vm586, %v6458, 0
      %v6546 = vsel %vm586, %v6459, 0
      %v6549 = vsel %vm586, %v6460, 0
      %v6552 = vsel %vm586, %v6461, 0
      %v6555 = vsel %vm586, %v6462, 0
      %v6558 = vsel %vm586, %v6463, 0
      %v6561 = vsel %vm586, %v6464, 0
      %v6564 = vsel %vm586, %v6465, 0
      %v6567 = vsel %vm586, %v6466, 0
      %v6570 = vsel %vm586, %v6467, 0
      %v6573 = vsel %vm586, %v6468, 0
      %v6576 = vsel %vm586, %v6469, 0
      %v6579 = vsel %vm586, %v6470, 0
      %v6582 = vsel %vm586, %v6471, 0
      %v6585 = vsel %vm586, %v6472, 0
      %v6588 = vsel %vm586, %v6473, 0
      %v6591 = vsel %vm586, %v6474, 0
      %v6594 = vsel %vm586, %v6475, 0
      %v6597 = vsel %vm586, %v6476, 0
      %v6600 = vsel %vm586, %v6477, 0
      %v6603 = vsel %vm586, %v6478, 0
      %v6606 = vsel %vm586, %v6479, 0
      %v6609 = vsel %vm586, %v6480, 0
      %v6612 = vsel %vm586, %v6481, 0
      %v6615 = vsel %vm586, %v6482, 0
      %v6618 = vsel %vm586, %v6483, 0
      %v6621 = vsel %vm586, %v6484, 0
      %v6624 = vsel %vm586, %v6485, 0
      %v6627 = vsel %vm586, %v6486, 0
      %v6630 = vsel %vm586, %v6487, 0
      %v6633 = vsel %vm586, %v6488, 0
      %v6636 = vsel %vm586, %v6489, 0
      %v6639 = vsel %vm586, %v6490, 0
      %v6642 = vsel %vm586, %v6491, 0
      %v6645 = vsel %vm586, %v6492, 0
      %v6648 = vsel %vm586, %v6493, 0
      %v6651 = vsel %vm586, %v6494, 0
      %v6654 = vsel %vm586, %v6495, 0
      %v6657 = vsel %vm586, %v6496, 0
      %v6660 = vsel %vm586, %v6497, 0
      %v6663 = vsel %vm586, %v6498, 0
      %v6666 = vsel %vm586, %v6499, 0
      %v6669 = vsel %vm586, %v6500, 0
      %v6672 = vsel %vm586, %v6501, 0
      %v6675 = vsel %vm586, %v6502, 0
      %v6678 = vsel %vm586, %v6503, 0
      %v6681 = vsel %vm586, %v6504, 0
      %v6684 = vsel %vm586, %v6505, 0
      %v6687 = vsel %vm586, %v6506, 0
      %v6690 = vsel %vm586, %v6507, 0
      %v6693 = vsel %vm586, %v6508, 0
      %v6696 = vsel %vm586, %v6509, 0
      %v6699 = vsel %vm586, %v6510, 0
      %v6702 = vsel %vm586, %v6511, 0
      %v6705 = vsel %vm586, %v6512, 0
      %v6708 = vand.u32 %v6514, %v782
      %6710 = vmatprep.subr.bf16.mxu0 0
      %6711 = vmatpush1.bf16.msra.mxu0 %v6708
      %6712 = vmatprep.subr.bf16.mxu0 0
      %6713 = vmatpush1.bf16.msra.mxu0 0
      %6714 = vmatprep.subr.bf16.mxu0 0
      %6715 = vmatpush1.bf16.msra.mxu0 0
      %6716 = vmatprep.subr.bf16.mxu0 0
      %6717 = vmatpush1.bf16.msra.mxu0 0
      %6718 = vmatprep.subr.bf16.mxu0 0
      %6719 = vmatpush1.bf16.msra.mxu0 0
      %6720 = vmatprep.subr.bf16.mxu0 0
      %6721 = vmatpush1.bf16.msra.mxu0 0
      %6722 = vmatprep.subr.bf16.mxu0 0
      %6723 = vmatpush1.bf16.msra.mxu0 0
      %6724 = vmatprep.subr.bf16.mxu0 0
      %6725 = vmatpush1.bf16.msra.mxu0 0
      %6726 = vmatprep.subr.bf16.mxu0 0
      %6727 = vmatpush1.bf16.msra.mxu0 0
      %6728 = vmatprep.subr.bf16.mxu0 0
      %6729 = vmatpush1.bf16.msra.mxu0 0
      %6730 = vmatprep.subr.bf16.mxu0 0
      %6731 = vmatpush1.bf16.msra.mxu0 0
      %6732 = vmatprep.subr.bf16.mxu0 0
      %6733 = vmatpush1.bf16.msra.mxu0 0
      %6734 = vmatprep.subr.bf16.mxu0 0
      %6735 = vmatpush1.bf16.msra.mxu0 0
      %6736 = vmatprep.subr.bf16.mxu0 0
      %6737 = vmatpush1.bf16.msra.mxu0 0
      %6738 = vmatprep.subr.bf16.mxu0 0
      %6739 = vmatpush1.bf16.msra.mxu0 0
      %6740 = vmatprep.subr.bf16.mxu0 0
      %6741 = vmatpush1.bf16.msra.mxu0 0
      %6742 = vmatprep.mubr.bf16.mxu0 0
      %6743 = vmatmul.mubr.bf16.gmra.mrb[0].mxu0 %v6516
      %v6744 = vpop.f32.mrb[0].mxu0
      %v6745 = vadd.f32 0.0, %v6744
      %v6746 = vpop.f32.mrb[0].mxu0
      %v6747 = vpop.f32.mrb[0].mxu0
      %v6748 = vadd.f32 0.0, %v6747
      %v6749 = vpop.f32.mrb[0].mxu0
      %6750 = vmatprep.mubr.bf16.mxu0 0
      %6751 = vmatmul.mubr.bf16.gmra.mrb[0].mxu0 %v6519
      %v6752 = vpop.f32.mrb[0].mxu0
      %v6753 = vadd.f32 0.0, %v6752
      %v6754 = vpop.f32.mrb[0].mxu0
      %v6755 = vpop.f32.mrb[0].mxu0
      %v6756 = vadd.f32 0.0, %v6755
      %v6757 = vpop.f32.mrb[0].mxu0
      %6758 = vmatprep.mubr.bf16.mxu0 0
      %6759 = vmatmul.mubr.bf16.gmra.mrb[0].mxu0 %v6522
      %v6760 = vpop.f32.mrb[0].mxu0
      %v6761 = vadd.f32 0.0, %v6760
      %v6762 = vpop.f32.mrb[0].mxu0
      %v6763 = vpop.f32.mrb[0].mxu0
      %v6764 = vadd.f32 0.0, %v6763
      %v6765 = vpop.f32.mrb[0].mxu0
      %6766 = vmatprep.mubr.bf16.mxu0 0
      %6767 = vmatmul.mubr.bf16.gmra.mrb[0].mxu0 %v6525
      %v6768 = vpop.f32.mrb[0].mxu0
      %v6769 = vadd.f32 0.0, %v6768
      %v6770 = vpop.f32.mrb[0].mxu0
      %v6771 = vpop.f32.mrb[0].mxu0
      %v6772 = vadd.f32 0.0, %v6771
      %v6773 = vpop.f32.mrb[0].mxu0
      %6774 = vmatprep.mubr.bf16.mxu0 0
      %6775 = vmatmul.mubr.bf16.gmra.mrb[0].mxu0 %v6528
      %v6776 = vpop.f32.mrb[0].mxu0
      %v6777 = vadd.f32 0.0, %v6776
      %v6778 = vpop.f32.mrb[0].mxu0
      %v6779 = vpop.f32.mrb[0].mxu0
      %v6780 = vadd.f32 0.0, %v6779
      %v6781 = vpop.f32.mrb[0].mxu0
      %6782 = vmatprep.mubr.bf16.mxu0 0
      %6783 = vmatmul.mubr.bf16.gmra.mrb[0].mxu0 %v6531
      %v6784 = vpop.f32.mrb[0].mxu0
      %v6785 = vadd.f32 0.0, %v6784
      %v6786 = vpop.f32.mrb[0].mxu0
      %v6787 = vpop.f32.mrb[0].mxu0
      %v6788 = vadd.f32 0.0, %v6787
      %v6789 = vpop.f32.mrb[0].mxu0
      %6790 = vmatprep.mubr.bf16.mxu0 0
      %6791 = vmatmul.mubr.bf16.gmra.mrb[0].mxu0 %v6534
      %v6792 = vpop.f32.mrb[0].mxu0
      %v6793 = vadd.f32 0.0, %v6792
      %v6794 = vpop.f32.mrb[0].mxu0
      %v6795 = vpop.f32.mrb[0].mxu0
      %v6796 = vadd.f32 0.0, %v6795
      %v6797 = vpop.f32.mrb[0].mxu0
      %6798 = vmatprep.mubr.bf16.mxu0 0
      %6799 = vmatmul.mubr.bf16.gmra.mrb[0].mxu0 %v6537
      %v6800 = vpop.f32.mrb[0].mxu0
      %v6801 = vadd.f32 0.0, %v6800
      %v6802 = vpop.f32.mrb[0].mxu0
      %v6803 = vpop.f32.mrb[0].mxu0
      %v6804 = vadd.f32 0.0, %v6803
      %v6805 = vpop.f32.mrb[0].mxu0
      %6806 = vmatprep.mubr.bf16.mxu0 0
      %6807 = vmatmul.mubr.bf16.gmra.mrb[0].mxu0 %v6540
      %v6808 = vpop.f32.mrb[0].mxu0
      %v6809 = vadd.f32 0.0, %v6808
      %v6810 = vpop.f32.mrb[0].mxu0
      %v6811 = vpop.f32.mrb[0].mxu0
      %v6812 = vadd.f32 0.0, %v6811
      %v6813 = vpop.f32.mrb[0].mxu0
      %6814 = vmatprep.mubr.bf16.mxu0 0
      %6815 = vmatmul.mubr.bf16.gmra.mrb[0].mxu0 %v6543
      %v6816 = vpop.f32.mrb[0].mxu0
      %v6817 = vadd.f32 0.0, %v6816
      %v6818 = vpop.f32.mrb[0].mxu0
      %v6819 = vpop.f32.mrb[0].mxu0
      %v6820 = vadd.f32 0.0, %v6819
      %v6821 = vpop.f32.mrb[0].mxu0
      %6822 = vmatprep.mubr.bf16.mxu0 0
      %6823 = vmatmul.mubr.bf16.gmra.mrb[0].mxu0 %v6546
      %v6824 = vpop.f32.mrb[0].mxu0
      %v6825 = vadd.f32 0.0, %v6824
      %v6826 = vpop.f32.mrb[0].mxu0
      %v6827 = vpop.f32.mrb[0].mxu0
      %v6828 = vadd.f32 0.0, %v6827
      %v6829 = vpop.f32.mrb[0].mxu0
      %6830 = vmatprep.mubr.bf16.mxu0 0
      %6831 = vmatmul.mubr.bf16.gmra.mrb[0].mxu0 %v6549
      %v6832 = vpop.f32.mrb[0].mxu0
      %v6833 = vadd.f32 0.0, %v6832
      %v6834 = vpop.f32.mrb[0].mxu0
      %v6835 = vpop.f32.mrb[0].mxu0
      %v6836 = vadd.f32 0.0, %v6835
      %v6837 = vpop.f32.mrb[0].mxu0
      %6838 = vmatprep.mubr.bf16.mxu0 0
      %6839 = vmatmul.mubr.bf16.gmra.mrb[0].mxu0 %v6552
      %v6840 = vpop.f32.mrb[0].mxu0
      %v6841 = vadd.f32 0.0, %v6840
      %v6842 = vpop.f32.mrb[0].mxu0
      %v6843 = vpop.f32.mrb[0].mxu0
      %v6844 = vadd.f32 0.0, %v6843
      %v6845 = vpop.f32.mrb[0].mxu0
      %6846 = vmatprep.mubr.bf16.mxu0 0
      %6847 = vmatmul.mubr.bf16.gmra.mrb[0].mxu0 %v6555
      %v6848 = vpop.f32.mrb[0].mxu0
      %v6849 = vadd.f32 0.0, %v6848
      %v6850 = vpop.f32.mrb[0].mxu0
      %v6851 = vpop.f32.mrb[0].mxu0
      %v6852 = vadd.f32 0.0, %v6851
      %v6853 = vpop.f32.mrb[0].mxu0
      %6854 = vmatprep.mubr.bf16.mxu0 0
      %6855 = vmatmul.mubr.bf16.gmra.mrb[0].mxu0 %v6558
      %v6856 = vpop.f32.mrb[0].mxu0
      %v6857 = vadd.f32 0.0, %v6856
      %v6858 = vpop.f32.mrb[0].mxu0
      %v6859 = vpop.f32.mrb[0].mxu0
      %v6860 = vadd.f32 0.0, %v6859
      %v6861 = vpop.f32.mrb[0].mxu0
      %6862 = vmatprep.mubr.bf16.mxu0 0
      %6863 = vmatmul.mubr.bf16.gmra.mrb[0].mxu0 %v6561
      %v6864 = vpop.f32.mrb[0].mxu0
      %v6865 = vadd.f32 0.0, %v6864
      %v6866 = vpop.f32.mrb[0].mxu0
      %v6867 = vpop.f32.mrb[0].mxu0
      %v6868 = vadd.f32 0.0, %v6867
      %v6869 = vpop.f32.mrb[0].mxu0
      %6870 = vmatprep.mubr.bf16.mxu0 0
      %6871 = vmatmul.mubr.bf16.gmra.mrb[0].mxu0 %v6564
      %v6872 = vpop.f32.mrb[0].mxu0
      %v6873 = vadd.f32 0.0, %v6872
      %v6874 = vpop.f32.mrb[0].mxu0
      %v6875 = vpop.f32.mrb[0].mxu0
      %v6876 = vadd.f32 0.0, %v6875
      %v6877 = vpop.f32.mrb[0].mxu0
      %6878 = vmatprep.mubr.bf16.mxu0 0
      %6879 = vmatmul.mubr.bf16.gmra.mrb[0].mxu0 %v6567
      %v6880 = vpop.f32.mrb[0].mxu0
      %v6881 = vadd.f32 0.0, %v6880
      %v6882 = vpop.f32.mrb[0].mxu0
      %v6883 = vpop.f32.mrb[0].mxu0
      %v6884 = vadd.f32 0.0, %v6883
      %v6885 = vpop.f32.mrb[0].mxu0
      %6886 = vmatprep.mubr.bf16.mxu0 0
      %6887 = vmatmul.mubr.bf16.gmra.mrb[0].mxu0 %v6570
      %v6888 = vpop.f32.mrb[0].mxu0
      %v6889 = vadd.f32 0.0, %v6888
      %v6890 = vpop.f32.mrb[0].mxu0
      %v6891 = vpop.f32.mrb[0].mxu0
      %v6892 = vadd.f32 0.0, %v6891
      %v6893 = vpop.f32.mrb[0].mxu0
      %6894 = vmatprep.mubr.bf16.mxu0 0
      %6895 = vmatmul.mubr.bf16.gmra.mrb[0].mxu0 %v6573
      %v6896 = vpop.f32.mrb[0].mxu0
      %v6897 = vadd.f32 0.0, %v6896
      %v6898 = vpop.f32.mrb[0].mxu0
      %v6899 = vpop.f32.mrb[0].mxu0
      %v6900 = vadd.f32 0.0, %v6899
      %v6901 = vpop.f32.mrb[0].mxu0
      %6902 = vmatprep.mubr.bf16.mxu0 0
      %6903 = vmatmul.mubr.bf16.gmra.mrb[0].mxu0 %v6576
      %v6904 = vpop.f32.mrb[0].mxu0
      %v6905 = vadd.f32 0.0, %v6904
      %v6906 = vpop.f32.mrb[0].mxu0
      %v6907 = vpop.f32.mrb[0].mxu0
      %v6908 = vadd.f32 0.0, %v6907
      %v6909 = vpop.f32.mrb[0].mxu0
      %6910 = vmatprep.mubr.bf16.mxu0 0
      %6911 = vmatmul.mubr.bf16.gmra.mrb[0].mxu0 %v6579
      %v6912 = vpop.f32.mrb[0].mxu0
      %v6913 = vadd.f32 0.0, %v6912
      %v6914 = vpop.f32.mrb[0].mxu0
      %v6915 = vpop.f32.mrb[0].mxu0
      %v6916 = vadd.f32 0.0, %v6915
      %v6917 = vpop.f32.mrb[0].mxu0
      %6918 = vmatprep.mubr.bf16.mxu0 0
      %6919 = vmatmul.mubr.bf16.gmra.mrb[0].mxu0 %v6582
      %v6920 = vpop.f32.mrb[0].mxu0
      %v6921 = vadd.f32 0.0, %v6920
      %v6922 = vpop.f32.mrb[0].mxu0
      %v6923 = vpop.f32.mrb[0].mxu0
      %v6924 = vadd.f32 0.0, %v6923
      %v6925 = vpop.f32.mrb[0].mxu0
      %6926 = vmatprep.mubr.bf16.mxu0 0
      %6927 = vmatmul.mubr.bf16.gmra.mrb[0].mxu0 %v6585
      %v6928 = vpop.f32.mrb[0].mxu0
      %v6929 = vadd.f32 0.0, %v6928
      %v6930 = vpop.f32.mrb[0].mxu0
      %v6931 = vpop.f32.mrb[0].mxu0
      %v6932 = vadd.f32 0.0, %v6931
      %v6933 = vpop.f32.mrb[0].mxu0
      %6934 = vmatprep.mubr.bf16.mxu0 0
      %6935 = vmatmul.mubr.bf16.gmra.mrb[0].mxu0 %v6588
      %v6936 = vpop.f32.mrb[0].mxu0
      %v6937 = vadd.f32 0.0, %v6936
      %v6938 = vpop.f32.mrb[0].mxu0
      %v6939 = vpop.f32.mrb[0].mxu0
      %v6940 = vadd.f32 0.0, %v6939
      %v6941 = vpop.f32.mrb[0].mxu0
      %6942 = vmatprep.mubr.bf16.mxu0 0
      %6943 = vmatmul.mubr.bf16.gmra.mrb[0].mxu0 %v6591
      %v6944 = vpop.f32.mrb[0].mxu0
      %v6945 = vadd.f32 0.0, %v6944
      %v6946 = vpop.f32.mrb[0].mxu0
      %v6947 = vpop.f32.mrb[0].mxu0
      %v6948 = vadd.f32 0.0, %v6947
      %v6949 = vpop.f32.mrb[0].mxu0
      %6950 = vmatprep.mubr.bf16.mxu0 0
      %6951 = vmatmul.mubr.bf16.gmra.mrb[0].mxu0 %v6594
      %v6952 = vpop.f32.mrb[0].mxu0
      %v6953 = vadd.f32 0.0, %v6952
      %v6954 = vpop.f32.mrb[0].mxu0
      %v6955 = vpop.f32.mrb[0].mxu0
      %v6956 = vadd.f32 0.0, %v6955
      %v6957 = vpop.f32.mrb[0].mxu0
      %6958 = vmatprep.mubr.bf16.mxu0 0
      %6959 = vmatmul.mubr.bf16.gmra.mrb[0].mxu0 %v6597
      %v6960 = vpop.f32.mrb[0].mxu0
      %v6961 = vadd.f32 0.0, %v6960
      %v6962 = vpop.f32.mrb[0].mxu0
      %v6963 = vpop.f32.mrb[0].mxu0
      %v6964 = vadd.f32 0.0, %v6963
      %v6965 = vpop.f32.mrb[0].mxu0
      %6966 = vmatprep.mubr.bf16.mxu0 0
      %6967 = vmatmul.mubr.bf16.gmra.mrb[0].mxu0 %v6600
      %v6968 = vpop.f32.mrb[0].mxu0
      %v6969 = vadd.f32 0.0, %v6968
      %v6970 = vpop.f32.mrb[0].mxu0
      %v6971 = vpop.f32.mrb[0].mxu0
      %v6972 = vadd.f32 0.0, %v6971
      %v6973 = vpop.f32.mrb[0].mxu0
      %6974 = vmatprep.mubr.bf16.mxu0 0
      %6975 = vmatmul.mubr.bf16.gmra.mrb[0].mxu0 %v6603
      %v6976 = vpop.f32.mrb[0].mxu0
      %v6977 = vadd.f32 0.0, %v6976
      %v6978 = vpop.f32.mrb[0].mxu0
      %v6979 = vpop.f32.mrb[0].mxu0
      %v6980 = vadd.f32 0.0, %v6979
      %v6981 = vpop.f32.mrb[0].mxu0
      %6982 = vmatprep.mubr.bf16.mxu0 0
      %6983 = vmatmul.mubr.bf16.gmra.mrb[0].mxu0 %v6606
      %v6984 = vpop.f32.mrb[0].mxu0
      %v6985 = vadd.f32 0.0, %v6984
      %v6986 = vpop.f32.mrb[0].mxu0
      %v6987 = vpop.f32.mrb[0].mxu0
      %v6988 = vadd.f32 0.0, %v6987
      %v6989 = vpop.f32.mrb[0].mxu0
      %6990 = vmatprep.mubr.bf16.mxu0 0
      %6991 = vmatmul.mubr.bf16.gmra.mrb[0].mxu0 %v6609
      %v6992 = vpop.f32.mrb[0].mxu0
      %v6993 = vadd.f32 0.0, %v6992
      %v6994 = vpop.f32.mrb[0].mxu0
      %v6995 = vpop.f32.mrb[0].mxu0
      %v6996 = vadd.f32 0.0, %v6995
      %v6997 = vpop.f32.mrb[0].mxu0
      %6998 = vmatprep.mubr.bf16.mxu0 0
      %6999 = vmatmul.mubr.bf16.gmra.mrb[0].mxu0 %v6612
      %v7000 = vpop.f32.mrb[0].mxu0
      %v7001 = vadd.f32 0.0, %v7000
      %v7002 = vpop.f32.mrb[0].mxu0
      %v7003 = vpop.f32.mrb[0].mxu0
      %v7004 = vadd.f32 0.0, %v7003
      %v7005 = vpop.f32.mrb[0].mxu0
      %7006 = vmatprep.mubr.bf16.mxu0 0
      %7007 = vmatmul.mubr.bf16.gmra.mrb[0].mxu0 %v6615
      %v7008 = vpop.f32.mrb[0].mxu0
      %v7009 = vadd.f32 0.0, %v7008
      %v7010 = vpop.f32.mrb[0].mxu0
      %v7011 = vpop.f32.mrb[0].mxu0
      %v7012 = vadd.f32 0.0, %v7011
      %v7013 = vpop.f32.mrb[0].mxu0
      %7014 = vmatprep.mubr.bf16.mxu0 0
      %7015 = vmatmul.mubr.bf16.gmra.mrb[0].mxu0 %v6618
      %v7016 = vpop.f32.mrb[0].mxu0
      %v7017 = vadd.f32 0.0, %v7016
      %v7018 = vpop.f32.mrb[0].mxu0
      %v7019 = vpop.f32.mrb[0].mxu0
      %v7020 = vadd.f32 0.0, %v7019
      %v7021 = vpop.f32.mrb[0].mxu0
      %7022 = vmatprep.mubr.bf16.mxu0 0
      %7023 = vmatmul.mubr.bf16.gmra.mrb[0].mxu0 %v6621
      %v7024 = vpop.f32.mrb[0].mxu0
      %v7025 = vadd.f32 0.0, %v7024
      %v7026 = vpop.f32.mrb[0].mxu0
      %v7027 = vpop.f32.mrb[0].mxu0
      %v7028 = vadd.f32 0.0, %v7027
      %v7029 = vpop.f32.mrb[0].mxu0
      %7030 = vmatprep.mubr.bf16.mxu0 0
      %7031 = vmatmul.mubr.bf16.gmra.mrb[0].mxu0 %v6624
      %v7032 = vpop.f32.mrb[0].mxu0
      %v7033 = vadd.f32 0.0, %v7032
      %v7034 = vpop.f32.mrb[0].mxu0
      %v7035 = vpop.f32.mrb[0].mxu0
      %v7036 = vadd.f32 0.0, %v7035
      %v7037 = vpop.f32.mrb[0].mxu0
      %7038 = vmatprep.mubr.bf16.mxu0 0
      %7039 = vmatmul.mubr.bf16.gmra.mrb[0].mxu0 %v6627
      %v7040 = vpop.f32.mrb[0].mxu0
      %v7041 = vadd.f32 0.0, %v7040
      %v7042 = vpop.f32.mrb[0].mxu0
      %v7043 = vpop.f32.mrb[0].mxu0
      %v7044 = vadd.f32 0.0, %v7043
      %v7045 = vpop.f32.mrb[0].mxu0
      %7046 = vmatprep.mubr.bf16.mxu0 0
      %7047 = vmatmul.mubr.bf16.gmra.mrb[0].mxu0 %v6630
      %v7048 = vpop.f32.mrb[0].mxu0
      %v7049 = vadd.f32 0.0, %v7048
      %v7050 = vpop.f32.mrb[0].mxu0
      %v7051 = vpop.f32.mrb[0].mxu0
      %v7052 = vadd.f32 0.0, %v7051
      %v7053 = vpop.f32.mrb[0].mxu0
      %7054 = vmatprep.mubr.bf16.mxu0 0
      %7055 = vmatmul.mubr.bf16.gmra.mrb[0].mxu0 %v6633
      %v7056 = vpop.f32.mrb[0].mxu0
      %v7057 = vadd.f32 0.0, %v7056
      %v7058 = vpop.f32.mrb[0].mxu0
      %v7059 = vpop.f32.mrb[0].mxu0
      %v7060 = vadd.f32 0.0, %v7059
      %v7061 = vpop.f32.mrb[0].mxu0
      %7062 = vmatprep.mubr.bf16.mxu0 0
      %7063 = vmatmul.mubr.bf16.gmra.mrb[0].mxu0 %v6636
      %v7064 = vpop.f32.mrb[0].mxu0
      %v7065 = vadd.f32 0.0, %v7064
      %v7066 = vpop.f32.mrb[0].mxu0
      %v7067 = vpop.f32.mrb[0].mxu0
      %v7068 = vadd.f32 0.0, %v7067
      %v7069 = vpop.f32.mrb[0].mxu0
      %7070 = vmatprep.mubr.bf16.mxu0 0
      %7071 = vmatmul.mubr.bf16.gmra.mrb[0].mxu0 %v6639
      %v7072 = vpop.f32.mrb[0].mxu0
      %v7073 = vadd.f32 0.0, %v7072
      %v7074 = vpop.f32.mrb[0].mxu0
      %v7075 = vpop.f32.mrb[0].mxu0
      %v7076 = vadd.f32 0.0, %v7075
      %v7077 = vpop.f32.mrb[0].mxu0
      %7078 = vmatprep.mubr.bf16.mxu0 0
      %7079 = vmatmul.mubr.bf16.gmra.mrb[0].mxu0 %v6642
      %v7080 = vpop.f32.mrb[0].mxu0
      %v7081 = vadd.f32 0.0, %v7080
      %v7082 = vpop.f32.mrb[0].mxu0
      %v7083 = vpop.f32.mrb[0].mxu0
      %v7084 = vadd.f32 0.0, %v7083
      %v7085 = vpop.f32.mrb[0].mxu0
      %7086 = vmatprep.mubr.bf16.mxu0 0
      %7087 = vmatmul.mubr.bf16.gmra.mrb[0].mxu0 %v6645
      %v7088 = vpop.f32.mrb[0].mxu0
      %v7089 = vadd.f32 0.0, %v7088
      %v7090 = vpop.f32.mrb[0].mxu0
      %v7091 = vpop.f32.mrb[0].mxu0
      %v7092 = vadd.f32 0.0, %v7091
      %v7093 = vpop.f32.mrb[0].mxu0
      %7094 = vmatprep.mubr.bf16.mxu0 0
      %7095 = vmatmul.mubr.bf16.gmra.mrb[0].mxu0 %v6648
      %v7096 = vpop.f32.mrb[0].mxu0
      %v7097 = vadd.f32 0.0, %v7096
      %v7098 = vpop.f32.mrb[0].mxu0
      %v7099 = vpop.f32.mrb[0].mxu0
      %v7100 = vadd.f32 0.0, %v7099
      %v7101 = vpop.f32.mrb[0].mxu0
      %7102 = vmatprep.mubr.bf16.mxu0 0
      %7103 = vmatmul.mubr.bf16.gmra.mrb[0].mxu0 %v6651
      %v7104 = vpop.f32.mrb[0].mxu0
      %v7105 = vadd.f32 0.0, %v7104
      %v7106 = vpop.f32.mrb[0].mxu0
      %v7107 = vpop.f32.mrb[0].mxu0
      %v7108 = vadd.f32 0.0, %v7107
      %v7109 = vpop.f32.mrb[0].mxu0
      %7110 = vmatprep.mubr.bf16.mxu0 0
      %7111 = vmatmul.mubr.bf16.gmra.mrb[0].mxu0 %v6654
      %v7112 = vpop.f32.mrb[0].mxu0
      %v7113 = vadd.f32 0.0, %v7112
      %v7114 = vpop.f32.mrb[0].mxu0
      %v7115 = vpop.f32.mrb[0].mxu0
      %v7116 = vadd.f32 0.0, %v7115
      %v7117 = vpop.f32.mrb[0].mxu0
      %7118 = vmatprep.mubr.bf16.mxu0 0
      %7119 = vmatmul.mubr.bf16.gmra.mrb[0].mxu0 %v6657
      %v7120 = vpop.f32.mrb[0].mxu0
      %v7121 = vadd.f32 0.0, %v7120
      %v7122 = vpop.f32.mrb[0].mxu0
      %v7123 = vpop.f32.mrb[0].mxu0
      %v7124 = vadd.f32 0.0, %v7123
      %v7125 = vpop.f32.mrb[0].mxu0
      %7126 = vmatprep.mubr.bf16.mxu0 0
      %7127 = vmatmul.mubr.bf16.gmra.mrb[0].mxu0 %v6660
      %v7128 = vpop.f32.mrb[0].mxu0
      %v7129 = vadd.f32 0.0, %v7128
      %v7130 = vpop.f32.mrb[0].mxu0
      %v7131 = vpop.f32.mrb[0].mxu0
      %v7132 = vadd.f32 0.0, %v7131
      %v7133 = vpop.f32.mrb[0].mxu0
      %7134 = vmatprep.mubr.bf16.mxu0 0
      %7135 = vmatmul.mubr.bf16.gmra.mrb[0].mxu0 %v6663
      %v7136 = vpop.f32.mrb[0].mxu0
      %v7137 = vadd.f32 0.0, %v7136
      %v7138 = vpop.f32.mrb[0].mxu0
      %v7139 = vpop.f32.mrb[0].mxu0
      %v7140 = vadd.f32 0.0, %v7139
      %v7141 = vpop.f32.mrb[0].mxu0
      %7142 = vmatprep.mubr.bf16.mxu0 0
      %7143 = vmatmul.mubr.bf16.gmra.mrb[0].mxu0 %v6666
      %v7144 = vpop.f32.mrb[0].mxu0
      %v7145 = vadd.f32 0.0, %v7144
      %v7146 = vpop.f32.mrb[0].mxu0
      %v7147 = vpop.f32.mrb[0].mxu0
      %v7148 = vadd.f32 0.0, %v7147
      %v7149 = vpop.f32.mrb[0].mxu0
      %7150 = vmatprep.mubr.bf16.mxu0 0
      %7151 = vmatmul.mubr.bf16.gmra.mrb[0].mxu0 %v6669
      %v7152 = vpop.f32.mrb[0].mxu0
      %v7153 = vadd.f32 0.0, %v7152
      %v7154 = vpop.f32.mrb[0].mxu0
      %v7155 = vpop.f32.mrb[0].mxu0
      %v7156 = vadd.f32 0.0, %v7155
      %v7157 = vpop.f32.mrb[0].mxu0
      %7158 = vmatprep.mubr.bf16.mxu0 0
      %7159 = vmatmul.mubr.bf16.gmra.mrb[0].mxu0 %v6672
      %v7160 = vpop.f32.mrb[0].mxu0
      %v7161 = vadd.f32 0.0, %v7160
      %v7162 = vpop.f32.mrb[0].mxu0
      %v7163 = vpop.f32.mrb[0].mxu0
      %v7164 = vadd.f32 0.0, %v7163
      %v7165 = vpop.f32.mrb[0].mxu0
      %7166 = vmatprep.mubr.bf16.mxu0 0
      %7167 = vmatmul.mubr.bf16.gmra.mrb[0].mxu0 %v6675
      %v7168 = vpop.f32.mrb[0].mxu0
      %v7169 = vadd.f32 0.0, %v7168
      %v7170 = vpop.f32.mrb[0].mxu0
      %v7171 = vpop.f32.mrb[0].mxu0
      %v7172 = vadd.f32 0.0, %v7171
      %v7173 = vpop.f32.mrb[0].mxu0
      %7174 = vmatprep.mubr.bf16.mxu0 0
      %7175 = vmatmul.mubr.bf16.gmra.mrb[0].mxu0 %v6678
      %v7176 = vpop.f32.mrb[0].mxu0
      %v7177 = vadd.f32 0.0, %v7176
      %v7178 = vpop.f32.mrb[0].mxu0
      %v7179 = vpop.f32.mrb[0].mxu0
      %v7180 = vadd.f32 0.0, %v7179
      %v7181 = vpop.f32.mrb[0].mxu0
      %7182 = vmatprep.mubr.bf16.mxu0 0
      %7183 = vmatmul.mubr.bf16.gmra.mrb[0].mxu0 %v6681
      %v7184 = vpop.f32.mrb[0].mxu0
      %v7185 = vadd.f32 0.0, %v7184
      %v7186 = vpop.f32.mrb[0].mxu0
      %v7187 = vpop.f32.mrb[0].mxu0
      %v7188 = vadd.f32 0.0, %v7187
      %v7189 = vpop.f32.mrb[0].mxu0
      %7190 = vmatprep.mubr.bf16.mxu0 0
      %7191 = vmatmul.mubr.bf16.gmra.mrb[0].mxu0 %v6684
      %v7192 = vpop.f32.mrb[0].mxu0
      %v7193 = vadd.f32 0.0, %v7192
      %v7194 = vpop.f32.mrb[0].mxu0
      %v7195 = vpop.f32.mrb[0].mxu0
      %v7196 = vadd.f32 0.0, %v7195
      %v7197 = vpop.f32.mrb[0].mxu0
      %7198 = vmatprep.mubr.bf16.mxu0 0
      %7199 = vmatmul.mubr.bf16.gmra.mrb[0].mxu0 %v6687
      %v7200 = vpop.f32.mrb[0].mxu0
      %v7201 = vadd.f32 0.0, %v7200
      %v7202 = vpop.f32.mrb[0].mxu0
      %v7203 = vpop.f32.mrb[0].mxu0
      %v7204 = vadd.f32 0.0, %v7203
      %v7205 = vpop.f32.mrb[0].mxu0
      %7206 = vmatprep.mubr.bf16.mxu0 0
      %7207 = vmatmul.mubr.bf16.gmra.mrb[0].mxu0 %v6690
      %v7208 = vpop.f32.mrb[0].mxu0
      %v7209 = vadd.f32 0.0, %v7208
      %v7210 = vpop.f32.mrb[0].mxu0
      %v7211 = vpop.f32.mrb[0].mxu0
      %v7212 = vadd.f32 0.0, %v7211
      %v7213 = vpop.f32.mrb[0].mxu0
      %7214 = vmatprep.mubr.bf16.mxu0 0
      %7215 = vmatmul.mubr.bf16.gmra.mrb[0].mxu0 %v6693
      %v7216 = vpop.f32.mrb[0].mxu0
      %v7217 = vadd.f32 0.0, %v7216
      %v7218 = vpop.f32.mrb[0].mxu0
      %v7219 = vpop.f32.mrb[0].mxu0
      %v7220 = vadd.f32 0.0, %v7219
      %v7221 = vpop.f32.mrb[0].mxu0
      %7222 = vmatprep.mubr.bf16.mxu0 0
      %7223 = vmatmul.mubr.bf16.gmra.mrb[0].mxu0 %v6696
      %v7224 = vpop.f32.mrb[0].mxu0
      %v7225 = vadd.f32 0.0, %v7224
      %v7226 = vpop.f32.mrb[0].mxu0
      %v7227 = vpop.f32.mrb[0].mxu0
      %v7228 = vadd.f32 0.0, %v7227
      %v7229 = vpop.f32.mrb[0].mxu0
      %7230 = vmatprep.mubr.bf16.mxu0 0
      %7231 = vmatmul.mubr.bf16.gmra.mrb[0].mxu0 %v6699
      %v7232 = vpop.f32.mrb[0].mxu0
      %v7233 = vadd.f32 0.0, %v7232
      %v7234 = vpop.f32.mrb[0].mxu0
      %v7235 = vpop.f32.mrb[0].mxu0
      %v7236 = vadd.f32 0.0, %v7235
      %v7237 = vpop.f32.mrb[0].mxu0
      %7238 = vmatprep.mubr.bf16.mxu0 0
      %7239 = vmatmul.mubr.bf16.gmra.mrb[0].mxu0 %v6702
      %v7240 = vpop.f32.mrb[0].mxu0
      %v7241 = vadd.f32 0.0, %v7240
      %v7242 = vpop.f32.mrb[0].mxu0
      %v7243 = vpop.f32.mrb[0].mxu0
      %v7244 = vadd.f32 0.0, %v7243
      %v7245 = vpop.f32.mrb[0].mxu0
      %7246 = vmatprep.mubr.bf16.mxu0 0
      %7247 = vmatmul.mubr.bf16.gmra.mrb[0].mxu0 %v6705
      %v7248 = vpop.f32.mrb[0].mxu0
      %v7249 = vadd.f32 0.0, %v7248
      %v7250 = vpop.f32.mrb[0].mxu0
      %v7251 = vpop.f32.mrb[0].mxu0
      %v7252 = vadd.f32 0.0, %v7251
      %v7253 = vpop.f32.mrb[0].mxu0
      %7254 = vdwg.mxu0
      %v7255 = vadd.f32 %v6192, %v6745
      %v7256 = vadd.f32 %v6193, %v6748
      %v7257 = vadd.f32 %v6194, %v6753
      %v7258 = vadd.f32 %v6195, %v6756
      %v7259 = vadd.f32 %v6196, %v6761
      %v7260 = vadd.f32 %v6197, %v6764
      %v7261 = vadd.f32 %v6198, %v6769
      %v7262 = vadd.f32 %v6199, %v6772
      %v7263 = vadd.f32 %v6200, %v6777
      %v7264 = vadd.f32 %v6201, %v6780
      %v7265 = vadd.f32 %v6202, %v6785
      %v7266 = vadd.f32 %v6203, %v6788
      %v7267 = vadd.f32 %v6204, %v6793
      %v7268 = vadd.f32 %v6205, %v6796
      %v7269 = vadd.f32 %v6206, %v6801
      %v7270 = vadd.f32 %v6207, %v6804
      %v7271 = vadd.f32 %v6208, %v6809
      %v7272 = vadd.f32 %v6209, %v6812
      %v7273 = vadd.f32 %v6210, %v6817
      %v7274 = vadd.f32 %v6211, %v6820
      %v7275 = vadd.f32 %v6212, %v6825
      %v7276 = vadd.f32 %v6213, %v6828
      %v7277 = vadd.f32 %v6214, %v6833
      %v7278 = vadd.f32 %v6215, %v6836
      %v7279 = vadd.f32 %v6216, %v6841
      %v7280 = vadd.f32 %v6217, %v6844
      %v7281 = vadd.f32 %v6218, %v6849
      %v7282 = vadd.f32 %v6219, %v6852
      %v7283 = vadd.f32 %v6220, %v6857
      %v7284 = vadd.f32 %v6221, %v6860
      %v7285 = vadd.f32 %v6222, %v6865
      %v7286 = vadd.f32 %v6223, %v6868
      %v7287 = vadd.f32 %v6224, %v6873
      %v7288 = vadd.f32 %v6225, %v6876
      %v7289 = vadd.f32 %v6226, %v6881
      %v7290 = vadd.f32 %v6227, %v6884
      %v7291 = vadd.f32 %v6228, %v6889
      %v7292 = vadd.f32 %v6229, %v6892
      %v7293 = vadd.f32 %v6230, %v6897
      %v7294 = vadd.f32 %v6231, %v6900
      %v7295 = vadd.f32 %v6232, %v6905
      %v7296 = vadd.f32 %v6233, %v6908
      %v7297 = vadd.f32 %v6234, %v6913
      %v7298 = vadd.f32 %v6235, %v6916
      %v7299 = vadd.f32 %v6236, %v6921
      %v7300 = vadd.f32 %v6237, %v6924
      %v7301 = vadd.f32 %v6238, %v6929
      %v7302 = vadd.f32 %v6239, %v6932
      %v7303 = vadd.f32 %v6240, %v6937
      %v7304 = vadd.f32 %v6241, %v6940
      %v7305 = vadd.f32 %v6242, %v6945
      %v7306 = vadd.f32 %v6243, %v6948
      %v7307 = vadd.f32 %v6244, %v6953
      %v7308 = vadd.f32 %v6245, %v6956
      %v7309 = vadd.f32 %v6246, %v6961
      %v7310 = vadd.f32 %v6247, %v6964
      %v7311 = vadd.f32 %v6248, %v6969
      %v7312 = vadd.f32 %v6249, %v6972
      %v7313 = vadd.f32 %v6250, %v6977
      %v7314 = vadd.f32 %v6251, %v6980
      %v7315 = vadd.f32 %v6252, %v6985
      %v7316 = vadd.f32 %v6253, %v6988
      %v7317 = vadd.f32 %v6254, %v6993
      %v7318 = vadd.f32 %v6255, %v6996
      %v7319 = vadd.f32 %v6256, %v7001
      %v7320 = vadd.f32 %v6257, %v7004
      %v7321 = vadd.f32 %v6258, %v7009
      %v7322 = vadd.f32 %v6259, %v7012
      %v7323 = vadd.f32 %v6260, %v7017
      %v7324 = vadd.f32 %v6261, %v7020
      %v7325 = vadd.f32 %v6262, %v7025
      %v7326 = vadd.f32 %v6263, %v7028
      %v7327 = vadd.f32 %v6264, %v7033
      %v7328 = vadd.f32 %v6265, %v7036
      %v7329 = vadd.f32 %v6266, %v7041
      %v7330 = vadd.f32 %v6267, %v7044
      %v7331 = vadd.f32 %v6268, %v7049
      %v7332 = vadd.f32 %v6269, %v7052
      %v7333 = vadd.f32 %v6270, %v7057
      %v7334 = vadd.f32 %v6271, %v7060
      %v7335 = vadd.f32 %v6272, %v7065
      %v7336 = vadd.f32 %v6273, %v7068
      %v7337 = vadd.f32 %v6274, %v7073
      %v7338 = vadd.f32 %v6275, %v7076
      %v7339 = vadd.f32 %v6276, %v7081
      %v7340 = vadd.f32 %v6277, %v7084
      %v7341 = vadd.f32 %v6278, %v7089
      %v7342 = vadd.f32 %v6279, %v7092
      %v7343 = vadd.f32 %v6280, %v7097
      %v7344 = vadd.f32 %v6281, %v7100
      %v7345 = vadd.f32 %v6282, %v7105
      %v7346 = vadd.f32 %v6283, %v7108
      %v7347 = vadd.f32 %v6284, %v7113
      %v7348 = vadd.f32 %v6285, %v7116
      %v7349 = vadd.f32 %v6286, %v7121
      %v7350 = vadd.f32 %v6287, %v7124
      %v7351 = vadd.f32 %v6288, %v7129
      %v7352 = vadd.f32 %v6289, %v7132
      %v7353 = vadd.f32 %v6290, %v7137
      %v7354 = vadd.f32 %v6291, %v7140
      %v7355 = vadd.f32 %v6292, %v7145
      %v7356 = vadd.f32 %v6293, %v7148
      %v7357 = vadd.f32 %v6294, %v7153
      %v7358 = vadd.f32 %v6295, %v7156
      %v7359 = vadd.f32 %v6296, %v7161
      %v7360 = vadd.f32 %v6297, %v7164
      %v7361 = vadd.f32 %v6298, %v7169
      %v7362 = vadd.f32 %v6299, %v7172
      %v7363 = vadd.f32 %v6300, %v7177
      %v7364 = vadd.f32 %v6301, %v7180
      %v7365 = vadd.f32 %v6302, %v7185
      %v7366 = vadd.f32 %v6303, %v7188
      %v7367 = vadd.f32 %v6304, %v7193
      %v7368 = vadd.f32 %v6305, %v7196
      %v7369 = vadd.f32 %v6306, %v7201
      %v7370 = vadd.f32 %v6307, %v7204
      %v7371 = vadd.f32 %v6308, %v7209
      %v7372 = vadd.f32 %v6309, %v7212
      %v7373 = vadd.f32 %v6310, %v7217
      %v7374 = vadd.f32 %v6311, %v7220
      %v7375 = vadd.f32 %v6312, %v7225
      %v7376 = vadd.f32 %v6313, %v7228
      %v7377 = vadd.f32 %v6314, %v7233
      %v7378 = vadd.f32 %v6315, %v7236
      %v7379 = vadd.f32 %v6316, %v7241
      %v7380 = vadd.f32 %v6317, %v7244
      %v7381 = vadd.f32 %v6318, %v7249
      %v7382 = vadd.f32 %v6319, %v7252
      %v7383 = vld [vmem:[%s6320 + $0x1] sm:$0xff]
      %v7384 = vld [vmem:[%s6320 + $0x9] sm:$0xff]
      %v7385 = vld [vmem:[%s6320 + $0x11] sm:$0xff]
      %v7386 = vld [vmem:[%s6320 + $0x19] sm:$0xff]
      %v7387 = vld [vmem:[%s6320 + $0x29] sm:$0xff]
      %v7388 = vld [vmem:[%s6320 + $0x31] sm:$0xff]
      %v7389 = vld [vmem:[%s6320 + $0x39] sm:$0xff]
      %v7390 = vld [vmem:[%s6320 + $0x41] sm:$0xff]
      %v7391 = vld [vmem:[%s6320 + $0x51] sm:$0xff]
      %v7392 = vld [vmem:[%s6320 + $0x59] sm:$0xff]
      %v7393 = vld [vmem:[%s6320 + $0x61] sm:$0xff]
      %v7394 = vld [vmem:[%s6320 + $0x69] sm:$0xff]
      %v7395 = vld [vmem:[%s6320 + $0x79] sm:$0xff]
      %v7396 = vld [vmem:[%s6320 + $0x81] sm:$0xff]
      %v7397 = vld [vmem:[%s6320 + $0x89] sm:$0xff]
      %v7398 = vld [vmem:[%s6320 + $0x91] sm:$0xff]
      %v7399 = vld [vmem:[%s6320 + $0xa1] sm:$0xff]
      %v7400 = vld [vmem:[%s6320 + $0xa9] sm:$0xff]
      %v7401 = vld [vmem:[%s6320 + $0xb1] sm:$0xff]
      %v7402 = vld [vmem:[%s6320 + $0xb9] sm:$0xff]
      %v7403 = vld [vmem:[%s6320 + $0xc9] sm:$0xff]
      %v7404 = vld [vmem:[%s6320 + $0xd1] sm:$0xff]
      %v7405 = vld [vmem:[%s6320 + $0xd9] sm:$0xff]
      %v7406 = vld [vmem:[%s6320 + $0xe1] sm:$0xff]
      %v7407 = vld [vmem:[%s6320 + $0xf1] sm:$0xff]
      %v7408 = vld [vmem:[%s6320 + $0xf9] sm:$0xff]
      %v7409 = vld [vmem:[%s6320 + $0x101] sm:$0xff]
      %v7410 = vld [vmem:[%s6320 + $0x109] sm:$0xff]
      %v7411 = vld [vmem:[%s6320 + $0x119] sm:$0xff]
      %v7412 = vld [vmem:[%s6320 + $0x121] sm:$0xff]
      %v7413 = vld [vmem:[%s6320 + $0x129] sm:$0xff]
      %v7414 = vld [vmem:[%s6320 + $0x131] sm:$0xff]
      %v7415 = vld [vmem:[%s6320 + $0x141] sm:$0xff]
      %v7416 = vld [vmem:[%s6320 + $0x149] sm:$0xff]
      %v7417 = vld [vmem:[%s6320 + $0x151] sm:$0xff]
      %v7418 = vld [vmem:[%s6320 + $0x159] sm:$0xff]
      %v7419 = vld [vmem:[%s6320 + $0x169] sm:$0xff]
      %v7420 = vld [vmem:[%s6320 + $0x171] sm:$0xff]
      %v7421 = vld [vmem:[%s6320 + $0x179] sm:$0xff]
      %v7422 = vld [vmem:[%s6320 + $0x181] sm:$0xff]
      %v7423 = vld [vmem:[%s6320 + $0x191] sm:$0xff]
      %v7424 = vld [vmem:[%s6320 + $0x199] sm:$0xff]
      %v7425 = vld [vmem:[%s6320 + $0x1a1] sm:$0xff]
      %v7426 = vld [vmem:[%s6320 + $0x1a9] sm:$0xff]
      %v7427 = vld [vmem:[%s6320 + $0x1b9] sm:$0xff]
      %v7428 = vld [vmem:[%s6320 + $0x1c1] sm:$0xff]
      %v7429 = vld [vmem:[%s6320 + $0x1c9] sm:$0xff]
      %v7430 = vld [vmem:[%s6320 + $0x1d1] sm:$0xff]
      %v7431 = vld [vmem:[%s6320 + $0x1e1] sm:$0xff]
      %v7432 = vld [vmem:[%s6320 + $0x1e9] sm:$0xff]
      %v7433 = vld [vmem:[%s6320 + $0x1f1] sm:$0xff]
      %v7434 = vld [vmem:[%s6320 + $0x1f9] sm:$0xff]
      %v7435 = vld [vmem:[%s6320 + $0x209] sm:$0xff]
      %v7436 = vld [vmem:[%s6320 + $0x211] sm:$0xff]
      %v7437 = vld [vmem:[%s6320 + $0x219] sm:$0xff]
      %v7438 = vld [vmem:[%s6320 + $0x221] sm:$0xff]
      %v7439 = vld [vmem:[%s6320 + $0x231] sm:$0xff]
      %v7440 = vld [vmem:[%s6320 + $0x239] sm:$0xff]
      %v7441 = vld [vmem:[%s6320 + $0x241] sm:$0xff]
      %v7442 = vld [vmem:[%s6320 + $0x249] sm:$0xff]
      %v7443 = vld [vmem:[%s6320 + $0x259] sm:$0xff]
      %v7444 = vld [vmem:[%s6320 + $0x261] sm:$0xff]
      %v7445 = vld [vmem:[%s6320 + $0x269] sm:$0xff]
      %v7446 = vld [vmem:[%s6320 + $0x271] sm:$0xff]
      %v7447 = vld [vmem:[%s6320 + $0x281] sm:$0xff]
      %v7448 = vld [vmem:[%s6320 + $0x289] sm:$0xff]
      %v7449 = vld [vmem:[%s6320 + $0x291] sm:$0xff]
      %v7450 = vld [vmem:[%s6320 + $0x299] sm:$0xff]
      %v7451 = vld [vmem:[%s6320 + $0x2a9] sm:$0xff]
      %v7452 = vld [vmem:[%s6320 + $0x2b1] sm:$0xff]
      %v7453 = vld [vmem:[%s6320 + $0x2b9] sm:$0xff]
      %v7454 = vld [vmem:[%s6320 + $0x2c1] sm:$0xff]
      %v7455 = vld [vmem:[%s6320 + $0x2d1] sm:$0xff]
      %v7456 = vld [vmem:[%s6320 + $0x2d9] sm:$0xff]
      %v7457 = vld [vmem:[%s6320 + $0x2e1] sm:$0xff]
      %v7458 = vld [vmem:[%s6320 + $0x2e9] sm:$0xff]
      %v7459 = vld [vmem:[%s6320 + $0x2f9] sm:$0xff]
      %v7460 = vld [vmem:[%s6320 + $0x301] sm:$0xff]
      %v7461 = vld [vmem:[%s6320 + $0x309] sm:$0xff]
      %v7462 = vld [vmem:[%s6320 + $0x311] sm:$0xff]
      %v7463 = vld [vmem:[%s6320 + $0x321] sm:$0xff]
      %v7464 = vld [vmem:[%s6320 + $0x329] sm:$0xff]
      %v7465 = vld [vmem:[%s6320 + $0x331] sm:$0xff]
      %v7466 = vld [vmem:[%s6320 + $0x339] sm:$0xff]
      %v7467 = vld [vmem:[%s6320 + $0x349] sm:$0xff]
      %v7468 = vld [vmem:[%s6320 + $0x351] sm:$0xff]
      %v7469 = vld [vmem:[%s6320 + $0x359] sm:$0xff]
      %v7470 = vld [vmem:[%s6320 + $0x361] sm:$0xff]
      %v7471 = vld [vmem:[%s6320 + $0x371] sm:$0xff]
      %v7472 = vld [vmem:[%s6320 + $0x379] sm:$0xff]
      %v7473 = vld [vmem:[%s6320 + $0x381] sm:$0xff]
      %v7474 = vld [vmem:[%s6320 + $0x389] sm:$0xff]
      %v7475 = vld [vmem:[%s6320 + $0x399] sm:$0xff]
      %v7476 = vld [vmem:[%s6320 + $0x3a1] sm:$0xff]
      %v7477 = vld [vmem:[%s6320 + $0x3a9] sm:$0xff]
      %v7478 = vld [vmem:[%s6320 + $0x3b1] sm:$0xff]
      %v7479 = vld [vmem:[%s6320 + $0x3c1] sm:$0xff]
      %v7480 = vld [vmem:[%s6320 + $0x3c9] sm:$0xff]
      %v7481 = vld [vmem:[%s6320 + $0x3d1] sm:$0xff]
      %v7482 = vld [vmem:[%s6320 + $0x3d9] sm:$0xff]
      %v7483 = vld [vmem:[%s6320 + $0x3e9] sm:$0xff]
      %v7484 = vld [vmem:[%s6320 + $0x3f1] sm:$0xff]
      %v7485 = vld [vmem:[%s6320 + $0x3f9] sm:$0xff]
      %v7486 = vld [vmem:[%s6320 + $0x401] sm:$0xff]
      %v7487 = vld [vmem:[%s6320 + $0x411] sm:$0xff]
      %v7488 = vld [vmem:[%s6320 + $0x419] sm:$0xff]
      %v7489 = vld [vmem:[%s6320 + $0x421] sm:$0xff]
      %v7490 = vld [vmem:[%s6320 + $0x429] sm:$0xff]
      %v7491 = vld [vmem:[%s6320 + $0x439] sm:$0xff]
      %v7492 = vld [vmem:[%s6320 + $0x441] sm:$0xff]
      %v7493 = vld [vmem:[%s6320 + $0x449] sm:$0xff]
      %v7494 = vld [vmem:[%s6320 + $0x451] sm:$0xff]
      %v7495 = vld [vmem:[%s6320 + $0x461] sm:$0xff]
      %v7496 = vld [vmem:[%s6320 + $0x469] sm:$0xff]
      %v7497 = vld [vmem:[%s6320 + $0x471] sm:$0xff]
      %v7498 = vld [vmem:[%s6320 + $0x479] sm:$0xff]
      %v7499 = vld [vmem:[%s6320 + $0x489] sm:$0xff]
      %v7500 = vld [vmem:[%s6320 + $0x491] sm:$0xff]
      %v7501 = vld [vmem:[%s6320 + $0x499] sm:$0xff]
      %v7502 = vld [vmem:[%s6320 + $0x4a1] sm:$0xff]
      %v7503 = vld [vmem:[%s6320 + $0x4b1] sm:$0xff]
      %v7504 = vld [vmem:[%s6320 + $0x4b9] sm:$0xff]
      %v7505 = vld [vmem:[%s6320 + $0x4c1] sm:$0xff]
      %v7506 = vld [vmem:[%s6320 + $0x4c9] sm:$0xff]
      %v7507 = vld [vmem:[%s6320 + $0x4d9] sm:$0xff]
      %v7508 = vld [vmem:[%s6320 + $0x4e1] sm:$0xff]
      %v7509 = vld [vmem:[%s6320 + $0x4e9] sm:$0xff]
      %v7510 = vld [vmem:[%s6320 + $0x4f1] sm:$0xff]
      %v7511 = vpack.c.bf16 %v7384, %v7383
      %v7512 = vpack.c.bf16 %v7386, %v7385
      %v7513 = vpack.c.bf16 %v7388, %v7387
      %v7514 = vpack.c.bf16 %v7390, %v7389
      %v7515 = vpack.c.bf16 %v7392, %v7391
      %v7516 = vpack.c.bf16 %v7394, %v7393
      %v7517 = vpack.c.bf16 %v7396, %v7395
      %v7518 = vpack.c.bf16 %v7398, %v7397
      %v7519 = vpack.c.bf16 %v7400, %v7399
      %v7520 = vpack.c.bf16 %v7402, %v7401
      %v7521 = vpack.c.bf16 %v7404, %v7403
      %v7522 = vpack.c.bf16 %v7406, %v7405
      %v7523 = vpack.c.bf16 %v7408, %v7407
      %v7524 = vpack.c.bf16 %v7410, %v7409
      %v7525 = vpack.c.bf16 %v7412, %v7411
      %v7526 = vpack.c.bf16 %v7414, %v7413
      %v7527 = vpack.c.bf16 %v7416, %v7415
      %v7528 = vpack.c.bf16 %v7418, %v7417
      %v7529 = vpack.c.bf16 %v7420, %v7419
      %v7530 = vpack.c.bf16 %v7422, %v7421
      %v7531 = vpack.c.bf16 %v7424, %v7423
      %v7532 = vpack.c.bf16 %v7426, %v7425
      %v7533 = vpack.c.bf16 %v7428, %v7427
      %v7534 = vpack.c.bf16 %v7430, %v7429
      %v7535 = vpack.c.bf16 %v7432, %v7431
      %v7536 = vpack.c.bf16 %v7434, %v7433
      %v7537 = vpack.c.bf16 %v7436, %v7435
      %v7538 = vpack.c.bf16 %v7438, %v7437
      %v7539 = vpack.c.bf16 %v7440, %v7439
      %v7540 = vpack.c.bf16 %v7442, %v7441
      %v7541 = vpack.c.bf16 %v7444, %v7443
      %v7542 = vpack.c.bf16 %v7446, %v7445
      %v7543 = vpack.c.bf16 %v7448, %v7447
      %v7544 = vpack.c.bf16 %v7450, %v7449
      %v7545 = vpack.c.bf16 %v7452, %v7451
      %v7546 = vpack.c.bf16 %v7454, %v7453
      %v7547 = vpack.c.bf16 %v7456, %v7455
      %v7548 = vpack.c.bf16 %v7458, %v7457
      %v7549 = vpack.c.bf16 %v7460, %v7459
      %v7550 = vpack.c.bf16 %v7462, %v7461
      %v7551 = vpack.c.bf16 %v7464, %v7463
      %v7552 = vpack.c.bf16 %v7466, %v7465
      %v7553 = vpack.c.bf16 %v7468, %v7467
      %v7554 = vpack.c.bf16 %v7470, %v7469
      %v7555 = vpack.c.bf16 %v7472, %v7471
      %v7556 = vpack.c.bf16 %v7474, %v7473
      %v7557 = vpack.c.bf16 %v7476, %v7475
      %v7558 = vpack.c.bf16 %v7478, %v7477
      %v7559 = vpack.c.bf16 %v7480, %v7479
      %v7560 = vpack.c.bf16 %v7482, %v7481
      %v7561 = vpack.c.bf16 %v7484, %v7483
      %v7562 = vpack.c.bf16 %v7486, %v7485
      %v7563 = vpack.c.bf16 %v7488, %v7487
      %v7564 = vpack.c.bf16 %v7490, %v7489
      %v7565 = vpack.c.bf16 %v7492, %v7491
      %v7566 = vpack.c.bf16 %v7494, %v7493
      %v7567 = vpack.c.bf16 %v7496, %v7495
      %v7568 = vpack.c.bf16 %v7498, %v7497
      %v7569 = vpack.c.bf16 %v7500, %v7499
      %v7570 = vpack.c.bf16 %v7502, %v7501
      %v7571 = vpack.c.bf16 %v7504, %v7503
      %v7572 = vpack.c.bf16 %v7506, %v7505
      %v7573 = vpack.c.bf16 %v7508, %v7507
      %v7574 = vpack.c.bf16 %v7510, %v7509
      %s7575 = scalar_lea.vmem %s1, 14
      %v7576 = vld [vmem:[%s7575] sm:$0x3]
      %v7578 = vsel %vm586, %v7511, 0
      %v7581 = vsel %vm586, %v7512, 0
      %v7584 = vsel %vm586, %v7513, 0
      %v7587 = vsel %vm586, %v7514, 0
      %v7590 = vsel %vm586, %v7515, 0
      %v7593 = vsel %vm586, %v7516, 0
      %v7596 = vsel %vm586, %v7517, 0
      %v7599 = vsel %vm586, %v7518, 0
      %v7602 = vsel %vm586, %v7519, 0
      %v7605 = vsel %vm586, %v7520, 0
      %v7608 = vsel %vm586, %v7521, 0
      %v7611 = vsel %vm586, %v7522, 0
      %v7614 = vsel %vm586, %v7523, 0
      %v7617 = vsel %vm586, %v7524, 0
      %v7620 = vsel %vm586, %v7525, 0
      %v7623 = vsel %vm586, %v7526, 0
      %v7626 = vsel %vm586, %v7527, 0
      %v7629 = vsel %vm586, %v7528, 0
      %v7632 = vsel %vm586, %v7529, 0
      %v7635 = vsel %vm586, %v7530, 0
      %v7638 = vsel %vm586, %v7531, 0
      %v7641 = vsel %vm586, %v7532, 0
      %v7644 = vsel %vm586, %v7533, 0
      %v7647 = vsel %vm586, %v7534, 0
      %v7650 = vsel %vm586, %v7535, 0
      %v7653 = vsel %vm586, %v7536, 0
      %v7656 = vsel %vm586, %v7537, 0
      %v7659 = vsel %vm586, %v7538, 0
      %v7662 = vsel %vm586, %v7539, 0
      %v7665 = vsel %vm586, %v7540, 0
      %v7668 = vsel %vm586, %v7541, 0
      %v7671 = vsel %vm586, %v7542, 0
      %v7674 = vsel %vm586, %v7543, 0
      %v7677 = vsel %vm586, %v7544, 0
      %v7680 = vsel %vm586, %v7545, 0
      %v7683 = vsel %vm586, %v7546, 0
      %v7686 = vsel %vm586, %v7547, 0
      %v7689 = vsel %vm586, %v7548, 0
      %v7692 = vsel %vm586, %v7549, 0
      %v7695 = vsel %vm586, %v7550, 0
      %v7698 = vsel %vm586, %v7551, 0
      %v7701 = vsel %vm586, %v7552, 0
      %v7704 = vsel %vm586, %v7553, 0
      %v7707 = vsel %vm586, %v7554, 0
      %v7710 = vsel %vm586, %v7555, 0
      %v7713 = vsel %vm586, %v7556, 0
      %v7716 = vsel %vm586, %v7557, 0
      %v7719 = vsel %vm586, %v7558, 0
      %v7722 = vsel %vm586, %v7559, 0
      %v7725 = vsel %vm586, %v7560, 0
      %v7728 = vsel %vm586, %v7561, 0
      %v7731 = vsel %vm586, %v7562, 0
      %v7734 = vsel %vm586, %v7563, 0
      %v7737 = vsel %vm586, %v7564, 0
      %v7740 = vsel %vm586, %v7565, 0
      %v7743 = vsel %vm586, %v7566, 0
      %v7746 = vsel %vm586, %v7567, 0
      %v7749 = vsel %vm586, %v7568, 0
      %v7752 = vsel %vm586, %v7569, 0
      %v7755 = vsel %vm586, %v7570, 0
      %v7758 = vsel %vm586, %v7571, 0
      %v7761 = vsel %vm586, %v7572, 0
      %v7764 = vsel %vm586, %v7573, 0
      %v7767 = vsel %vm586, %v7574, 0
      %v7770 = vand.u32 %v7576, %v782
      %7772 = vmatprep.subr.bf16.mxu0 0
      %7773 = vmatpush1.bf16.msra.mxu0 %v7770
      %7774 = vmatprep.subr.bf16.mxu0 0
      %7775 = vmatpush1.bf16.msra.mxu0 0
      %7776 = vmatprep.subr.bf16.mxu0 0
      %7777 = vmatpush1.bf16.msra.mxu0 0
      %7778 = vmatprep.subr.bf16.mxu0 0
      %7779 = vmatpush1.bf16.msra.mxu0 0
      %7780 = vmatprep.subr.bf16.mxu0 0
      %7781 = vmatpush1.bf16.msra.mxu0 0
      %7782 = vmatprep.subr.bf16.mxu0 0
      %7783 = vmatpush1.bf16.msra.mxu0 0
      %7784 = vmatprep.subr.bf16.mxu0 0
      %7785 = vmatpush1.bf16.msra.mxu0 0
      %7786 = vmatprep.subr.bf16.mxu0 0
      %7787 = vmatpush1.bf16.msra.mxu0 0
      %7788 = vmatprep.subr.bf16.mxu0 0
      %7789 = vmatpush1.bf16.msra.mxu0 0
      %7790 = vmatprep.subr.bf16.mxu0 0
      %7791 = vmatpush1.bf16.msra.mxu0 0
      %7792 = vmatprep.subr.bf16.mxu0 0
      %7793 = vmatpush1.bf16.msra.mxu0 0
      %7794 = vmatprep.subr.bf16.mxu0 0
      %7795 = vmatpush1.bf16.msra.mxu0 0
      %7796 = vmatprep.subr.bf16.mxu0 0
      %7797 = vmatpush1.bf16.msra.mxu0 0
      %7798 = vmatprep.subr.bf16.mxu0 0
      %7799 = vmatpush1.bf16.msra.mxu0 0
      %7800 = vmatprep.subr.bf16.mxu0 0
      %7801 = vmatpush1.bf16.msra.mxu0 0
      %7802 = vmatprep.subr.bf16.mxu0 0
      %7803 = vmatpush1.bf16.msra.mxu0 0
      %7804 = vmatprep.mubr.bf16.mxu0 0
      %7805 = vmatmul.mubr.bf16.gmra.mrb[0].mxu0 %v7578
      %v7806 = vpop.f32.mrb[0].mxu0
      %v7807 = vadd.f32 0.0, %v7806
      %v7808 = vpop.f32.mrb[0].mxu0
      %v7809 = vpop.f32.mrb[0].mxu0
      %v7810 = vadd.f32 0.0, %v7809
      %v7811 = vpop.f32.mrb[0].mxu0
      %7812 = vmatprep.mubr.bf16.mxu0 0
      %7813 = vmatmul.mubr.bf16.gmra.mrb[0].mxu0 %v7581
      %v7814 = vpop.f32.mrb[0].mxu0
      %v7815 = vadd.f32 0.0, %v7814
      %v7816 = vpop.f32.mrb[0].mxu0
      %v7817 = vpop.f32.mrb[0].mxu0
      %v7818 = vadd.f32 0.0, %v7817
      %v7819 = vpop.f32.mrb[0].mxu0
      %7820 = vmatprep.mubr.bf16.mxu0 0
      %7821 = vmatmul.mubr.bf16.gmra.mrb[0].mxu0 %v7584
      %v7822 = vpop.f32.mrb[0].mxu0
      %v7823 = vadd.f32 0.0, %v7822
      %v7824 = vpop.f32.mrb[0].mxu0
      %v7825 = vpop.f32.mrb[0].mxu0
      %v7826 = vadd.f32 0.0, %v7825
      %v7827 = vpop.f32.mrb[0].mxu0
      %7828 = vmatprep.mubr.bf16.mxu0 0
      %7829 = vmatmul.mubr.bf16.gmra.mrb[0].mxu0 %v7587
      %v7830 = vpop.f32.mrb[0].mxu0
      %v7831 = vadd.f32 0.0, %v7830
      %v7832 = vpop.f32.mrb[0].mxu0
      %v7833 = vpop.f32.mrb[0].mxu0
      %v7834 = vadd.f32 0.0, %v7833
      %v7835 = vpop.f32.mrb[0].mxu0
      %7836 = vmatprep.mubr.bf16.mxu0 0
      %7837 = vmatmul.mubr.bf16.gmra.mrb[0].mxu0 %v7590
      %v7838 = vpop.f32.mrb[0].mxu0
      %v7839 = vadd.f32 0.0, %v7838
      %v7840 = vpop.f32.mrb[0].mxu0
      %v7841 = vpop.f32.mrb[0].mxu0
      %v7842 = vadd.f32 0.0, %v7841
      %v7843 = vpop.f32.mrb[0].mxu0
      %7844 = vmatprep.mubr.bf16.mxu0 0
      %7845 = vmatmul.mubr.bf16.gmra.mrb[0].mxu0 %v7593
      %v7846 = vpop.f32.mrb[0].mxu0
      %v7847 = vadd.f32 0.0, %v7846
      %v7848 = vpop.f32.mrb[0].mxu0
      %v7849 = vpop.f32.mrb[0].mxu0
      %v7850 = vadd.f32 0.0, %v7849
      %v7851 = vpop.f32.mrb[0].mxu0
      %7852 = vmatprep.mubr.bf16.mxu0 0
      %7853 = vmatmul.mubr.bf16.gmra.mrb[0].mxu0 %v7596
      %v7854 = vpop.f32.mrb[0].mxu0
      %v7855 = vadd.f32 0.0, %v7854
      %v7856 = vpop.f32.mrb[0].mxu0
      %v7857 = vpop.f32.mrb[0].mxu0
      %v7858 = vadd.f32 0.0, %v7857
      %v7859 = vpop.f32.mrb[0].mxu0
      %7860 = vmatprep.mubr.bf16.mxu0 0
      %7861 = vmatmul.mubr.bf16.gmra.mrb[0].mxu0 %v7599
      %v7862 = vpop.f32.mrb[0].mxu0
      %v7863 = vadd.f32 0.0, %v7862
      %v7864 = vpop.f32.mrb[0].mxu0
      %v7865 = vpop.f32.mrb[0].mxu0
      %v7866 = vadd.f32 0.0, %v7865
      %v7867 = vpop.f32.mrb[0].mxu0
      %7868 = vmatprep.mubr.bf16.mxu0 0
      %7869 = vmatmul.mubr.bf16.gmra.mrb[0].mxu0 %v7602
      %v7870 = vpop.f32.mrb[0].mxu0
      %v7871 = vadd.f32 0.0, %v7870
      %v7872 = vpop.f32.mrb[0].mxu0
      %v7873 = vpop.f32.mrb[0].mxu0
      %v7874 = vadd.f32 0.0, %v7873
      %v7875 = vpop.f32.mrb[0].mxu0
      %7876 = vmatprep.mubr.bf16.mxu0 0
      %7877 = vmatmul.mubr.bf16.gmra.mrb[0].mxu0 %v7605
      %v7878 = vpop.f32.mrb[0].mxu0
      %v7879 = vadd.f32 0.0, %v7878
      %v7880 = vpop.f32.mrb[0].mxu0
      %v7881 = vpop.f32.mrb[0].mxu0
      %v7882 = vadd.f32 0.0, %v7881
      %v7883 = vpop.f32.mrb[0].mxu0
      %7884 = vmatprep.mubr.bf16.mxu0 0
      %7885 = vmatmul.mubr.bf16.gmra.mrb[0].mxu0 %v7608
      %v7886 = vpop.f32.mrb[0].mxu0
      %v7887 = vadd.f32 0.0, %v7886
      %v7888 = vpop.f32.mrb[0].mxu0
      %v7889 = vpop.f32.mrb[0].mxu0
      %v7890 = vadd.f32 0.0, %v7889
      %v7891 = vpop.f32.mrb[0].mxu0
      %7892 = vmatprep.mubr.bf16.mxu0 0
      %7893 = vmatmul.mubr.bf16.gmra.mrb[0].mxu0 %v7611
      %v7894 = vpop.f32.mrb[0].mxu0
      %v7895 = vadd.f32 0.0, %v7894
      %v7896 = vpop.f32.mrb[0].mxu0
      %v7897 = vpop.f32.mrb[0].mxu0
      %v7898 = vadd.f32 0.0, %v7897
      %v7899 = vpop.f32.mrb[0].mxu0
      %7900 = vmatprep.mubr.bf16.mxu0 0
      %7901 = vmatmul.mubr.bf16.gmra.mrb[0].mxu0 %v7614
      %v7902 = vpop.f32.mrb[0].mxu0
      %v7903 = vadd.f32 0.0, %v7902
      %v7904 = vpop.f32.mrb[0].mxu0
      %v7905 = vpop.f32.mrb[0].mxu0
      %v7906 = vadd.f32 0.0, %v7905
      %v7907 = vpop.f32.mrb[0].mxu0
      %7908 = vmatprep.mubr.bf16.mxu0 0
      %7909 = vmatmul.mubr.bf16.gmra.mrb[0].mxu0 %v7617
      %v7910 = vpop.f32.mrb[0].mxu0
      %v7911 = vadd.f32 0.0, %v7910
      %v7912 = vpop.f32.mrb[0].mxu0
      %v7913 = vpop.f32.mrb[0].mxu0
      %v7914 = vadd.f32 0.0, %v7913
      %v7915 = vpop.f32.mrb[0].mxu0
      %7916 = vmatprep.mubr.bf16.mxu0 0
      %7917 = vmatmul.mubr.bf16.gmra.mrb[0].mxu0 %v7620
      %v7918 = vpop.f32.mrb[0].mxu0
      %v7919 = vadd.f32 0.0, %v7918
      %v7920 = vpop.f32.mrb[0].mxu0
      %v7921 = vpop.f32.mrb[0].mxu0
      %v7922 = vadd.f32 0.0, %v7921
      %v7923 = vpop.f32.mrb[0].mxu0
      %7924 = vmatprep.mubr.bf16.mxu0 0
      %7925 = vmatmul.mubr.bf16.gmra.mrb[0].mxu0 %v7623
      %v7926 = vpop.f32.mrb[0].mxu0
      %v7927 = vadd.f32 0.0, %v7926
      %v7928 = vpop.f32.mrb[0].mxu0
      %v7929 = vpop.f32.mrb[0].mxu0
      %v7930 = vadd.f32 0.0, %v7929
      %v7931 = vpop.f32.mrb[0].mxu0
      %7932 = vmatprep.mubr.bf16.mxu0 0
      %7933 = vmatmul.mubr.bf16.gmra.mrb[0].mxu0 %v7626
      %v7934 = vpop.f32.mrb[0].mxu0
      %v7935 = vadd.f32 0.0, %v7934
      %v7936 = vpop.f32.mrb[0].mxu0
      %v7937 = vpop.f32.mrb[0].mxu0
      %v7938 = vadd.f32 0.0, %v7937
      %v7939 = vpop.f32.mrb[0].mxu0
      %7940 = vmatprep.mubr.bf16.mxu0 0
      %7941 = vmatmul.mubr.bf16.gmra.mrb[0].mxu0 %v7629
      %v7942 = vpop.f32.mrb[0].mxu0
      %v7943 = vadd.f32 0.0, %v7942
      %v7944 = vpop.f32.mrb[0].mxu0
      %v7945 = vpop.f32.mrb[0].mxu0
      %v7946 = vadd.f32 0.0, %v7945
      %v7947 = vpop.f32.mrb[0].mxu0
      %7948 = vmatprep.mubr.bf16.mxu0 0
      %7949 = vmatmul.mubr.bf16.gmra.mrb[0].mxu0 %v7632
      %v7950 = vpop.f32.mrb[0].mxu0
      %v7951 = vadd.f32 0.0, %v7950
      %v7952 = vpop.f32.mrb[0].mxu0
      %v7953 = vpop.f32.mrb[0].mxu0
      %v7954 = vadd.f32 0.0, %v7953
      %v7955 = vpop.f32.mrb[0].mxu0
      %7956 = vmatprep.mubr.bf16.mxu0 0
      %7957 = vmatmul.mubr.bf16.gmra.mrb[0].mxu0 %v7635
      %v7958 = vpop.f32.mrb[0].mxu0
      %v7959 = vadd.f32 0.0, %v7958
      %v7960 = vpop.f32.mrb[0].mxu0
      %v7961 = vpop.f32.mrb[0].mxu0
      %v7962 = vadd.f32 0.0, %v7961
      %v7963 = vpop.f32.mrb[0].mxu0
      %7964 = vmatprep.mubr.bf16.mxu0 0
      %7965 = vmatmul.mubr.bf16.gmra.mrb[0].mxu0 %v7638
      %v7966 = vpop.f32.mrb[0].mxu0
      %v7967 = vadd.f32 0.0, %v7966
      %v7968 = vpop.f32.mrb[0].mxu0
      %v7969 = vpop.f32.mrb[0].mxu0
      %v7970 = vadd.f32 0.0, %v7969
      %v7971 = vpop.f32.mrb[0].mxu0
      %7972 = vmatprep.mubr.bf16.mxu0 0
      %7973 = vmatmul.mubr.bf16.gmra.mrb[0].mxu0 %v7641
      %v7974 = vpop.f32.mrb[0].mxu0
      %v7975 = vadd.f32 0.0, %v7974
      %v7976 = vpop.f32.mrb[0].mxu0
      %v7977 = vpop.f32.mrb[0].mxu0
      %v7978 = vadd.f32 0.0, %v7977
      %v7979 = vpop.f32.mrb[0].mxu0
      %7980 = vmatprep.mubr.bf16.mxu0 0
      %7981 = vmatmul.mubr.bf16.gmra.mrb[0].mxu0 %v7644
      %v7982 = vpop.f32.mrb[0].mxu0
      %v7983 = vadd.f32 0.0, %v7982
      %v7984 = vpop.f32.mrb[0].mxu0
      %v7985 = vpop.f32.mrb[0].mxu0
      %v7986 = vadd.f32 0.0, %v7985
      %v7987 = vpop.f32.mrb[0].mxu0
      %7988 = vmatprep.mubr.bf16.mxu0 0
      %7989 = vmatmul.mubr.bf16.gmra.mrb[0].mxu0 %v7647
      %v7990 = vpop.f32.mrb[0].mxu0
      %v7991 = vadd.f32 0.0, %v7990
      %v7992 = vpop.f32.mrb[0].mxu0
      %v7993 = vpop.f32.mrb[0].mxu0
      %v7994 = vadd.f32 0.0, %v7993
      %v7995 = vpop.f32.mrb[0].mxu0
      %7996 = vmatprep.mubr.bf16.mxu0 0
      %7997 = vmatmul.mubr.bf16.gmra.mrb[0].mxu0 %v7650
      %v7998 = vpop.f32.mrb[0].mxu0
      %v7999 = vadd.f32 0.0, %v7998
      %v8000 = vpop.f32.mrb[0].mxu0
      %v8001 = vpop.f32.mrb[0].mxu0
      %v8002 = vadd.f32 0.0, %v8001
      %v8003 = vpop.f32.mrb[0].mxu0
      %8004 = vmatprep.mubr.bf16.mxu0 0
      %8005 = vmatmul.mubr.bf16.gmra.mrb[0].mxu0 %v7653
      %v8006 = vpop.f32.mrb[0].mxu0
      %v8007 = vadd.f32 0.0, %v8006
      %v8008 = vpop.f32.mrb[0].mxu0
      %v8009 = vpop.f32.mrb[0].mxu0
      %v8010 = vadd.f32 0.0, %v8009
      %v8011 = vpop.f32.mrb[0].mxu0
      %8012 = vmatprep.mubr.bf16.mxu0 0
      %8013 = vmatmul.mubr.bf16.gmra.mrb[0].mxu0 %v7656
      %v8014 = vpop.f32.mrb[0].mxu0
      %v8015 = vadd.f32 0.0, %v8014
      %v8016 = vpop.f32.mrb[0].mxu0
      %v8017 = vpop.f32.mrb[0].mxu0
      %v8018 = vadd.f32 0.0, %v8017
      %v8019 = vpop.f32.mrb[0].mxu0
      %8020 = vmatprep.mubr.bf16.mxu0 0
      %8021 = vmatmul.mubr.bf16.gmra.mrb[0].mxu0 %v7659
      %v8022 = vpop.f32.mrb[0].mxu0
      %v8023 = vadd.f32 0.0, %v8022
      %v8024 = vpop.f32.mrb[0].mxu0
      %v8025 = vpop.f32.mrb[0].mxu0
      %v8026 = vadd.f32 0.0, %v8025
      %v8027 = vpop.f32.mrb[0].mxu0
      %8028 = vmatprep.mubr.bf16.mxu0 0
      %8029 = vmatmul.mubr.bf16.gmra.mrb[0].mxu0 %v7662
      %v8030 = vpop.f32.mrb[0].mxu0
      %v8031 = vadd.f32 0.0, %v8030
      %v8032 = vpop.f32.mrb[0].mxu0
      %v8033 = vpop.f32.mrb[0].mxu0
      %v8034 = vadd.f32 0.0, %v8033
      %v8035 = vpop.f32.mrb[0].mxu0
      %8036 = vmatprep.mubr.bf16.mxu0 0
      %8037 = vmatmul.mubr.bf16.gmra.mrb[0].mxu0 %v7665
      %v8038 = vpop.f32.mrb[0].mxu0
      %v8039 = vadd.f32 0.0, %v8038
      %v8040 = vpop.f32.mrb[0].mxu0
      %v8041 = vpop.f32.mrb[0].mxu0
      %v8042 = vadd.f32 0.0, %v8041
      %v8043 = vpop.f32.mrb[0].mxu0
      %8044 = vmatprep.mubr.bf16.mxu0 0
      %8045 = vmatmul.mubr.bf16.gmra.mrb[0].mxu0 %v7668
      %v8046 = vpop.f32.mrb[0].mxu0
      %v8047 = vadd.f32 0.0, %v8046
      %v8048 = vpop.f32.mrb[0].mxu0
      %v8049 = vpop.f32.mrb[0].mxu0
      %v8050 = vadd.f32 0.0, %v8049
      %v8051 = vpop.f32.mrb[0].mxu0
      %8052 = vmatprep.mubr.bf16.mxu0 0
      %8053 = vmatmul.mubr.bf16.gmra.mrb[0].mxu0 %v7671
      %v8054 = vpop.f32.mrb[0].mxu0
      %v8055 = vadd.f32 0.0, %v8054
      %v8056 = vpop.f32.mrb[0].mxu0
      %v8057 = vpop.f32.mrb[0].mxu0
      %v8058 = vadd.f32 0.0, %v8057
      %v8059 = vpop.f32.mrb[0].mxu0
      %8060 = vmatprep.mubr.bf16.mxu0 0
      %8061 = vmatmul.mubr.bf16.gmra.mrb[0].mxu0 %v7674
      %v8062 = vpop.f32.mrb[0].mxu0
      %v8063 = vadd.f32 0.0, %v8062
      %v8064 = vpop.f32.mrb[0].mxu0
      %v8065 = vpop.f32.mrb[0].mxu0
      %v8066 = vadd.f32 0.0, %v8065
      %v8067 = vpop.f32.mrb[0].mxu0
      %8068 = vmatprep.mubr.bf16.mxu0 0
      %8069 = vmatmul.mubr.bf16.gmra.mrb[0].mxu0 %v7677
      %v8070 = vpop.f32.mrb[0].mxu0
      %v8071 = vadd.f32 0.0, %v8070
      %v8072 = vpop.f32.mrb[0].mxu0
      %v8073 = vpop.f32.mrb[0].mxu0
      %v8074 = vadd.f32 0.0, %v8073
      %v8075 = vpop.f32.mrb[0].mxu0
      %8076 = vmatprep.mubr.bf16.mxu0 0
      %8077 = vmatmul.mubr.bf16.gmra.mrb[0].mxu0 %v7680
      %v8078 = vpop.f32.mrb[0].mxu0
      %v8079 = vadd.f32 0.0, %v8078
      %v8080 = vpop.f32.mrb[0].mxu0
      %v8081 = vpop.f32.mrb[0].mxu0
      %v8082 = vadd.f32 0.0, %v8081
      %v8083 = vpop.f32.mrb[0].mxu0
      %8084 = vmatprep.mubr.bf16.mxu0 0
      %8085 = vmatmul.mubr.bf16.gmra.mrb[0].mxu0 %v7683
      %v8086 = vpop.f32.mrb[0].mxu0
      %v8087 = vadd.f32 0.0, %v8086
      %v8088 = vpop.f32.mrb[0].mxu0
      %v8089 = vpop.f32.mrb[0].mxu0
      %v8090 = vadd.f32 0.0, %v8089
      %v8091 = vpop.f32.mrb[0].mxu0
      %8092 = vmatprep.mubr.bf16.mxu0 0
      %8093 = vmatmul.mubr.bf16.gmra.mrb[0].mxu0 %v7686
      %v8094 = vpop.f32.mrb[0].mxu0
      %v8095 = vadd.f32 0.0, %v8094
      %v8096 = vpop.f32.mrb[0].mxu0
      %v8097 = vpop.f32.mrb[0].mxu0
      %v8098 = vadd.f32 0.0, %v8097
      %v8099 = vpop.f32.mrb[0].mxu0
      %8100 = vmatprep.mubr.bf16.mxu0 0
      %8101 = vmatmul.mubr.bf16.gmra.mrb[0].mxu0 %v7689
      %v8102 = vpop.f32.mrb[0].mxu0
      %v8103 = vadd.f32 0.0, %v8102
      %v8104 = vpop.f32.mrb[0].mxu0
      %v8105 = vpop.f32.mrb[0].mxu0
      %v8106 = vadd.f32 0.0, %v8105
      %v8107 = vpop.f32.mrb[0].mxu0
      %8108 = vmatprep.mubr.bf16.mxu0 0
      %8109 = vmatmul.mubr.bf16.gmra.mrb[0].mxu0 %v7692
      %v8110 = vpop.f32.mrb[0].mxu0
      %v8111 = vadd.f32 0.0, %v8110
      %v8112 = vpop.f32.mrb[0].mxu0
      %v8113 = vpop.f32.mrb[0].mxu0
      %v8114 = vadd.f32 0.0, %v8113
      %v8115 = vpop.f32.mrb[0].mxu0
      %8116 = vmatprep.mubr.bf16.mxu0 0
      %8117 = vmatmul.mubr.bf16.gmra.mrb[0].mxu0 %v7695
      %v8118 = vpop.f32.mrb[0].mxu0
      %v8119 = vadd.f32 0.0, %v8118
      %v8120 = vpop.f32.mrb[0].mxu0
      %v8121 = vpop.f32.mrb[0].mxu0
      %v8122 = vadd.f32 0.0, %v8121
      %v8123 = vpop.f32.mrb[0].mxu0
      %8124 = vmatprep.mubr.bf16.mxu0 0
      %8125 = vmatmul.mubr.bf16.gmra.mrb[0].mxu0 %v7698
      %v8126 = vpop.f32.mrb[0].mxu0
      %v8127 = vadd.f32 0.0, %v8126
      %v8128 = vpop.f32.mrb[0].mxu0
      %v8129 = vpop.f32.mrb[0].mxu0
      %v8130 = vadd.f32 0.0, %v8129
      %v8131 = vpop.f32.mrb[0].mxu0
      %8132 = vmatprep.mubr.bf16.mxu0 0
      %8133 = vmatmul.mubr.bf16.gmra.mrb[0].mxu0 %v7701
      %v8134 = vpop.f32.mrb[0].mxu0
      %v8135 = vadd.f32 0.0, %v8134
      %v8136 = vpop.f32.mrb[0].mxu0
      %v8137 = vpop.f32.mrb[0].mxu0
      %v8138 = vadd.f32 0.0, %v8137
      %v8139 = vpop.f32.mrb[0].mxu0
      %8140 = vmatprep.mubr.bf16.mxu0 0
      %8141 = vmatmul.mubr.bf16.gmra.mrb[0].mxu0 %v7704
      %v8142 = vpop.f32.mrb[0].mxu0
      %v8143 = vadd.f32 0.0, %v8142
      %v8144 = vpop.f32.mrb[0].mxu0
      %v8145 = vpop.f32.mrb[0].mxu0
      %v8146 = vadd.f32 0.0, %v8145
      %v8147 = vpop.f32.mrb[0].mxu0
      %8148 = vmatprep.mubr.bf16.mxu0 0
      %8149 = vmatmul.mubr.bf16.gmra.mrb[0].mxu0 %v7707
      %v8150 = vpop.f32.mrb[0].mxu0
      %v8151 = vadd.f32 0.0, %v8150
      %v8152 = vpop.f32.mrb[0].mxu0
      %v8153 = vpop.f32.mrb[0].mxu0
      %v8154 = vadd.f32 0.0, %v8153
      %v8155 = vpop.f32.mrb[0].mxu0
      %8156 = vmatprep.mubr.bf16.mxu0 0
      %8157 = vmatmul.mubr.bf16.gmra.mrb[0].mxu0 %v7710
      %v8158 = vpop.f32.mrb[0].mxu0
      %v8159 = vadd.f32 0.0, %v8158
      %v8160 = vpop.f32.mrb[0].mxu0
      %v8161 = vpop.f32.mrb[0].mxu0
      %v8162 = vadd.f32 0.0, %v8161
      %v8163 = vpop.f32.mrb[0].mxu0
      %8164 = vmatprep.mubr.bf16.mxu0 0
      %8165 = vmatmul.mubr.bf16.gmra.mrb[0].mxu0 %v7713
      %v8166 = vpop.f32.mrb[0].mxu0
      %v8167 = vadd.f32 0.0, %v8166
      %v8168 = vpop.f32.mrb[0].mxu0
      %v8169 = vpop.f32.mrb[0].mxu0
      %v8170 = vadd.f32 0.0, %v8169
      %v8171 = vpop.f32.mrb[0].mxu0
      %8172 = vmatprep.mubr.bf16.mxu0 0
      %8173 = vmatmul.mubr.bf16.gmra.mrb[0].mxu0 %v7716
      %v8174 = vpop.f32.mrb[0].mxu0
      %v8175 = vadd.f32 0.0, %v8174
      %v8176 = vpop.f32.mrb[0].mxu0
      %v8177 = vpop.f32.mrb[0].mxu0
      %v8178 = vadd.f32 0.0, %v8177
      %v8179 = vpop.f32.mrb[0].mxu0
      %8180 = vmatprep.mubr.bf16.mxu0 0
      %8181 = vmatmul.mubr.bf16.gmra.mrb[0].mxu0 %v7719
      %v8182 = vpop.f32.mrb[0].mxu0
      %v8183 = vadd.f32 0.0, %v8182
      %v8184 = vpop.f32.mrb[0].mxu0
      %v8185 = vpop.f32.mrb[0].mxu0
      %v8186 = vadd.f32 0.0, %v8185
      %v8187 = vpop.f32.mrb[0].mxu0
      %8188 = vmatprep.mubr.bf16.mxu0 0
      %8189 = vmatmul.mubr.bf16.gmra.mrb[0].mxu0 %v7722
      %v8190 = vpop.f32.mrb[0].mxu0
      %v8191 = vadd.f32 0.0, %v8190
      %v8192 = vpop.f32.mrb[0].mxu0
      %v8193 = vpop.f32.mrb[0].mxu0
      %v8194 = vadd.f32 0.0, %v8193
      %v8195 = vpop.f32.mrb[0].mxu0
      %8196 = vmatprep.mubr.bf16.mxu0 0
      %8197 = vmatmul.mubr.bf16.gmra.mrb[0].mxu0 %v7725
      %v8198 = vpop.f32.mrb[0].mxu0
      %v8199 = vadd.f32 0.0, %v8198
      %v8200 = vpop.f32.mrb[0].mxu0
      %v8201 = vpop.f32.mrb[0].mxu0
      %v8202 = vadd.f32 0.0, %v8201
      %v8203 = vpop.f32.mrb[0].mxu0
      %8204 = vmatprep.mubr.bf16.mxu0 0
      %8205 = vmatmul.mubr.bf16.gmra.mrb[0].mxu0 %v7728
      %v8206 = vpop.f32.mrb[0].mxu0
      %v8207 = vadd.f32 0.0, %v8206
      %v8208 = vpop.f32.mrb[0].mxu0
      %v8209 = vpop.f32.mrb[0].mxu0
      %v8210 = vadd.f32 0.0, %v8209
      %v8211 = vpop.f32.mrb[0].mxu0
      %8212 = vmatprep.mubr.bf16.mxu0 0
      %8213 = vmatmul.mubr.bf16.gmra.mrb[0].mxu0 %v7731
      %v8214 = vpop.f32.mrb[0].mxu0
      %v8215 = vadd.f32 0.0, %v8214
      %v8216 = vpop.f32.mrb[0].mxu0
      %v8217 = vpop.f32.mrb[0].mxu0
      %v8218 = vadd.f32 0.0, %v8217
      %v8219 = vpop.f32.mrb[0].mxu0
      %8220 = vmatprep.mubr.bf16.mxu0 0
      %8221 = vmatmul.mubr.bf16.gmra.mrb[0].mxu0 %v7734
      %v8222 = vpop.f32.mrb[0].mxu0
      %v8223 = vadd.f32 0.0, %v8222
      %v8224 = vpop.f32.mrb[0].mxu0
      %v8225 = vpop.f32.mrb[0].mxu0
      %v8226 = vadd.f32 0.0, %v8225
      %v8227 = vpop.f32.mrb[0].mxu0
      %8228 = vmatprep.mubr.bf16.mxu0 0
      %8229 = vmatmul.mubr.bf16.gmra.mrb[0].mxu0 %v7737
      %v8230 = vpop.f32.mrb[0].mxu0
      %v8231 = vadd.f32 0.0, %v8230
      %v8232 = vpop.f32.mrb[0].mxu0
      %v8233 = vpop.f32.mrb[0].mxu0
      %v8234 = vadd.f32 0.0, %v8233
      %v8235 = vpop.f32.mrb[0].mxu0
      %8236 = vmatprep.mubr.bf16.mxu0 0
      %8237 = vmatmul.mubr.bf16.gmra.mrb[0].mxu0 %v7740
      %v8238 = vpop.f32.mrb[0].mxu0
      %v8239 = vadd.f32 0.0, %v8238
      %v8240 = vpop.f32.mrb[0].mxu0
      %v8241 = vpop.f32.mrb[0].mxu0
      %v8242 = vadd.f32 0.0, %v8241
      %v8243 = vpop.f32.mrb[0].mxu0
      %8244 = vmatprep.mubr.bf16.mxu0 0
      %8245 = vmatmul.mubr.bf16.gmra.mrb[0].mxu0 %v7743
      %v8246 = vpop.f32.mrb[0].mxu0
      %v8247 = vadd.f32 0.0, %v8246
      %v8248 = vpop.f32.mrb[0].mxu0
      %v8249 = vpop.f32.mrb[0].mxu0
      %v8250 = vadd.f32 0.0, %v8249
      %v8251 = vpop.f32.mrb[0].mxu0
      %8252 = vmatprep.mubr.bf16.mxu0 0
      %8253 = vmatmul.mubr.bf16.gmra.mrb[0].mxu0 %v7746
      %v8254 = vpop.f32.mrb[0].mxu0
      %v8255 = vadd.f32 0.0, %v8254
      %v8256 = vpop.f32.mrb[0].mxu0
      %v8257 = vpop.f32.mrb[0].mxu0
      %v8258 = vadd.f32 0.0, %v8257
      %v8259 = vpop.f32.mrb[0].mxu0
      %8260 = vmatprep.mubr.bf16.mxu0 0
      %8261 = vmatmul.mubr.bf16.gmra.mrb[0].mxu0 %v7749
      %v8262 = vpop.f32.mrb[0].mxu0
      %v8263 = vadd.f32 0.0, %v8262
      %v8264 = vpop.f32.mrb[0].mxu0
      %v8265 = vpop.f32.mrb[0].mxu0
      %v8266 = vadd.f32 0.0, %v8265
      %v8267 = vpop.f32.mrb[0].mxu0
      %8268 = vmatprep.mubr.bf16.mxu0 0
      %8269 = vmatmul.mubr.bf16.gmra.mrb[0].mxu0 %v7752
      %v8270 = vpop.f32.mrb[0].mxu0
      %v8271 = vadd.f32 0.0, %v8270
      %v8272 = vpop.f32.mrb[0].mxu0
      %v8273 = vpop.f32.mrb[0].mxu0
      %v8274 = vadd.f32 0.0, %v8273
      %v8275 = vpop.f32.mrb[0].mxu0
      %8276 = vmatprep.mubr.bf16.mxu0 0
      %8277 = vmatmul.mubr.bf16.gmra.mrb[0].mxu0 %v7755
      %v8278 = vpop.f32.mrb[0].mxu0
      %v8279 = vadd.f32 0.0, %v8278
      %v8280 = vpop.f32.mrb[0].mxu0
      %v8281 = vpop.f32.mrb[0].mxu0
      %v8282 = vadd.f32 0.0, %v8281
      %v8283 = vpop.f32.mrb[0].mxu0
      %8284 = vmatprep.mubr.bf16.mxu0 0
      %8285 = vmatmul.mubr.bf16.gmra.mrb[0].mxu0 %v7758
      %v8286 = vpop.f32.mrb[0].mxu0
      %v8287 = vadd.f32 0.0, %v8286
      %v8288 = vpop.f32.mrb[0].mxu0
      %v8289 = vpop.f32.mrb[0].mxu0
      %v8290 = vadd.f32 0.0, %v8289
      %v8291 = vpop.f32.mrb[0].mxu0
      %8292 = vmatprep.mubr.bf16.mxu0 0
      %8293 = vmatmul.mubr.bf16.gmra.mrb[0].mxu0 %v7761
      %v8294 = vpop.f32.mrb[0].mxu0
      %v8295 = vadd.f32 0.0, %v8294
      %v8296 = vpop.f32.mrb[0].mxu0
      %v8297 = vpop.f32.mrb[0].mxu0
      %v8298 = vadd.f32 0.0, %v8297
      %v8299 = vpop.f32.mrb[0].mxu0
      %8300 = vmatprep.mubr.bf16.mxu0 0
      %8301 = vmatmul.mubr.bf16.gmra.mrb[0].mxu0 %v7764
      %v8302 = vpop.f32.mrb[0].mxu0
      %v8303 = vadd.f32 0.0, %v8302
      %v8304 = vpop.f32.mrb[0].mxu0
      %v8305 = vpop.f32.mrb[0].mxu0
      %v8306 = vadd.f32 0.0, %v8305
      %v8307 = vpop.f32.mrb[0].mxu0
      %8308 = vmatprep.mubr.bf16.mxu0 0
      %8309 = vmatmul.mubr.bf16.gmra.mrb[0].mxu0 %v7767
      %v8310 = vpop.f32.mrb[0].mxu0
      %v8311 = vadd.f32 0.0, %v8310
      %v8312 = vpop.f32.mrb[0].mxu0
      %v8313 = vpop.f32.mrb[0].mxu0
      %v8314 = vadd.f32 0.0, %v8313
      %v8315 = vpop.f32.mrb[0].mxu0
      %8316 = vdwg.mxu0
      %v8317 = vadd.f32 %v7255, %v7807
      %v8318 = vadd.f32 %v7256, %v7810
      %v8319 = vadd.f32 %v7257, %v7815
      %v8320 = vadd.f32 %v7258, %v7818
      %v8321 = vadd.f32 %v7259, %v7823
      %v8322 = vadd.f32 %v7260, %v7826
      %v8323 = vadd.f32 %v7261, %v7831
      %v8324 = vadd.f32 %v7262, %v7834
      %v8325 = vadd.f32 %v7263, %v7839
      %v8326 = vadd.f32 %v7264, %v7842
      %v8327 = vadd.f32 %v7265, %v7847
      %v8328 = vadd.f32 %v7266, %v7850
      %v8329 = vadd.f32 %v7267, %v7855
      %v8330 = vadd.f32 %v7268, %v7858
      %v8331 = vadd.f32 %v7269, %v7863
      %v8332 = vadd.f32 %v7270, %v7866
      %v8333 = vadd.f32 %v7271, %v7871
      %v8334 = vadd.f32 %v7272, %v7874
      %v8335 = vadd.f32 %v7273, %v7879
      %v8336 = vadd.f32 %v7274, %v7882
      %v8337 = vadd.f32 %v7275, %v7887
      %v8338 = vadd.f32 %v7276, %v7890
      %v8339 = vadd.f32 %v7277, %v7895
      %v8340 = vadd.f32 %v7278, %v7898
      %v8341 = vadd.f32 %v7279, %v7903
      %v8342 = vadd.f32 %v7280, %v7906
      %v8343 = vadd.f32 %v7281, %v7911
      %v8344 = vadd.f32 %v7282, %v7914
      %v8345 = vadd.f32 %v7283, %v7919
      %v8346 = vadd.f32 %v7284, %v7922
      %v8347 = vadd.f32 %v7285, %v7927
      %v8348 = vadd.f32 %v7286, %v7930
      %v8349 = vadd.f32 %v7287, %v7935
      %v8350 = vadd.f32 %v7288, %v7938
      %v8351 = vadd.f32 %v7289, %v7943
      %v8352 = vadd.f32 %v7290, %v7946
      %v8353 = vadd.f32 %v7291, %v7951
      %v8354 = vadd.f32 %v7292, %v7954
      %v8355 = vadd.f32 %v7293, %v7959
      %v8356 = vadd.f32 %v7294, %v7962
      %v8357 = vadd.f32 %v7295, %v7967
      %v8358 = vadd.f32 %v7296, %v7970
      %v8359 = vadd.f32 %v7297, %v7975
      %v8360 = vadd.f32 %v7298, %v7978
      %v8361 = vadd.f32 %v7299, %v7983
      %v8362 = vadd.f32 %v7300, %v7986
      %v8363 = vadd.f32 %v7301, %v7991
      %v8364 = vadd.f32 %v7302, %v7994
      %v8365 = vadd.f32 %v7303, %v7999
      %v8366 = vadd.f32 %v7304, %v8002
      %v8367 = vadd.f32 %v7305, %v8007
      %v8368 = vadd.f32 %v7306, %v8010
      %v8369 = vadd.f32 %v7307, %v8015
      %v8370 = vadd.f32 %v7308, %v8018
      %v8371 = vadd.f32 %v7309, %v8023
      %v8372 = vadd.f32 %v7310, %v8026
      %v8373 = vadd.f32 %v7311, %v8031
      %v8374 = vadd.f32 %v7312, %v8034
      %v8375 = vadd.f32 %v7313, %v8039
      %v8376 = vadd.f32 %v7314, %v8042
      %v8377 = vadd.f32 %v7315, %v8047
      %v8378 = vadd.f32 %v7316, %v8050
      %v8379 = vadd.f32 %v7317, %v8055
      %v8380 = vadd.f32 %v7318, %v8058
      %v8381 = vadd.f32 %v7319, %v8063
      %v8382 = vadd.f32 %v7320, %v8066
      %v8383 = vadd.f32 %v7321, %v8071
      %v8384 = vadd.f32 %v7322, %v8074
      %v8385 = vadd.f32 %v7323, %v8079
      %v8386 = vadd.f32 %v7324, %v8082
      %v8387 = vadd.f32 %v7325, %v8087
      %v8388 = vadd.f32 %v7326, %v8090
      %v8389 = vadd.f32 %v7327, %v8095
      %v8390 = vadd.f32 %v7328, %v8098
      %v8391 = vadd.f32 %v7329, %v8103
      %v8392 = vadd.f32 %v7330, %v8106
      %v8393 = vadd.f32 %v7331, %v8111
      %v8394 = vadd.f32 %v7332, %v8114
      %v8395 = vadd.f32 %v7333, %v8119
      %v8396 = vadd.f32 %v7334, %v8122
      %v8397 = vadd.f32 %v7335, %v8127
      %v8398 = vadd.f32 %v7336, %v8130
      %v8399 = vadd.f32 %v7337, %v8135
      %v8400 = vadd.f32 %v7338, %v8138
      %v8401 = vadd.f32 %v7339, %v8143
      %v8402 = vadd.f32 %v7340, %v8146
      %v8403 = vadd.f32 %v7341, %v8151
      %v8404 = vadd.f32 %v7342, %v8154
      %v8405 = vadd.f32 %v7343, %v8159
      %v8406 = vadd.f32 %v7344, %v8162
      %v8407 = vadd.f32 %v7345, %v8167
      %v8408 = vadd.f32 %v7346, %v8170
      %v8409 = vadd.f32 %v7347, %v8175
      %v8410 = vadd.f32 %v7348, %v8178
      %v8411 = vadd.f32 %v7349, %v8183
      %v8412 = vadd.f32 %v7350, %v8186
      %v8413 = vadd.f32 %v7351, %v8191
      %v8414 = vadd.f32 %v7352, %v8194
      %v8415 = vadd.f32 %v7353, %v8199
      %v8416 = vadd.f32 %v7354, %v8202
      %v8417 = vadd.f32 %v7355, %v8207
      %v8418 = vadd.f32 %v7356, %v8210
      %v8419 = vadd.f32 %v7357, %v8215
      %v8420 = vadd.f32 %v7358, %v8218
      %v8421 = vadd.f32 %v7359, %v8223
      %v8422 = vadd.f32 %v7360, %v8226
      %v8423 = vadd.f32 %v7361, %v8231
      %v8424 = vadd.f32 %v7362, %v8234
      %v8425 = vadd.f32 %v7363, %v8239
      %v8426 = vadd.f32 %v7364, %v8242
      %v8427 = vadd.f32 %v7365, %v8247
      %v8428 = vadd.f32 %v7366, %v8250
      %v8429 = vadd.f32 %v7367, %v8255
      %v8430 = vadd.f32 %v7368, %v8258
      %v8431 = vadd.f32 %v7369, %v8263
      %v8432 = vadd.f32 %v7370, %v8266
      %v8433 = vadd.f32 %v7371, %v8271
      %v8434 = vadd.f32 %v7372, %v8274
      %v8435 = vadd.f32 %v7373, %v8279
      %v8436 = vadd.f32 %v7374, %v8282
      %v8437 = vadd.f32 %v7375, %v8287
      %v8438 = vadd.f32 %v7376, %v8290
      %v8439 = vadd.f32 %v7377, %v8295
      %v8440 = vadd.f32 %v7378, %v8298
      %v8441 = vadd.f32 %v7379, %v8303
      %v8442 = vadd.f32 %v7380, %v8306
      %v8443 = vadd.f32 %v7381, %v8311
      %v8444 = vadd.f32 %v7382, %v8314
      %v8445 = vld [vmem:[%s6320 + $0x2] sm:$0xff]
      %v8446 = vld [vmem:[%s6320 + $0xa] sm:$0xff]
      %v8447 = vld [vmem:[%s6320 + $0x12] sm:$0xff]
      %v8448 = vld [vmem:[%s6320 + $0x1a] sm:$0xff]
      %v8449 = vld [vmem:[%s6320 + $0x2a] sm:$0xff]
      %v8450 = vld [vmem:[%s6320 + $0x32] sm:$0xff]
      %v8451 = vld [vmem:[%s6320 + $0x3a] sm:$0xff]
      %v8452 = vld [vmem:[%s6320 + $0x42] sm:$0xff]
      %v8453 = vld [vmem:[%s6320 + $0x52] sm:$0xff]
      %v8454 = vld [vmem:[%s6320 + $0x5a] sm:$0xff]
      %v8455 = vld [vmem:[%s6320 + $0x62] sm:$0xff]
      %v8456 = vld [vmem:[%s6320 + $0x6a] sm:$0xff]
      %v8457 = vld [vmem:[%s6320 + $0x7a] sm:$0xff]
      %v8458 = vld [vmem:[%s6320 + $0x82] sm:$0xff]
      %v8459 = vld [vmem:[%s6320 + $0x8a] sm:$0xff]
      %v8460 = vld [vmem:[%s6320 + $0x92] sm:$0xff]
      %v8461 = vld [vmem:[%s6320 + $0xa2] sm:$0xff]
      %v8462 = vld [vmem:[%s6320 + $0xaa] sm:$0xff]
      %v8463 = vld [vmem:[%s6320 + $0xb2] sm:$0xff]
      %v8464 = vld [vmem:[%s6320 + $0xba] sm:$0xff]
      %v8465 = vld [vmem:[%s6320 + $0xca] sm:$0xff]
      %v8466 = vld [vmem:[%s6320 + $0xd2] sm:$0xff]
      %v8467 = vld [vmem:[%s6320 + $0xda] sm:$0xff]
      %v8468 = vld [vmem:[%s6320 + $0xe2] sm:$0xff]
      %v8469 = vld [vmem:[%s6320 + $0xf2] sm:$0xff]
      %v8470 = vld [vmem:[%s6320 + $0xfa] sm:$0xff]
      %v8471 = vld [vmem:[%s6320 + $0x102] sm:$0xff]
      %v8472 = vld [vmem:[%s6320 + $0x10a] sm:$0xff]
      %v8473 = vld [vmem:[%s6320 + $0x11a] sm:$0xff]
      %v8474 = vld [vmem:[%s6320 + $0x122] sm:$0xff]
      %v8475 = vld [vmem:[%s6320 + $0x12a] sm:$0xff]
      %v8476 = vld [vmem:[%s6320 + $0x132] sm:$0xff]
      %v8477 = vld [vmem:[%s6320 + $0x142] sm:$0xff]
      %v8478 = vld [vmem:[%s6320 + $0x14a] sm:$0xff]
      %v8479 = vld [vmem:[%s6320 + $0x152] sm:$0xff]
      %v8480 = vld [vmem:[%s6320 + $0x15a] sm:$0xff]
      %v8481 = vld [vmem:[%s6320 + $0x16a] sm:$0xff]
      %v8482 = vld [vmem:[%s6320 + $0x172] sm:$0xff]
      %v8483 = vld [vmem:[%s6320 + $0x17a] sm:$0xff]
      %v8484 = vld [vmem:[%s6320 + $0x182] sm:$0xff]
      %v8485 = vld [vmem:[%s6320 + $0x192] sm:$0xff]
      %v8486 = vld [vmem:[%s6320 + $0x19a] sm:$0xff]
      %v8487 = vld [vmem:[%s6320 + $0x1a2] sm:$0xff]
      %v8488 = vld [vmem:[%s6320 + $0x1aa] sm:$0xff]
      %v8489 = vld [vmem:[%s6320 + $0x1ba] sm:$0xff]
      %v8490 = vld [vmem:[%s6320 + $0x1c2] sm:$0xff]
      %v8491 = vld [vmem:[%s6320 + $0x1ca] sm:$0xff]
      %v8492 = vld [vmem:[%s6320 + $0x1d2] sm:$0xff]
      %v8493 = vld [vmem:[%s6320 + $0x1e2] sm:$0xff]
      %v8494 = vld [vmem:[%s6320 + $0x1ea] sm:$0xff]
      %v8495 = vld [vmem:[%s6320 + $0x1f2] sm:$0xff]
      %v8496 = vld [vmem:[%s6320 + $0x1fa] sm:$0xff]
      %v8497 = vld [vmem:[%s6320 + $0x20a] sm:$0xff]
      %v8498 = vld [vmem:[%s6320 + $0x212] sm:$0xff]
      %v8499 = vld [vmem:[%s6320 + $0x21a] sm:$0xff]
      %v8500 = vld [vmem:[%s6320 + $0x222] sm:$0xff]
      %v8501 = vld [vmem:[%s6320 + $0x232] sm:$0xff]
      %v8502 = vld [vmem:[%s6320 + $0x23a] sm:$0xff]
      %v8503 = vld [vmem:[%s6320 + $0x242] sm:$0xff]
      %v8504 = vld [vmem:[%s6320 + $0x24a] sm:$0xff]
      %v8505 = vld [vmem:[%s6320 + $0x25a] sm:$0xff]
      %v8506 = vld [vmem:[%s6320 + $0x262] sm:$0xff]
      %v8507 = vld [vmem:[%s6320 + $0x26a] sm:$0xff]
      %v8508 = vld [vmem:[%s6320 + $0x272] sm:$0xff]
      %v8509 = vld [vmem:[%s6320 + $0x282] sm:$0xff]
      %v8510 = vld [vmem:[%s6320 + $0x28a] sm:$0xff]
      %v8511 = vld [vmem:[%s6320 + $0x292] sm:$0xff]
      %v8512 = vld [vmem:[%s6320 + $0x29a] sm:$0xff]
      %v8513 = vld [vmem:[%s6320 + $0x2aa] sm:$0xff]
      %v8514 = vld [vmem:[%s6320 + $0x2b2] sm:$0xff]
      %v8515 = vld [vmem:[%s6320 + $0x2ba] sm:$0xff]
      %v8516 = vld [vmem:[%s6320 + $0x2c2] sm:$0xff]
      %v8517 = vld [vmem:[%s6320 + $0x2d2] sm:$0xff]
      %v8518 = vld [vmem:[%s6320 + $0x2da] sm:$0xff]
      %v8519 = vld [vmem:[%s6320 + $0x2e2] sm:$0xff]
      %v8520 = vld [vmem:[%s6320 + $0x2ea] sm:$0xff]
      %v8521 = vld [vmem:[%s6320 + $0x2fa] sm:$0xff]
      %v8522 = vld [vmem:[%s6320 + $0x302] sm:$0xff]
      %v8523 = vld [vmem:[%s6320 + $0x30a] sm:$0xff]
      %v8524 = vld [vmem:[%s6320 + $0x312] sm:$0xff]
      %v8525 = vld [vmem:[%s6320 + $0x322] sm:$0xff]
      %v8526 = vld [vmem:[%s6320 + $0x32a] sm:$0xff]
      %v8527 = vld [vmem:[%s6320 + $0x332] sm:$0xff]
      %v8528 = vld [vmem:[%s6320 + $0x33a] sm:$0xff]
      %v8529 = vld [vmem:[%s6320 + $0x34a] sm:$0xff]
      %v8530 = vld [vmem:[%s6320 + $0x352] sm:$0xff]
      %v8531 = vld [vmem:[%s6320 + $0x35a] sm:$0xff]
      %v8532 = vld [vmem:[%s6320 + $0x362] sm:$0xff]
      %v8533 = vld [vmem:[%s6320 + $0x372] sm:$0xff]
      %v8534 = vld [vmem:[%s6320 + $0x37a] sm:$0xff]
      %v8535 = vld [vmem:[%s6320 + $0x382] sm:$0xff]
      %v8536 = vld [vmem:[%s6320 + $0x38a] sm:$0xff]
      %v8537 = vld [vmem:[%s6320 + $0x39a] sm:$0xff]
      %v8538 = vld [vmem:[%s6320 + $0x3a2] sm:$0xff]
      %v8539 = vld [vmem:[%s6320 + $0x3aa] sm:$0xff]
      %v8540 = vld [vmem:[%s6320 + $0x3b2] sm:$0xff]
      %v8541 = vld [vmem:[%s6320 + $0x3c2] sm:$0xff]
      %v8542 = vld [vmem:[%s6320 + $0x3ca] sm:$0xff]
      %v8543 = vld [vmem:[%s6320 + $0x3d2] sm:$0xff]
      %v8544 = vld [vmem:[%s6320 + $0x3da] sm:$0xff]
      %v8545 = vld [vmem:[%s6320 + $0x3ea] sm:$0xff]
      %v8546 = vld [vmem:[%s6320 + $0x3f2] sm:$0xff]
      %v8547 = vld [vmem:[%s6320 + $0x3fa] sm:$0xff]
      %v8548 = vld [vmem:[%s6320 + $0x402] sm:$0xff]
      %v8549 = vld [vmem:[%s6320 + $0x412] sm:$0xff]
      %v8550 = vld [vmem:[%s6320 + $0x41a] sm:$0xff]
      %v8551 = vld [vmem:[%s6320 + $0x422] sm:$0xff]
      %v8552 = vld [vmem:[%s6320 + $0x42a] sm:$0xff]
      %v8553 = vld [vmem:[%s6320 + $0x43a] sm:$0xff]
      %v8554 = vld [vmem:[%s6320 + $0x442] sm:$0xff]
      %v8555 = vld [vmem:[%s6320 + $0x44a] sm:$0xff]
      %v8556 = vld [vmem:[%s6320 + $0x452] sm:$0xff]
      %v8557 = vld [vmem:[%s6320 + $0x462] sm:$0xff]
      %v8558 = vld [vmem:[%s6320 + $0x46a] sm:$0xff]
      %v8559 = vld [vmem:[%s6320 + $0x472] sm:$0xff]
      %v8560 = vld [vmem:[%s6320 + $0x47a] sm:$0xff]
      %v8561 = vld [vmem:[%s6320 + $0x48a] sm:$0xff]
      %v8562 = vld [vmem:[%s6320 + $0x492] sm:$0xff]
      %v8563 = vld [vmem:[%s6320 + $0x49a] sm:$0xff]
      %v8564 = vld [vmem:[%s6320 + $0x4a2] sm:$0xff]
      %v8565 = vld [vmem:[%s6320 + $0x4b2] sm:$0xff]
      %v8566 = vld [vmem:[%s6320 + $0x4ba] sm:$0xff]
      %v8567 = vld [vmem:[%s6320 + $0x4c2] sm:$0xff]
      %v8568 = vld [vmem:[%s6320 + $0x4ca] sm:$0xff]
      %v8569 = vld [vmem:[%s6320 + $0x4da] sm:$0xff]
      %v8570 = vld [vmem:[%s6320 + $0x4e2] sm:$0xff]
      %v8571 = vld [vmem:[%s6320 + $0x4ea] sm:$0xff]
      %v8572 = vld [vmem:[%s6320 + $0x4f2] sm:$0xff]
      %v8573 = vpack.c.bf16 %v8446, %v8445
      %v8574 = vpack.c.bf16 %v8448, %v8447
      %v8575 = vpack.c.bf16 %v8450, %v8449
      %v8576 = vpack.c.bf16 %v8452, %v8451
      %v8577 = vpack.c.bf16 %v8454, %v8453
      %v8578 = vpack.c.bf16 %v8456, %v8455
      %v8579 = vpack.c.bf16 %v8458, %v8457
      %v8580 = vpack.c.bf16 %v8460, %v8459
      %v8581 = vpack.c.bf16 %v8462, %v8461
      %v8582 = vpack.c.bf16 %v8464, %v8463
      %v8583 = vpack.c.bf16 %v8466, %v8465
      %v8584 = vpack.c.bf16 %v8468, %v8467
      %v8585 = vpack.c.bf16 %v8470, %v8469
      %v8586 = vpack.c.bf16 %v8472, %v8471
      %v8587 = vpack.c.bf16 %v8474, %v8473
      %v8588 = vpack.c.bf16 %v8476, %v8475
      %v8589 = vpack.c.bf16 %v8478, %v8477
      %v8590 = vpack.c.bf16 %v8480, %v8479
      %v8591 = vpack.c.bf16 %v8482, %v8481
      %v8592 = vpack.c.bf16 %v8484, %v8483
      %v8593 = vpack.c.bf16 %v8486, %v8485
      %v8594 = vpack.c.bf16 %v8488, %v8487
      %v8595 = vpack.c.bf16 %v8490, %v8489
      %v8596 = vpack.c.bf16 %v8492, %v8491
      %v8597 = vpack.c.bf16 %v8494, %v8493
      %v8598 = vpack.c.bf16 %v8496, %v8495
      %v8599 = vpack.c.bf16 %v8498, %v8497
      %v8600 = vpack.c.bf16 %v8500, %v8499
      %v8601 = vpack.c.bf16 %v8502, %v8501
      %v8602 = vpack.c.bf16 %v8504, %v8503
      %v8603 = vpack.c.bf16 %v8506, %v8505
      %v8604 = vpack.c.bf16 %v8508, %v8507
      %v8605 = vpack.c.bf16 %v8510, %v8509
      %v8606 = vpack.c.bf16 %v8512, %v8511
      %v8607 = vpack.c.bf16 %v8514, %v8513
      %v8608 = vpack.c.bf16 %v8516, %v8515
      %v8609 = vpack.c.bf16 %v8518, %v8517
      %v8610 = vpack.c.bf16 %v8520, %v8519
      %v8611 = vpack.c.bf16 %v8522, %v8521
      %v8612 = vpack.c.bf16 %v8524, %v8523
      %v8613 = vpack.c.bf16 %v8526, %v8525
      %v8614 = vpack.c.bf16 %v8528, %v8527
      %v8615 = vpack.c.bf16 %v8530, %v8529
      %v8616 = vpack.c.bf16 %v8532, %v8531
      %v8617 = vpack.c.bf16 %v8534, %v8533
      %v8618 = vpack.c.bf16 %v8536, %v8535
      %v8619 = vpack.c.bf16 %v8538, %v8537
      %v8620 = vpack.c.bf16 %v8540, %v8539
      %v8621 = vpack.c.bf16 %v8542, %v8541
      %v8622 = vpack.c.bf16 %v8544, %v8543
      %v8623 = vpack.c.bf16 %v8546, %v8545
      %v8624 = vpack.c.bf16 %v8548, %v8547
      %v8625 = vpack.c.bf16 %v8550, %v8549
      %v8626 = vpack.c.bf16 %v8552, %v8551
      %v8627 = vpack.c.bf16 %v8554, %v8553
      %v8628 = vpack.c.bf16 %v8556, %v8555
      %v8629 = vpack.c.bf16 %v8558, %v8557
      %v8630 = vpack.c.bf16 %v8560, %v8559
      %v8631 = vpack.c.bf16 %v8562, %v8561
      %v8632 = vpack.c.bf16 %v8564, %v8563
      %v8633 = vpack.c.bf16 %v8566, %v8565
      %v8634 = vpack.c.bf16 %v8568, %v8567
      %v8635 = vpack.c.bf16 %v8570, %v8569
      %v8636 = vpack.c.bf16 %v8572, %v8571
      %s8637 = scalar_lea.vmem %s1, 16
      %v8638 = vld [vmem:[%s8637] sm:$0x3]
      %v8640 = vsel %vm586, %v8573, 0
      %v8643 = vsel %vm586, %v8574, 0
      %v8646 = vsel %vm586, %v8575, 0
      %v8649 = vsel %vm586, %v8576, 0
      %v8652 = vsel %vm586, %v8577, 0
      %v8655 = vsel %vm586, %v8578, 0
      %v8658 = vsel %vm586, %v8579, 0
      %v8661 = vsel %vm586, %v8580, 0
      %v8664 = vsel %vm586, %v8581, 0
      %v8667 = vsel %vm586, %v8582, 0
      %v8670 = vsel %vm586, %v8583, 0
      %v8673 = vsel %vm586, %v8584, 0
      %v8676 = vsel %vm586, %v8585, 0
      %v8679 = vsel %vm586, %v8586, 0
      %v8682 = vsel %vm586, %v8587, 0
      %v8685 = vsel %vm586, %v8588, 0
      %v8688 = vsel %vm586, %v8589, 0
      %v8691 = vsel %vm586, %v8590, 0
      %v8694 = vsel %vm586, %v8591, 0
      %v8697 = vsel %vm586, %v8592, 0
      %v8700 = vsel %vm586, %v8593, 0
      %v8703 = vsel %vm586, %v8594, 0
      %v8706 = vsel %vm586, %v8595, 0
      %v8709 = vsel %vm586, %v8596, 0
      %v8712 = vsel %vm586, %v8597, 0
      %v8715 = vsel %vm586, %v8598, 0
      %v8718 = vsel %vm586, %v8599, 0
      %v8721 = vsel %vm586, %v8600, 0
      %v8724 = vsel %vm586, %v8601, 0
      %v8727 = vsel %vm586, %v8602, 0
      %v8730 = vsel %vm586, %v8603, 0
      %v8733 = vsel %vm586, %v8604, 0
      %v8736 = vsel %vm586, %v8605, 0
      %v8739 = vsel %vm586, %v8606, 0
      %v8742 = vsel %vm586, %v8607, 0
      %v8745 = vsel %vm586, %v8608, 0
      %v8748 = vsel %vm586, %v8609, 0
      %v8751 = vsel %vm586, %v8610, 0
      %v8754 = vsel %vm586, %v8611, 0
      %v8757 = vsel %vm586, %v8612, 0
      %v8760 = vsel %vm586, %v8613, 0
      %v8763 = vsel %vm586, %v8614, 0
      %v8766 = vsel %vm586, %v8615, 0
      %v8769 = vsel %vm586, %v8616, 0
      %v8772 = vsel %vm586, %v8617, 0
      %v8775 = vsel %vm586, %v8618, 0
      %v8778 = vsel %vm586, %v8619, 0
      %v8781 = vsel %vm586, %v8620, 0
      %v8784 = vsel %vm586, %v8621, 0
      %v8787 = vsel %vm586, %v8622, 0
      %v8790 = vsel %vm586, %v8623, 0
      %v8793 = vsel %vm586, %v8624, 0
      %v8796 = vsel %vm586, %v8625, 0
      %v8799 = vsel %vm586, %v8626, 0
      %v8802 = vsel %vm586, %v8627, 0
      %v8805 = vsel %vm586, %v8628, 0
      %v8808 = vsel %vm586, %v8629, 0
      %v8811 = vsel %vm586, %v8630, 0
      %v8814 = vsel %vm586, %v8631, 0
      %v8817 = vsel %vm586, %v8632, 0
      %v8820 = vsel %vm586, %v8633, 0
      %v8823 = vsel %vm586, %v8634, 0
      %v8826 = vsel %vm586, %v8635, 0
      %v8829 = vsel %vm586, %v8636, 0
      %v8832 = vand.u32 %v8638, %v782
      %8834 = vmatprep.subr.bf16.mxu0 0
      %8835 = vmatpush1.bf16.msra.mxu0 %v8832
      %8836 = vmatprep.subr.bf16.mxu0 0
      %8837 = vmatpush1.bf16.msra.mxu0 0
      %8838 = vmatprep.subr.bf16.mxu0 0
      %8839 = vmatpush1.bf16.msra.mxu0 0
      %8840 = vmatprep.subr.bf16.mxu0 0
      %8841 = vmatpush1.bf16.msra.mxu0 0
      %8842 = vmatprep.subr.bf16.mxu0 0
      %8843 = vmatpush1.bf16.msra.mxu0 0
      %8844 = vmatprep.subr.bf16.mxu0 0
      %8845 = vmatpush1.bf16.msra.mxu0 0
      %8846 = vmatprep.subr.bf16.mxu0 0
      %8847 = vmatpush1.bf16.msra.mxu0 0
      %8848 = vmatprep.subr.bf16.mxu0 0
      %8849 = vmatpush1.bf16.msra.mxu0 0
      %8850 = vmatprep.subr.bf16.mxu0 0
      %8851 = vmatpush1.bf16.msra.mxu0 0
      %8852 = vmatprep.subr.bf16.mxu0 0
      %8853 = vmatpush1.bf16.msra.mxu0 0
      %8854 = vmatprep.subr.bf16.mxu0 0
      %8855 = vmatpush1.bf16.msra.mxu0 0
      %8856 = vmatprep.subr.bf16.mxu0 0
      %8857 = vmatpush1.bf16.msra.mxu0 0
      %8858 = vmatprep.subr.bf16.mxu0 0
      %8859 = vmatpush1.bf16.msra.mxu0 0
      %8860 = vmatprep.subr.bf16.mxu0 0
      %8861 = vmatpush1.bf16.msra.mxu0 0
      %8862 = vmatprep.subr.bf16.mxu0 0
      %8863 = vmatpush1.bf16.msra.mxu0 0
      %8864 = vmatprep.subr.bf16.mxu0 0
      %8865 = vmatpush1.bf16.msra.mxu0 0
      %8866 = vmatprep.mubr.bf16.mxu0 0
      %8867 = vmatmul.mubr.bf16.gmra.mrb[0].mxu0 %v8640
      %v8868 = vpop.f32.mrb[0].mxu0
      %v8869 = vadd.f32 0.0, %v8868
      %v8870 = vpop.f32.mrb[0].mxu0
      %v8871 = vpop.f32.mrb[0].mxu0
      %v8872 = vadd.f32 0.0, %v8871
      %v8873 = vpop.f32.mrb[0].mxu0
      %8874 = vmatprep.mubr.bf16.mxu0 0
      %8875 = vmatmul.mubr.bf16.gmra.mrb[0].mxu0 %v8643
      %v8876 = vpop.f32.mrb[0].mxu0
      %v8877 = vadd.f32 0.0, %v8876
      %v8878 = vpop.f32.mrb[0].mxu0
      %v8879 = vpop.f32.mrb[0].mxu0
      %v8880 = vadd.f32 0.0, %v8879
      %v8881 = vpop.f32.mrb[0].mxu0
      %8882 = vmatprep.mubr.bf16.mxu0 0
      %8883 = vmatmul.mubr.bf16.gmra.mrb[0].mxu0 %v8646
      %v8884 = vpop.f32.mrb[0].mxu0
      %v8885 = vadd.f32 0.0, %v8884
      %v8886 = vpop.f32.mrb[0].mxu0
      %v8887 = vpop.f32.mrb[0].mxu0
      %v8888 = vadd.f32 0.0, %v8887
      %v8889 = vpop.f32.mrb[0].mxu0
      %8890 = vmatprep.mubr.bf16.mxu0 0
      %8891 = vmatmul.mubr.bf16.gmra.mrb[0].mxu0 %v8649
      %v8892 = vpop.f32.mrb[0].mxu0
      %v8893 = vadd.f32 0.0, %v8892
      %v8894 = vpop.f32.mrb[0].mxu0
      %v8895 = vpop.f32.mrb[0].mxu0
      %v8896 = vadd.f32 0.0, %v8895
      %v8897 = vpop.f32.mrb[0].mxu0
      %8898 = vmatprep.mubr.bf16.mxu0 0
      %8899 = vmatmul.mubr.bf16.gmra.mrb[0].mxu0 %v8652
      %v8900 = vpop.f32.mrb[0].mxu0
      %v8901 = vadd.f32 0.0, %v8900
      %v8902 = vpop.f32.mrb[0].mxu0
      %v8903 = vpop.f32.mrb[0].mxu0
      %v8904 = vadd.f32 0.0, %v8903
      %v8905 = vpop.f32.mrb[0].mxu0
      %8906 = vmatprep.mubr.bf16.mxu0 0
      %8907 = vmatmul.mubr.bf16.gmra.mrb[0].mxu0 %v8655
      %v8908 = vpop.f32.mrb[0].mxu0
      %v8909 = vadd.f32 0.0, %v8908
      %v8910 = vpop.f32.mrb[0].mxu0
      %v8911 = vpop.f32.mrb[0].mxu0
      %v8912 = vadd.f32 0.0, %v8911
      %v8913 = vpop.f32.mrb[0].mxu0
      %8914 = vmatprep.mubr.bf16.mxu0 0
      %8915 = vmatmul.mubr.bf16.gmra.mrb[0].mxu0 %v8658
      %v8916 = vpop.f32.mrb[0].mxu0
      %v8917 = vadd.f32 0.0, %v8916
      %v8918 = vpop.f32.mrb[0].mxu0
      %v8919 = vpop.f32.mrb[0].mxu0
      %v8920 = vadd.f32 0.0, %v8919
      %v8921 = vpop.f32.mrb[0].mxu0
      %8922 = vmatprep.mubr.bf16.mxu0 0
      %8923 = vmatmul.mubr.bf16.gmra.mrb[0].mxu0 %v8661
      %v8924 = vpop.f32.mrb[0].mxu0
      %v8925 = vadd.f32 0.0, %v8924
      %v8926 = vpop.f32.mrb[0].mxu0
      %v8927 = vpop.f32.mrb[0].mxu0
      %v8928 = vadd.f32 0.0, %v8927
      %v8929 = vpop.f32.mrb[0].mxu0
      %8930 = vmatprep.mubr.bf16.mxu0 0
      %8931 = vmatmul.mubr.bf16.gmra.mrb[0].mxu0 %v8664
      %v8932 = vpop.f32.mrb[0].mxu0
      %v8933 = vadd.f32 0.0, %v8932
      %v8934 = vpop.f32.mrb[0].mxu0
      %v8935 = vpop.f32.mrb[0].mxu0
      %v8936 = vadd.f32 0.0, %v8935
      %v8937 = vpop.f32.mrb[0].mxu0
      %8938 = vmatprep.mubr.bf16.mxu0 0
      %8939 = vmatmul.mubr.bf16.gmra.mrb[0].mxu0 %v8667
      %v8940 = vpop.f32.mrb[0].mxu0
      %v8941 = vadd.f32 0.0, %v8940
      %v8942 = vpop.f32.mrb[0].mxu0
      %v8943 = vpop.f32.mrb[0].mxu0
      %v8944 = vadd.f32 0.0, %v8943
      %v8945 = vpop.f32.mrb[0].mxu0
      %8946 = vmatprep.mubr.bf16.mxu0 0
      %8947 = vmatmul.mubr.bf16.gmra.mrb[0].mxu0 %v8670
      %v8948 = vpop.f32.mrb[0].mxu0
      %v8949 = vadd.f32 0.0, %v8948
      %v8950 = vpop.f32.mrb[0].mxu0
      %v8951 = vpop.f32.mrb[0].mxu0
      %v8952 = vadd.f32 0.0, %v8951
      %v8953 = vpop.f32.mrb[0].mxu0
      %8954 = vmatprep.mubr.bf16.mxu0 0
      %8955 = vmatmul.mubr.bf16.gmra.mrb[0].mxu0 %v8673
      %v8956 = vpop.f32.mrb[0].mxu0
      %v8957 = vadd.f32 0.0, %v8956
      %v8958 = vpop.f32.mrb[0].mxu0
      %v8959 = vpop.f32.mrb[0].mxu0
      %v8960 = vadd.f32 0.0, %v8959
      %v8961 = vpop.f32.mrb[0].mxu0
      %8962 = vmatprep.mubr.bf16.mxu0 0
      %8963 = vmatmul.mubr.bf16.gmra.mrb[0].mxu0 %v8676
      %v8964 = vpop.f32.mrb[0].mxu0
      %v8965 = vadd.f32 0.0, %v8964
      %v8966 = vpop.f32.mrb[0].mxu0
      %v8967 = vpop.f32.mrb[0].mxu0
      %v8968 = vadd.f32 0.0, %v8967
      %v8969 = vpop.f32.mrb[0].mxu0
      %8970 = vmatprep.mubr.bf16.mxu0 0
      %8971 = vmatmul.mubr.bf16.gmra.mrb[0].mxu0 %v8679
      %v8972 = vpop.f32.mrb[0].mxu0
      %v8973 = vadd.f32 0.0, %v8972
      %v8974 = vpop.f32.mrb[0].mxu0
      %v8975 = vpop.f32.mrb[0].mxu0
      %v8976 = vadd.f32 0.0, %v8975
      %v8977 = vpop.f32.mrb[0].mxu0
      %8978 = vmatprep.mubr.bf16.mxu0 0
      %8979 = vmatmul.mubr.bf16.gmra.mrb[0].mxu0 %v8682
      %v8980 = vpop.f32.mrb[0].mxu0
      %v8981 = vadd.f32 0.0, %v8980
      %v8982 = vpop.f32.mrb[0].mxu0
      %v8983 = vpop.f32.mrb[0].mxu0
      %v8984 = vadd.f32 0.0, %v8983
      %v8985 = vpop.f32.mrb[0].mxu0
      %8986 = vmatprep.mubr.bf16.mxu0 0
      %8987 = vmatmul.mubr.bf16.gmra.mrb[0].mxu0 %v8685
      %v8988 = vpop.f32.mrb[0].mxu0
      %v8989 = vadd.f32 0.0, %v8988
      %v8990 = vpop.f32.mrb[0].mxu0
      %v8991 = vpop.f32.mrb[0].mxu0
      %v8992 = vadd.f32 0.0, %v8991
      %v8993 = vpop.f32.mrb[0].mxu0
      %8994 = vmatprep.mubr.bf16.mxu0 0
      %8995 = vmatmul.mubr.bf16.gmra.mrb[0].mxu0 %v8688
      %v8996 = vpop.f32.mrb[0].mxu0
      %v8997 = vadd.f32 0.0, %v8996
      %v8998 = vpop.f32.mrb[0].mxu0
      %v8999 = vpop.f32.mrb[0].mxu0
      %v9000 = vadd.f32 0.0, %v8999
      %v9001 = vpop.f32.mrb[0].mxu0
      %9002 = vmatprep.mubr.bf16.mxu0 0
      %9003 = vmatmul.mubr.bf16.gmra.mrb[0].mxu0 %v8691
      %v9004 = vpop.f32.mrb[0].mxu0
      %v9005 = vadd.f32 0.0, %v9004
      %v9006 = vpop.f32.mrb[0].mxu0
      %v9007 = vpop.f32.mrb[0].mxu0
      %v9008 = vadd.f32 0.0, %v9007
      %v9009 = vpop.f32.mrb[0].mxu0
      %9010 = vmatprep.mubr.bf16.mxu0 0
      %9011 = vmatmul.mubr.bf16.gmra.mrb[0].mxu0 %v8694
      %v9012 = vpop.f32.mrb[0].mxu0
      %v9013 = vadd.f32 0.0, %v9012
      %v9014 = vpop.f32.mrb[0].mxu0
      %v9015 = vpop.f32.mrb[0].mxu0
      %v9016 = vadd.f32 0.0, %v9015
      %v9017 = vpop.f32.mrb[0].mxu0
      %9018 = vmatprep.mubr.bf16.mxu0 0
      %9019 = vmatmul.mubr.bf16.gmra.mrb[0].mxu0 %v8697
      %v9020 = vpop.f32.mrb[0].mxu0
      %v9021 = vadd.f32 0.0, %v9020
      %v9022 = vpop.f32.mrb[0].mxu0
      %v9023 = vpop.f32.mrb[0].mxu0
      %v9024 = vadd.f32 0.0, %v9023
      %v9025 = vpop.f32.mrb[0].mxu0
      %9026 = vmatprep.mubr.bf16.mxu0 0
      %9027 = vmatmul.mubr.bf16.gmra.mrb[0].mxu0 %v8700
      %v9028 = vpop.f32.mrb[0].mxu0
      %v9029 = vadd.f32 0.0, %v9028
      %v9030 = vpop.f32.mrb[0].mxu0
      %v9031 = vpop.f32.mrb[0].mxu0
      %v9032 = vadd.f32 0.0, %v9031
      %v9033 = vpop.f32.mrb[0].mxu0
      %9034 = vmatprep.mubr.bf16.mxu0 0
      %9035 = vmatmul.mubr.bf16.gmra.mrb[0].mxu0 %v8703
      %v9036 = vpop.f32.mrb[0].mxu0
      %v9037 = vadd.f32 0.0, %v9036
      %v9038 = vpop.f32.mrb[0].mxu0
      %v9039 = vpop.f32.mrb[0].mxu0
      %v9040 = vadd.f32 0.0, %v9039
      %v9041 = vpop.f32.mrb[0].mxu0
      %9042 = vmatprep.mubr.bf16.mxu0 0
      %9043 = vmatmul.mubr.bf16.gmra.mrb[0].mxu0 %v8706
      %v9044 = vpop.f32.mrb[0].mxu0
      %v9045 = vadd.f32 0.0, %v9044
      %v9046 = vpop.f32.mrb[0].mxu0
      %v9047 = vpop.f32.mrb[0].mxu0
      %v9048 = vadd.f32 0.0, %v9047
      %v9049 = vpop.f32.mrb[0].mxu0
      %9050 = vmatprep.mubr.bf16.mxu0 0
      %9051 = vmatmul.mubr.bf16.gmra.mrb[0].mxu0 %v8709
      %v9052 = vpop.f32.mrb[0].mxu0
      %v9053 = vadd.f32 0.0, %v9052
      %v9054 = vpop.f32.mrb[0].mxu0
      %v9055 = vpop.f32.mrb[0].mxu0
      %v9056 = vadd.f32 0.0, %v9055
      %v9057 = vpop.f32.mrb[0].mxu0
      %9058 = vmatprep.mubr.bf16.mxu0 0
      %9059 = vmatmul.mubr.bf16.gmra.mrb[0].mxu0 %v8712
      %v9060 = vpop.f32.mrb[0].mxu0
      %v9061 = vadd.f32 0.0, %v9060
      %v9062 = vpop.f32.mrb[0].mxu0
      %v9063 = vpop.f32.mrb[0].mxu0
      %v9064 = vadd.f32 0.0, %v9063
      %v9065 = vpop.f32.mrb[0].mxu0
      %9066 = vmatprep.mubr.bf16.mxu0 0
      %9067 = vmatmul.mubr.bf16.gmra.mrb[0].mxu0 %v8715
      %v9068 = vpop.f32.mrb[0].mxu0
      %v9069 = vadd.f32 0.0, %v9068
      %v9070 = vpop.f32.mrb[0].mxu0
      %v9071 = vpop.f32.mrb[0].mxu0
      %v9072 = vadd.f32 0.0, %v9071
      %v9073 = vpop.f32.mrb[0].mxu0
      %9074 = vmatprep.mubr.bf16.mxu0 0
      %9075 = vmatmul.mubr.bf16.gmra.mrb[0].mxu0 %v8718
      %v9076 = vpop.f32.mrb[0].mxu0
      %v9077 = vadd.f32 0.0, %v9076
      %v9078 = vpop.f32.mrb[0].mxu0
      %v9079 = vpop.f32.mrb[0].mxu0
      %v9080 = vadd.f32 0.0, %v9079
      %v9081 = vpop.f32.mrb[0].mxu0
      %9082 = vmatprep.mubr.bf16.mxu0 0
      %9083 = vmatmul.mubr.bf16.gmra.mrb[0].mxu0 %v8721
      %v9084 = vpop.f32.mrb[0].mxu0
      %v9085 = vadd.f32 0.0, %v9084
      %v9086 = vpop.f32.mrb[0].mxu0
      %v9087 = vpop.f32.mrb[0].mxu0
      %v9088 = vadd.f32 0.0, %v9087
      %v9089 = vpop.f32.mrb[0].mxu0
      %9090 = vmatprep.mubr.bf16.mxu0 0
      %9091 = vmatmul.mubr.bf16.gmra.mrb[0].mxu0 %v8724
      %v9092 = vpop.f32.mrb[0].mxu0
      %v9093 = vadd.f32 0.0, %v9092
      %v9094 = vpop.f32.mrb[0].mxu0
      %v9095 = vpop.f32.mrb[0].mxu0
      %v9096 = vadd.f32 0.0, %v9095
      %v9097 = vpop.f32.mrb[0].mxu0
      %9098 = vmatprep.mubr.bf16.mxu0 0
      %9099 = vmatmul.mubr.bf16.gmra.mrb[0].mxu0 %v8727
      %v9100 = vpop.f32.mrb[0].mxu0
      %v9101 = vadd.f32 0.0, %v9100
      %v9102 = vpop.f32.mrb[0].mxu0
      %v9103 = vpop.f32.mrb[0].mxu0
      %v9104 = vadd.f32 0.0, %v9103
      %v9105 = vpop.f32.mrb[0].mxu0
      %9106 = vmatprep.mubr.bf16.mxu0 0
      %9107 = vmatmul.mubr.bf16.gmra.mrb[0].mxu0 %v8730
      %v9108 = vpop.f32.mrb[0].mxu0
      %v9109 = vadd.f32 0.0, %v9108
      %v9110 = vpop.f32.mrb[0].mxu0
      %v9111 = vpop.f32.mrb[0].mxu0
      %v9112 = vadd.f32 0.0, %v9111
      %v9113 = vpop.f32.mrb[0].mxu0
      %9114 = vmatprep.mubr.bf16.mxu0 0
      %9115 = vmatmul.mubr.bf16.gmra.mrb[0].mxu0 %v8733
      %v9116 = vpop.f32.mrb[0].mxu0
      %v9117 = vadd.f32 0.0, %v9116
      %v9118 = vpop.f32.mrb[0].mxu0
      %v9119 = vpop.f32.mrb[0].mxu0
      %v9120 = vadd.f32 0.0, %v9119
      %v9121 = vpop.f32.mrb[0].mxu0
      %9122 = vmatprep.mubr.bf16.mxu0 0
      %9123 = vmatmul.mubr.bf16.gmra.mrb[0].mxu0 %v8736
      %v9124 = vpop.f32.mrb[0].mxu0
      %v9125 = vadd.f32 0.0, %v9124
      %v9126 = vpop.f32.mrb[0].mxu0
      %v9127 = vpop.f32.mrb[0].mxu0
      %v9128 = vadd.f32 0.0, %v9127
      %v9129 = vpop.f32.mrb[0].mxu0
      %9130 = vmatprep.mubr.bf16.mxu0 0
      %9131 = vmatmul.mubr.bf16.gmra.mrb[0].mxu0 %v8739
      %v9132 = vpop.f32.mrb[0].mxu0
      %v9133 = vadd.f32 0.0, %v9132
      %v9134 = vpop.f32.mrb[0].mxu0
      %v9135 = vpop.f32.mrb[0].mxu0
      %v9136 = vadd.f32 0.0, %v9135
      %v9137 = vpop.f32.mrb[0].mxu0
      %9138 = vmatprep.mubr.bf16.mxu0 0
      %9139 = vmatmul.mubr.bf16.gmra.mrb[0].mxu0 %v8742
      %v9140 = vpop.f32.mrb[0].mxu0
      %v9141 = vadd.f32 0.0, %v9140
      %v9142 = vpop.f32.mrb[0].mxu0
      %v9143 = vpop.f32.mrb[0].mxu0
      %v9144 = vadd.f32 0.0, %v9143
      %v9145 = vpop.f32.mrb[0].mxu0
      %9146 = vmatprep.mubr.bf16.mxu0 0
      %9147 = vmatmul.mubr.bf16.gmra.mrb[0].mxu0 %v8745
      %v9148 = vpop.f32.mrb[0].mxu0
      %v9149 = vadd.f32 0.0, %v9148
      %v9150 = vpop.f32.mrb[0].mxu0
      %v9151 = vpop.f32.mrb[0].mxu0
      %v9152 = vadd.f32 0.0, %v9151
      %v9153 = vpop.f32.mrb[0].mxu0
      %9154 = vmatprep.mubr.bf16.mxu0 0
      %9155 = vmatmul.mubr.bf16.gmra.mrb[0].mxu0 %v8748
      %v9156 = vpop.f32.mrb[0].mxu0
      %v9157 = vadd.f32 0.0, %v9156
      %v9158 = vpop.f32.mrb[0].mxu0
      %v9159 = vpop.f32.mrb[0].mxu0
      %v9160 = vadd.f32 0.0, %v9159
      %v9161 = vpop.f32.mrb[0].mxu0
      %9162 = vmatprep.mubr.bf16.mxu0 0
      %9163 = vmatmul.mubr.bf16.gmra.mrb[0].mxu0 %v8751
      %v9164 = vpop.f32.mrb[0].mxu0
      %v9165 = vadd.f32 0.0, %v9164
      %v9166 = vpop.f32.mrb[0].mxu0
      %v9167 = vpop.f32.mrb[0].mxu0
      %v9168 = vadd.f32 0.0, %v9167
      %v9169 = vpop.f32.mrb[0].mxu0
      %9170 = vmatprep.mubr.bf16.mxu0 0
      %9171 = vmatmul.mubr.bf16.gmra.mrb[0].mxu0 %v8754
      %v9172 = vpop.f32.mrb[0].mxu0
      %v9173 = vadd.f32 0.0, %v9172
      %v9174 = vpop.f32.mrb[0].mxu0
      %v9175 = vpop.f32.mrb[0].mxu0
      %v9176 = vadd.f32 0.0, %v9175
      %v9177 = vpop.f32.mrb[0].mxu0
      %9178 = vmatprep.mubr.bf16.mxu0 0
      %9179 = vmatmul.mubr.bf16.gmra.mrb[0].mxu0 %v8757
      %v9180 = vpop.f32.mrb[0].mxu0
      %v9181 = vadd.f32 0.0, %v9180
      %v9182 = vpop.f32.mrb[0].mxu0
      %v9183 = vpop.f32.mrb[0].mxu0
      %v9184 = vadd.f32 0.0, %v9183
      %v9185 = vpop.f32.mrb[0].mxu0
      %9186 = vmatprep.mubr.bf16.mxu0 0
      %9187 = vmatmul.mubr.bf16.gmra.mrb[0].mxu0 %v8760
      %v9188 = vpop.f32.mrb[0].mxu0
      %v9189 = vadd.f32 0.0, %v9188
      %v9190 = vpop.f32.mrb[0].mxu0
      %v9191 = vpop.f32.mrb[0].mxu0
      %v9192 = vadd.f32 0.0, %v9191
      %v9193 = vpop.f32.mrb[0].mxu0
      %9194 = vmatprep.mubr.bf16.mxu0 0
      %9195 = vmatmul.mubr.bf16.gmra.mrb[0].mxu0 %v8763
      %v9196 = vpop.f32.mrb[0].mxu0
      %v9197 = vadd.f32 0.0, %v9196
      %v9198 = vpop.f32.mrb[0].mxu0
      %v9199 = vpop.f32.mrb[0].mxu0
      %v9200 = vadd.f32 0.0, %v9199
      %v9201 = vpop.f32.mrb[0].mxu0
      %9202 = vmatprep.mubr.bf16.mxu0 0
      %9203 = vmatmul.mubr.bf16.gmra.mrb[0].mxu0 %v8766
      %v9204 = vpop.f32.mrb[0].mxu0
      %v9205 = vadd.f32 0.0, %v9204
      %v9206 = vpop.f32.mrb[0].mxu0
      %v9207 = vpop.f32.mrb[0].mxu0
      %v9208 = vadd.f32 0.0, %v9207
      %v9209 = vpop.f32.mrb[0].mxu0
      %9210 = vmatprep.mubr.bf16.mxu0 0
      %9211 = vmatmul.mubr.bf16.gmra.mrb[0].mxu0 %v8769
      %v9212 = vpop.f32.mrb[0].mxu0
      %v9213 = vadd.f32 0.0, %v9212
      %v9214 = vpop.f32.mrb[0].mxu0
      %v9215 = vpop.f32.mrb[0].mxu0
      %v9216 = vadd.f32 0.0, %v9215
      %v9217 = vpop.f32.mrb[0].mxu0
      %9218 = vmatprep.mubr.bf16.mxu0 0
      %9219 = vmatmul.mubr.bf16.gmra.mrb[0].mxu0 %v8772
      %v9220 = vpop.f32.mrb[0].mxu0
      %v9221 = vadd.f32 0.0, %v9220
      %v9222 = vpop.f32.mrb[0].mxu0
      %v9223 = vpop.f32.mrb[0].mxu0
      %v9224 = vadd.f32 0.0, %v9223
      %v9225 = vpop.f32.mrb[0].mxu0
      %9226 = vmatprep.mubr.bf16.mxu0 0
      %9227 = vmatmul.mubr.bf16.gmra.mrb[0].mxu0 %v8775
      %v9228 = vpop.f32.mrb[0].mxu0
      %v9229 = vadd.f32 0.0, %v9228
      %v9230 = vpop.f32.mrb[0].mxu0
      %v9231 = vpop.f32.mrb[0].mxu0
      %v9232 = vadd.f32 0.0, %v9231
      %v9233 = vpop.f32.mrb[0].mxu0
      %9234 = vmatprep.mubr.bf16.mxu0 0
      %9235 = vmatmul.mubr.bf16.gmra.mrb[0].mxu0 %v8778
      %v9236 = vpop.f32.mrb[0].mxu0
      %v9237 = vadd.f32 0.0, %v9236
      %v9238 = vpop.f32.mrb[0].mxu0
      %v9239 = vpop.f32.mrb[0].mxu0
      %v9240 = vadd.f32 0.0, %v9239
      %v9241 = vpop.f32.mrb[0].mxu0
      %9242 = vmatprep.mubr.bf16.mxu0 0
      %9243 = vmatmul.mubr.bf16.gmra.mrb[0].mxu0 %v8781
      %v9244 = vpop.f32.mrb[0].mxu0
      %v9245 = vadd.f32 0.0, %v9244
      %v9246 = vpop.f32.mrb[0].mxu0
      %v9247 = vpop.f32.mrb[0].mxu0
      %v9248 = vadd.f32 0.0, %v9247
      %v9249 = vpop.f32.mrb[0].mxu0
      %9250 = vmatprep.mubr.bf16.mxu0 0
      %9251 = vmatmul.mubr.bf16.gmra.mrb[0].mxu0 %v8784
      %v9252 = vpop.f32.mrb[0].mxu0
      %v9253 = vadd.f32 0.0, %v9252
      %v9254 = vpop.f32.mrb[0].mxu0
      %v9255 = vpop.f32.mrb[0].mxu0
      %v9256 = vadd.f32 0.0, %v9255
      %v9257 = vpop.f32.mrb[0].mxu0
      %9258 = vmatprep.mubr.bf16.mxu0 0
      %9259 = vmatmul.mubr.bf16.gmra.mrb[0].mxu0 %v8787
      %v9260 = vpop.f32.mrb[0].mxu0
      %v9261 = vadd.f32 0.0, %v9260
      %v9262 = vpop.f32.mrb[0].mxu0
      %v9263 = vpop.f32.mrb[0].mxu0
      %v9264 = vadd.f32 0.0, %v9263
      %v9265 = vpop.f32.mrb[0].mxu0
      %9266 = vmatprep.mubr.bf16.mxu0 0
      %9267 = vmatmul.mubr.bf16.gmra.mrb[0].mxu0 %v8790
      %v9268 = vpop.f32.mrb[0].mxu0
      %v9269 = vadd.f32 0.0, %v9268
      %v9270 = vpop.f32.mrb[0].mxu0
      %v9271 = vpop.f32.mrb[0].mxu0
      %v9272 = vadd.f32 0.0, %v9271
      %v9273 = vpop.f32.mrb[0].mxu0
      %9274 = vmatprep.mubr.bf16.mxu0 0
      %9275 = vmatmul.mubr.bf16.gmra.mrb[0].mxu0 %v8793
      %v9276 = vpop.f32.mrb[0].mxu0
      %v9277 = vadd.f32 0.0, %v9276
      %v9278 = vpop.f32.mrb[0].mxu0
      %v9279 = vpop.f32.mrb[0].mxu0
      %v9280 = vadd.f32 0.0, %v9279
      %v9281 = vpop.f32.mrb[0].mxu0
      %9282 = vmatprep.mubr.bf16.mxu0 0
      %9283 = vmatmul.mubr.bf16.gmra.mrb[0].mxu0 %v8796
      %v9284 = vpop.f32.mrb[0].mxu0
      %v9285 = vadd.f32 0.0, %v9284
      %v9286 = vpop.f32.mrb[0].mxu0
      %v9287 = vpop.f32.mrb[0].mxu0
      %v9288 = vadd.f32 0.0, %v9287
      %v9289 = vpop.f32.mrb[0].mxu0
      %9290 = vmatprep.mubr.bf16.mxu0 0
      %9291 = vmatmul.mubr.bf16.gmra.mrb[0].mxu0 %v8799
      %v9292 = vpop.f32.mrb[0].mxu0
      %v9293 = vadd.f32 0.0, %v9292
      %v9294 = vpop.f32.mrb[0].mxu0
      %v9295 = vpop.f32.mrb[0].mxu0
      %v9296 = vadd.f32 0.0, %v9295
      %v9297 = vpop.f32.mrb[0].mxu0
      %9298 = vmatprep.mubr.bf16.mxu0 0
      %9299 = vmatmul.mubr.bf16.gmra.mrb[0].mxu0 %v8802
      %v9300 = vpop.f32.mrb[0].mxu0
      %v9301 = vadd.f32 0.0, %v9300
      %v9302 = vpop.f32.mrb[0].mxu0
      %v9303 = vpop.f32.mrb[0].mxu0
      %v9304 = vadd.f32 0.0, %v9303
      %v9305 = vpop.f32.mrb[0].mxu0
      %9306 = vmatprep.mubr.bf16.mxu0 0
      %9307 = vmatmul.mubr.bf16.gmra.mrb[0].mxu0 %v8805
      %v9308 = vpop.f32.mrb[0].mxu0
      %v9309 = vadd.f32 0.0, %v9308
      %v9310 = vpop.f32.mrb[0].mxu0
      %v9311 = vpop.f32.mrb[0].mxu0
      %v9312 = vadd.f32 0.0, %v9311
      %v9313 = vpop.f32.mrb[0].mxu0
      %9314 = vmatprep.mubr.bf16.mxu0 0
      %9315 = vmatmul.mubr.bf16.gmra.mrb[0].mxu0 %v8808
      %v9316 = vpop.f32.mrb[0].mxu0
      %v9317 = vadd.f32 0.0, %v9316
      %v9318 = vpop.f32.mrb[0].mxu0
      %v9319 = vpop.f32.mrb[0].mxu0
      %v9320 = vadd.f32 0.0, %v9319
      %v9321 = vpop.f32.mrb[0].mxu0
      %9322 = vmatprep.mubr.bf16.mxu0 0
      %9323 = vmatmul.mubr.bf16.gmra.mrb[0].mxu0 %v8811
      %v9324 = vpop.f32.mrb[0].mxu0
      %v9325 = vadd.f32 0.0, %v9324
      %v9326 = vpop.f32.mrb[0].mxu0
      %v9327 = vpop.f32.mrb[0].mxu0
      %v9328 = vadd.f32 0.0, %v9327
      %v9329 = vpop.f32.mrb[0].mxu0
      %9330 = vmatprep.mubr.bf16.mxu0 0
      %9331 = vmatmul.mubr.bf16.gmra.mrb[0].mxu0 %v8814
      %v9332 = vpop.f32.mrb[0].mxu0
      %v9333 = vadd.f32 0.0, %v9332
      %v9334 = vpop.f32.mrb[0].mxu0
      %v9335 = vpop.f32.mrb[0].mxu0
      %v9336 = vadd.f32 0.0, %v9335
      %v9337 = vpop.f32.mrb[0].mxu0
      %9338 = vmatprep.mubr.bf16.mxu0 0
      %9339 = vmatmul.mubr.bf16.gmra.mrb[0].mxu0 %v8817
      %v9340 = vpop.f32.mrb[0].mxu0
      %v9341 = vadd.f32 0.0, %v9340
      %v9342 = vpop.f32.mrb[0].mxu0
      %v9343 = vpop.f32.mrb[0].mxu0
      %v9344 = vadd.f32 0.0, %v9343
      %v9345 = vpop.f32.mrb[0].mxu0
      %9346 = vmatprep.mubr.bf16.mxu0 0
      %9347 = vmatmul.mubr.bf16.gmra.mrb[0].mxu0 %v8820
      %v9348 = vpop.f32.mrb[0].mxu0
      %v9349 = vadd.f32 0.0, %v9348
      %v9350 = vpop.f32.mrb[0].mxu0
      %v9351 = vpop.f32.mrb[0].mxu0
      %v9352 = vadd.f32 0.0, %v9351
      %v9353 = vpop.f32.mrb[0].mxu0
      %9354 = vmatprep.mubr.bf16.mxu0 0
      %9355 = vmatmul.mubr.bf16.gmra.mrb[0].mxu0 %v8823
      %v9356 = vpop.f32.mrb[0].mxu0
      %v9357 = vadd.f32 0.0, %v9356
      %v9358 = vpop.f32.mrb[0].mxu0
      %v9359 = vpop.f32.mrb[0].mxu0
      %v9360 = vadd.f32 0.0, %v9359
      %v9361 = vpop.f32.mrb[0].mxu0
      %9362 = vmatprep.mubr.bf16.mxu0 0
      %9363 = vmatmul.mubr.bf16.gmra.mrb[0].mxu0 %v8826
      %v9364 = vpop.f32.mrb[0].mxu0
      %v9365 = vadd.f32 0.0, %v9364
      %v9366 = vpop.f32.mrb[0].mxu0
      %v9367 = vpop.f32.mrb[0].mxu0
      %v9368 = vadd.f32 0.0, %v9367
      %v9369 = vpop.f32.mrb[0].mxu0
      %9370 = vmatprep.mubr.bf16.mxu0 0
      %9371 = vmatmul.mubr.bf16.gmra.mrb[0].mxu0 %v8829
      %v9372 = vpop.f32.mrb[0].mxu0
      %v9373 = vadd.f32 0.0, %v9372
      %v9374 = vpop.f32.mrb[0].mxu0
      %v9375 = vpop.f32.mrb[0].mxu0
      %v9376 = vadd.f32 0.0, %v9375
      %v9377 = vpop.f32.mrb[0].mxu0
      %9378 = vdwg.mxu0
      %v9379 = vadd.f32 %v8317, %v8869
      %v9380 = vadd.f32 %v8318, %v8872
      %v9381 = vadd.f32 %v8319, %v8877
      %v9382 = vadd.f32 %v8320, %v8880
      %v9383 = vadd.f32 %v8321, %v8885
      %v9384 = vadd.f32 %v8322, %v8888
      %v9385 = vadd.f32 %v8323, %v8893
      %v9386 = vadd.f32 %v8324, %v8896
      %v9387 = vadd.f32 %v8325, %v8901
      %v9388 = vadd.f32 %v8326, %v8904
      %v9389 = vadd.f32 %v8327, %v8909
      %v9390 = vadd.f32 %v8328, %v8912
      %v9391 = vadd.f32 %v8329, %v8917
      %v9392 = vadd.f32 %v8330, %v8920
      %v9393 = vadd.f32 %v8331, %v8925
      %v9394 = vadd.f32 %v8332, %v8928
      %v9395 = vadd.f32 %v8333, %v8933
      %v9396 = vadd.f32 %v8334, %v8936
      %v9397 = vadd.f32 %v8335, %v8941
      %v9398 = vadd.f32 %v8336, %v8944
      %v9399 = vadd.f32 %v8337, %v8949
      %v9400 = vadd.f32 %v8338, %v8952
      %v9401 = vadd.f32 %v8339, %v8957
      %v9402 = vadd.f32 %v8340, %v8960
      %v9403 = vadd.f32 %v8341, %v8965
      %v9404 = vadd.f32 %v8342, %v8968
      %v9405 = vadd.f32 %v8343, %v8973
      %v9406 = vadd.f32 %v8344, %v8976
      %v9407 = vadd.f32 %v8345, %v8981
      %v9408 = vadd.f32 %v8346, %v8984
      %v9409 = vadd.f32 %v8347, %v8989
      %v9410 = vadd.f32 %v8348, %v8992
      %v9411 = vadd.f32 %v8349, %v8997
      %v9412 = vadd.f32 %v8350, %v9000
      %v9413 = vadd.f32 %v8351, %v9005
      %v9414 = vadd.f32 %v8352, %v9008
      %v9415 = vadd.f32 %v8353, %v9013
      %v9416 = vadd.f32 %v8354, %v9016
      %v9417 = vadd.f32 %v8355, %v9021
      %v9418 = vadd.f32 %v8356, %v9024
      %v9419 = vadd.f32 %v8357, %v9029
      %v9420 = vadd.f32 %v8358, %v9032
      %v9421 = vadd.f32 %v8359, %v9037
      %v9422 = vadd.f32 %v8360, %v9040
      %v9423 = vadd.f32 %v8361, %v9045
      %v9424 = vadd.f32 %v8362, %v9048
      %v9425 = vadd.f32 %v8363, %v9053
      %v9426 = vadd.f32 %v8364, %v9056
      %v9427 = vadd.f32 %v8365, %v9061
      %v9428 = vadd.f32 %v8366, %v9064
      %v9429 = vadd.f32 %v8367, %v9069
      %v9430 = vadd.f32 %v8368, %v9072
      %v9431 = vadd.f32 %v8369, %v9077
      %v9432 = vadd.f32 %v8370, %v9080
      %v9433 = vadd.f32 %v8371, %v9085
      %v9434 = vadd.f32 %v8372, %v9088
      %v9435 = vadd.f32 %v8373, %v9093
      %v9436 = vadd.f32 %v8374, %v9096
      %v9437 = vadd.f32 %v8375, %v9101
      %v9438 = vadd.f32 %v8376, %v9104
      %v9439 = vadd.f32 %v8377, %v9109
      %v9440 = vadd.f32 %v8378, %v9112
      %v9441 = vadd.f32 %v8379, %v9117
      %v9442 = vadd.f32 %v8380, %v9120
      %v9443 = vadd.f32 %v8381, %v9125
      %v9444 = vadd.f32 %v8382, %v9128
      %v9445 = vadd.f32 %v8383, %v9133
      %v9446 = vadd.f32 %v8384, %v9136
      %v9447 = vadd.f32 %v8385, %v9141
      %v9448 = vadd.f32 %v8386, %v9144
      %v9449 = vadd.f32 %v8387, %v9149
      %v9450 = vadd.f32 %v8388, %v9152
      %v9451 = vadd.f32 %v8389, %v9157
      %v9452 = vadd.f32 %v8390, %v9160
      %v9453 = vadd.f32 %v8391, %v9165
      %v9454 = vadd.f32 %v8392, %v9168
      %v9455 = vadd.f32 %v8393, %v9173
      %v9456 = vadd.f32 %v8394, %v9176
      %v9457 = vadd.f32 %v8395, %v9181
      %v9458 = vadd.f32 %v8396, %v9184
      %v9459 = vadd.f32 %v8397, %v9189
      %v9460 = vadd.f32 %v8398, %v9192
      %v9461 = vadd.f32 %v8399, %v9197
      %v9462 = vadd.f32 %v8400, %v9200
      %v9463 = vadd.f32 %v8401, %v9205
      %v9464 = vadd.f32 %v8402, %v9208
      %v9465 = vadd.f32 %v8403, %v9213
      %v9466 = vadd.f32 %v8404, %v9216
      %v9467 = vadd.f32 %v8405, %v9221
      %v9468 = vadd.f32 %v8406, %v9224
      %v9469 = vadd.f32 %v8407, %v9229
      %v9470 = vadd.f32 %v8408, %v9232
      %v9471 = vadd.f32 %v8409, %v9237
      %v9472 = vadd.f32 %v8410, %v9240
      %v9473 = vadd.f32 %v8411, %v9245
      %v9474 = vadd.f32 %v8412, %v9248
      %v9475 = vadd.f32 %v8413, %v9253
      %v9476 = vadd.f32 %v8414, %v9256
      %v9477 = vadd.f32 %v8415, %v9261
      %v9478 = vadd.f32 %v8416, %v9264
      %v9479 = vadd.f32 %v8417, %v9269
      %v9480 = vadd.f32 %v8418, %v9272
      %v9481 = vadd.f32 %v8419, %v9277
      %v9482 = vadd.f32 %v8420, %v9280
      %v9483 = vadd.f32 %v8421, %v9285
      %v9484 = vadd.f32 %v8422, %v9288
      %v9485 = vadd.f32 %v8423, %v9293
      %v9486 = vadd.f32 %v8424, %v9296
      %v9487 = vadd.f32 %v8425, %v9301
      %v9488 = vadd.f32 %v8426, %v9304
      %v9489 = vadd.f32 %v8427, %v9309
      %v9490 = vadd.f32 %v8428, %v9312
      %v9491 = vadd.f32 %v8429, %v9317
      %v9492 = vadd.f32 %v8430, %v9320
      %v9493 = vadd.f32 %v8431, %v9325
      %v9494 = vadd.f32 %v8432, %v9328
      %v9495 = vadd.f32 %v8433, %v9333
      %v9496 = vadd.f32 %v8434, %v9336
      %v9497 = vadd.f32 %v8435, %v9341
      %v9498 = vadd.f32 %v8436, %v9344
      %v9499 = vadd.f32 %v8437, %v9349
      %v9500 = vadd.f32 %v8438, %v9352
      %v9501 = vadd.f32 %v8439, %v9357
      %v9502 = vadd.f32 %v8440, %v9360
      %v9503 = vadd.f32 %v8441, %v9365
      %v9504 = vadd.f32 %v8442, %v9368
      %v9505 = vadd.f32 %v8443, %v9373
      %v9506 = vadd.f32 %v8444, %v9376
      %v9507 = vld [vmem:[%s2] sm:$0x1]
      %v9509 = vlaneseq
      %v9510 = vshrl.u32 %v9509, 7
      %v9511 = vsub.s32 0, %v9510
      %v9512 = vrot.slane %v9507, %v9511
      %v9514 = vmul.f32 %v9379, %v9512
      %v9515 = vmul.f32 %v9380, %v9512
      %v9516 = vmul.f32 %v9381, %v9512
      %v9517 = vmul.f32 %v9382, %v9512
      %v9518 = vmul.f32 %v9383, %v9512
      %v9519 = vmul.f32 %v9384, %v9512
      %v9520 = vmul.f32 %v9385, %v9512
      %v9521 = vmul.f32 %v9386, %v9512
      %v9522 = vmul.f32 %v9387, %v9512
      %v9523 = vmul.f32 %v9388, %v9512
      %v9524 = vmul.f32 %v9389, %v9512
      %v9525 = vmul.f32 %v9390, %v9512
      %v9526 = vmul.f32 %v9391, %v9512
      %v9527 = vmul.f32 %v9392, %v9512
      %v9528 = vmul.f32 %v9393, %v9512
      %v9529 = vmul.f32 %v9394, %v9512
      %v9530 = vmul.f32 %v9395, %v9512
      %v9531 = vmul.f32 %v9396, %v9512
      %v9532 = vmul.f32 %v9397, %v9512
      %v9533 = vmul.f32 %v9398, %v9512
      %v9534 = vmul.f32 %v9399, %v9512
      %v9535 = vmul.f32 %v9400, %v9512
      %v9536 = vmul.f32 %v9401, %v9512
      %v9537 = vmul.f32 %v9402, %v9512
      %v9538 = vmul.f32 %v9403, %v9512
      %v9539 = vmul.f32 %v9404, %v9512
      %v9540 = vmul.f32 %v9405, %v9512
      %v9541 = vmul.f32 %v9406, %v9512
      %v9542 = vmul.f32 %v9407, %v9512
      %v9543 = vmul.f32 %v9408, %v9512
      %v9544 = vmul.f32 %v9409, %v9512
      %v9545 = vmul.f32 %v9410, %v9512
      %v9546 = vmul.f32 %v9411, %v9512
      %v9547 = vmul.f32 %v9412, %v9512
      %v9548 = vmul.f32 %v9413, %v9512
      %v9549 = vmul.f32 %v9414, %v9512
      %v9550 = vmul.f32 %v9415, %v9512
      %v9551 = vmul.f32 %v9416, %v9512
      %v9552 = vmul.f32 %v9417, %v9512
      %v9553 = vmul.f32 %v9418, %v9512
      %v9554 = vmul.f32 %v9419, %v9512
      %v9555 = vmul.f32 %v9420, %v9512
      %v9556 = vmul.f32 %v9421, %v9512
      %v9557 = vmul.f32 %v9422, %v9512
      %v9558 = vmul.f32 %v9423, %v9512
      %v9559 = vmul.f32 %v9424, %v9512
      %v9560 = vmul.f32 %v9425, %v9512
      %v9561 = vmul.f32 %v9426, %v9512
      %v9562 = vmul.f32 %v9427, %v9512
      %v9563 = vmul.f32 %v9428, %v9512
      %v9564 = vmul.f32 %v9429, %v9512
      %v9565 = vmul.f32 %v9430, %v9512
      %v9566 = vmul.f32 %v9431, %v9512
      %v9567 = vmul.f32 %v9432, %v9512
      %v9568 = vmul.f32 %v9433, %v9512
      %v9569 = vmul.f32 %v9434, %v9512
      %v9570 = vmul.f32 %v9435, %v9512
      %v9571 = vmul.f32 %v9436, %v9512
      %v9572 = vmul.f32 %v9437, %v9512
      %v9573 = vmul.f32 %v9438, %v9512
      %v9574 = vmul.f32 %v9439, %v9512
      %v9575 = vmul.f32 %v9440, %v9512
      %v9576 = vmul.f32 %v9441, %v9512
      %v9577 = vmul.f32 %v9442, %v9512
      %v9578 = vmul.f32 %v9443, %v9512
      %v9579 = vmul.f32 %v9444, %v9512
      %v9580 = vmul.f32 %v9445, %v9512
      %v9581 = vmul.f32 %v9446, %v9512
      %v9582 = vmul.f32 %v9447, %v9512
      %v9583 = vmul.f32 %v9448, %v9512
      %v9584 = vmul.f32 %v9449, %v9512
      %v9585 = vmul.f32 %v9450, %v9512
      %v9586 = vmul.f32 %v9451, %v9512
      %v9587 = vmul.f32 %v9452, %v9512
      %v9588 = vmul.f32 %v9453, %v9512
      %v9589 = vmul.f32 %v9454, %v9512
      %v9590 = vmul.f32 %v9455, %v9512
      %v9591 = vmul.f32 %v9456, %v9512
      %v9592 = vmul.f32 %v9457, %v9512
      %v9593 = vmul.f32 %v9458, %v9512
      %v9594 = vmul.f32 %v9459, %v9512
      %v9595 = vmul.f32 %v9460, %v9512
      %v9596 = vmul.f32 %v9461, %v9512
      %v9597 = vmul.f32 %v9462, %v9512
      %v9598 = vmul.f32 %v9463, %v9512
      %v9599 = vmul.f32 %v9464, %v9512
      %v9600 = vmul.f32 %v9465, %v9512
      %v9601 = vmul.f32 %v9466, %v9512
      %v9602 = vmul.f32 %v9467, %v9512
      %v9603 = vmul.f32 %v9468, %v9512
      %v9604 = vmul.f32 %v9469, %v9512
      %v9605 = vmul.f32 %v9470, %v9512
      %v9606 = vmul.f32 %v9471, %v9512
      %v9607 = vmul.f32 %v9472, %v9512
      %v9608 = vmul.f32 %v9473, %v9512
      %v9609 = vmul.f32 %v9474, %v9512
      %v9610 = vmul.f32 %v9475, %v9512
      %v9611 = vmul.f32 %v9476, %v9512
      %v9612 = vmul.f32 %v9477, %v9512
      %v9613 = vmul.f32 %v9478, %v9512
      %v9614 = vmul.f32 %v9479, %v9512
      %v9615 = vmul.f32 %v9480, %v9512
      %v9616 = vmul.f32 %v9481, %v9512
      %v9617 = vmul.f32 %v9482, %v9512
      %v9618 = vmul.f32 %v9483, %v9512
      %v9619 = vmul.f32 %v9484, %v9512
      %v9620 = vmul.f32 %v9485, %v9512
      %v9621 = vmul.f32 %v9486, %v9512
      %v9622 = vmul.f32 %v9487, %v9512
      %v9623 = vmul.f32 %v9488, %v9512
      %v9624 = vmul.f32 %v9489, %v9512
      %v9625 = vmul.f32 %v9490, %v9512
      %v9626 = vmul.f32 %v9491, %v9512
      %v9627 = vmul.f32 %v9492, %v9512
      %v9628 = vmul.f32 %v9493, %v9512
      %v9629 = vmul.f32 %v9494, %v9512
      %v9630 = vmul.f32 %v9495, %v9512
      %v9631 = vmul.f32 %v9496, %v9512
      %v9632 = vmul.f32 %v9497, %v9512
      %v9633 = vmul.f32 %v9498, %v9512
      %v9634 = vmul.f32 %v9499, %v9512
      %v9635 = vmul.f32 %v9500, %v9512
      %v9636 = vmul.f32 %v9501, %v9512
      %v9637 = vmul.f32 %v9502, %v9512
      %v9638 = vmul.f32 %v9503, %v9512
      %v9639 = vmul.f32 %v9504, %v9512
      %v9640 = vmul.f32 %v9505, %v9512
      %v9641 = vmul.f32 %v9506, %v9512
      %v9642 = vld [vmem:[%s3] sm:$0x1]
      %v9644 = vlaneseq
      %v9645 = vshrl.u32 %v9644, 7
      %v9646 = vsub.s32 0, %v9645
      %v9647 = vrot.slane %v9642, %v9646
      %v9649 = vadd.f32 %v9514, %v9647
      %v9650 = vadd.f32 %v9515, %v9647
      %v9651 = vadd.f32 %v9516, %v9647
      %v9652 = vadd.f32 %v9517, %v9647
      %v9653 = vadd.f32 %v9518, %v9647
      %v9654 = vadd.f32 %v9519, %v9647
      %v9655 = vadd.f32 %v9520, %v9647
      %v9656 = vadd.f32 %v9521, %v9647
      %v9657 = vadd.f32 %v9522, %v9647
      %v9658 = vadd.f32 %v9523, %v9647
      %v9659 = vadd.f32 %v9524, %v9647
      %v9660 = vadd.f32 %v9525, %v9647
      %v9661 = vadd.f32 %v9526, %v9647
      %v9662 = vadd.f32 %v9527, %v9647
      %v9663 = vadd.f32 %v9528, %v9647
      %v9664 = vadd.f32 %v9529, %v9647
      %v9665 = vadd.f32 %v9530, %v9647
      %v9666 = vadd.f32 %v9531, %v9647
      %v9667 = vadd.f32 %v9532, %v9647
      %v9668 = vadd.f32 %v9533, %v9647
      %v9669 = vadd.f32 %v9534, %v9647
      %v9670 = vadd.f32 %v9535, %v9647
      %v9671 = vadd.f32 %v9536, %v9647
      %v9672 = vadd.f32 %v9537, %v9647
      %v9673 = vadd.f32 %v9538, %v9647
      %v9674 = vadd.f32 %v9539, %v9647
      %v9675 = vadd.f32 %v9540, %v9647
      %v9676 = vadd.f32 %v9541, %v9647
      %v9677 = vadd.f32 %v9542, %v9647
      %v9678 = vadd.f32 %v9543, %v9647
      %v9679 = vadd.f32 %v9544, %v9647
      %v9680 = vadd.f32 %v9545, %v9647
      %v9681 = vadd.f32 %v9546, %v9647
      %v9682 = vadd.f32 %v9547, %v9647
      %v9683 = vadd.f32 %v9548, %v9647
      %v9684 = vadd.f32 %v9549, %v9647
      %v9685 = vadd.f32 %v9550, %v9647
      %v9686 = vadd.f32 %v9551, %v9647
      %v9687 = vadd.f32 %v9552, %v9647
      %v9688 = vadd.f32 %v9553, %v9647
      %v9689 = vadd.f32 %v9554, %v9647
      %v9690 = vadd.f32 %v9555, %v9647
      %v9691 = vadd.f32 %v9556, %v9647
      %v9692 = vadd.f32 %v9557, %v9647
      %v9693 = vadd.f32 %v9558, %v9647
      %v9694 = vadd.f32 %v9559, %v9647
      %v9695 = vadd.f32 %v9560, %v9647
      %v9696 = vadd.f32 %v9561, %v9647
      %v9697 = vadd.f32 %v9562, %v9647
      %v9698 = vadd.f32 %v9563, %v9647
      %v9699 = vadd.f32 %v9564, %v9647
      %v9700 = vadd.f32 %v9565, %v9647
      %v9701 = vadd.f32 %v9566, %v9647
      %v9702 = vadd.f32 %v9567, %v9647
      %v9703 = vadd.f32 %v9568, %v9647
      %v9704 = vadd.f32 %v9569, %v9647
      %v9705 = vadd.f32 %v9570, %v9647
      %v9706 = vadd.f32 %v9571, %v9647
      %v9707 = vadd.f32 %v9572, %v9647
      %v9708 = vadd.f32 %v9573, %v9647
      %v9709 = vadd.f32 %v9574, %v9647
      %v9710 = vadd.f32 %v9575, %v9647
      %v9711 = vadd.f32 %v9576, %v9647
      %v9712 = vadd.f32 %v9577, %v9647
      %v9713 = vadd.f32 %v9578, %v9647
      %v9714 = vadd.f32 %v9579, %v9647
      %v9715 = vadd.f32 %v9580, %v9647
      %v9716 = vadd.f32 %v9581, %v9647
      %v9717 = vadd.f32 %v9582, %v9647
      %v9718 = vadd.f32 %v9583, %v9647
      %v9719 = vadd.f32 %v9584, %v9647
      %v9720 = vadd.f32 %v9585, %v9647
      %v9721 = vadd.f32 %v9586, %v9647
      %v9722 = vadd.f32 %v9587, %v9647
      %v9723 = vadd.f32 %v9588, %v9647
      %v9724 = vadd.f32 %v9589, %v9647
      %v9725 = vadd.f32 %v9590, %v9647
      %v9726 = vadd.f32 %v9591, %v9647
      %v9727 = vadd.f32 %v9592, %v9647
      %v9728 = vadd.f32 %v9593, %v9647
      %v9729 = vadd.f32 %v9594, %v9647
      %v9730 = vadd.f32 %v9595, %v9647
      %v9731 = vadd.f32 %v9596, %v9647
      %v9732 = vadd.f32 %v9597, %v9647
      %v9733 = vadd.f32 %v9598, %v9647
      %v9734 = vadd.f32 %v9599, %v9647
      %v9735 = vadd.f32 %v9600, %v9647
      %v9736 = vadd.f32 %v9601, %v9647
      %v9737 = vadd.f32 %v9602, %v9647
      %v9738 = vadd.f32 %v9603, %v9647
      %v9739 = vadd.f32 %v9604, %v9647
      %v9740 = vadd.f32 %v9605, %v9647
      %v9741 = vadd.f32 %v9606, %v9647
      %v9742 = vadd.f32 %v9607, %v9647
      %v9743 = vadd.f32 %v9608, %v9647
      %v9744 = vadd.f32 %v9609, %v9647
      %v9745 = vadd.f32 %v9610, %v9647
      %v9746 = vadd.f32 %v9611, %v9647
      %v9747 = vadd.f32 %v9612, %v9647
      %v9748 = vadd.f32 %v9613, %v9647
      %v9749 = vadd.f32 %v9614, %v9647
      %v9750 = vadd.f32 %v9615, %v9647
      %v9751 = vadd.f32 %v9616, %v9647
      %v9752 = vadd.f32 %v9617, %v9647
      %v9753 = vadd.f32 %v9618, %v9647
      %v9754 = vadd.f32 %v9619, %v9647
      %v9755 = vadd.f32 %v9620, %v9647
      %v9756 = vadd.f32 %v9621, %v9647
      %v9757 = vadd.f32 %v9622, %v9647
      %v9758 = vadd.f32 %v9623, %v9647
      %v9759 = vadd.f32 %v9624, %v9647
      %v9760 = vadd.f32 %v9625, %v9647
      %v9761 = vadd.f32 %v9626, %v9647
      %v9762 = vadd.f32 %v9627, %v9647
      %v9763 = vadd.f32 %v9628, %v9647
      %v9764 = vadd.f32 %v9629, %v9647
      %v9765 = vadd.f32 %v9630, %v9647
      %v9766 = vadd.f32 %v9631, %v9647
      %v9767 = vadd.f32 %v9632, %v9647
      %v9768 = vadd.f32 %v9633, %v9647
      %v9769 = vadd.f32 %v9634, %v9647
      %v9770 = vadd.f32 %v9635, %v9647
      %v9771 = vadd.f32 %v9636, %v9647
      %v9772 = vadd.f32 %v9637, %v9647
      %v9773 = vadd.f32 %v9638, %v9647
      %v9774 = vadd.f32 %v9639, %v9647
      %v9775 = vadd.f32 %v9640, %v9647
      %v9776 = vadd.f32 %v9641, %v9647
      %v9777 = vmax.f32 %v9649, 0.0
      %v9778 = vmax.f32 %v9650, 0.0
      %v9779 = vmax.f32 %v9651, 0.0
      %v9780 = vmax.f32 %v9652, 0.0
      %v9781 = vmax.f32 %v9653, 0.0
      %v9782 = vmax.f32 %v9654, 0.0
      %v9783 = vmax.f32 %v9655, 0.0
      %v9784 = vmax.f32 %v9656, 0.0
      %v9785 = vmax.f32 %v9657, 0.0
      %v9786 = vmax.f32 %v9658, 0.0
      %v9787 = vmax.f32 %v9659, 0.0
      %v9788 = vmax.f32 %v9660, 0.0
      %v9789 = vmax.f32 %v9661, 0.0
      %v9790 = vmax.f32 %v9662, 0.0
      %v9791 = vmax.f32 %v9663, 0.0
      %v9792 = vmax.f32 %v9664, 0.0
      %v9793 = vmax.f32 %v9665, 0.0
      %v9794 = vmax.f32 %v9666, 0.0
      %v9795 = vmax.f32 %v9667, 0.0
      %v9796 = vmax.f32 %v9668, 0.0
      %v9797 = vmax.f32 %v9669, 0.0
      %v9798 = vmax.f32 %v9670, 0.0
      %v9799 = vmax.f32 %v9671, 0.0
      %v9800 = vmax.f32 %v9672, 0.0
      %v9801 = vmax.f32 %v9673, 0.0
      %v9802 = vmax.f32 %v9674, 0.0
      %v9803 = vmax.f32 %v9675, 0.0
      %v9804 = vmax.f32 %v9676, 0.0
      %v9805 = vmax.f32 %v9677, 0.0
      %v9806 = vmax.f32 %v9678, 0.0
      %v9807 = vmax.f32 %v9679, 0.0
      %v9808 = vmax.f32 %v9680, 0.0
      %v9809 = vmax.f32 %v9681, 0.0
      %v9810 = vmax.f32 %v9682, 0.0
      %v9811 = vmax.f32 %v9683, 0.0
      %v9812 = vmax.f32 %v9684, 0.0
      %v9813 = vmax.f32 %v9685, 0.0
      %v9814 = vmax.f32 %v9686, 0.0
      %v9815 = vmax.f32 %v9687, 0.0
      %v9816 = vmax.f32 %v9688, 0.0
      %v9817 = vmax.f32 %v9689, 0.0
      %v9818 = vmax.f32 %v9690, 0.0
      %v9819 = vmax.f32 %v9691, 0.0
      %v9820 = vmax.f32 %v9692, 0.0
      %v9821 = vmax.f32 %v9693, 0.0
      %v9822 = vmax.f32 %v9694, 0.0
      %v9823 = vmax.f32 %v9695, 0.0
      %v9824 = vmax.f32 %v9696, 0.0
      %v9825 = vmax.f32 %v9697, 0.0
      %v9826 = vmax.f32 %v9698, 0.0
      %v9827 = vmax.f32 %v9699, 0.0
      %v9828 = vmax.f32 %v9700, 0.0
      %v9829 = vmax.f32 %v9701, 0.0
      %v9830 = vmax.f32 %v9702, 0.0
      %v9831 = vmax.f32 %v9703, 0.0
      %v9832 = vmax.f32 %v9704, 0.0
      %v9833 = vmax.f32 %v9705, 0.0
      %v9834 = vmax.f32 %v9706, 0.0
      %v9835 = vmax.f32 %v9707, 0.0
      %v9836 = vmax.f32 %v9708, 0.0
      %v9837 = vmax.f32 %v9709, 0.0
      %v9838 = vmax.f32 %v9710, 0.0
      %v9839 = vmax.f32 %v9711, 0.0
      %v9840 = vmax.f32 %v9712, 0.0
      %v9841 = vmax.f32 %v9713, 0.0
      %v9842 = vmax.f32 %v9714, 0.0
      %v9843 = vmax.f32 %v9715, 0.0
      %v9844 = vmax.f32 %v9716, 0.0
      %v9845 = vmax.f32 %v9717, 0.0
      %v9846 = vmax.f32 %v9718, 0.0
      %v9847 = vmax.f32 %v9719, 0.0
      %v9848 = vmax.f32 %v9720, 0.0
      %v9849 = vmax.f32 %v9721, 0.0
      %v9850 = vmax.f32 %v9722, 0.0
      %v9851 = vmax.f32 %v9723, 0.0
      %v9852 = vmax.f32 %v9724, 0.0
      %v9853 = vmax.f32 %v9725, 0.0
      %v9854 = vmax.f32 %v9726, 0.0
      %v9855 = vmax.f32 %v9727, 0.0
      %v9856 = vmax.f32 %v9728, 0.0
      %v9857 = vmax.f32 %v9729, 0.0
      %v9858 = vmax.f32 %v9730, 0.0
      %v9859 = vmax.f32 %v9731, 0.0
      %v9860 = vmax.f32 %v9732, 0.0
      %v9861 = vmax.f32 %v9733, 0.0
      %v9862 = vmax.f32 %v9734, 0.0
      %v9863 = vmax.f32 %v9735, 0.0
      %v9864 = vmax.f32 %v9736, 0.0
      %v9865 = vmax.f32 %v9737, 0.0
      %v9866 = vmax.f32 %v9738, 0.0
      %v9867 = vmax.f32 %v9739, 0.0
      %v9868 = vmax.f32 %v9740, 0.0
      %v9869 = vmax.f32 %v9741, 0.0
      %v9870 = vmax.f32 %v9742, 0.0
      %v9871 = vmax.f32 %v9743, 0.0
      %v9872 = vmax.f32 %v9744, 0.0
      %v9873 = vmax.f32 %v9745, 0.0
      %v9874 = vmax.f32 %v9746, 0.0
      %v9875 = vmax.f32 %v9747, 0.0
      %v9876 = vmax.f32 %v9748, 0.0
      %v9877 = vmax.f32 %v9749, 0.0
      %v9878 = vmax.f32 %v9750, 0.0
      %v9879 = vmax.f32 %v9751, 0.0
      %v9880 = vmax.f32 %v9752, 0.0
      %v9881 = vmax.f32 %v9753, 0.0
      %v9882 = vmax.f32 %v9754, 0.0
      %v9883 = vmax.f32 %v9755, 0.0
      %v9884 = vmax.f32 %v9756, 0.0
      %v9885 = vmax.f32 %v9757, 0.0
      %v9886 = vmax.f32 %v9758, 0.0
      %v9887 = vmax.f32 %v9759, 0.0
      %v9888 = vmax.f32 %v9760, 0.0
      %v9889 = vmax.f32 %v9761, 0.0
      %v9890 = vmax.f32 %v9762, 0.0
      %v9891 = vmax.f32 %v9763, 0.0
      %v9892 = vmax.f32 %v9764, 0.0
      %v9893 = vmax.f32 %v9765, 0.0
      %v9894 = vmax.f32 %v9766, 0.0
      %v9895 = vmax.f32 %v9767, 0.0
      %v9896 = vmax.f32 %v9768, 0.0
      %v9897 = vmax.f32 %v9769, 0.0
      %v9898 = vmax.f32 %v9770, 0.0
      %v9899 = vmax.f32 %v9771, 0.0
      %v9900 = vmax.f32 %v9772, 0.0
      %v9901 = vmax.f32 %v9773, 0.0
      %v9902 = vmax.f32 %v9774, 0.0
      %v9903 = vmax.f32 %v9775, 0.0
      %v9904 = vmax.f32 %v9776, 0.0
      %vm9905 = vcmask 130048
      %9906 = vst.msk [vmem:[%s197] sm:$0xff] %vm9905, %v9777
      %9907 = vst.msk [vmem:[%s197 + $0x8] sm:$0xff] %vm9905, %v9778
      %9908 = vst.msk [vmem:[%s197 + $0x10] sm:$0xff] %vm9905, %v9779
      %9909 = vst.msk [vmem:[%s197 + $0x18] sm:$0xff] %vm9905, %v9780
      %9910 = vst.msk [vmem:[%s197 + $0x20] sm:$0xff] %vm9905, %v9781
      %9911 = vst.msk [vmem:[%s197 + $0x28] sm:$0xff] %vm9905, %v9782
      %9912 = vst.msk [vmem:[%s197 + $0x30] sm:$0xff] %vm9905, %v9783
      %9913 = vst.msk [vmem:[%s197 + $0x38] sm:$0xff] %vm9905, %v9784
      %9914 = vst.msk [vmem:[%s197 + $0x40] sm:$0xff] %vm9905, %v9785
      %9915 = vst.msk [vmem:[%s197 + $0x48] sm:$0xff] %vm9905, %v9786
      %9916 = vst.msk [vmem:[%s197 + $0x50] sm:$0xff] %vm9905, %v9787
      %9917 = vst.msk [vmem:[%s197 + $0x58] sm:$0xff] %vm9905, %v9788
      %9918 = vst.msk [vmem:[%s197 + $0x60] sm:$0xff] %vm9905, %v9789
      %9919 = vst.msk [vmem:[%s197 + $0x68] sm:$0xff] %vm9905, %v9790
      %9920 = vst.msk [vmem:[%s197 + $0x70] sm:$0xff] %vm9905, %v9791
      %9921 = vst.msk [vmem:[%s197 + $0x78] sm:$0xff] %vm9905, %v9792
      %9922 = vst.msk [vmem:[%s197 + $0x80] sm:$0xff] %vm9905, %v9793
      %9923 = vst.msk [vmem:[%s197 + $0x88] sm:$0xff] %vm9905, %v9794
      %9924 = vst.msk [vmem:[%s197 + $0x90] sm:$0xff] %vm9905, %v9795
      %9925 = vst.msk [vmem:[%s197 + $0x98] sm:$0xff] %vm9905, %v9796
      %9926 = vst.msk [vmem:[%s197 + $0xa0] sm:$0xff] %vm9905, %v9797
      %9927 = vst.msk [vmem:[%s197 + $0xa8] sm:$0xff] %vm9905, %v9798
      %9928 = vst.msk [vmem:[%s197 + $0xb0] sm:$0xff] %vm9905, %v9799
      %9929 = vst.msk [vmem:[%s197 + $0xb8] sm:$0xff] %vm9905, %v9800
      %9930 = vst.msk [vmem:[%s197 + $0xc0] sm:$0xff] %vm9905, %v9801
      %9931 = vst.msk [vmem:[%s197 + $0xc8] sm:$0xff] %vm9905, %v9802
      %9932 = vst.msk [vmem:[%s197 + $0xd0] sm:$0xff] %vm9905, %v9803
      %9933 = vst.msk [vmem:[%s197 + $0xd8] sm:$0xff] %vm9905, %v9804
      %9934 = vst.msk [vmem:[%s197 + $0xe0] sm:$0xff] %vm9905, %v9805
      %9935 = vst.msk [vmem:[%s197 + $0xe8] sm:$0xff] %vm9905, %v9806
      %9936 = vst.msk [vmem:[%s197 + $0xf0] sm:$0xff] %vm9905, %v9807
      %9937 = vst.msk [vmem:[%s197 + $0xf8] sm:$0xff] %vm9905, %v9808
      %9938 = vst.msk [vmem:[%s197 + $0x100] sm:$0xff] %vm9905, %v9809
      %9939 = vst.msk [vmem:[%s197 + $0x108] sm:$0xff] %vm9905, %v9810
      %9940 = vst.msk [vmem:[%s197 + $0x110] sm:$0xff] %vm9905, %v9811
      %9941 = vst.msk [vmem:[%s197 + $0x118] sm:$0xff] %vm9905, %v9812
      %9942 = vst.msk [vmem:[%s197 + $0x120] sm:$0xff] %vm9905, %v9813
      %9943 = vst.msk [vmem:[%s197 + $0x128] sm:$0xff] %vm9905, %v9814
      %9944 = vst.msk [vmem:[%s197 + $0x130] sm:$0xff] %vm9905, %v9815
      %9945 = vst.msk [vmem:[%s197 + $0x138] sm:$0xff] %vm9905, %v9816
      %9946 = vst.msk [vmem:[%s197 + $0x140] sm:$0xff] %vm9905, %v9817
      %9947 = vst.msk [vmem:[%s197 + $0x148] sm:$0xff] %vm9905, %v9818
      %9948 = vst.msk [vmem:[%s197 + $0x150] sm:$0xff] %vm9905, %v9819
      %9949 = vst.msk [vmem:[%s197 + $0x158] sm:$0xff] %vm9905, %v9820
      %9950 = vst.msk [vmem:[%s197 + $0x160] sm:$0xff] %vm9905, %v9821
      %9951 = vst.msk [vmem:[%s197 + $0x168] sm:$0xff] %vm9905, %v9822
      %9952 = vst.msk [vmem:[%s197 + $0x170] sm:$0xff] %vm9905, %v9823
      %9953 = vst.msk [vmem:[%s197 + $0x178] sm:$0xff] %vm9905, %v9824
      %9954 = vst.msk [vmem:[%s197 + $0x180] sm:$0xff] %vm9905, %v9825
      %9955 = vst.msk [vmem:[%s197 + $0x188] sm:$0xff] %vm9905, %v9826
      %9956 = vst.msk [vmem:[%s197 + $0x190] sm:$0xff] %vm9905, %v9827
      %9957 = vst.msk [vmem:[%s197 + $0x198] sm:$0xff] %vm9905, %v9828
      %9958 = vst.msk [vmem:[%s197 + $0x1a0] sm:$0xff] %vm9905, %v9829
      %9959 = vst.msk [vmem:[%s197 + $0x1a8] sm:$0xff] %vm9905, %v9830
      %9960 = vst.msk [vmem:[%s197 + $0x1b0] sm:$0xff] %vm9905, %v9831
      %9961 = vst.msk [vmem:[%s197 + $0x1b8] sm:$0xff] %vm9905, %v9832
      %9962 = vst.msk [vmem:[%s197 + $0x1c0] sm:$0xff] %vm9905, %v9833
      %9963 = vst.msk [vmem:[%s197 + $0x1c8] sm:$0xff] %vm9905, %v9834
      %9964 = vst.msk [vmem:[%s197 + $0x1d0] sm:$0xff] %vm9905, %v9835
      %9965 = vst.msk [vmem:[%s197 + $0x1d8] sm:$0xff] %vm9905, %v9836
      %9966 = vst.msk [vmem:[%s197 + $0x1e0] sm:$0xff] %vm9905, %v9837
      %9967 = vst.msk [vmem:[%s197 + $0x1e8] sm:$0xff] %vm9905, %v9838
      %9968 = vst.msk [vmem:[%s197 + $0x1f0] sm:$0xff] %vm9905, %v9839
      %9969 = vst.msk [vmem:[%s197 + $0x1f8] sm:$0xff] %vm9905, %v9840
      %9970 = vst.msk [vmem:[%s197 + $0x200] sm:$0xff] %vm9905, %v9841
      %9971 = vst.msk [vmem:[%s197 + $0x208] sm:$0xff] %vm9905, %v9842
      %9972 = vst.msk [vmem:[%s197 + $0x210] sm:$0xff] %vm9905, %v9843
      %9973 = vst.msk [vmem:[%s197 + $0x218] sm:$0xff] %vm9905, %v9844
      %9974 = vst.msk [vmem:[%s197 + $0x220] sm:$0xff] %vm9905, %v9845
      %9975 = vst.msk [vmem:[%s197 + $0x228] sm:$0xff] %vm9905, %v9846
      %9976 = vst.msk [vmem:[%s197 + $0x230] sm:$0xff] %vm9905, %v9847
      %9977 = vst.msk [vmem:[%s197 + $0x238] sm:$0xff] %vm9905, %v9848
      %9978 = vst.msk [vmem:[%s197 + $0x240] sm:$0xff] %vm9905, %v9849
      %9979 = vst.msk [vmem:[%s197 + $0x248] sm:$0xff] %vm9905, %v9850
      %9980 = vst.msk [vmem:[%s197 + $0x250] sm:$0xff] %vm9905, %v9851
      %9981 = vst.msk [vmem:[%s197 + $0x258] sm:$0xff] %vm9905, %v9852
      %9982 = vst.msk [vmem:[%s197 + $0x260] sm:$0xff] %vm9905, %v9853
      %9983 = vst.msk [vmem:[%s197 + $0x268] sm:$0xff] %vm9905, %v9854
      %9984 = vst.msk [vmem:[%s197 + $0x270] sm:$0xff] %vm9905, %v9855
      %9985 = vst.msk [vmem:[%s197 + $0x278] sm:$0xff] %vm9905, %v9856
      %9986 = vst.msk [vmem:[%s197 + $0x280] sm:$0xff] %vm9905, %v9857
      %9987 = vst.msk [vmem:[%s197 + $0x288] sm:$0xff] %vm9905, %v9858
      %9988 = vst.msk [vmem:[%s197 + $0x290] sm:$0xff] %vm9905, %v9859
      %9989 = vst.msk [vmem:[%s197 + $0x298] sm:$0xff] %vm9905, %v9860
      %9990 = vst.msk [vmem:[%s197 + $0x2a0] sm:$0xff] %vm9905, %v9861
      %9991 = vst.msk [vmem:[%s197 + $0x2a8] sm:$0xff] %vm9905, %v9862
      %9992 = vst.msk [vmem:[%s197 + $0x2b0] sm:$0xff] %vm9905, %v9863
      %9993 = vst.msk [vmem:[%s197 + $0x2b8] sm:$0xff] %vm9905, %v9864
      %9994 = vst.msk [vmem:[%s197 + $0x2c0] sm:$0xff] %vm9905, %v9865
      %9995 = vst.msk [vmem:[%s197 + $0x2c8] sm:$0xff] %vm9905, %v9866
      %9996 = vst.msk [vmem:[%s197 + $0x2d0] sm:$0xff] %vm9905, %v9867
      %9997 = vst.msk [vmem:[%s197 + $0x2d8] sm:$0xff] %vm9905, %v9868
      %9998 = vst.msk [vmem:[%s197 + $0x2e0] sm:$0xff] %vm9905, %v9869
      %9999 = vst.msk [vmem:[%s197 + $0x2e8] sm:$0xff] %vm9905, %v9870
      %10000 = vst.msk [vmem:[%s197 + $0x2f0] sm:$0xff] %vm9905, %v9871
      %10001 = vst.msk [vmem:[%s197 + $0x2f8] sm:$0xff] %vm9905, %v9872
      %10002 = vst.msk [vmem:[%s197 + $0x300] sm:$0xff] %vm9905, %v9873
      %10003 = vst.msk [vmem:[%s197 + $0x308] sm:$0xff] %vm9905, %v9874
      %10004 = vst.msk [vmem:[%s197 + $0x310] sm:$0xff] %vm9905, %v9875
      %10005 = vst.msk [vmem:[%s197 + $0x318] sm:$0xff] %vm9905, %v9876
      %10006 = vst.msk [vmem:[%s197 + $0x320] sm:$0xff] %vm9905, %v9877
      %10007 = vst.msk [vmem:[%s197 + $0x328] sm:$0xff] %vm9905, %v9878
      %10008 = vst.msk [vmem:[%s197 + $0x330] sm:$0xff] %vm9905, %v9879
      %10009 = vst.msk [vmem:[%s197 + $0x338] sm:$0xff] %vm9905, %v9880
      %10010 = vst.msk [vmem:[%s197 + $0x340] sm:$0xff] %vm9905, %v9881
      %10011 = vst.msk [vmem:[%s197 + $0x348] sm:$0xff] %vm9905, %v9882
      %10012 = vst.msk [vmem:[%s197 + $0x350] sm:$0xff] %vm9905, %v9883
      %10013 = vst.msk [vmem:[%s197 + $0x358] sm:$0xff] %vm9905, %v9884
      %10014 = vst.msk [vmem:[%s197 + $0x360] sm:$0xff] %vm9905, %v9885
      %10015 = vst.msk [vmem:[%s197 + $0x368] sm:$0xff] %vm9905, %v9886
      %10016 = vst.msk [vmem:[%s197 + $0x370] sm:$0xff] %vm9905, %v9887
      %10017 = vst.msk [vmem:[%s197 + $0x378] sm:$0xff] %vm9905, %v9888
      %10018 = vst.msk [vmem:[%s197 + $0x380] sm:$0xff] %vm9905, %v9889
      %10019 = vst.msk [vmem:[%s197 + $0x388] sm:$0xff] %vm9905, %v9890
      %10020 = vst.msk [vmem:[%s197 + $0x390] sm:$0xff] %vm9905, %v9891
      %10021 = vst.msk [vmem:[%s197 + $0x398] sm:$0xff] %vm9905, %v9892
      %10022 = vst.msk [vmem:[%s197 + $0x3a0] sm:$0xff] %vm9905, %v9893
      %10023 = vst.msk [vmem:[%s197 + $0x3a8] sm:$0xff] %vm9905, %v9894
      %10024 = vst.msk [vmem:[%s197 + $0x3b0] sm:$0xff] %vm9905, %v9895
      %10025 = vst.msk [vmem:[%s197 + $0x3b8] sm:$0xff] %vm9905, %v9896
      %10026 = vst.msk [vmem:[%s197 + $0x3c0] sm:$0xff] %vm9905, %v9897
      %10027 = vst.msk [vmem:[%s197 + $0x3c8] sm:$0xff] %vm9905, %v9898
      %10028 = vst.msk [vmem:[%s197 + $0x3d0] sm:$0xff] %vm9905, %v9899
      %10029 = vst.msk [vmem:[%s197 + $0x3d8] sm:$0xff] %vm9905, %v9900
      %10030 = vst.msk [vmem:[%s197 + $0x3e0] sm:$0xff] %vm9905, %v9901
      %10031 = vst.msk [vmem:[%s197 + $0x3e8] sm:$0xff] %vm9905, %v9902
      %10032 = vst.msk [vmem:[%s197 + $0x3f0] sm:$0xff] %vm9905, %v9903
      %10033 = vst.msk [vmem:[%s197 + $0x3f8] sm:$0xff] %vm9905, %v9904
      %p10034 = scmp.lt.s32.totalorder %s15, 1
      %s10035 = scalar_select %p10034, %s15, 1
      %s10036 = smul.addr %s10035, 128
      %s10037 = smul.addr %s10036, 8
      %s10038 = scalar_lea.vmem %s4, %s10037
      // Predicated region
      $region37: #{tpu_custom_call.1} parent=35 // pred_check
        %p10039 = pneg %p122
      $region38: #{tpu_custom_call.1} parent=35 // pred_check_branch
        %10041 = sbr.rel (%p10039) target = $region40
      $region39: #{tpu_custom_call.1} parent=35 // pred_region
        _
      $region40: #{tpu_custom_call.1} parent=35 // pred_fallthru
        _
    $region36: #{tpu_custom_call.1} parent=5 // pred_fallthru
      _
    %p10042 = scmp.le.s32.totalorder 2, %s10
    // Predicated region
    $region41: #{tpu_custom_call.1} parent=5 // pred_check
      %p10043 = pneg %p10042
    $region42: #{tpu_custom_call.1} parent=5 // pred_check_branch
      %10045 = sbr.rel (%p10043) target = $region44
    $region43: #{tpu_custom_call.1} parent=5 // pred_region
      %s10046 = ssub.s32 %s10, 2
      // Predicated region
      $region45: #{tpu_custom_call.1} parent=43 // pred_check
        %p10047 = pneg %p128
      $region46: #{tpu_custom_call.1} parent=43 // pred_check_branch
        %10049 = sbr.rel (%p10047) target = $region48
      $region47: #{tpu_custom_call.1} parent=43 // pred_region
        %p10050 = scmp.lt.s32.totalorder %s16, 1
        %s10051 = scalar_select %p10050, %s16, 1
        %s10052 = smul.addr %s10051, 128
        %s10053 = smul.addr %s10052, 8
        %s10054 = scalar_lea.vmem %s4, %s10053
      $region48: #{tpu_custom_call.1} parent=43 // pred_fallthru
        _
    $region44: #{tpu_custom_call.1} parent=5 // pred_fallthru
      _
  $region6: #{tpu_custom_call.1} parent=0 // loop_footer
    %s14 = sadd.s32 1, %s10
  $region7: #{tpu_custom_call.1} parent=0 // loop_footer_branch
    %9 = sbr.rel target = $region3
  $region8: #{tpu_custom_call.1} parent=0 // loop_exit
    _

</llo_original>
